<compile_context>
chip_gen: v7x
topology: tpu7x:2x2x1
jax: 0.10.0
libtpu: 0.0.40
codegen_flags: <defaults>
</compile_context>

<pallas_src>
import jax
import jax.numpy as jnp
from jax.experimental import pallas as pl
from jax.experimental.pallas import tpu as pltpu

EPS = 1e-5  # nn.BatchNorm2d default eps


def double_conv_kernel(x_ref, w1_ref, g1_ref, b1_ref, w2_ref, g2_ref, b2_ref,
                       o_ref, xp_ref, mid_ref):
    # x_ref  : (N, H, W, Cin)          NHWC input (unpadded)
    # w1_ref : (9*Cin, CP)             im2col conv1 weights, out-channels zero-padded to CP
    # w2_ref : (9, CP, CP)             conv2 weights per tap, zero-padded
    # g*/b*  : (1, CP)                 BN affine params (pad: gamma=1, beta=0 -> pad chans stay 0)
    # o_ref  : (N, H, W, CP)           channel-padded output (lane-dense store)
    # xp_ref : VMEM (N, H+2, W+2, Cin) zero-padded input scratch
    # mid_ref: VMEM (N, H+2, W+2, CP)  zero-padded intermediate scratch
    N, H, W, Cin = x_ref.shape
    CP = o_ref.shape[-1]
    Hp, Wp = H + 2, W + 2
    M = N * H * W
    inv_m = 1.0 / M

    # ---- in-kernel zero-pad of the input: zero halo only, then copy interior ----
    xp_ref[:, 0:1, :, :] = jnp.zeros((N, 1, Wp, Cin), jnp.float32)
    xp_ref[:, Hp - 1:Hp, :, :] = jnp.zeros((N, 1, Wp, Cin), jnp.float32)
    xp_ref[:, :, 0:1, :] = jnp.zeros((N, Hp, 1, Cin), jnp.float32)
    xp_ref[:, :, Wp - 1:Wp, :] = jnp.zeros((N, Hp, 1, Cin), jnp.float32)
    xp_ref[:, 1:H + 1, 1:W + 1, :] = x_ref[...]

    # ---- Conv1: single im2col matmul, K = 9*Cin ----
    taps = [xp_ref[:, ky:ky + H, kx:kx + W, :].reshape(M, Cin)
            for ky in range(3) for kx in range(3)]
    patch = jnp.concatenate(taps, axis=1)                                    # (M, 9*Cin)
    acc1 = jnp.dot(patch, w1_ref[...], preferred_element_type=jnp.float32)   # (M, CP)

    # ---- BN1 (one-pass batch stats over N*H*W per channel) + ReLU ----
    mean1 = jnp.sum(acc1, axis=0, keepdims=True) * inv_m
    msq1 = jnp.sum(acc1 * acc1, axis=0, keepdims=True) * inv_m
    var1 = jnp.maximum(msq1 - mean1 * mean1, 0.0)
    y1 = (acc1 - mean1) * jax.lax.rsqrt(var1 + EPS) * g1_ref[...] + b1_ref[...]
    y1 = jnp.maximum(y1, 0.0)

    # ---- padded intermediate: zero halo only, write interior once ----
    mid_ref[:, 0:1, :, :] = jnp.zeros((N, 1, Wp, CP), jnp.float32)
    mid_ref[:, Hp - 1:Hp, :, :] = jnp.zeros((N, 1, Wp, CP), jnp.float32)
    mid_ref[:, :, 0:1, :] = jnp.zeros((N, Hp, 1, CP), jnp.float32)
    mid_ref[:, :, Wp - 1:Wp, :] = jnp.zeros((N, Hp, 1, CP), jnp.float32)
    mid_ref[:, 1:H + 1, 1:W + 1, :] = y1.reshape(N, H, W, CP)

    # ---- Conv2: nine dense (M, CP) @ (CP, CP) matmuls (K fully lane-dense) ----
    acc2 = jnp.zeros((M, CP), jnp.float32)
    for ky in range(3):
        for kx in range(3):
            win = mid_ref[:, ky:ky + H, kx:kx + W, :].reshape(M, CP)
            acc2 = acc2 + jnp.dot(win, w2_ref[ky * 3 + kx],
                                  preferred_element_type=jnp.float32)

    # ---- BN2 + ReLU ----
    mean2 = jnp.sum(acc2, axis=0, keepdims=True) * inv_m
    msq2 = jnp.sum(acc2 * acc2, axis=0, keepdims=True) * inv_m
    var2 = jnp.maximum(msq2 - mean2 * mean2, 0.0)
    y2 = (acc2 - mean2) * jax.lax.rsqrt(var2 + EPS) * g2_ref[...] + b2_ref[...]
    y2 = jnp.maximum(y2, 0.0)

    # lane-dense (last dim = CP = multiple of 128) output store
    o_ref[...] = y2.reshape(N, H, W, CP)


@jax.jit
def double_conv(x_nchw, w1, g1, b1, w2, g2, b2):
    """x_nchw: (N, Cin, H, W); w1: (Cout, Cin, 3, 3); w2: (Cout, Cout, 3, 3)."""
    N, Cin, H, W = x_nchw.shape
    Cout = w1.shape[0]
    CP = ((Cout + 127) // 128) * 128  # lane-dense padded channel count

    # NCHW -> NHWC (single fused XLA transpose; padding happens inside the kernel)
    x_nhwc = jnp.transpose(x_nchw, (0, 2, 3, 1)).astype(jnp.float32)

    # conv1 weights: (Cout, Cin, 3, 3) -> (ky, kx, Cin, Cout) -> (9*Cin, Cout) -> pad to CP cols
    w1m = jnp.transpose(w1, (2, 3, 1, 0)).reshape(9 * Cin, Cout).astype(jnp.float32)
    w1m = jnp.pad(w1m, ((0, 0), (0, CP - Cout)))

    # conv2 weights: (Cout, Cout, 3, 3) -> (9, Cin2=Cout, Cout) -> pad both channel dims to CP
    w2m = jnp.transpose(w2, (2, 3, 1, 0)).reshape(9, Cout, Cout).astype(jnp.float32)
    w2m = jnp.pad(w2m, ((0, 0), (0, CP - Cout), (0, CP - Cout)))

    def pad_vec(v, fill):
        v = v.reshape(1, Cout).astype(jnp.float32)
        return jnp.pad(v, ((0, 0), (0, CP - Cout)), constant_values=fill)

    g1p, b1p = pad_vec(g1, 1.0), pad_vec(b1, 0.0)
    g2p, b2p = pad_vec(g2, 1.0), pad_vec(b2, 0.0)

    out_nhwc = pl.pallas_call(
        double_conv_kernel,
        out_shape=jax.ShapeDtypeStruct((N, H, W, CP), jnp.float32),
        in_specs=[pl.BlockSpec(memory_space=pltpu.MemorySpace.VMEM)] * 7,
        out_specs=pl.BlockSpec(memory_space=pltpu.MemorySpace.VMEM),
        scratch_shapes=[
            pltpu.VMEM((N, H + 2, W + 2, Cin), jnp.float32),  # padded input
            pltpu.VMEM((N, H + 2, W + 2, CP), jnp.float32),   # padded intermediate
        ],
        compiler_params=pltpu.CompilerParams(vmem_limit_bytes=32 * 1024 * 1024),
    )(x_nhwc, w1m, g1p, b1p, w2m, g2p, b2p)

    # drop channel padding, NHWC -> NCHW to match PyTorch output layout
    return jnp.transpose(out_nhwc[..., :Cout], (0, 3, 1, 2))


def reference(x, w1, g1, b1, w2, g2, b2):
    """Pure-JAX reference of DoubleConv.forward (training-mode BN)."""
    def conv(x, w):
        return jax.lax.conv_general_dilated(
            x, w, window_strides=(1, 1), padding=((1, 1), (1, 1)),
            dimension_numbers=('NCHW', 'OIHW', 'NCHW'))

    def bn_relu(y, g, b):
        mean = jnp.mean(y, axis=(0, 2, 3), keepdims=True)
        var = jnp.mean((y - mean) ** 2, axis=(0, 2, 3), keepdims=True)
        yn = (y - mean) * jax.lax.rsqrt(var + EPS)
        yn = yn * g.reshape(1, -1, 1, 1) + b.reshape(1, -1, 1, 1)
        return jnp.maximum(yn, 0.0)

    y = bn_relu(conv(x, w1), g1, b1)
    return bn_relu(conv(y, w2), g2, b2)


if __name__ == "__main__":
    N, Cin, Cout, H, W = 2, 4, 8, 16, 16

    key = jax.random.PRNGKey(0)
    k_x, k_w1, k_w2 = jax.random.split(key, 3)

    x = jax.random.normal(k_x, (N, Cin, H, W), jnp.float32)
    # deterministic Conv2d weights (kaiming-uniform-like scale), no bias
    w1 = jax.random.uniform(k_w1, (Cout, Cin, 3, 3), jnp.float32, -1.0, 1.0) / jnp.sqrt(Cin * 9.0)
    w2 = jax.random.uniform(k_w2, (Cout, Cout, 3, 3), jnp.float32, -1.0, 1.0) / jnp.sqrt(Cout * 9.0)
    # BatchNorm2d default affine init: weight=1, bias=0
    g1 = jnp.ones((Cout,), jnp.float32); b1 = jnp.zeros((Cout,), jnp.float32)
    g2 = jnp.ones((Cout,), jnp.float32); b2 = jnp.zeros((Cout,), jnp.float32)

    out = double_conv(x, w1, g1, b1, w2, g2, b2)
    out = jax.block_until_ready(out)

    ref = reference(x, w1, g1, b1, w2, g2, b2)
    assert out.shape == (N, Cout, H, W), out.shape
    err = float(jnp.max(jnp.abs(out - ref)))
    assert jnp.allclose(out, ref, atol=2e-4, rtol=2e-4), err

    print("KERNEL_OK")
</pallas_src>

<mosaic_0001>
module attributes {stable_mosaic.version = 11 : i64} {
  func.func @double_conv_kernel(%arg0: memref<2x16x16x4xf32, #tpu.memory_space<vmem>>, %arg1: memref<36x128xf32, #tpu.memory_space<vmem>>, %arg2: memref<1x128xf32, #tpu.memory_space<vmem>>, %arg3: memref<1x128xf32, #tpu.memory_space<vmem>>, %arg4: memref<9x128x128xf32, #tpu.memory_space<vmem>>, %arg5: memref<1x128xf32, #tpu.memory_space<vmem>>, %arg6: memref<1x128xf32, #tpu.memory_space<vmem>>, %arg7: memref<2x16x16x128xf32, #tpu.memory_space<vmem>>, %arg8: memref<2x18x18x4xf32, #tpu.memory_space<vmem>>, %arg9: memref<2x18x18x128xf32, #tpu.memory_space<vmem>>) attributes {dimension_semantics = [], scalar_prefetch = 0 : i64, scratch_operands = 2 : i64, tpu.core_type = #tpu.core_type<tc>} {
    %cst = arith.constant 0.000000e+00 : f32
    %0 = vector.broadcast %cst : f32 to vector<2x1x18x4xf32>
    %c0 = arith.constant 0 : index
    %c0_0 = arith.constant 0 : index
    %c0_1 = arith.constant 0 : index
    %c0_2 = arith.constant 0 : index
    %1 = vector.load %arg8[%c0, %c0_0, %c0_1, %c0_2] : memref<2x18x18x4xf32, #tpu.memory_space<vmem>>, vector<2x1x18x4xf32>
    tpu.vector_store %arg8[%c0, %c0_0, %c0_1, %c0_2], %0 {strides = array<i32>} : memref<2x18x18x4xf32, #tpu.memory_space<vmem>>, vector<2x1x18x4xf32>,
    %cst_3 = arith.constant 0.000000e+00 : f32
    %2 = vector.broadcast %cst_3 : f32 to vector<2x1x18x4xf32>
    %c0_4 = arith.constant 0 : index
    %c17 = arith.constant 17 : index
    %c0_5 = arith.constant 0 : index
    %c0_6 = arith.constant 0 : index
    %3 = vector.load %arg8[%c0_4, %c17, %c0_5, %c0_6] : memref<2x18x18x4xf32, #tpu.memory_space<vmem>>, vector<2x1x18x4xf32>
    tpu.vector_store %arg8[%c0_4, %c17, %c0_5, %c0_6], %2 {strides = array<i32>} : memref<2x18x18x4xf32, #tpu.memory_space<vmem>>, vector<2x1x18x4xf32>,
    %cst_7 = arith.constant 0.000000e+00 : f32
    %4 = vector.broadcast %cst_7 : f32 to vector<2x18x1x4xf32>
    %c0_8 = arith.constant 0 : index
    %c0_9 = arith.constant 0 : index
    %c0_10 = arith.constant 0 : index
    %c0_11 = arith.constant 0 : index
    %5 = vector.load %arg8[%c0_8, %c0_9, %c0_10, %c0_11] : memref<2x18x18x4xf32, #tpu.memory_space<vmem>>, vector<2x18x1x4xf32>
    tpu.vector_store %arg8[%c0_8, %c0_9, %c0_10, %c0_11], %4 {strides = array<i32>} : memref<2x18x18x4xf32, #tpu.memory_space<vmem>>, vector<2x18x1x4xf32>,
    %cst_12 = arith.constant 0.000000e+00 : f32
    %6 = vector.broadcast %cst_12 : f32 to vector<2x18x1x4xf32>
    %c0_13 = arith.constant 0 : index
    %c0_14 = arith.constant 0 : index
    %c17_15 = arith.constant 17 : index
    %c0_16 = arith.constant 0 : index
    %7 = vector.load %arg8[%c0_13, %c0_14, %c17_15, %c0_16] : memref<2x18x18x4xf32, #tpu.memory_space<vmem>>, vector<2x18x1x4xf32>
    tpu.vector_store %arg8[%c0_13, %c0_14, %c17_15, %c0_16], %6 {strides = array<i32>} : memref<2x18x18x4xf32, #tpu.memory_space<vmem>>, vector<2x18x1x4xf32>,
    %c0_17 = arith.constant 0 : index
    %c0_18 = arith.constant 0 : index
    %c0_19 = arith.constant 0 : index
    %c0_20 = arith.constant 0 : index
    %8 = vector.load %arg0[%c0_17, %c0_18, %c0_19, %c0_20] : memref<2x16x16x4xf32, #tpu.memory_space<vmem>>, vector<2x16x16x4xf32>
    %c0_21 = arith.constant 0 : index
    %c1 = arith.constant 1 : index
    %c1_22 = arith.constant 1 : index
    %c0_23 = arith.constant 0 : index
    %9 = vector.load %arg8[%c0_21, %c1, %c1_22, %c0_23] : memref<2x18x18x4xf32, #tpu.memory_space<vmem>>, vector<2x16x16x4xf32>
    tpu.vector_store %arg8[%c0_21, %c1, %c1_22, %c0_23], %8 {strides = array<i32>} : memref<2x18x18x4xf32, #tpu.memory_space<vmem>>, vector<2x16x16x4xf32>,
    %c0_24 = arith.constant 0 : index
    %c0_25 = arith.constant 0 : index
    %c0_26 = arith.constant 0 : index
    %c0_27 = arith.constant 0 : index
    %10 = vector.load %arg8[%c0_24, %c0_25, %c0_26, %c0_27] : memref<2x18x18x4xf32, #tpu.memory_space<vmem>>, vector<2x16x16x4xf32>
    %11 = vector.shape_cast %10 : vector<2x16x16x4xf32> to vector<512x4xf32>
    %c0_28 = arith.constant 0 : index
    %c0_29 = arith.constant 0 : index
    %c1_30 = arith.constant 1 : index
    %c0_31 = arith.constant 0 : index
    %12 = vector.load %arg8[%c0_28, %c0_29, %c1_30, %c0_31] : memref<2x18x18x4xf32, #tpu.memory_space<vmem>>, vector<2x16x16x4xf32>
    %13 = vector.shape_cast %12 : vector<2x16x16x4xf32> to vector<512x4xf32>
    %c0_32 = arith.constant 0 : index
    %c0_33 = arith.constant 0 : index
    %c2 = arith.constant 2 : index
    %c0_34 = arith.constant 0 : index
    %14 = vector.load %arg8[%c0_32, %c0_33, %c2, %c0_34] : memref<2x18x18x4xf32, #tpu.memory_space<vmem>>, vector<2x16x16x4xf32>
    %15 = vector.shape_cast %14 : vector<2x16x16x4xf32> to vector<512x4xf32>
    %c0_35 = arith.constant 0 : index
    %c1_36 = arith.constant 1 : index
    %c0_37 = arith.constant 0 : index
    %c0_38 = arith.constant 0 : index
    %16 = vector.load %arg8[%c0_35, %c1_36, %c0_37, %c0_38] : memref<2x18x18x4xf32, #tpu.memory_space<vmem>>, vector<2x16x16x4xf32>
    %17 = vector.shape_cast %16 : vector<2x16x16x4xf32> to vector<512x4xf32>
    %c0_39 = arith.constant 0 : index
    %c1_40 = arith.constant 1 : index
    %c1_41 = arith.constant 1 : index
    %c0_42 = arith.constant 0 : index
    %18 = vector.load %arg8[%c0_39, %c1_40, %c1_41, %c0_42] : memref<2x18x18x4xf32, #tpu.memory_space<vmem>>, vector<2x16x16x4xf32>
    %19 = vector.shape_cast %18 : vector<2x16x16x4xf32> to vector<512x4xf32>
    %c0_43 = arith.constant 0 : index
    %c1_44 = arith.constant 1 : index
    %c2_45 = arith.constant 2 : index
    %c0_46 = arith.constant 0 : index
    %20 = vector.load %arg8[%c0_43, %c1_44, %c2_45, %c0_46] : memref<2x18x18x4xf32, #tpu.memory_space<vmem>>, vector<2x16x16x4xf32>
    %21 = vector.shape_cast %20 : vector<2x16x16x4xf32> to vector<512x4xf32>
    %c0_47 = arith.constant 0 : index
    %c2_48 = arith.constant 2 : index
    %c0_49 = arith.constant 0 : index
    %c0_50 = arith.constant 0 : index
    %22 = vector.load %arg8[%c0_47, %c2_48, %c0_49, %c0_50] : memref<2x18x18x4xf32, #tpu.memory_space<vmem>>, vector<2x16x16x4xf32>
    %23 = vector.shape_cast %22 : vector<2x16x16x4xf32> to vector<512x4xf32>
    %c0_51 = arith.constant 0 : index
    %c2_52 = arith.constant 2 : index
    %c1_53 = arith.constant 1 : index
    %c0_54 = arith.constant 0 : index
    %24 = vector.load %arg8[%c0_51, %c2_52, %c1_53, %c0_54] : memref<2x18x18x4xf32, #tpu.memory_space<vmem>>, vector<2x16x16x4xf32>
    %25 = vector.shape_cast %24 : vector<2x16x16x4xf32> to vector<512x4xf32>
    %c0_55 = arith.constant 0 : index
    %c2_56 = arith.constant 2 : index
    %c2_57 = arith.constant 2 : index
    %c0_58 = arith.constant 0 : index
    %26 = vector.load %arg8[%c0_55, %c2_56, %c2_57, %c0_58] : memref<2x18x18x4xf32, #tpu.memory_space<vmem>>, vector<2x16x16x4xf32>
    %27 = vector.shape_cast %26 : vector<2x16x16x4xf32> to vector<512x4xf32>
    %28 = tpu.concatenate %11, %13, %15, %17, %19, %21, %23, %25, %27 in 1 : vector<512x4xf32>, vector<512x4xf32>, vector<512x4xf32>, vector<512x4xf32>, vector<512x4xf32>, vector<512x4xf32>, vector<512x4xf32>, vector<512x4xf32>, vector<512x4xf32> -> vector<512x36xf32>
    %c0_59 = arith.constant 0 : index
    %c0_60 = arith.constant 0 : index
    %29 = vector.load %arg1[%c0_59, %c0_60] : memref<36x128xf32, #tpu.memory_space<vmem>>, vector<36x128xf32>
    %cst_61 = arith.constant dense<0.000000e+00> : vector<512x128xf32>
    %30 = tpu.matmul %28, %29, %cst_61 {dimension_numbers = #tpu.dot_dimension_numbers<[1], [0], [0], [1], [0, 0, 1, 1], [], []>} : vector<512x36xf32>, vector<36x128xf32>, vector<512x128xf32> -> vector<512x128xf32>
    %cst_62 = arith.constant dense<0.000000e+00> : vector<128xf32>
    %31 = vector.multi_reduction <add>, %30, %cst_62 [0] : vector<512x128xf32> to vector<128xf32>
    %32 = vector.shape_cast %31 : vector<128xf32> to vector<1x128xf32>
    %cst_63 = arith.constant 0.001953125 : f32
    %33 = vector.broadcast %cst_63 : f32 to vector<1x128xf32>
    %34 = arith.mulf %32, %33 : vector<1x128xf32>
    %35 = arith.mulf %30, %30 : vector<512x128xf32>
    %cst_64 = arith.constant dense<0.000000e+00> : vector<128xf32>
    %36 = vector.multi_reduction <add>, %35, %cst_64 [0] : vector<512x128xf32> to vector<128xf32>
    %37 = vector.shape_cast %36 : vector<128xf32> to vector<1x128xf32>
    %cst_65 = arith.constant 0.001953125 : f32
    %38 = vector.broadcast %cst_65 : f32 to vector<1x128xf32>
    %39 = arith.mulf %37, %38 : vector<1x128xf32>
    %40 = arith.mulf %34, %34 : vector<1x128xf32>
    %41 = arith.subf %39, %40 : vector<1x128xf32>
    %cst_66 = arith.constant 0.000000e+00 : f32
    %42 = vector.broadcast %cst_66 : f32 to vector<1x128xf32>
    %43 = arith.maximumf %41, %42 : vector<1x128xf32>
    %44 = vector.broadcast %34 : vector<1x128xf32> to vector<512x128xf32>
    %45 = arith.subf %30, %44 : vector<512x128xf32>
    %cst_67 = arith.constant 9.99999974E-6 : f32
    %46 = vector.broadcast %cst_67 : f32 to vector<1x128xf32>
    %47 = arith.addf %43, %46 : vector<1x128xf32>
    %48 = math.rsqrt %47 : vector<1x128xf32>
    %49 = vector.broadcast %48 : vector<1x128xf32> to vector<512x128xf32>
    %50 = arith.mulf %45, %49 : vector<512x128xf32>
    %c0_68 = arith.constant 0 : index
    %c0_69 = arith.constant 0 : index
    %51 = vector.load %arg2[%c0_68, %c0_69] : memref<1x128xf32, #tpu.memory_space<vmem>>, vector<1x128xf32>
    %52 = vector.broadcast %51 : vector<1x128xf32> to vector<512x128xf32>
    %53 = arith.mulf %50, %52 : vector<512x128xf32>
    %c0_70 = arith.constant 0 : index
    %c0_71 = arith.constant 0 : index
    %54 = vector.load %arg3[%c0_70, %c0_71] : memref<1x128xf32, #tpu.memory_space<vmem>>, vector<1x128xf32>
    %55 = vector.broadcast %54 : vector<1x128xf32> to vector<512x128xf32>
    %56 = arith.addf %53, %55 : vector<512x128xf32>
    %cst_72 = arith.constant 0.000000e+00 : f32
    %57 = vector.broadcast %cst_72 : f32 to vector<512x128xf32>
    %58 = arith.maximumf %56, %57 : vector<512x128xf32>
    %cst_73 = arith.constant 0.000000e+00 : f32
    %59 = vector.broadcast %cst_73 : f32 to vector<2x1x18x128xf32>
    %c0_74 = arith.constant 0 : index
    %c0_75 = arith.constant 0 : index
    %c0_76 = arith.constant 0 : index
    %c0_77 = arith.constant 0 : index
    %60 = vector.load %arg9[%c0_74, %c0_75, %c0_76, %c0_77] : memref<2x18x18x128xf32, #tpu.memory_space<vmem>>, vector<2x1x18x128xf32>
    tpu.vector_store %arg9[%c0_74, %c0_75, %c0_76, %c0_77], %59 {strides = array<i32>} : memref<2x18x18x128xf32, #tpu.memory_space<vmem>>, vector<2x1x18x128xf32>,
    %cst_78 = arith.constant 0.000000e+00 : f32
    %61 = vector.broadcast %cst_78 : f32 to vector<2x1x18x128xf32>
    %c0_79 = arith.constant 0 : index
    %c17_80 = arith.constant 17 : index
    %c0_81 = arith.constant 0 : index
    %c0_82 = arith.constant 0 : index
    %62 = vector.load %arg9[%c0_79, %c17_80, %c0_81, %c0_82] : memref<2x18x18x128xf32, #tpu.memory_space<vmem>>, vector<2x1x18x128xf32>
    tpu.vector_store %arg9[%c0_79, %c17_80, %c0_81, %c0_82], %61 {strides = array<i32>} : memref<2x18x18x128xf32, #tpu.memory_space<vmem>>, vector<2x1x18x128xf32>,
    %cst_83 = arith.constant 0.000000e+00 : f32
    %63 = vector.broadcast %cst_83 : f32 to vector<2x18x1x128xf32>
    %c0_84 = arith.constant 0 : index
    %c0_85 = arith.constant 0 : index
    %c0_86 = arith.constant 0 : index
    %c0_87 = arith.constant 0 : index
    %64 = vector.load %arg9[%c0_84, %c0_85, %c0_86, %c0_87] : memref<2x18x18x128xf32, #tpu.memory_space<vmem>>, vector<2x18x1x128xf32>
    tpu.vector_store %arg9[%c0_84, %c0_85, %c0_86, %c0_87], %63 {strides = array<i32>} : memref<2x18x18x128xf32, #tpu.memory_space<vmem>>, vector<2x18x1x128xf32>,
    %cst_88 = arith.constant 0.000000e+00 : f32
    %65 = vector.broadcast %cst_88 : f32 to vector<2x18x1x128xf32>
    %c0_89 = arith.constant 0 : index
    %c0_90 = arith.constant 0 : index
    %c17_91 = arith.constant 17 : index
    %c0_92 = arith.constant 0 : index
    %66 = vector.load %arg9[%c0_89, %c0_90, %c17_91, %c0_92] : memref<2x18x18x128xf32, #tpu.memory_space<vmem>>, vector<2x18x1x128xf32>
    tpu.vector_store %arg9[%c0_89, %c0_90, %c17_91, %c0_92], %65 {strides = array<i32>} : memref<2x18x18x128xf32, #tpu.memory_space<vmem>>, vector<2x18x1x128xf32>,
    %67 = vector.shape_cast %58 : vector<512x128xf32> to vector<2x16x16x128xf32>
    %c0_93 = arith.constant 0 : index
    %c1_94 = arith.constant 1 : index
    %c1_95 = arith.constant 1 : index
    %c0_96 = arith.constant 0 : index
    %68 = vector.load %arg9[%c0_93, %c1_94, %c1_95, %c0_96] : memref<2x18x18x128xf32, #tpu.memory_space<vmem>>, vector<2x16x16x128xf32>
    tpu.vector_store %arg9[%c0_93, %c1_94, %c1_95, %c0_96], %67 {strides = array<i32>} : memref<2x18x18x128xf32, #tpu.memory_space<vmem>>, vector<2x16x16x128xf32>,
    %cst_97 = arith.constant 0.000000e+00 : f32
    %69 = vector.broadcast %cst_97 : f32 to vector<512x128xf32>
    %c0_98 = arith.constant 0 : index
    %c0_99 = arith.constant 0 : index
    %c0_100 = arith.constant 0 : index
    %c0_101 = arith.constant 0 : index
    %70 = vector.load %arg9[%c0_98, %c0_99, %c0_100, %c0_101] : memref<2x18x18x128xf32, #tpu.memory_space<vmem>>, vector<2x16x16x128xf32>
    %71 = vector.shape_cast %70 : vector<2x16x16x128xf32> to vector<512x128xf32>
    %c0_102 = arith.constant 0 : index
    %c0_103 = arith.constant 0 : index
    %c0_104 = arith.constant 0 : index
    %72 = vector.load %arg4[%c0_102, %c0_103, %c0_104] : memref<9x128x128xf32, #tpu.memory_space<vmem>>, vector<1x128x128xf32>
    %73 = vector.shape_cast %72 : vector<1x128x128xf32> to vector<128x128xf32>
    %cst_105 = arith.constant dense<0.000000e+00> : vector<512x128xf32>
    %74 = tpu.matmul %71, %73, %cst_105 {dimension_numbers = #tpu.dot_dimension_numbers<[1], [0], [0], [1], [0, 0, 1, 1], [], []>} : vector<512x128xf32>, vector<128x128xf32>, vector<512x128xf32> -> vector<512x128xf32>
    %75 = arith.addf %69, %74 : vector<512x128xf32>
    %c0_106 = arith.constant 0 : index
    %c0_107 = arith.constant 0 : index
    %c1_108 = arith.constant 1 : index
    %c0_109 = arith.constant 0 : index
    %76 = vector.load %arg9[%c0_106, %c0_107, %c1_108, %c0_109] : memref<2x18x18x128xf32, #tpu.memory_space<vmem>>, vector<2x16x16x128xf32>
    %77 = vector.shape_cast %76 : vector<2x16x16x128xf32> to vector<512x128xf32>
    %c1_110 = arith.constant 1 : index
    %c0_111 = arith.constant 0 : index
    %c0_112 = arith.constant 0 : index
    %78 = vector.load %arg4[%c1_110, %c0_111, %c0_112] : memref<9x128x128xf32, #tpu.memory_space<vmem>>, vector<1x128x128xf32>
    %79 = vector.shape_cast %78 : vector<1x128x128xf32> to vector<128x128xf32>
    %cst_113 = arith.constant dense<0.000000e+00> : vector<512x128xf32>
    %80 = tpu.matmul %77, %79, %cst_113 {dimension_numbers = #tpu.dot_dimension_numbers<[1], [0], [0], [1], [0, 0, 1, 1], [], []>} : vector<512x128xf32>, vector<128x128xf32>, vector<512x128xf32> -> vector<512x128xf32>
    %81 = arith.addf %75, %80 : vector<512x128xf32>
    %c0_114 = arith.constant 0 : index
    %c0_115 = arith.constant 0 : index
    %c2_116 = arith.constant 2 : index
    %c0_117 = arith.constant 0 : index
    %82 = vector.load %arg9[%c0_114, %c0_115, %c2_116, %c0_117] : memref<2x18x18x128xf32, #tpu.memory_space<vmem>>, vector<2x16x16x128xf32>
    %83 = vector.shape_cast %82 : vector<2x16x16x128xf32> to vector<512x128xf32>
    %c2_118 = arith.constant 2 : index
    %c0_119 = arith.constant 0 : index
    %c0_120 = arith.constant 0 : index
    %84 = vector.load %arg4[%c2_118, %c0_119, %c0_120] : memref<9x128x128xf32, #tpu.memory_space<vmem>>, vector<1x128x128xf32>
    %85 = vector.shape_cast %84 : vector<1x128x128xf32> to vector<128x128xf32>
    %cst_121 = arith.constant dense<0.000000e+00> : vector<512x128xf32>
    %86 = tpu.matmul %83, %85, %cst_121 {dimension_numbers = #tpu.dot_dimension_numbers<[1], [0], [0], [1], [0, 0, 1, 1], [], []>} : vector<512x128xf32>, vector<128x128xf32>, vector<512x128xf32> -> vector<512x128xf32>
    %87 = arith.addf %81, %86 : vector<512x128xf32>
    %c0_122 = arith.constant 0 : index
    %c1_123 = arith.constant 1 : index
    %c0_124 = arith.constant 0 : index
    %c0_125 = arith.constant 0 : index
    %88 = vector.load %arg9[%c0_122, %c1_123, %c0_124, %c0_125] : memref<2x18x18x128xf32, #tpu.memory_space<vmem>>, vector<2x16x16x128xf32>
    %89 = vector.shape_cast %88 : vector<2x16x16x128xf32> to vector<512x128xf32>
    %c3 = arith.constant 3 : index
    %c0_126 = arith.constant 0 : index
    %c0_127 = arith.constant 0 : index
    %90 = vector.load %arg4[%c3, %c0_126, %c0_127] : memref<9x128x128xf32, #tpu.memory_space<vmem>>, vector<1x128x128xf32>
    %91 = vector.shape_cast %90 : vector<1x128x128xf32> to vector<128x128xf32>
    %cst_128 = arith.constant dense<0.000000e+00> : vector<512x128xf32>
    %92 = tpu.matmul %89, %91, %cst_128 {dimension_numbers = #tpu.dot_dimension_numbers<[1], [0], [0], [1], [0, 0, 1, 1], [], []>} : vector<512x128xf32>, vector<128x128xf32>, vector<512x128xf32> -> vector<512x128xf32>
    %93 = arith.addf %87, %92 : vector<512x128xf32>
    %c0_129 = arith.constant 0 : index
    %c1_130 = arith.constant 1 : index
    %c1_131 = arith.constant 1 : index
    %c0_132 = arith.constant 0 : index
    %94 = vector.load %arg9[%c0_129, %c1_130, %c1_131, %c0_132] : memref<2x18x18x128xf32, #tpu.memory_space<vmem>>, vector<2x16x16x128xf32>
    %95 = vector.shape_cast %94 : vector<2x16x16x128xf32> to vector<512x128xf32>
    %c4 = arith.constant 4 : index
    %c0_133 = arith.constant 0 : index
    %c0_134 = arith.constant 0 : index
    %96 = vector.load %arg4[%c4, %c0_133, %c0_134] : memref<9x128x128xf32, #tpu.memory_space<vmem>>, vector<1x128x128xf32>
    %97 = vector.shape_cast %96 : vector<1x128x128xf32> to vector<128x128xf32>
    %cst_135 = arith.constant dense<0.000000e+00> : vector<512x128xf32>
    %98 = tpu.matmul %95, %97, %cst_135 {dimension_numbers = #tpu.dot_dimension_numbers<[1], [0], [0], [1], [0, 0, 1, 1], [], []>} : vector<512x128xf32>, vector<128x128xf32>, vector<512x128xf32> -> vector<512x128xf32>
    %99 = arith.addf %93, %98 : vector<512x128xf32>
    %c0_136 = arith.constant 0 : index
    %c1_137 = arith.constant 1 : index
    %c2_138 = arith.constant 2 : index
    %c0_139 = arith.constant 0 : index
    %100 = vector.load %arg9[%c0_136, %c1_137, %c2_138, %c0_139] : memref<2x18x18x128xf32, #tpu.memory_space<vmem>>, vector<2x16x16x128xf32>
    %101 = vector.shape_cast %100 : vector<2x16x16x128xf32> to vector<512x128xf32>
    %c5 = arith.constant 5 : index
    %c0_140 = arith.constant 0 : index
    %c0_141 = arith.constant 0 : index
    %102 = vector.load %arg4[%c5, %c0_140, %c0_141] : memref<9x128x128xf32, #tpu.memory_space<vmem>>, vector<1x128x128xf32>
    %103 = vector.shape_cast %102 : vector<1x128x128xf32> to vector<128x128xf32>
    %cst_142 = arith.constant dense<0.000000e+00> : vector<512x128xf32>
    %104 = tpu.matmul %101, %103, %cst_142 {dimension_numbers = #tpu.dot_dimension_numbers<[1], [0], [0], [1], [0, 0, 1, 1], [], []>} : vector<512x128xf32>, vector<128x128xf32>, vector<512x128xf32> -> vector<512x128xf32>
    %105 = arith.addf %99, %104 : vector<512x128xf32>
    %c0_143 = arith.constant 0 : index
    %c2_144 = arith.constant 2 : index
    %c0_145 = arith.constant 0 : index
    %c0_146 = arith.constant 0 : index
    %106 = vector.load %arg9[%c0_143, %c2_144, %c0_145, %c0_146] : memref<2x18x18x128xf32, #tpu.memory_space<vmem>>, vector<2x16x16x128xf32>
    %107 = vector.shape_cast %106 : vector<2x16x16x128xf32> to vector<512x128xf32>
    %c6 = arith.constant 6 : index
    %c0_147 = arith.constant 0 : index
    %c0_148 = arith.constant 0 : index
    %108 = vector.load %arg4[%c6, %c0_147, %c0_148] : memref<9x128x128xf32, #tpu.memory_space<vmem>>, vector<1x128x128xf32>
    %109 = vector.shape_cast %108 : vector<1x128x128xf32> to vector<128x128xf32>
    %cst_149 = arith.constant dense<0.000000e+00> : vector<512x128xf32>
    %110 = tpu.matmul %107, %109, %cst_149 {dimension_numbers = #tpu.dot_dimension_numbers<[1], [0], [0], [1], [0, 0, 1, 1], [], []>} : vector<512x128xf32>, vector<128x128xf32>, vector<512x128xf32> -> vector<512x128xf32>
    %111 = arith.addf %105, %110 : vector<512x128xf32>
    %c0_150 = arith.constant 0 : index
    %c2_151 = arith.constant 2 : index
    %c1_152 = arith.constant 1 : index
    %c0_153 = arith.constant 0 : index
    %112 = vector.load %arg9[%c0_150, %c2_151, %c1_152, %c0_153] : memref<2x18x18x128xf32, #tpu.memory_space<vmem>>, vector<2x16x16x128xf32>
    %113 = vector.shape_cast %112 : vector<2x16x16x128xf32> to vector<512x128xf32>
    %c7 = arith.constant 7 : index
    %c0_154 = arith.constant 0 : index
    %c0_155 = arith.constant 0 : index
    %114 = vector.load %arg4[%c7, %c0_154, %c0_155] : memref<9x128x128xf32, #tpu.memory_space<vmem>>, vector<1x128x128xf32>
    %115 = vector.shape_cast %114 : vector<1x128x128xf32> to vector<128x128xf32>
    %cst_156 = arith.constant dense<0.000000e+00> : vector<512x128xf32>
    %116 = tpu.matmul %113, %115, %cst_156 {dimension_numbers = #tpu.dot_dimension_numbers<[1], [0], [0], [1], [0, 0, 1, 1], [], []>} : vector<512x128xf32>, vector<128x128xf32>, vector<512x128xf32> -> vector<512x128xf32>
    %117 = arith.addf %111, %116 : vector<512x128xf32>
    %c0_157 = arith.constant 0 : index
    %c2_158 = arith.constant 2 : index
    %c2_159 = arith.constant 2 : index
    %c0_160 = arith.constant 0 : index
    %118 = vector.load %arg9[%c0_157, %c2_158, %c2_159, %c0_160] : memref<2x18x18x128xf32, #tpu.memory_space<vmem>>, vector<2x16x16x128xf32>
    %119 = vector.shape_cast %118 : vector<2x16x16x128xf32> to vector<512x128xf32>
    %c8 = arith.constant 8 : index
    %c0_161 = arith.constant 0 : index
    %c0_162 = arith.constant 0 : index
    %120 = vector.load %arg4[%c8, %c0_161, %c0_162] : memref<9x128x128xf32, #tpu.memory_space<vmem>>, vector<1x128x128xf32>
    %121 = vector.shape_cast %120 : vector<1x128x128xf32> to vector<128x128xf32>
    %cst_163 = arith.constant dense<0.000000e+00> : vector<512x128xf32>
    %122 = tpu.matmul %119, %121, %cst_163 {dimension_numbers = #tpu.dot_dimension_numbers<[1], [0], [0], [1], [0, 0, 1, 1], [], []>} : vector<512x128xf32>, vector<128x128xf32>, vector<512x128xf32> -> vector<512x128xf32>
    %123 = arith.addf %117, %122 : vector<512x128xf32>
    %cst_164 = arith.constant dense<0.000000e+00> : vector<128xf32>
    %124 = vector.multi_reduction <add>, %123, %cst_164 [0] : vector<512x128xf32> to vector<128xf32>
    %125 = vector.shape_cast %124 : vector<128xf32> to vector<1x128xf32>
    %cst_165 = arith.constant 0.001953125 : f32
    %126 = vector.broadcast %cst_165 : f32 to vector<1x128xf32>
    %127 = arith.mulf %125, %126 : vector<1x128xf32>
    %128 = arith.mulf %123, %123 : vector<512x128xf32>
    %cst_166 = arith.constant dense<0.000000e+00> : vector<128xf32>
    %129 = vector.multi_reduction <add>, %128, %cst_166 [0] : vector<512x128xf32> to vector<128xf32>
    %130 = vector.shape_cast %129 : vector<128xf32> to vector<1x128xf32>
    %cst_167 = arith.constant 0.001953125 : f32
    %131 = vector.broadcast %cst_167 : f32 to vector<1x128xf32>
    %132 = arith.mulf %130, %131 : vector<1x128xf32>
    %133 = arith.mulf %127, %127 : vector<1x128xf32>
    %134 = arith.subf %132, %133 : vector<1x128xf32>
    %cst_168 = arith.constant 0.000000e+00 : f32
    %135 = vector.broadcast %cst_168 : f32 to vector<1x128xf32>
    %136 = arith.maximumf %134, %135 : vector<1x128xf32>
    %137 = vector.broadcast %127 : vector<1x128xf32> to vector<512x128xf32>
    %138 = arith.subf %123, %137 : vector<512x128xf32>
    %cst_169 = arith.constant 9.99999974E-6 : f32
    %139 = vector.broadcast %cst_169 : f32 to vector<1x128xf32>
    %140 = arith.addf %136, %139 : vector<1x128xf32>
    %141 = math.rsqrt %140 : vector<1x128xf32>
    %142 = vector.broadcast %141 : vector<1x128xf32> to vector<512x128xf32>
    %143 = arith.mulf %138, %142 : vector<512x128xf32>
    %c0_170 = arith.constant 0 : index
    %c0_171 = arith.constant 0 : index
    %144 = vector.load %arg5[%c0_170, %c0_171] : memref<1x128xf32, #tpu.memory_space<vmem>>, vector<1x128xf32>
    %145 = vector.broadcast %144 : vector<1x128xf32> to vector<512x128xf32>
    %146 = arith.mulf %143, %145 : vector<512x128xf32>
    %c0_172 = arith.constant 0 : index
    %c0_173 = arith.constant 0 : index
    %147 = vector.load %arg6[%c0_172, %c0_173] : memref<1x128xf32, #tpu.memory_space<vmem>>, vector<1x128xf32>
    %148 = vector.broadcast %147 : vector<1x128xf32> to vector<512x128xf32>
    %149 = arith.addf %146, %148 : vector<512x128xf32>
    %cst_174 = arith.constant 0.000000e+00 : f32
    %150 = vector.broadcast %cst_174 : f32 to vector<512x128xf32>
    %151 = arith.maximumf %149, %150 : vector<512x128xf32>
    %152 = vector.shape_cast %151 : vector<512x128xf32> to vector<2x16x16x128xf32>
    %c0_175 = arith.constant 0 : index
    %c0_176 = arith.constant 0 : index
    %c0_177 = arith.constant 0 : index
    %c0_178 = arith.constant 0 : index
    %153 = vector.load %arg7[%c0_175, %c0_176, %c0_177, %c0_178] : memref<2x16x16x128xf32, #tpu.memory_space<vmem>>, vector<2x16x16x128xf32>
    tpu.vector_store %arg7[%c0_175, %c0_176, %c0_177, %c0_178], %152 {strides = array<i32>} : memref<2x16x16x128xf32, #tpu.memory_space<vmem>>, vector<2x16x16x128xf32>,
    return
  }
}

</mosaic_0001>

<llo_original>
// kernel: double_conv.1
$region0: #{double_conv.1}
  #allocation0 [shape = 'u32[]', space=smem, size = 0x4, offset = 0x4, fixed_abs, tag = 'smem constant byte address 0x4 - core index']
  #allocation1 [shape = 'u32[144,128]{1,0:T(1,128)}', space=vmem, size = 0x12000, scoped, tag = 'internal scratch']
  #allocation2 [shape = 'f32[2,18,18,4]{3,2,1,0:T(8,128)}', space=vmem, size = 0x6c000, scoped, tag = 'scratch operand']
  #allocation3 [shape = 'f32[2,18,18,128]{3,2,1,0:T(8,128)}', space=vmem, size = 0x6c000, scoped, tag = 'scratch operand']
  %s0 = inlined_call_operand.vmem [shape: f32[2,16,16,4], index: 0, kind: input, shape index: {}]
  %s1 = inlined_call_operand.vmem [shape: f32[36,128], index: 1, kind: input, shape index: {}]
  %s2 = inlined_call_operand.vmem [shape: f32[1,128], index: 2, kind: input, shape index: {}]
  %s3 = inlined_call_operand.vmem [shape: f32[1,128], index: 3, kind: input, shape index: {}]
  %s4 = inlined_call_operand.vmem [shape: f32[9,128,128], index: 4, kind: input, shape index: {}]
  %s5 = inlined_call_operand.vmem [shape: f32[1,128], index: 5, kind: input, shape index: {}]
  %s6 = inlined_call_operand.vmem [shape: f32[1,128], index: 6, kind: input, shape index: {}]
  %s7 = inlined_call_operand.vmem [shape: f32[2,16,16,128], index: 7, kind: output, shape index: {}]
  %s8 = sld [smem:[#allocation0]]
  $region38: #{double_conv.1} parent=0
    _
  %s10 = ssub.s32 1, %s8
  %s11 = scalar_select 0, %s10, %s8
  // Predicated region
  $region2: #{double_conv.1} parent=0 // pred_check
    _
  $region3: #{double_conv.1} parent=0 // pred_check_branch
    %13 = sbr.rel (0) target = $region5
  $region4: #{double_conv.1} parent=0 // pred_region
    _
  $region5: #{double_conv.1} parent=0 // pred_fallthru
    _
  // Predicated region
  $region6: #{double_conv.1} parent=0 // pred_check
    _
  $region7: #{double_conv.1} parent=0 // pred_check_branch
    %15 = sbr.rel (0) target = $region9
  $region8: #{double_conv.1} parent=0 // pred_region
    _
  $region9: #{double_conv.1} parent=0 // pred_fallthru
    _
  // Predicated region
  $region10: #{double_conv.1} parent=0 // pred_check
    _
  $region11: #{double_conv.1} parent=0 // pred_check_branch
    %17 = sbr.rel (0) target = $region13
  $region12: #{double_conv.1} parent=0 // pred_region
    _
  $region13: #{double_conv.1} parent=0 // pred_fallthru
    _
  // Predicated region
  $region14: #{double_conv.1} parent=0 // pred_check
    _
  $region15: #{double_conv.1} parent=0 // pred_check_branch
    %19 = sbr.rel (0) target = $region17
  $region16: #{double_conv.1} parent=0 // pred_region
    _
  $region17: #{double_conv.1} parent=0 // pred_fallthru
    _
  // Predicated region
  $region18: #{double_conv.1} parent=0 // pred_check
    _
  $region19: #{double_conv.1} parent=0 // pred_check_branch
    %21 = sbr.rel (0) target = $region21
  $region20: #{double_conv.1} parent=0 // pred_region
    _
  $region21: #{double_conv.1} parent=0 // pred_fallthru
    _
  // Predicated region
  $region22: #{double_conv.1} parent=0 // pred_check
    _
  $region23: #{double_conv.1} parent=0 // pred_check_branch
    %23 = sbr.rel (0) target = $region25
  $region24: #{double_conv.1} parent=0 // pred_region
    _
  $region25: #{double_conv.1} parent=0 // pred_fallthru
    _
  // Predicated region
  $region26: #{double_conv.1} parent=0 // pred_check
    _
  $region27: #{double_conv.1} parent=0 // pred_check_branch
    %25 = sbr.rel (0) target = $region29
  $region28: #{double_conv.1} parent=0 // pred_region
    _
  $region29: #{double_conv.1} parent=0 // pred_fallthru
    _
  %vm26 = vcmask 31744
  %27 = vst.msk [vmem:[#allocation2] sm:$0xff] %vm26, 0.0
  %28 = vst.msk [vmem:[#allocation2 + $0x8] sm:$0xff] %vm26, 0.0
  %vm29 = vcmask 25600
  %30 = vst.msk [vmem:[#allocation2 + $0x10] sm:$0x3] %vm29, 0.0
  %31 = vst.msk [vmem:[#allocation2 + $0x1b0] sm:$0xff] %vm26, 0.0
  %32 = vst.msk [vmem:[#allocation2 + $0x1b8] sm:$0xff] %vm26, 0.0
  %33 = vst.msk [vmem:[#allocation2 + $0x1c0] sm:$0x3] %vm29, 0.0
  %s34 = scalar_lea.vmem [#allocation2], 408
  %35 = vst.msk [vmem:[%s34] sm:$0xff] %vm26, 0.0
  %36 = vst.msk [vmem:[%s34 + $0x8] sm:$0xff] %vm26, 0.0
  %37 = vst.msk [vmem:[%s34 + $0x10] sm:$0x3] %vm29, 0.0
  %38 = vst.msk [vmem:[%s34 + $0x1b0] sm:$0xff] %vm26, 0.0
  %39 = vst.msk [vmem:[%s34 + $0x1b8] sm:$0xff] %vm26, 0.0
  %40 = vst.msk [vmem:[%s34 + $0x1c0] sm:$0x3] %vm29, 0.0
  %vm41 = vcmask 24576
  %42 = vst.msk [vmem:[#allocation2] sm:$0x1] %vm41, 0.0
  %43 = vst.msk [vmem:[#allocation2 + $0x18] sm:$0x1] %vm41, 0.0
  %44 = vst.msk [vmem:[#allocation2 + $0x30] sm:$0x1] %vm41, 0.0
  %45 = vst.msk [vmem:[#allocation2 + $0x48] sm:$0x1] %vm41, 0.0
  %46 = vst.msk [vmem:[#allocation2 + $0x60] sm:$0x1] %vm41, 0.0
  %47 = vst.msk [vmem:[#allocation2 + $0x78] sm:$0x1] %vm41, 0.0
  %48 = vst.msk [vmem:[#allocation2 + $0x90] sm:$0x1] %vm41, 0.0
  %49 = vst.msk [vmem:[#allocation2 + $0xa8] sm:$0x1] %vm41, 0.0
  %50 = vst.msk [vmem:[#allocation2 + $0xc0] sm:$0x1] %vm41, 0.0
  %51 = vst.msk [vmem:[#allocation2 + $0xd8] sm:$0x1] %vm41, 0.0
  %52 = vst.msk [vmem:[#allocation2 + $0xf0] sm:$0x1] %vm41, 0.0
  %53 = vst.msk [vmem:[#allocation2 + $0x108] sm:$0x1] %vm41, 0.0
  %54 = vst.msk [vmem:[#allocation2 + $0x120] sm:$0x1] %vm41, 0.0
  %55 = vst.msk [vmem:[#allocation2 + $0x138] sm:$0x1] %vm41, 0.0
  %56 = vst.msk [vmem:[#allocation2 + $0x150] sm:$0x1] %vm41, 0.0
  %57 = vst.msk [vmem:[#allocation2 + $0x168] sm:$0x1] %vm41, 0.0
  %58 = vst.msk [vmem:[#allocation2 + $0x180] sm:$0x1] %vm41, 0.0
  %59 = vst.msk [vmem:[#allocation2 + $0x198] sm:$0x1] %vm41, 0.0
  %60 = vst.msk [vmem:[#allocation2 + $0x1b0] sm:$0x1] %vm41, 0.0
  %61 = vst.msk [vmem:[#allocation2 + $0x1c8] sm:$0x1] %vm41, 0.0
  %62 = vst.msk [vmem:[#allocation2 + $0x1e0] sm:$0x1] %vm41, 0.0
  %63 = vst.msk [vmem:[#allocation2 + $0x1f8] sm:$0x1] %vm41, 0.0
  %64 = vst.msk [vmem:[#allocation2 + $0x210] sm:$0x1] %vm41, 0.0
  %65 = vst.msk [vmem:[#allocation2 + $0x228] sm:$0x1] %vm41, 0.0
  %66 = vst.msk [vmem:[#allocation2 + $0x240] sm:$0x1] %vm41, 0.0
  %67 = vst.msk [vmem:[#allocation2 + $0x258] sm:$0x1] %vm41, 0.0
  %68 = vst.msk [vmem:[#allocation2 + $0x270] sm:$0x1] %vm41, 0.0
  %69 = vst.msk [vmem:[#allocation2 + $0x288] sm:$0x1] %vm41, 0.0
  %70 = vst.msk [vmem:[#allocation2 + $0x2a0] sm:$0x1] %vm41, 0.0
  %71 = vst.msk [vmem:[#allocation2 + $0x2b8] sm:$0x1] %vm41, 0.0
  %72 = vst.msk [vmem:[#allocation2 + $0x2d0] sm:$0x1] %vm41, 0.0
  %73 = vst.msk [vmem:[#allocation2 + $0x2e8] sm:$0x1] %vm41, 0.0
  %74 = vst.msk [vmem:[#allocation2 + $0x300] sm:$0x1] %vm41, 0.0
  %75 = vst.msk [vmem:[#allocation2 + $0x318] sm:$0x1] %vm41, 0.0
  %76 = vst.msk [vmem:[#allocation2 + $0x330] sm:$0x1] %vm41, 0.0
  %77 = vst.msk [vmem:[#allocation2 + $0x348] sm:$0x1] %vm41, 0.0
  %78 = vst.msk [vmem:[#allocation2 + $0x11] sm:$0x1] %vm41, 0.0
  %79 = vst.msk [vmem:[#allocation2 + $0x29] sm:$0x1] %vm41, 0.0
  %80 = vst.msk [vmem:[#allocation2 + $0x41] sm:$0x1] %vm41, 0.0
  %81 = vst.msk [vmem:[#allocation2 + $0x59] sm:$0x1] %vm41, 0.0
  %82 = vst.msk [vmem:[#allocation2 + $0x71] sm:$0x1] %vm41, 0.0
  %83 = vst.msk [vmem:[#allocation2 + $0x89] sm:$0x1] %vm41, 0.0
  %84 = vst.msk [vmem:[#allocation2 + $0xa1] sm:$0x1] %vm41, 0.0
  %85 = vst.msk [vmem:[#allocation2 + $0xb9] sm:$0x1] %vm41, 0.0
  %86 = vst.msk [vmem:[#allocation2 + $0xd1] sm:$0x1] %vm41, 0.0
  %87 = vst.msk [vmem:[#allocation2 + $0xe9] sm:$0x1] %vm41, 0.0
  %88 = vst.msk [vmem:[#allocation2 + $0x101] sm:$0x1] %vm41, 0.0
  %89 = vst.msk [vmem:[#allocation2 + $0x119] sm:$0x1] %vm41, 0.0
  %90 = vst.msk [vmem:[#allocation2 + $0x131] sm:$0x1] %vm41, 0.0
  %91 = vst.msk [vmem:[#allocation2 + $0x149] sm:$0x1] %vm41, 0.0
  %92 = vst.msk [vmem:[#allocation2 + $0x161] sm:$0x1] %vm41, 0.0
  %93 = vst.msk [vmem:[#allocation2 + $0x179] sm:$0x1] %vm41, 0.0
  %94 = vst.msk [vmem:[#allocation2 + $0x191] sm:$0x1] %vm41, 0.0
  %95 = vst.msk [vmem:[#allocation2 + $0x1a9] sm:$0x1] %vm41, 0.0
  %96 = vst.msk [vmem:[#allocation2 + $0x1c1] sm:$0x1] %vm41, 0.0
  %97 = vst.msk [vmem:[#allocation2 + $0x1d9] sm:$0x1] %vm41, 0.0
  %98 = vst.msk [vmem:[#allocation2 + $0x1f1] sm:$0x1] %vm41, 0.0
  %99 = vst.msk [vmem:[#allocation2 + $0x209] sm:$0x1] %vm41, 0.0
  %100 = vst.msk [vmem:[#allocation2 + $0x221] sm:$0x1] %vm41, 0.0
  %101 = vst.msk [vmem:[#allocation2 + $0x239] sm:$0x1] %vm41, 0.0
  %102 = vst.msk [vmem:[#allocation2 + $0x251] sm:$0x1] %vm41, 0.0
  %103 = vst.msk [vmem:[#allocation2 + $0x269] sm:$0x1] %vm41, 0.0
  %104 = vst.msk [vmem:[#allocation2 + $0x281] sm:$0x1] %vm41, 0.0
  %105 = vst.msk [vmem:[#allocation2 + $0x299] sm:$0x1] %vm41, 0.0
  %106 = vst.msk [vmem:[#allocation2 + $0x2b1] sm:$0x1] %vm41, 0.0
  %107 = vst.msk [vmem:[#allocation2 + $0x2c9] sm:$0x1] %vm41, 0.0
  %108 = vst.msk [vmem:[#allocation2 + $0x2e1] sm:$0x1] %vm41, 0.0
  %109 = vst.msk [vmem:[#allocation2 + $0x2f9] sm:$0x1] %vm41, 0.0
  %110 = vst.msk [vmem:[#allocation2 + $0x311] sm:$0x1] %vm41, 0.0
  %111 = vst.msk [vmem:[#allocation2 + $0x329] sm:$0x1] %vm41, 0.0
  %112 = vst.msk [vmem:[#allocation2 + $0x341] sm:$0x1] %vm41, 0.0
  %113 = vst.msk [vmem:[#allocation2 + $0x359] sm:$0x1] %vm41, 0.0
  %v114 = vld [vmem:[%s0] sm:$0xff]
  %v115 = vld [vmem:[%s0 + $0x8] sm:$0xff]
  %v116 = vld [vmem:[%s0 + $0x10] sm:$0xff]
  %v117 = vld [vmem:[%s0 + $0x18] sm:$0xff]
  %v118 = vld [vmem:[%s0 + $0x20] sm:$0xff]
  %v119 = vld [vmem:[%s0 + $0x28] sm:$0xff]
  %v120 = vld [vmem:[%s0 + $0x30] sm:$0xff]
  %v121 = vld [vmem:[%s0 + $0x38] sm:$0xff]
  %v122 = vld [vmem:[%s0 + $0x40] sm:$0xff]
  %v123 = vld [vmem:[%s0 + $0x48] sm:$0xff]
  %v124 = vld [vmem:[%s0 + $0x50] sm:$0xff]
  %v125 = vld [vmem:[%s0 + $0x58] sm:$0xff]
  %v126 = vld [vmem:[%s0 + $0x60] sm:$0xff]
  %v127 = vld [vmem:[%s0 + $0x68] sm:$0xff]
  %v128 = vld [vmem:[%s0 + $0x70] sm:$0xff]
  %v129 = vld [vmem:[%s0 + $0x78] sm:$0xff]
  %v130 = vld [vmem:[%s0 + $0x80] sm:$0xff]
  %v131 = vld [vmem:[%s0 + $0x88] sm:$0xff]
  %v132 = vld [vmem:[%s0 + $0x90] sm:$0xff]
  %v133 = vld [vmem:[%s0 + $0x98] sm:$0xff]
  %v134 = vld [vmem:[%s0 + $0xa0] sm:$0xff]
  %v135 = vld [vmem:[%s0 + $0xa8] sm:$0xff]
  %v136 = vld [vmem:[%s0 + $0xb0] sm:$0xff]
  %v137 = vld [vmem:[%s0 + $0xb8] sm:$0xff]
  %v138 = vld [vmem:[%s0 + $0xc0] sm:$0xff]
  %v139 = vld [vmem:[%s0 + $0xc8] sm:$0xff]
  %v140 = vld [vmem:[%s0 + $0xd0] sm:$0xff]
  %v141 = vld [vmem:[%s0 + $0xd8] sm:$0xff]
  %v142 = vld [vmem:[%s0 + $0xe0] sm:$0xff]
  %v143 = vld [vmem:[%s0 + $0xe8] sm:$0xff]
  %v144 = vld [vmem:[%s0 + $0xf0] sm:$0xff]
  %v145 = vld [vmem:[%s0 + $0xf8] sm:$0xff]
  %v146 = vld [vmem:[%s0 + $0x100] sm:$0xff]
  %v147 = vld [vmem:[%s0 + $0x108] sm:$0xff]
  %v148 = vld [vmem:[%s0 + $0x110] sm:$0xff]
  %v149 = vld [vmem:[%s0 + $0x118] sm:$0xff]
  %v150 = vld [vmem:[%s0 + $0x120] sm:$0xff]
  %v151 = vld [vmem:[%s0 + $0x128] sm:$0xff]
  %v152 = vld [vmem:[%s0 + $0x130] sm:$0xff]
  %v153 = vld [vmem:[%s0 + $0x138] sm:$0xff]
  %v154 = vld [vmem:[%s0 + $0x140] sm:$0xff]
  %v155 = vld [vmem:[%s0 + $0x148] sm:$0xff]
  %v156 = vld [vmem:[%s0 + $0x150] sm:$0xff]
  %v157 = vld [vmem:[%s0 + $0x158] sm:$0xff]
  %v158 = vld [vmem:[%s0 + $0x160] sm:$0xff]
  %v159 = vld [vmem:[%s0 + $0x168] sm:$0xff]
  %v160 = vld [vmem:[%s0 + $0x170] sm:$0xff]
  %v161 = vld [vmem:[%s0 + $0x178] sm:$0xff]
  %v162 = vld [vmem:[%s0 + $0x180] sm:$0xff]
  %v163 = vld [vmem:[%s0 + $0x188] sm:$0xff]
  %v164 = vld [vmem:[%s0 + $0x190] sm:$0xff]
  %v165 = vld [vmem:[%s0 + $0x198] sm:$0xff]
  %v166 = vld [vmem:[%s0 + $0x1a0] sm:$0xff]
  %v167 = vld [vmem:[%s0 + $0x1a8] sm:$0xff]
  %v168 = vld [vmem:[%s0 + $0x1b0] sm:$0xff]
  %v169 = vld [vmem:[%s0 + $0x1b8] sm:$0xff]
  %v170 = vld [vmem:[%s0 + $0x1c0] sm:$0xff]
  %v171 = vld [vmem:[%s0 + $0x1c8] sm:$0xff]
  %v172 = vld [vmem:[%s0 + $0x1d0] sm:$0xff]
  %v173 = vld [vmem:[%s0 + $0x1d8] sm:$0xff]
  %v174 = vld [vmem:[%s0 + $0x1e0] sm:$0xff]
  %v175 = vld [vmem:[%s0 + $0x1e8] sm:$0xff]
  %v176 = vld [vmem:[%s0 + $0x1f0] sm:$0xff]
  %v177 = vld [vmem:[%s0 + $0x1f8] sm:$0xff]
  %s178 = scalar_lea.vmem [#allocation2], 24
  %179 = vst.msk [vmem:[%s178 + $0x1] sm:$0xff] %vm26, %v114
  %180 = vst.msk [vmem:[%s178 + $0x9] sm:$0xff] %vm26, %v115
  %181 = vst.msk [vmem:[%s178 + $0x19] sm:$0xff] %vm26, %v116
  %182 = vst.msk [vmem:[%s178 + $0x21] sm:$0xff] %vm26, %v117
  %183 = vst.msk [vmem:[%s178 + $0x31] sm:$0xff] %vm26, %v118
  %184 = vst.msk [vmem:[%s178 + $0x39] sm:$0xff] %vm26, %v119
  %185 = vst.msk [vmem:[%s178 + $0x49] sm:$0xff] %vm26, %v120
  %186 = vst.msk [vmem:[%s178 + $0x51] sm:$0xff] %vm26, %v121
  %187 = vst.msk [vmem:[%s178 + $0x61] sm:$0xff] %vm26, %v122
  %188 = vst.msk [vmem:[%s178 + $0x69] sm:$0xff] %vm26, %v123
  %189 = vst.msk [vmem:[%s178 + $0x79] sm:$0xff] %vm26, %v124
  %190 = vst.msk [vmem:[%s178 + $0x81] sm:$0xff] %vm26, %v125
  %191 = vst.msk [vmem:[%s178 + $0x91] sm:$0xff] %vm26, %v126
  %192 = vst.msk [vmem:[%s178 + $0x99] sm:$0xff] %vm26, %v127
  %193 = vst.msk [vmem:[%s178 + $0xa9] sm:$0xff] %vm26, %v128
  %194 = vst.msk [vmem:[%s178 + $0xb1] sm:$0xff] %vm26, %v129
  %195 = vst.msk [vmem:[%s178 + $0xc1] sm:$0xff] %vm26, %v130
  %196 = vst.msk [vmem:[%s178 + $0xc9] sm:$0xff] %vm26, %v131
  %197 = vst.msk [vmem:[%s178 + $0xd9] sm:$0xff] %vm26, %v132
  %198 = vst.msk [vmem:[%s178 + $0xe1] sm:$0xff] %vm26, %v133
  %199 = vst.msk [vmem:[%s178 + $0xf1] sm:$0xff] %vm26, %v134
  %200 = vst.msk [vmem:[%s178 + $0xf9] sm:$0xff] %vm26, %v135
  %201 = vst.msk [vmem:[%s178 + $0x109] sm:$0xff] %vm26, %v136
  %202 = vst.msk [vmem:[%s178 + $0x111] sm:$0xff] %vm26, %v137
  %203 = vst.msk [vmem:[%s178 + $0x121] sm:$0xff] %vm26, %v138
  %204 = vst.msk [vmem:[%s178 + $0x129] sm:$0xff] %vm26, %v139
  %205 = vst.msk [vmem:[%s178 + $0x139] sm:$0xff] %vm26, %v140
  %206 = vst.msk [vmem:[%s178 + $0x141] sm:$0xff] %vm26, %v141
  %207 = vst.msk [vmem:[%s178 + $0x151] sm:$0xff] %vm26, %v142
  %208 = vst.msk [vmem:[%s178 + $0x159] sm:$0xff] %vm26, %v143
  %209 = vst.msk [vmem:[%s178 + $0x169] sm:$0xff] %vm26, %v144
  %210 = vst.msk [vmem:[%s178 + $0x171] sm:$0xff] %vm26, %v145
  %211 = vst.msk [vmem:[%s178 + $0x1b1] sm:$0xff] %vm26, %v146
  %212 = vst.msk [vmem:[%s178 + $0x1b9] sm:$0xff] %vm26, %v147
  %213 = vst.msk [vmem:[%s178 + $0x1c9] sm:$0xff] %vm26, %v148
  %214 = vst.msk [vmem:[%s178 + $0x1d1] sm:$0xff] %vm26, %v149
  %215 = vst.msk [vmem:[%s178 + $0x1e1] sm:$0xff] %vm26, %v150
  %216 = vst.msk [vmem:[%s178 + $0x1e9] sm:$0xff] %vm26, %v151
  %217 = vst.msk [vmem:[%s178 + $0x1f9] sm:$0xff] %vm26, %v152
  %218 = vst.msk [vmem:[%s178 + $0x201] sm:$0xff] %vm26, %v153
  %219 = vst.msk [vmem:[%s178 + $0x211] sm:$0xff] %vm26, %v154
  %220 = vst.msk [vmem:[%s178 + $0x219] sm:$0xff] %vm26, %v155
  %221 = vst.msk [vmem:[%s178 + $0x229] sm:$0xff] %vm26, %v156
  %222 = vst.msk [vmem:[%s178 + $0x231] sm:$0xff] %vm26, %v157
  %223 = vst.msk [vmem:[%s178 + $0x241] sm:$0xff] %vm26, %v158
  %224 = vst.msk [vmem:[%s178 + $0x249] sm:$0xff] %vm26, %v159
  %225 = vst.msk [vmem:[%s178 + $0x259] sm:$0xff] %vm26, %v160
  %226 = vst.msk [vmem:[%s178 + $0x261] sm:$0xff] %vm26, %v161
  %227 = vst.msk [vmem:[%s178 + $0x271] sm:$0xff] %vm26, %v162
  %228 = vst.msk [vmem:[%s178 + $0x279] sm:$0xff] %vm26, %v163
  %229 = vst.msk [vmem:[%s178 + $0x289] sm:$0xff] %vm26, %v164
  %230 = vst.msk [vmem:[%s178 + $0x291] sm:$0xff] %vm26, %v165
  %231 = vst.msk [vmem:[%s178 + $0x2a1] sm:$0xff] %vm26, %v166
  %232 = vst.msk [vmem:[%s178 + $0x2a9] sm:$0xff] %vm26, %v167
  %233 = vst.msk [vmem:[%s178 + $0x2b9] sm:$0xff] %vm26, %v168
  %234 = vst.msk [vmem:[%s178 + $0x2c1] sm:$0xff] %vm26, %v169
  %235 = vst.msk [vmem:[%s178 + $0x2d1] sm:$0xff] %vm26, %v170
  %236 = vst.msk [vmem:[%s178 + $0x2d9] sm:$0xff] %vm26, %v171
  %237 = vst.msk [vmem:[%s178 + $0x2e9] sm:$0xff] %vm26, %v172
  %238 = vst.msk [vmem:[%s178 + $0x2f1] sm:$0xff] %vm26, %v173
  %239 = vst.msk [vmem:[%s178 + $0x301] sm:$0xff] %vm26, %v174
  %240 = vst.msk [vmem:[%s178 + $0x309] sm:$0xff] %vm26, %v175
  %241 = vst.msk [vmem:[%s178 + $0x319] sm:$0xff] %vm26, %v176
  %242 = vst.msk [vmem:[%s178 + $0x321] sm:$0xff] %vm26, %v177
  %v243 = vld [vmem:[#allocation2] sm:$0xff]
  %v244 = vld [vmem:[#allocation2 + $0x8] sm:$0xff]
  %v245 = vld [vmem:[#allocation2 + $0x18] sm:$0xff]
  %v246 = vld [vmem:[#allocation2 + $0x20] sm:$0xff]
  %v247 = vld [vmem:[#allocation2 + $0x30] sm:$0xff]
  %v248 = vld [vmem:[#allocation2 + $0x38] sm:$0xff]
  %v249 = vld [vmem:[#allocation2 + $0x48] sm:$0xff]
  %v250 = vld [vmem:[#allocation2 + $0x50] sm:$0xff]
  %v251 = vld [vmem:[#allocation2 + $0x60] sm:$0xff]
  %v252 = vld [vmem:[#allocation2 + $0x68] sm:$0xff]
  %v253 = vld [vmem:[#allocation2 + $0x78] sm:$0xff]
  %v254 = vld [vmem:[#allocation2 + $0x80] sm:$0xff]
  %v255 = vld [vmem:[#allocation2 + $0x90] sm:$0xff]
  %v256 = vld [vmem:[#allocation2 + $0x98] sm:$0xff]
  %v257 = vld [vmem:[#allocation2 + $0xa8] sm:$0xff]
  %v258 = vld [vmem:[#allocation2 + $0xb0] sm:$0xff]
  %v259 = vld [vmem:[#allocation2 + $0xc0] sm:$0xff]
  %v260 = vld [vmem:[#allocation2 + $0xc8] sm:$0xff]
  %v261 = vld [vmem:[#allocation2 + $0xd8] sm:$0xff]
  %v262 = vld [vmem:[#allocation2 + $0xe0] sm:$0xff]
  %v263 = vld [vmem:[#allocation2 + $0xf0] sm:$0xff]
  %v264 = vld [vmem:[#allocation2 + $0xf8] sm:$0xff]
  %v265 = vld [vmem:[#allocation2 + $0x108] sm:$0xff]
  %v266 = vld [vmem:[#allocation2 + $0x110] sm:$0xff]
  %v267 = vld [vmem:[#allocation2 + $0x120] sm:$0xff]
  %v268 = vld [vmem:[#allocation2 + $0x128] sm:$0xff]
  %v269 = vld [vmem:[#allocation2 + $0x138] sm:$0xff]
  %v270 = vld [vmem:[#allocation2 + $0x140] sm:$0xff]
  %v271 = vld [vmem:[#allocation2 + $0x150] sm:$0xff]
  %v272 = vld [vmem:[#allocation2 + $0x158] sm:$0xff]
  %v273 = vld [vmem:[#allocation2 + $0x168] sm:$0xff]
  %v274 = vld [vmem:[#allocation2 + $0x170] sm:$0xff]
  %v275 = vld [vmem:[#allocation2 + $0x1b0] sm:$0xff]
  %v276 = vld [vmem:[#allocation2 + $0x1b8] sm:$0xff]
  %v277 = vld [vmem:[#allocation2 + $0x1c8] sm:$0xff]
  %v278 = vld [vmem:[#allocation2 + $0x1d0] sm:$0xff]
  %v279 = vld [vmem:[#allocation2 + $0x1e0] sm:$0xff]
  %v280 = vld [vmem:[#allocation2 + $0x1e8] sm:$0xff]
  %v281 = vld [vmem:[#allocation2 + $0x1f8] sm:$0xff]
  %v282 = vld [vmem:[#allocation2 + $0x200] sm:$0xff]
  %v283 = vld [vmem:[#allocation2 + $0x210] sm:$0xff]
  %v284 = vld [vmem:[#allocation2 + $0x218] sm:$0xff]
  %v285 = vld [vmem:[#allocation2 + $0x228] sm:$0xff]
  %v286 = vld [vmem:[#allocation2 + $0x230] sm:$0xff]
  %v287 = vld [vmem:[#allocation2 + $0x240] sm:$0xff]
  %v288 = vld [vmem:[#allocation2 + $0x248] sm:$0xff]
  %v289 = vld [vmem:[#allocation2 + $0x258] sm:$0xff]
  %v290 = vld [vmem:[#allocation2 + $0x260] sm:$0xff]
  %v291 = vld [vmem:[#allocation2 + $0x270] sm:$0xff]
  %v292 = vld [vmem:[#allocation2 + $0x278] sm:$0xff]
  %v293 = vld [vmem:[#allocation2 + $0x288] sm:$0xff]
  %v294 = vld [vmem:[#allocation2 + $0x290] sm:$0xff]
  %v295 = vld [vmem:[#allocation2 + $0x2a0] sm:$0xff]
  %v296 = vld [vmem:[#allocation2 + $0x2a8] sm:$0xff]
  %v297 = vld [vmem:[#allocation2 + $0x2b8] sm:$0xff]
  %v298 = vld [vmem:[#allocation2 + $0x2c0] sm:$0xff]
  %v299 = vld [vmem:[#allocation2 + $0x2d0] sm:$0xff]
  %v300 = vld [vmem:[#allocation2 + $0x2d8] sm:$0xff]
  %v301 = vld [vmem:[#allocation2 + $0x2e8] sm:$0xff]
  %v302 = vld [vmem:[#allocation2 + $0x2f0] sm:$0xff]
  %v303 = vld [vmem:[#allocation2 + $0x300] sm:$0xff]
  %v304 = vld [vmem:[#allocation2 + $0x308] sm:$0xff]
  %v305 = vld [vmem:[#allocation2 + $0x318] sm:$0xff]
  %v306 = vld [vmem:[#allocation2 + $0x320] sm:$0xff]
  %v307 = vld [vmem:[#allocation2 + $0x1] sm:$0xff]
  %v308 = vld [vmem:[#allocation2 + $0x9] sm:$0xff]
  %v309 = vld [vmem:[#allocation2 + $0x19] sm:$0xff]
  %v310 = vld [vmem:[#allocation2 + $0x21] sm:$0xff]
  %v311 = vld [vmem:[#allocation2 + $0x31] sm:$0xff]
  %v312 = vld [vmem:[#allocation2 + $0x39] sm:$0xff]
  %v313 = vld [vmem:[#allocation2 + $0x49] sm:$0xff]
  %v314 = vld [vmem:[#allocation2 + $0x51] sm:$0xff]
  %v315 = vld [vmem:[#allocation2 + $0x61] sm:$0xff]
  %v316 = vld [vmem:[#allocation2 + $0x69] sm:$0xff]
  %v317 = vld [vmem:[#allocation2 + $0x79] sm:$0xff]
  %v318 = vld [vmem:[#allocation2 + $0x81] sm:$0xff]
  %v319 = vld [vmem:[#allocation2 + $0x91] sm:$0xff]
  %v320 = vld [vmem:[#allocation2 + $0x99] sm:$0xff]
  %v321 = vld [vmem:[#allocation2 + $0xa9] sm:$0xff]
  %v322 = vld [vmem:[#allocation2 + $0xb1] sm:$0xff]
  %v323 = vld [vmem:[#allocation2 + $0xc1] sm:$0xff]
  %v324 = vld [vmem:[#allocation2 + $0xc9] sm:$0xff]
  %v325 = vld [vmem:[#allocation2 + $0xd9] sm:$0xff]
  %v326 = vld [vmem:[#allocation2 + $0xe1] sm:$0xff]
  %v327 = vld [vmem:[#allocation2 + $0xf1] sm:$0xff]
  %v328 = vld [vmem:[#allocation2 + $0xf9] sm:$0xff]
  %v329 = vld [vmem:[#allocation2 + $0x109] sm:$0xff]
  %v330 = vld [vmem:[#allocation2 + $0x111] sm:$0xff]
  %v331 = vld [vmem:[#allocation2 + $0x121] sm:$0xff]
  %v332 = vld [vmem:[#allocation2 + $0x129] sm:$0xff]
  %v333 = vld [vmem:[#allocation2 + $0x139] sm:$0xff]
  %v334 = vld [vmem:[#allocation2 + $0x141] sm:$0xff]
  %v335 = vld [vmem:[#allocation2 + $0x151] sm:$0xff]
  %v336 = vld [vmem:[#allocation2 + $0x159] sm:$0xff]
  %v337 = vld [vmem:[#allocation2 + $0x169] sm:$0xff]
  %v338 = vld [vmem:[#allocation2 + $0x171] sm:$0xff]
  %v339 = vld [vmem:[#allocation2 + $0x1b1] sm:$0xff]
  %v340 = vld [vmem:[#allocation2 + $0x1b9] sm:$0xff]
  %v341 = vld [vmem:[#allocation2 + $0x1c9] sm:$0xff]
  %v342 = vld [vmem:[#allocation2 + $0x1d1] sm:$0xff]
  %v343 = vld [vmem:[#allocation2 + $0x1e1] sm:$0xff]
  %v344 = vld [vmem:[#allocation2 + $0x1e9] sm:$0xff]
  %v345 = vld [vmem:[#allocation2 + $0x1f9] sm:$0xff]
  %v346 = vld [vmem:[#allocation2 + $0x201] sm:$0xff]
  %v347 = vld [vmem:[#allocation2 + $0x211] sm:$0xff]
  %v348 = vld [vmem:[#allocation2 + $0x219] sm:$0xff]
  %v349 = vld [vmem:[#allocation2 + $0x229] sm:$0xff]
  %v350 = vld [vmem:[#allocation2 + $0x231] sm:$0xff]
  %v351 = vld [vmem:[#allocation2 + $0x241] sm:$0xff]
  %v352 = vld [vmem:[#allocation2 + $0x249] sm:$0xff]
  %v353 = vld [vmem:[#allocation2 + $0x259] sm:$0xff]
  %v354 = vld [vmem:[#allocation2 + $0x261] sm:$0xff]
  %v355 = vld [vmem:[#allocation2 + $0x271] sm:$0xff]
  %v356 = vld [vmem:[#allocation2 + $0x279] sm:$0xff]
  %v357 = vld [vmem:[#allocation2 + $0x289] sm:$0xff]
  %v358 = vld [vmem:[#allocation2 + $0x291] sm:$0xff]
  %v359 = vld [vmem:[#allocation2 + $0x2a1] sm:$0xff]
  %v360 = vld [vmem:[#allocation2 + $0x2a9] sm:$0xff]
  %v361 = vld [vmem:[#allocation2 + $0x2b9] sm:$0xff]
  %v362 = vld [vmem:[#allocation2 + $0x2c1] sm:$0xff]
  %v363 = vld [vmem:[#allocation2 + $0x2d1] sm:$0xff]
  %v364 = vld [vmem:[#allocation2 + $0x2d9] sm:$0xff]
  %v365 = vld [vmem:[#allocation2 + $0x2e9] sm:$0xff]
  %v366 = vld [vmem:[#allocation2 + $0x2f1] sm:$0xff]
  %v367 = vld [vmem:[#allocation2 + $0x301] sm:$0xff]
  %v368 = vld [vmem:[#allocation2 + $0x309] sm:$0xff]
  %v369 = vld [vmem:[#allocation2 + $0x319] sm:$0xff]
  %v370 = vld [vmem:[#allocation2 + $0x321] sm:$0xff]
  %v371 = vld [vmem:[#allocation2 + $0x2] sm:$0xff]
  %v372 = vld [vmem:[#allocation2 + $0xa] sm:$0xff]
  %v373 = vld [vmem:[#allocation2 + $0x1a] sm:$0xff]
  %v374 = vld [vmem:[#allocation2 + $0x22] sm:$0xff]
  %v375 = vld [vmem:[#allocation2 + $0x32] sm:$0xff]
  %v376 = vld [vmem:[#allocation2 + $0x3a] sm:$0xff]
  %v377 = vld [vmem:[#allocation2 + $0x4a] sm:$0xff]
  %v378 = vld [vmem:[#allocation2 + $0x52] sm:$0xff]
  %v379 = vld [vmem:[#allocation2 + $0x62] sm:$0xff]
  %v380 = vld [vmem:[#allocation2 + $0x6a] sm:$0xff]
  %v381 = vld [vmem:[#allocation2 + $0x7a] sm:$0xff]
  %v382 = vld [vmem:[#allocation2 + $0x82] sm:$0xff]
  %v383 = vld [vmem:[#allocation2 + $0x92] sm:$0xff]
  %v384 = vld [vmem:[#allocation2 + $0x9a] sm:$0xff]
  %v385 = vld [vmem:[#allocation2 + $0xaa] sm:$0xff]
  %v386 = vld [vmem:[#allocation2 + $0xb2] sm:$0xff]
  %v387 = vld [vmem:[#allocation2 + $0xc2] sm:$0xff]
  %v388 = vld [vmem:[#allocation2 + $0xca] sm:$0xff]
  %v389 = vld [vmem:[#allocation2 + $0xda] sm:$0xff]
  %v390 = vld [vmem:[#allocation2 + $0xe2] sm:$0xff]
  %v391 = vld [vmem:[#allocation2 + $0xf2] sm:$0xff]
  %v392 = vld [vmem:[#allocation2 + $0xfa] sm:$0xff]
  %v393 = vld [vmem:[#allocation2 + $0x10a] sm:$0xff]
  %v394 = vld [vmem:[#allocation2 + $0x112] sm:$0xff]
  %v395 = vld [vmem:[#allocation2 + $0x122] sm:$0xff]
  %v396 = vld [vmem:[#allocation2 + $0x12a] sm:$0xff]
  %v397 = vld [vmem:[#allocation2 + $0x13a] sm:$0xff]
  %v398 = vld [vmem:[#allocation2 + $0x142] sm:$0xff]
  %v399 = vld [vmem:[#allocation2 + $0x152] sm:$0xff]
  %v400 = vld [vmem:[#allocation2 + $0x15a] sm:$0xff]
  %v401 = vld [vmem:[#allocation2 + $0x16a] sm:$0xff]
  %v402 = vld [vmem:[#allocation2 + $0x172] sm:$0xff]
  %v403 = vld [vmem:[#allocation2 + $0x1b2] sm:$0xff]
  %v404 = vld [vmem:[#allocation2 + $0x1ba] sm:$0xff]
  %v405 = vld [vmem:[#allocation2 + $0x1ca] sm:$0xff]
  %v406 = vld [vmem:[#allocation2 + $0x1d2] sm:$0xff]
  %v407 = vld [vmem:[#allocation2 + $0x1e2] sm:$0xff]
  %v408 = vld [vmem:[#allocation2 + $0x1ea] sm:$0xff]
  %v409 = vld [vmem:[#allocation2 + $0x1fa] sm:$0xff]
  %v410 = vld [vmem:[#allocation2 + $0x202] sm:$0xff]
  %v411 = vld [vmem:[#allocation2 + $0x212] sm:$0xff]
  %v412 = vld [vmem:[#allocation2 + $0x21a] sm:$0xff]
  %v413 = vld [vmem:[#allocation2 + $0x22a] sm:$0xff]
  %v414 = vld [vmem:[#allocation2 + $0x232] sm:$0xff]
  %v415 = vld [vmem:[#allocation2 + $0x242] sm:$0xff]
  %v416 = vld [vmem:[#allocation2 + $0x24a] sm:$0xff]
  %v417 = vld [vmem:[#allocation2 + $0x25a] sm:$0xff]
  %v418 = vld [vmem:[#allocation2 + $0x262] sm:$0xff]
  %v419 = vld [vmem:[#allocation2 + $0x272] sm:$0xff]
  %v420 = vld [vmem:[#allocation2 + $0x27a] sm:$0xff]
  %v421 = vld [vmem:[#allocation2 + $0x28a] sm:$0xff]
  %v422 = vld [vmem:[#allocation2 + $0x292] sm:$0xff]
  %v423 = vld [vmem:[#allocation2 + $0x2a2] sm:$0xff]
  %v424 = vld [vmem:[#allocation2 + $0x2aa] sm:$0xff]
  %v425 = vld [vmem:[#allocation2 + $0x2ba] sm:$0xff]
  %v426 = vld [vmem:[#allocation2 + $0x2c2] sm:$0xff]
  %v427 = vld [vmem:[#allocation2 + $0x2d2] sm:$0xff]
  %v428 = vld [vmem:[#allocation2 + $0x2da] sm:$0xff]
  %v429 = vld [vmem:[#allocation2 + $0x2ea] sm:$0xff]
  %v430 = vld [vmem:[#allocation2 + $0x2f2] sm:$0xff]
  %v431 = vld [vmem:[#allocation2 + $0x302] sm:$0xff]
  %v432 = vld [vmem:[#allocation2 + $0x30a] sm:$0xff]
  %v433 = vld [vmem:[#allocation2 + $0x31a] sm:$0xff]
  %v434 = vld [vmem:[#allocation2 + $0x322] sm:$0xff]
  %v435 = vld [vmem:[%s178] sm:$0xff]
  %v436 = vld [vmem:[%s178 + $0x8] sm:$0xff]
  %v437 = vld [vmem:[%s178 + $0x18] sm:$0xff]
  %v438 = vld [vmem:[%s178 + $0x20] sm:$0xff]
  %v439 = vld [vmem:[%s178 + $0x30] sm:$0xff]
  %v440 = vld [vmem:[%s178 + $0x38] sm:$0xff]
  %v441 = vld [vmem:[%s178 + $0x48] sm:$0xff]
  %v442 = vld [vmem:[%s178 + $0x50] sm:$0xff]
  %v443 = vld [vmem:[%s178 + $0x60] sm:$0xff]
  %v444 = vld [vmem:[%s178 + $0x68] sm:$0xff]
  %v445 = vld [vmem:[%s178 + $0x78] sm:$0xff]
  %v446 = vld [vmem:[%s178 + $0x80] sm:$0xff]
  %v447 = vld [vmem:[%s178 + $0x90] sm:$0xff]
  %v448 = vld [vmem:[%s178 + $0x98] sm:$0xff]
  %v449 = vld [vmem:[%s178 + $0xa8] sm:$0xff]
  %v450 = vld [vmem:[%s178 + $0xb0] sm:$0xff]
  %v451 = vld [vmem:[%s178 + $0xc0] sm:$0xff]
  %v452 = vld [vmem:[%s178 + $0xc8] sm:$0xff]
  %v453 = vld [vmem:[%s178 + $0xd8] sm:$0xff]
  %v454 = vld [vmem:[%s178 + $0xe0] sm:$0xff]
  %v455 = vld [vmem:[%s178 + $0xf0] sm:$0xff]
  %v456 = vld [vmem:[%s178 + $0xf8] sm:$0xff]
  %v457 = vld [vmem:[%s178 + $0x108] sm:$0xff]
  %v458 = vld [vmem:[%s178 + $0x110] sm:$0xff]
  %v459 = vld [vmem:[%s178 + $0x120] sm:$0xff]
  %v460 = vld [vmem:[%s178 + $0x128] sm:$0xff]
  %v461 = vld [vmem:[%s178 + $0x138] sm:$0xff]
  %v462 = vld [vmem:[%s178 + $0x140] sm:$0xff]
  %v463 = vld [vmem:[%s178 + $0x150] sm:$0xff]
  %v464 = vld [vmem:[%s178 + $0x158] sm:$0xff]
  %v465 = vld [vmem:[%s178 + $0x168] sm:$0xff]
  %v466 = vld [vmem:[%s178 + $0x170] sm:$0xff]
  %v467 = vld [vmem:[%s178 + $0x1b0] sm:$0xff]
  %v468 = vld [vmem:[%s178 + $0x1b8] sm:$0xff]
  %v469 = vld [vmem:[%s178 + $0x1c8] sm:$0xff]
  %v470 = vld [vmem:[%s178 + $0x1d0] sm:$0xff]
  %v471 = vld [vmem:[%s178 + $0x1e0] sm:$0xff]
  %v472 = vld [vmem:[%s178 + $0x1e8] sm:$0xff]
  %v473 = vld [vmem:[%s178 + $0x1f8] sm:$0xff]
  %v474 = vld [vmem:[%s178 + $0x200] sm:$0xff]
  %v475 = vld [vmem:[%s178 + $0x210] sm:$0xff]
  %v476 = vld [vmem:[%s178 + $0x218] sm:$0xff]
  %v477 = vld [vmem:[%s178 + $0x228] sm:$0xff]
  %v478 = vld [vmem:[%s178 + $0x230] sm:$0xff]
  %v479 = vld [vmem:[%s178 + $0x240] sm:$0xff]
  %v480 = vld [vmem:[%s178 + $0x248] sm:$0xff]
  %v481 = vld [vmem:[%s178 + $0x258] sm:$0xff]
  %v482 = vld [vmem:[%s178 + $0x260] sm:$0xff]
  %v483 = vld [vmem:[%s178 + $0x270] sm:$0xff]
  %v484 = vld [vmem:[%s178 + $0x278] sm:$0xff]
  %v485 = vld [vmem:[%s178 + $0x288] sm:$0xff]
  %v486 = vld [vmem:[%s178 + $0x290] sm:$0xff]
  %v487 = vld [vmem:[%s178 + $0x2a0] sm:$0xff]
  %v488 = vld [vmem:[%s178 + $0x2a8] sm:$0xff]
  %v489 = vld [vmem:[%s178 + $0x2b8] sm:$0xff]
  %v490 = vld [vmem:[%s178 + $0x2c0] sm:$0xff]
  %v491 = vld [vmem:[%s178 + $0x2d0] sm:$0xff]
  %v492 = vld [vmem:[%s178 + $0x2d8] sm:$0xff]
  %v493 = vld [vmem:[%s178 + $0x2e8] sm:$0xff]
  %v494 = vld [vmem:[%s178 + $0x2f0] sm:$0xff]
  %v495 = vld [vmem:[%s178 + $0x300] sm:$0xff]
  %v496 = vld [vmem:[%s178 + $0x308] sm:$0xff]
  %v497 = vld [vmem:[%s178 + $0x318] sm:$0xff]
  %v498 = vld [vmem:[%s178 + $0x320] sm:$0xff]
  %v499 = vld [vmem:[%s178 + $0x1] sm:$0xff]
  %v500 = vld [vmem:[%s178 + $0x9] sm:$0xff]
  %v501 = vld [vmem:[%s178 + $0x19] sm:$0xff]
  %v502 = vld [vmem:[%s178 + $0x21] sm:$0xff]
  %v503 = vld [vmem:[%s178 + $0x31] sm:$0xff]
  %v504 = vld [vmem:[%s178 + $0x39] sm:$0xff]
  %v505 = vld [vmem:[%s178 + $0x49] sm:$0xff]
  %v506 = vld [vmem:[%s178 + $0x51] sm:$0xff]
  %v507 = vld [vmem:[%s178 + $0x61] sm:$0xff]
  %v508 = vld [vmem:[%s178 + $0x69] sm:$0xff]
  %v509 = vld [vmem:[%s178 + $0x79] sm:$0xff]
  %v510 = vld [vmem:[%s178 + $0x81] sm:$0xff]
  %v511 = vld [vmem:[%s178 + $0x91] sm:$0xff]
  %v512 = vld [vmem:[%s178 + $0x99] sm:$0xff]
  %v513 = vld [vmem:[%s178 + $0xa9] sm:$0xff]
  %v514 = vld [vmem:[%s178 + $0xb1] sm:$0xff]
  %v515 = vld [vmem:[%s178 + $0xc1] sm:$0xff]
  %v516 = vld [vmem:[%s178 + $0xc9] sm:$0xff]
  %v517 = vld [vmem:[%s178 + $0xd9] sm:$0xff]
  %v518 = vld [vmem:[%s178 + $0xe1] sm:$0xff]
  %v519 = vld [vmem:[%s178 + $0xf1] sm:$0xff]
  %v520 = vld [vmem:[%s178 + $0xf9] sm:$0xff]
  %v521 = vld [vmem:[%s178 + $0x109] sm:$0xff]
  %v522 = vld [vmem:[%s178 + $0x111] sm:$0xff]
  %v523 = vld [vmem:[%s178 + $0x121] sm:$0xff]
  %v524 = vld [vmem:[%s178 + $0x129] sm:$0xff]
  %v525 = vld [vmem:[%s178 + $0x139] sm:$0xff]
  %v526 = vld [vmem:[%s178 + $0x141] sm:$0xff]
  %v527 = vld [vmem:[%s178 + $0x151] sm:$0xff]
  %v528 = vld [vmem:[%s178 + $0x159] sm:$0xff]
  %v529 = vld [vmem:[%s178 + $0x169] sm:$0xff]
  %v530 = vld [vmem:[%s178 + $0x171] sm:$0xff]
  %v531 = vld [vmem:[%s178 + $0x1b1] sm:$0xff]
  %v532 = vld [vmem:[%s178 + $0x1b9] sm:$0xff]
  %v533 = vld [vmem:[%s178 + $0x1c9] sm:$0xff]
  %v534 = vld [vmem:[%s178 + $0x1d1] sm:$0xff]
  %v535 = vld [vmem:[%s178 + $0x1e1] sm:$0xff]
  %v536 = vld [vmem:[%s178 + $0x1e9] sm:$0xff]
  %v537 = vld [vmem:[%s178 + $0x1f9] sm:$0xff]
  %v538 = vld [vmem:[%s178 + $0x201] sm:$0xff]
  %v539 = vld [vmem:[%s178 + $0x211] sm:$0xff]
  %v540 = vld [vmem:[%s178 + $0x219] sm:$0xff]
  %v541 = vld [vmem:[%s178 + $0x229] sm:$0xff]
  %v542 = vld [vmem:[%s178 + $0x231] sm:$0xff]
  %v543 = vld [vmem:[%s178 + $0x241] sm:$0xff]
  %v544 = vld [vmem:[%s178 + $0x249] sm:$0xff]
  %v545 = vld [vmem:[%s178 + $0x259] sm:$0xff]
  %v546 = vld [vmem:[%s178 + $0x261] sm:$0xff]
  %v547 = vld [vmem:[%s178 + $0x271] sm:$0xff]
  %v548 = vld [vmem:[%s178 + $0x279] sm:$0xff]
  %v549 = vld [vmem:[%s178 + $0x289] sm:$0xff]
  %v550 = vld [vmem:[%s178 + $0x291] sm:$0xff]
  %v551 = vld [vmem:[%s178 + $0x2a1] sm:$0xff]
  %v552 = vld [vmem:[%s178 + $0x2a9] sm:$0xff]
  %v553 = vld [vmem:[%s178 + $0x2b9] sm:$0xff]
  %v554 = vld [vmem:[%s178 + $0x2c1] sm:$0xff]
  %v555 = vld [vmem:[%s178 + $0x2d1] sm:$0xff]
  %v556 = vld [vmem:[%s178 + $0x2d9] sm:$0xff]
  %v557 = vld [vmem:[%s178 + $0x2e9] sm:$0xff]
  %v558 = vld [vmem:[%s178 + $0x2f1] sm:$0xff]
  %v559 = vld [vmem:[%s178 + $0x301] sm:$0xff]
  %v560 = vld [vmem:[%s178 + $0x309] sm:$0xff]
  %v561 = vld [vmem:[%s178 + $0x319] sm:$0xff]
  %v562 = vld [vmem:[%s178 + $0x321] sm:$0xff]
  %v563 = vld [vmem:[%s178 + $0x2] sm:$0xff]
  %v564 = vld [vmem:[%s178 + $0xa] sm:$0xff]
  %v565 = vld [vmem:[%s178 + $0x1a] sm:$0xff]
  %v566 = vld [vmem:[%s178 + $0x22] sm:$0xff]
  %v567 = vld [vmem:[%s178 + $0x32] sm:$0xff]
  %v568 = vld [vmem:[%s178 + $0x3a] sm:$0xff]
  %v569 = vld [vmem:[%s178 + $0x4a] sm:$0xff]
  %v570 = vld [vmem:[%s178 + $0x52] sm:$0xff]
  %v571 = vld [vmem:[%s178 + $0x62] sm:$0xff]
  %v572 = vld [vmem:[%s178 + $0x6a] sm:$0xff]
  %v573 = vld [vmem:[%s178 + $0x7a] sm:$0xff]
  %v574 = vld [vmem:[%s178 + $0x82] sm:$0xff]
  %v575 = vld [vmem:[%s178 + $0x92] sm:$0xff]
  %v576 = vld [vmem:[%s178 + $0x9a] sm:$0xff]
  %v577 = vld [vmem:[%s178 + $0xaa] sm:$0xff]
  %v578 = vld [vmem:[%s178 + $0xb2] sm:$0xff]
  %v579 = vld [vmem:[%s178 + $0xc2] sm:$0xff]
  %v580 = vld [vmem:[%s178 + $0xca] sm:$0xff]
  %v581 = vld [vmem:[%s178 + $0xda] sm:$0xff]
  %v582 = vld [vmem:[%s178 + $0xe2] sm:$0xff]
  %v583 = vld [vmem:[%s178 + $0xf2] sm:$0xff]
  %v584 = vld [vmem:[%s178 + $0xfa] sm:$0xff]
  %v585 = vld [vmem:[%s178 + $0x10a] sm:$0xff]
  %v586 = vld [vmem:[%s178 + $0x112] sm:$0xff]
  %v587 = vld [vmem:[%s178 + $0x122] sm:$0xff]
  %v588 = vld [vmem:[%s178 + $0x12a] sm:$0xff]
  %v589 = vld [vmem:[%s178 + $0x13a] sm:$0xff]
  %v590 = vld [vmem:[%s178 + $0x142] sm:$0xff]
  %v591 = vld [vmem:[%s178 + $0x152] sm:$0xff]
  %v592 = vld [vmem:[%s178 + $0x15a] sm:$0xff]
  %v593 = vld [vmem:[%s178 + $0x16a] sm:$0xff]
  %v594 = vld [vmem:[%s178 + $0x172] sm:$0xff]
  %v595 = vld [vmem:[%s178 + $0x1b2] sm:$0xff]
  %v596 = vld [vmem:[%s178 + $0x1ba] sm:$0xff]
  %v597 = vld [vmem:[%s178 + $0x1ca] sm:$0xff]
  %v598 = vld [vmem:[%s178 + $0x1d2] sm:$0xff]
  %v599 = vld [vmem:[%s178 + $0x1e2] sm:$0xff]
  %v600 = vld [vmem:[%s178 + $0x1ea] sm:$0xff]
  %v601 = vld [vmem:[%s178 + $0x1fa] sm:$0xff]
  %v602 = vld [vmem:[%s178 + $0x202] sm:$0xff]
  %v603 = vld [vmem:[%s178 + $0x212] sm:$0xff]
  %v604 = vld [vmem:[%s178 + $0x21a] sm:$0xff]
  %v605 = vld [vmem:[%s178 + $0x22a] sm:$0xff]
  %v606 = vld [vmem:[%s178 + $0x232] sm:$0xff]
  %v607 = vld [vmem:[%s178 + $0x242] sm:$0xff]
  %v608 = vld [vmem:[%s178 + $0x24a] sm:$0xff]
  %v609 = vld [vmem:[%s178 + $0x25a] sm:$0xff]
  %v610 = vld [vmem:[%s178 + $0x262] sm:$0xff]
  %v611 = vld [vmem:[%s178 + $0x272] sm:$0xff]
  %v612 = vld [vmem:[%s178 + $0x27a] sm:$0xff]
  %v613 = vld [vmem:[%s178 + $0x28a] sm:$0xff]
  %v614 = vld [vmem:[%s178 + $0x292] sm:$0xff]
  %v615 = vld [vmem:[%s178 + $0x2a2] sm:$0xff]
  %v616 = vld [vmem:[%s178 + $0x2aa] sm:$0xff]
  %v617 = vld [vmem:[%s178 + $0x2ba] sm:$0xff]
  %v618 = vld [vmem:[%s178 + $0x2c2] sm:$0xff]
  %v619 = vld [vmem:[%s178 + $0x2d2] sm:$0xff]
  %v620 = vld [vmem:[%s178 + $0x2da] sm:$0xff]
  %v621 = vld [vmem:[%s178 + $0x2ea] sm:$0xff]
  %v622 = vld [vmem:[%s178 + $0x2f2] sm:$0xff]
  %v623 = vld [vmem:[%s178 + $0x302] sm:$0xff]
  %v624 = vld [vmem:[%s178 + $0x30a] sm:$0xff]
  %v625 = vld [vmem:[%s178 + $0x31a] sm:$0xff]
  %v626 = vld [vmem:[%s178 + $0x322] sm:$0xff]
  %s627 = scalar_lea.vmem [#allocation2], 48
  %v628 = vld [vmem:[%s627] sm:$0xff]
  %v629 = vld [vmem:[%s627 + $0x8] sm:$0xff]
  %v630 = vld [vmem:[%s627 + $0x18] sm:$0xff]
  %v631 = vld [vmem:[%s627 + $0x20] sm:$0xff]
  %v632 = vld [vmem:[%s627 + $0x30] sm:$0xff]
  %v633 = vld [vmem:[%s627 + $0x38] sm:$0xff]
  %v634 = vld [vmem:[%s627 + $0x48] sm:$0xff]
  %v635 = vld [vmem:[%s627 + $0x50] sm:$0xff]
  %v636 = vld [vmem:[%s627 + $0x60] sm:$0xff]
  %v637 = vld [vmem:[%s627 + $0x68] sm:$0xff]
  %v638 = vld [vmem:[%s627 + $0x78] sm:$0xff]
  %v639 = vld [vmem:[%s627 + $0x80] sm:$0xff]
  %v640 = vld [vmem:[%s627 + $0x90] sm:$0xff]
  %v641 = vld [vmem:[%s627 + $0x98] sm:$0xff]
  %v642 = vld [vmem:[%s627 + $0xa8] sm:$0xff]
  %v643 = vld [vmem:[%s627 + $0xb0] sm:$0xff]
  %v644 = vld [vmem:[%s627 + $0xc0] sm:$0xff]
  %v645 = vld [vmem:[%s627 + $0xc8] sm:$0xff]
  %v646 = vld [vmem:[%s627 + $0xd8] sm:$0xff]
  %v647 = vld [vmem:[%s627 + $0xe0] sm:$0xff]
  %v648 = vld [vmem:[%s627 + $0xf0] sm:$0xff]
  %v649 = vld [vmem:[%s627 + $0xf8] sm:$0xff]
  %v650 = vld [vmem:[%s627 + $0x108] sm:$0xff]
  %v651 = vld [vmem:[%s627 + $0x110] sm:$0xff]
  %v652 = vld [vmem:[%s627 + $0x120] sm:$0xff]
  %v653 = vld [vmem:[%s627 + $0x128] sm:$0xff]
  %v654 = vld [vmem:[%s627 + $0x138] sm:$0xff]
  %v655 = vld [vmem:[%s627 + $0x140] sm:$0xff]
  %v656 = vld [vmem:[%s627 + $0x150] sm:$0xff]
  %v657 = vld [vmem:[%s627 + $0x158] sm:$0xff]
  %v658 = vld [vmem:[%s627 + $0x168] sm:$0xff]
  %v659 = vld [vmem:[%s627 + $0x170] sm:$0xff]
  %v660 = vld [vmem:[%s627 + $0x1b0] sm:$0xff]
  %v661 = vld [vmem:[%s627 + $0x1b8] sm:$0xff]
  %v662 = vld [vmem:[%s627 + $0x1c8] sm:$0xff]
  %v663 = vld [vmem:[%s627 + $0x1d0] sm:$0xff]
  %v664 = vld [vmem:[%s627 + $0x1e0] sm:$0xff]
  %v665 = vld [vmem:[%s627 + $0x1e8] sm:$0xff]
  %v666 = vld [vmem:[%s627 + $0x1f8] sm:$0xff]
  %v667 = vld [vmem:[%s627 + $0x200] sm:$0xff]
  %v668 = vld [vmem:[%s627 + $0x210] sm:$0xff]
  %v669 = vld [vmem:[%s627 + $0x218] sm:$0xff]
  %v670 = vld [vmem:[%s627 + $0x228] sm:$0xff]
  %v671 = vld [vmem:[%s627 + $0x230] sm:$0xff]
  %v672 = vld [vmem:[%s627 + $0x240] sm:$0xff]
  %v673 = vld [vmem:[%s627 + $0x248] sm:$0xff]
  %v674 = vld [vmem:[%s627 + $0x258] sm:$0xff]
  %v675 = vld [vmem:[%s627 + $0x260] sm:$0xff]
  %v676 = vld [vmem:[%s627 + $0x270] sm:$0xff]
  %v677 = vld [vmem:[%s627 + $0x278] sm:$0xff]
  %v678 = vld [vmem:[%s627 + $0x288] sm:$0xff]
  %v679 = vld [vmem:[%s627 + $0x290] sm:$0xff]
  %v680 = vld [vmem:[%s627 + $0x2a0] sm:$0xff]
  %v681 = vld [vmem:[%s627 + $0x2a8] sm:$0xff]
  %v682 = vld [vmem:[%s627 + $0x2b8] sm:$0xff]
  %v683 = vld [vmem:[%s627 + $0x2c0] sm:$0xff]
  %v684 = vld [vmem:[%s627 + $0x2d0] sm:$0xff]
  %v685 = vld [vmem:[%s627 + $0x2d8] sm:$0xff]
  %v686 = vld [vmem:[%s627 + $0x2e8] sm:$0xff]
  %v687 = vld [vmem:[%s627 + $0x2f0] sm:$0xff]
  %v688 = vld [vmem:[%s627 + $0x300] sm:$0xff]
  %v689 = vld [vmem:[%s627 + $0x308] sm:$0xff]
  %v690 = vld [vmem:[%s627 + $0x318] sm:$0xff]
  %v691 = vld [vmem:[%s627 + $0x320] sm:$0xff]
  %v692 = vld [vmem:[%s627 + $0x1] sm:$0xff]
  %v693 = vld [vmem:[%s627 + $0x9] sm:$0xff]
  %v694 = vld [vmem:[%s627 + $0x19] sm:$0xff]
  %v695 = vld [vmem:[%s627 + $0x21] sm:$0xff]
  %v696 = vld [vmem:[%s627 + $0x31] sm:$0xff]
  %v697 = vld [vmem:[%s627 + $0x39] sm:$0xff]
  %v698 = vld [vmem:[%s627 + $0x49] sm:$0xff]
  %v699 = vld [vmem:[%s627 + $0x51] sm:$0xff]
  %v700 = vld [vmem:[%s627 + $0x61] sm:$0xff]
  %v701 = vld [vmem:[%s627 + $0x69] sm:$0xff]
  %v702 = vld [vmem:[%s627 + $0x79] sm:$0xff]
  %v703 = vld [vmem:[%s627 + $0x81] sm:$0xff]
  %v704 = vld [vmem:[%s627 + $0x91] sm:$0xff]
  %v705 = vld [vmem:[%s627 + $0x99] sm:$0xff]
  %v706 = vld [vmem:[%s627 + $0xa9] sm:$0xff]
  %v707 = vld [vmem:[%s627 + $0xb1] sm:$0xff]
  %v708 = vld [vmem:[%s627 + $0xc1] sm:$0xff]
  %v709 = vld [vmem:[%s627 + $0xc9] sm:$0xff]
  %v710 = vld [vmem:[%s627 + $0xd9] sm:$0xff]
  %v711 = vld [vmem:[%s627 + $0xe1] sm:$0xff]
  %v712 = vld [vmem:[%s627 + $0xf1] sm:$0xff]
  %v713 = vld [vmem:[%s627 + $0xf9] sm:$0xff]
  %v714 = vld [vmem:[%s627 + $0x109] sm:$0xff]
  %v715 = vld [vmem:[%s627 + $0x111] sm:$0xff]
  %v716 = vld [vmem:[%s627 + $0x121] sm:$0xff]
  %v717 = vld [vmem:[%s627 + $0x129] sm:$0xff]
  %v718 = vld [vmem:[%s627 + $0x139] sm:$0xff]
  %v719 = vld [vmem:[%s627 + $0x141] sm:$0xff]
  %v720 = vld [vmem:[%s627 + $0x151] sm:$0xff]
  %v721 = vld [vmem:[%s627 + $0x159] sm:$0xff]
  %v722 = vld [vmem:[%s627 + $0x169] sm:$0xff]
  %v723 = vld [vmem:[%s627 + $0x171] sm:$0xff]
  %v724 = vld [vmem:[%s627 + $0x1b1] sm:$0xff]
  %v725 = vld [vmem:[%s627 + $0x1b9] sm:$0xff]
  %v726 = vld [vmem:[%s627 + $0x1c9] sm:$0xff]
  %v727 = vld [vmem:[%s627 + $0x1d1] sm:$0xff]
  %v728 = vld [vmem:[%s627 + $0x1e1] sm:$0xff]
  %v729 = vld [vmem:[%s627 + $0x1e9] sm:$0xff]
  %v730 = vld [vmem:[%s627 + $0x1f9] sm:$0xff]
  %v731 = vld [vmem:[%s627 + $0x201] sm:$0xff]
  %v732 = vld [vmem:[%s627 + $0x211] sm:$0xff]
  %v733 = vld [vmem:[%s627 + $0x219] sm:$0xff]
  %v734 = vld [vmem:[%s627 + $0x229] sm:$0xff]
  %v735 = vld [vmem:[%s627 + $0x231] sm:$0xff]
  %v736 = vld [vmem:[%s627 + $0x241] sm:$0xff]
  %v737 = vld [vmem:[%s627 + $0x249] sm:$0xff]
  %v738 = vld [vmem:[%s627 + $0x259] sm:$0xff]
  %v739 = vld [vmem:[%s627 + $0x261] sm:$0xff]
  %v740 = vld [vmem:[%s627 + $0x271] sm:$0xff]
  %v741 = vld [vmem:[%s627 + $0x279] sm:$0xff]
  %v742 = vld [vmem:[%s627 + $0x289] sm:$0xff]
  %v743 = vld [vmem:[%s627 + $0x291] sm:$0xff]
  %v744 = vld [vmem:[%s627 + $0x2a1] sm:$0xff]
  %v745 = vld [vmem:[%s627 + $0x2a9] sm:$0xff]
  %v746 = vld [vmem:[%s627 + $0x2b9] sm:$0xff]
  %v747 = vld [vmem:[%s627 + $0x2c1] sm:$0xff]
  %v748 = vld [vmem:[%s627 + $0x2d1] sm:$0xff]
  %v749 = vld [vmem:[%s627 + $0x2d9] sm:$0xff]
  %v750 = vld [vmem:[%s627 + $0x2e9] sm:$0xff]
  %v751 = vld [vmem:[%s627 + $0x2f1] sm:$0xff]
  %v752 = vld [vmem:[%s627 + $0x301] sm:$0xff]
  %v753 = vld [vmem:[%s627 + $0x309] sm:$0xff]
  %v754 = vld [vmem:[%s627 + $0x319] sm:$0xff]
  %v755 = vld [vmem:[%s627 + $0x321] sm:$0xff]
  %v756 = vld [vmem:[%s627 + $0x2] sm:$0xff]
  %v757 = vld [vmem:[%s627 + $0xa] sm:$0xff]
  %v758 = vld [vmem:[%s627 + $0x1a] sm:$0xff]
  %v759 = vld [vmem:[%s627 + $0x22] sm:$0xff]
  %v760 = vld [vmem:[%s627 + $0x32] sm:$0xff]
  %v761 = vld [vmem:[%s627 + $0x3a] sm:$0xff]
  %v762 = vld [vmem:[%s627 + $0x4a] sm:$0xff]
  %v763 = vld [vmem:[%s627 + $0x52] sm:$0xff]
  %v764 = vld [vmem:[%s627 + $0x62] sm:$0xff]
  %v765 = vld [vmem:[%s627 + $0x6a] sm:$0xff]
  %v766 = vld [vmem:[%s627 + $0x7a] sm:$0xff]
  %v767 = vld [vmem:[%s627 + $0x82] sm:$0xff]
  %v768 = vld [vmem:[%s627 + $0x92] sm:$0xff]
  %v769 = vld [vmem:[%s627 + $0x9a] sm:$0xff]
  %v770 = vld [vmem:[%s627 + $0xaa] sm:$0xff]
  %v771 = vld [vmem:[%s627 + $0xb2] sm:$0xff]
  %v772 = vld [vmem:[%s627 + $0xc2] sm:$0xff]
  %v773 = vld [vmem:[%s627 + $0xca] sm:$0xff]
  %v774 = vld [vmem:[%s627 + $0xda] sm:$0xff]
  %v775 = vld [vmem:[%s627 + $0xe2] sm:$0xff]
  %v776 = vld [vmem:[%s627 + $0xf2] sm:$0xff]
  %v777 = vld [vmem:[%s627 + $0xfa] sm:$0xff]
  %v778 = vld [vmem:[%s627 + $0x10a] sm:$0xff]
  %v779 = vld [vmem:[%s627 + $0x112] sm:$0xff]
  %v780 = vld [vmem:[%s627 + $0x122] sm:$0xff]
  %v781 = vld [vmem:[%s627 + $0x12a] sm:$0xff]
  %v782 = vld [vmem:[%s627 + $0x13a] sm:$0xff]
  %v783 = vld [vmem:[%s627 + $0x142] sm:$0xff]
  %v784 = vld [vmem:[%s627 + $0x152] sm:$0xff]
  %v785 = vld [vmem:[%s627 + $0x15a] sm:$0xff]
  %v786 = vld [vmem:[%s627 + $0x16a] sm:$0xff]
  %v787 = vld [vmem:[%s627 + $0x172] sm:$0xff]
  %v788 = vld [vmem:[%s627 + $0x1b2] sm:$0xff]
  %v789 = vld [vmem:[%s627 + $0x1ba] sm:$0xff]
  %v790 = vld [vmem:[%s627 + $0x1ca] sm:$0xff]
  %v791 = vld [vmem:[%s627 + $0x1d2] sm:$0xff]
  %v792 = vld [vmem:[%s627 + $0x1e2] sm:$0xff]
  %v793 = vld [vmem:[%s627 + $0x1ea] sm:$0xff]
  %v794 = vld [vmem:[%s627 + $0x1fa] sm:$0xff]
  %v795 = vld [vmem:[%s627 + $0x202] sm:$0xff]
  %v796 = vld [vmem:[%s627 + $0x212] sm:$0xff]
  %v797 = vld [vmem:[%s627 + $0x21a] sm:$0xff]
  %v798 = vld [vmem:[%s627 + $0x22a] sm:$0xff]
  %v799 = vld [vmem:[%s627 + $0x232] sm:$0xff]
  %v800 = vld [vmem:[%s627 + $0x242] sm:$0xff]
  %v801 = vld [vmem:[%s627 + $0x24a] sm:$0xff]
  %v802 = vld [vmem:[%s627 + $0x25a] sm:$0xff]
  %v803 = vld [vmem:[%s627 + $0x262] sm:$0xff]
  %v804 = vld [vmem:[%s627 + $0x272] sm:$0xff]
  %v805 = vld [vmem:[%s627 + $0x27a] sm:$0xff]
  %v806 = vld [vmem:[%s627 + $0x28a] sm:$0xff]
  %v807 = vld [vmem:[%s627 + $0x292] sm:$0xff]
  %v808 = vld [vmem:[%s627 + $0x2a2] sm:$0xff]
  %v809 = vld [vmem:[%s627 + $0x2aa] sm:$0xff]
  %v810 = vld [vmem:[%s627 + $0x2ba] sm:$0xff]
  %v811 = vld [vmem:[%s627 + $0x2c2] sm:$0xff]
  %v812 = vld [vmem:[%s627 + $0x2d2] sm:$0xff]
  %v813 = vld [vmem:[%s627 + $0x2da] sm:$0xff]
  %v814 = vld [vmem:[%s627 + $0x2ea] sm:$0xff]
  %v815 = vld [vmem:[%s627 + $0x2f2] sm:$0xff]
  %v816 = vld [vmem:[%s627 + $0x302] sm:$0xff]
  %v817 = vld [vmem:[%s627 + $0x30a] sm:$0xff]
  %v818 = vld [vmem:[%s627 + $0x31a] sm:$0xff]
  %v819 = vld [vmem:[%s627 + $0x322] sm:$0xff]
  %884 = vrot.lane.b32.xlu0 %v307, 4
  %v885 = vpop.permute.xlu0 %884
  %886 = vrot.lane.b32.xlu0 %v308, 4
  %v887 = vpop.permute.xlu0 %886
  %888 = vrot.lane.b32.xlu0 %v309, 4
  %v889 = vpop.permute.xlu0 %888
  %890 = vrot.lane.b32.xlu0 %v310, 4
  %v891 = vpop.permute.xlu0 %890
  %892 = vrot.lane.b32.xlu0 %v311, 4
  %v893 = vpop.permute.xlu0 %892
  %894 = vrot.lane.b32.xlu0 %v312, 4
  %v895 = vpop.permute.xlu0 %894
  %896 = vrot.lane.b32.xlu0 %v313, 4
  %v897 = vpop.permute.xlu0 %896
  %898 = vrot.lane.b32.xlu0 %v314, 4
  %v899 = vpop.permute.xlu0 %898
  %900 = vrot.lane.b32.xlu0 %v315, 4
  %v901 = vpop.permute.xlu0 %900
  %902 = vrot.lane.b32.xlu0 %v316, 4
  %v903 = vpop.permute.xlu0 %902
  %904 = vrot.lane.b32.xlu0 %v317, 4
  %v905 = vpop.permute.xlu0 %904
  %906 = vrot.lane.b32.xlu0 %v318, 4
  %v907 = vpop.permute.xlu0 %906
  %908 = vrot.lane.b32.xlu0 %v319, 4
  %v909 = vpop.permute.xlu0 %908
  %910 = vrot.lane.b32.xlu0 %v320, 4
  %v911 = vpop.permute.xlu0 %910
  %912 = vrot.lane.b32.xlu0 %v321, 4
  %v913 = vpop.permute.xlu0 %912
  %914 = vrot.lane.b32.xlu0 %v322, 4
  %v915 = vpop.permute.xlu0 %914
  %916 = vrot.lane.b32.xlu0 %v323, 4
  %v917 = vpop.permute.xlu0 %916
  %918 = vrot.lane.b32.xlu0 %v324, 4
  %v919 = vpop.permute.xlu0 %918
  %920 = vrot.lane.b32.xlu0 %v325, 4
  %v921 = vpop.permute.xlu0 %920
  %922 = vrot.lane.b32.xlu0 %v326, 4
  %v923 = vpop.permute.xlu0 %922
  %924 = vrot.lane.b32.xlu0 %v327, 4
  %v925 = vpop.permute.xlu0 %924
  %926 = vrot.lane.b32.xlu0 %v328, 4
  %v927 = vpop.permute.xlu0 %926
  %928 = vrot.lane.b32.xlu0 %v329, 4
  %v929 = vpop.permute.xlu0 %928
  %930 = vrot.lane.b32.xlu0 %v330, 4
  %v931 = vpop.permute.xlu0 %930
  %932 = vrot.lane.b32.xlu0 %v331, 4
  %v933 = vpop.permute.xlu0 %932
  %934 = vrot.lane.b32.xlu0 %v332, 4
  %v935 = vpop.permute.xlu0 %934
  %936 = vrot.lane.b32.xlu0 %v333, 4
  %v937 = vpop.permute.xlu0 %936
  %938 = vrot.lane.b32.xlu0 %v334, 4
  %v939 = vpop.permute.xlu0 %938
  %940 = vrot.lane.b32.xlu0 %v335, 4
  %v941 = vpop.permute.xlu0 %940
  %942 = vrot.lane.b32.xlu0 %v336, 4
  %v943 = vpop.permute.xlu0 %942
  %944 = vrot.lane.b32.xlu0 %v337, 4
  %v945 = vpop.permute.xlu0 %944
  %946 = vrot.lane.b32.xlu0 %v338, 4
  %v947 = vpop.permute.xlu0 %946
  %948 = vrot.lane.b32.xlu0 %v339, 4
  %v949 = vpop.permute.xlu0 %948
  %950 = vrot.lane.b32.xlu0 %v340, 4
  %v951 = vpop.permute.xlu0 %950
  %952 = vrot.lane.b32.xlu0 %v341, 4
  %v953 = vpop.permute.xlu0 %952
  %954 = vrot.lane.b32.xlu0 %v342, 4
  %v955 = vpop.permute.xlu0 %954
  %956 = vrot.lane.b32.xlu0 %v343, 4
  %v957 = vpop.permute.xlu0 %956
  %958 = vrot.lane.b32.xlu0 %v344, 4
  %v959 = vpop.permute.xlu0 %958
  %960 = vrot.lane.b32.xlu0 %v345, 4
  %v961 = vpop.permute.xlu0 %960
  %962 = vrot.lane.b32.xlu0 %v346, 4
  %v963 = vpop.permute.xlu0 %962
  %964 = vrot.lane.b32.xlu0 %v347, 4
  %v965 = vpop.permute.xlu0 %964
  %966 = vrot.lane.b32.xlu0 %v348, 4
  %v967 = vpop.permute.xlu0 %966
  %968 = vrot.lane.b32.xlu0 %v349, 4
  %v969 = vpop.permute.xlu0 %968
  %970 = vrot.lane.b32.xlu0 %v350, 4
  %v971 = vpop.permute.xlu0 %970
  %972 = vrot.lane.b32.xlu0 %v351, 4
  %v973 = vpop.permute.xlu0 %972
  %974 = vrot.lane.b32.xlu0 %v352, 4
  %v975 = vpop.permute.xlu0 %974
  %976 = vrot.lane.b32.xlu0 %v353, 4
  %v977 = vpop.permute.xlu0 %976
  %978 = vrot.lane.b32.xlu0 %v354, 4
  %v979 = vpop.permute.xlu0 %978
  %980 = vrot.lane.b32.xlu0 %v355, 4
  %v981 = vpop.permute.xlu0 %980
  %982 = vrot.lane.b32.xlu0 %v356, 4
  %v983 = vpop.permute.xlu0 %982
  %984 = vrot.lane.b32.xlu0 %v357, 4
  %v985 = vpop.permute.xlu0 %984
  %986 = vrot.lane.b32.xlu0 %v358, 4
  %v987 = vpop.permute.xlu0 %986
  %988 = vrot.lane.b32.xlu0 %v359, 4
  %v989 = vpop.permute.xlu0 %988
  %990 = vrot.lane.b32.xlu0 %v360, 4
  %v991 = vpop.permute.xlu0 %990
  %992 = vrot.lane.b32.xlu0 %v361, 4
  %v993 = vpop.permute.xlu0 %992
  %994 = vrot.lane.b32.xlu0 %v362, 4
  %v995 = vpop.permute.xlu0 %994
  %996 = vrot.lane.b32.xlu0 %v363, 4
  %v997 = vpop.permute.xlu0 %996
  %998 = vrot.lane.b32.xlu0 %v364, 4
  %v999 = vpop.permute.xlu0 %998
  %1000 = vrot.lane.b32.xlu0 %v365, 4
  %v1001 = vpop.permute.xlu0 %1000
  %1002 = vrot.lane.b32.xlu0 %v366, 4
  %v1003 = vpop.permute.xlu0 %1002
  %1004 = vrot.lane.b32.xlu0 %v367, 4
  %v1005 = vpop.permute.xlu0 %1004
  %1006 = vrot.lane.b32.xlu0 %v368, 4
  %v1007 = vpop.permute.xlu0 %1006
  %1008 = vrot.lane.b32.xlu0 %v369, 4
  %v1009 = vpop.permute.xlu0 %1008
  %1010 = vrot.lane.b32.xlu0 %v370, 4
  %v1011 = vpop.permute.xlu0 %1010
  %1140 = vrot.lane.b32.xlu0 %v371, 8
  %v1141 = vpop.permute.xlu0 %1140
  %1142 = vrot.lane.b32.xlu0 %v372, 8
  %v1143 = vpop.permute.xlu0 %1142
  %1144 = vrot.lane.b32.xlu0 %v373, 8
  %v1145 = vpop.permute.xlu0 %1144
  %1146 = vrot.lane.b32.xlu0 %v374, 8
  %v1147 = vpop.permute.xlu0 %1146
  %1148 = vrot.lane.b32.xlu0 %v375, 8
  %v1149 = vpop.permute.xlu0 %1148
  %1150 = vrot.lane.b32.xlu0 %v376, 8
  %v1151 = vpop.permute.xlu0 %1150
  %1152 = vrot.lane.b32.xlu0 %v377, 8
  %v1153 = vpop.permute.xlu0 %1152
  %1154 = vrot.lane.b32.xlu0 %v378, 8
  %v1155 = vpop.permute.xlu0 %1154
  %1156 = vrot.lane.b32.xlu0 %v379, 8
  %v1157 = vpop.permute.xlu0 %1156
  %1158 = vrot.lane.b32.xlu0 %v380, 8
  %v1159 = vpop.permute.xlu0 %1158
  %1160 = vrot.lane.b32.xlu0 %v381, 8
  %v1161 = vpop.permute.xlu0 %1160
  %1162 = vrot.lane.b32.xlu0 %v382, 8
  %v1163 = vpop.permute.xlu0 %1162
  %1164 = vrot.lane.b32.xlu0 %v383, 8
  %v1165 = vpop.permute.xlu0 %1164
  %1166 = vrot.lane.b32.xlu0 %v384, 8
  %v1167 = vpop.permute.xlu0 %1166
  %1168 = vrot.lane.b32.xlu0 %v385, 8
  %v1169 = vpop.permute.xlu0 %1168
  %1170 = vrot.lane.b32.xlu0 %v386, 8
  %v1171 = vpop.permute.xlu0 %1170
  %1172 = vrot.lane.b32.xlu0 %v387, 8
  %v1173 = vpop.permute.xlu0 %1172
  %1174 = vrot.lane.b32.xlu0 %v388, 8
  %v1175 = vpop.permute.xlu0 %1174
  %1176 = vrot.lane.b32.xlu0 %v389, 8
  %v1177 = vpop.permute.xlu0 %1176
  %1178 = vrot.lane.b32.xlu0 %v390, 8
  %v1179 = vpop.permute.xlu0 %1178
  %1180 = vrot.lane.b32.xlu0 %v391, 8
  %v1181 = vpop.permute.xlu0 %1180
  %1182 = vrot.lane.b32.xlu0 %v392, 8
  %v1183 = vpop.permute.xlu0 %1182
  %1184 = vrot.lane.b32.xlu0 %v393, 8
  %v1185 = vpop.permute.xlu0 %1184
  %1186 = vrot.lane.b32.xlu0 %v394, 8
  %v1187 = vpop.permute.xlu0 %1186
  %1188 = vrot.lane.b32.xlu0 %v395, 8
  %v1189 = vpop.permute.xlu0 %1188
  %1190 = vrot.lane.b32.xlu0 %v396, 8
  %v1191 = vpop.permute.xlu0 %1190
  %1192 = vrot.lane.b32.xlu0 %v397, 8
  %v1193 = vpop.permute.xlu0 %1192
  %1194 = vrot.lane.b32.xlu0 %v398, 8
  %v1195 = vpop.permute.xlu0 %1194
  %1196 = vrot.lane.b32.xlu0 %v399, 8
  %v1197 = vpop.permute.xlu0 %1196
  %1198 = vrot.lane.b32.xlu0 %v400, 8
  %v1199 = vpop.permute.xlu0 %1198
  %1200 = vrot.lane.b32.xlu0 %v401, 8
  %v1201 = vpop.permute.xlu0 %1200
  %1202 = vrot.lane.b32.xlu0 %v402, 8
  %v1203 = vpop.permute.xlu0 %1202
  %1204 = vrot.lane.b32.xlu0 %v403, 8
  %v1205 = vpop.permute.xlu0 %1204
  %1206 = vrot.lane.b32.xlu0 %v404, 8
  %v1207 = vpop.permute.xlu0 %1206
  %1208 = vrot.lane.b32.xlu0 %v405, 8
  %v1209 = vpop.permute.xlu0 %1208
  %1210 = vrot.lane.b32.xlu0 %v406, 8
  %v1211 = vpop.permute.xlu0 %1210
  %1212 = vrot.lane.b32.xlu0 %v407, 8
  %v1213 = vpop.permute.xlu0 %1212
  %1214 = vrot.lane.b32.xlu0 %v408, 8
  %v1215 = vpop.permute.xlu0 %1214
  %1216 = vrot.lane.b32.xlu0 %v409, 8
  %v1217 = vpop.permute.xlu0 %1216
  %1218 = vrot.lane.b32.xlu0 %v410, 8
  %v1219 = vpop.permute.xlu0 %1218
  %1220 = vrot.lane.b32.xlu0 %v411, 8
  %v1221 = vpop.permute.xlu0 %1220
  %1222 = vrot.lane.b32.xlu0 %v412, 8
  %v1223 = vpop.permute.xlu0 %1222
  %1224 = vrot.lane.b32.xlu0 %v413, 8
  %v1225 = vpop.permute.xlu0 %1224
  %1226 = vrot.lane.b32.xlu0 %v414, 8
  %v1227 = vpop.permute.xlu0 %1226
  %1228 = vrot.lane.b32.xlu0 %v415, 8
  %v1229 = vpop.permute.xlu0 %1228
  %1230 = vrot.lane.b32.xlu0 %v416, 8
  %v1231 = vpop.permute.xlu0 %1230
  %1232 = vrot.lane.b32.xlu0 %v417, 8
  %v1233 = vpop.permute.xlu0 %1232
  %1234 = vrot.lane.b32.xlu0 %v418, 8
  %v1235 = vpop.permute.xlu0 %1234
  %1236 = vrot.lane.b32.xlu0 %v419, 8
  %v1237 = vpop.permute.xlu0 %1236
  %1238 = vrot.lane.b32.xlu0 %v420, 8
  %v1239 = vpop.permute.xlu0 %1238
  %1240 = vrot.lane.b32.xlu0 %v421, 8
  %v1241 = vpop.permute.xlu0 %1240
  %1242 = vrot.lane.b32.xlu0 %v422, 8
  %v1243 = vpop.permute.xlu0 %1242
  %1244 = vrot.lane.b32.xlu0 %v423, 8
  %v1245 = vpop.permute.xlu0 %1244
  %1246 = vrot.lane.b32.xlu0 %v424, 8
  %v1247 = vpop.permute.xlu0 %1246
  %1248 = vrot.lane.b32.xlu0 %v425, 8
  %v1249 = vpop.permute.xlu0 %1248
  %1250 = vrot.lane.b32.xlu0 %v426, 8
  %v1251 = vpop.permute.xlu0 %1250
  %1252 = vrot.lane.b32.xlu0 %v427, 8
  %v1253 = vpop.permute.xlu0 %1252
  %1254 = vrot.lane.b32.xlu0 %v428, 8
  %v1255 = vpop.permute.xlu0 %1254
  %1256 = vrot.lane.b32.xlu0 %v429, 8
  %v1257 = vpop.permute.xlu0 %1256
  %1258 = vrot.lane.b32.xlu0 %v430, 8
  %v1259 = vpop.permute.xlu0 %1258
  %1260 = vrot.lane.b32.xlu0 %v431, 8
  %v1261 = vpop.permute.xlu0 %1260
  %1262 = vrot.lane.b32.xlu0 %v432, 8
  %v1263 = vpop.permute.xlu0 %1262
  %1264 = vrot.lane.b32.xlu0 %v433, 8
  %v1265 = vpop.permute.xlu0 %1264
  %1266 = vrot.lane.b32.xlu0 %v434, 8
  %v1267 = vpop.permute.xlu0 %1266
  %1396 = vrot.lane.b32.xlu0 %v435, 12
  %v1397 = vpop.permute.xlu0 %1396
  %1398 = vrot.lane.b32.xlu0 %v436, 12
  %v1399 = vpop.permute.xlu0 %1398
  %1400 = vrot.lane.b32.xlu0 %v437, 12
  %v1401 = vpop.permute.xlu0 %1400
  %1402 = vrot.lane.b32.xlu0 %v438, 12
  %v1403 = vpop.permute.xlu0 %1402
  %1404 = vrot.lane.b32.xlu0 %v439, 12
  %v1405 = vpop.permute.xlu0 %1404
  %1406 = vrot.lane.b32.xlu0 %v440, 12
  %v1407 = vpop.permute.xlu0 %1406
  %1408 = vrot.lane.b32.xlu0 %v441, 12
  %v1409 = vpop.permute.xlu0 %1408
  %1410 = vrot.lane.b32.xlu0 %v442, 12
  %v1411 = vpop.permute.xlu0 %1410
  %1412 = vrot.lane.b32.xlu0 %v443, 12
  %v1413 = vpop.permute.xlu0 %1412
  %1414 = vrot.lane.b32.xlu0 %v444, 12
  %v1415 = vpop.permute.xlu0 %1414
  %1416 = vrot.lane.b32.xlu0 %v445, 12
  %v1417 = vpop.permute.xlu0 %1416
  %1418 = vrot.lane.b32.xlu0 %v446, 12
  %v1419 = vpop.permute.xlu0 %1418
  %1420 = vrot.lane.b32.xlu0 %v447, 12
  %v1421 = vpop.permute.xlu0 %1420
  %1422 = vrot.lane.b32.xlu0 %v448, 12
  %v1423 = vpop.permute.xlu0 %1422
  %1424 = vrot.lane.b32.xlu0 %v449, 12
  %v1425 = vpop.permute.xlu0 %1424
  %1426 = vrot.lane.b32.xlu0 %v450, 12
  %v1427 = vpop.permute.xlu0 %1426
  %1428 = vrot.lane.b32.xlu0 %v451, 12
  %v1429 = vpop.permute.xlu0 %1428
  %1430 = vrot.lane.b32.xlu0 %v452, 12
  %v1431 = vpop.permute.xlu0 %1430
  %1432 = vrot.lane.b32.xlu0 %v453, 12
  %v1433 = vpop.permute.xlu0 %1432
  %1434 = vrot.lane.b32.xlu0 %v454, 12
  %v1435 = vpop.permute.xlu0 %1434
  %1436 = vrot.lane.b32.xlu0 %v455, 12
  %v1437 = vpop.permute.xlu0 %1436
  %1438 = vrot.lane.b32.xlu0 %v456, 12
  %v1439 = vpop.permute.xlu0 %1438
  %1440 = vrot.lane.b32.xlu0 %v457, 12
  %v1441 = vpop.permute.xlu0 %1440
  %1442 = vrot.lane.b32.xlu0 %v458, 12
  %v1443 = vpop.permute.xlu0 %1442
  %1444 = vrot.lane.b32.xlu0 %v459, 12
  %v1445 = vpop.permute.xlu0 %1444
  %1446 = vrot.lane.b32.xlu0 %v460, 12
  %v1447 = vpop.permute.xlu0 %1446
  %1448 = vrot.lane.b32.xlu0 %v461, 12
  %v1449 = vpop.permute.xlu0 %1448
  %1450 = vrot.lane.b32.xlu0 %v462, 12
  %v1451 = vpop.permute.xlu0 %1450
  %1452 = vrot.lane.b32.xlu0 %v463, 12
  %v1453 = vpop.permute.xlu0 %1452
  %1454 = vrot.lane.b32.xlu0 %v464, 12
  %v1455 = vpop.permute.xlu0 %1454
  %1456 = vrot.lane.b32.xlu0 %v465, 12
  %v1457 = vpop.permute.xlu0 %1456
  %1458 = vrot.lane.b32.xlu0 %v466, 12
  %v1459 = vpop.permute.xlu0 %1458
  %1460 = vrot.lane.b32.xlu0 %v467, 12
  %v1461 = vpop.permute.xlu0 %1460
  %1462 = vrot.lane.b32.xlu0 %v468, 12
  %v1463 = vpop.permute.xlu0 %1462
  %1464 = vrot.lane.b32.xlu0 %v469, 12
  %v1465 = vpop.permute.xlu0 %1464
  %1466 = vrot.lane.b32.xlu0 %v470, 12
  %v1467 = vpop.permute.xlu0 %1466
  %1468 = vrot.lane.b32.xlu0 %v471, 12
  %v1469 = vpop.permute.xlu0 %1468
  %1470 = vrot.lane.b32.xlu0 %v472, 12
  %v1471 = vpop.permute.xlu0 %1470
  %1472 = vrot.lane.b32.xlu0 %v473, 12
  %v1473 = vpop.permute.xlu0 %1472
  %1474 = vrot.lane.b32.xlu0 %v474, 12
  %v1475 = vpop.permute.xlu0 %1474
  %1476 = vrot.lane.b32.xlu0 %v475, 12
  %v1477 = vpop.permute.xlu0 %1476
  %1478 = vrot.lane.b32.xlu0 %v476, 12
  %v1479 = vpop.permute.xlu0 %1478
  %1480 = vrot.lane.b32.xlu0 %v477, 12
  %v1481 = vpop.permute.xlu0 %1480
  %1482 = vrot.lane.b32.xlu0 %v478, 12
  %v1483 = vpop.permute.xlu0 %1482
  %1484 = vrot.lane.b32.xlu0 %v479, 12
  %v1485 = vpop.permute.xlu0 %1484
  %1486 = vrot.lane.b32.xlu0 %v480, 12
  %v1487 = vpop.permute.xlu0 %1486
  %1488 = vrot.lane.b32.xlu0 %v481, 12
  %v1489 = vpop.permute.xlu0 %1488
  %1490 = vrot.lane.b32.xlu0 %v482, 12
  %v1491 = vpop.permute.xlu0 %1490
  %1492 = vrot.lane.b32.xlu0 %v483, 12
  %v1493 = vpop.permute.xlu0 %1492
  %1494 = vrot.lane.b32.xlu0 %v484, 12
  %v1495 = vpop.permute.xlu0 %1494
  %1496 = vrot.lane.b32.xlu0 %v485, 12
  %v1497 = vpop.permute.xlu0 %1496
  %1498 = vrot.lane.b32.xlu0 %v486, 12
  %v1499 = vpop.permute.xlu0 %1498
  %1500 = vrot.lane.b32.xlu0 %v487, 12
  %v1501 = vpop.permute.xlu0 %1500
  %1502 = vrot.lane.b32.xlu0 %v488, 12
  %v1503 = vpop.permute.xlu0 %1502
  %1504 = vrot.lane.b32.xlu0 %v489, 12
  %v1505 = vpop.permute.xlu0 %1504
  %1506 = vrot.lane.b32.xlu0 %v490, 12
  %v1507 = vpop.permute.xlu0 %1506
  %1508 = vrot.lane.b32.xlu0 %v491, 12
  %v1509 = vpop.permute.xlu0 %1508
  %1510 = vrot.lane.b32.xlu0 %v492, 12
  %v1511 = vpop.permute.xlu0 %1510
  %1512 = vrot.lane.b32.xlu0 %v493, 12
  %v1513 = vpop.permute.xlu0 %1512
  %1514 = vrot.lane.b32.xlu0 %v494, 12
  %v1515 = vpop.permute.xlu0 %1514
  %1516 = vrot.lane.b32.xlu0 %v495, 12
  %v1517 = vpop.permute.xlu0 %1516
  %1518 = vrot.lane.b32.xlu0 %v496, 12
  %v1519 = vpop.permute.xlu0 %1518
  %1520 = vrot.lane.b32.xlu0 %v497, 12
  %v1521 = vpop.permute.xlu0 %1520
  %1522 = vrot.lane.b32.xlu0 %v498, 12
  %v1523 = vpop.permute.xlu0 %1522
  %1652 = vrot.lane.b32.xlu0 %v499, 16
  %v1653 = vpop.permute.xlu0 %1652
  %1654 = vrot.lane.b32.xlu0 %v500, 16
  %v1655 = vpop.permute.xlu0 %1654
  %1656 = vrot.lane.b32.xlu0 %v501, 16
  %v1657 = vpop.permute.xlu0 %1656
  %1658 = vrot.lane.b32.xlu0 %v502, 16
  %v1659 = vpop.permute.xlu0 %1658
  %1660 = vrot.lane.b32.xlu0 %v503, 16
  %v1661 = vpop.permute.xlu0 %1660
  %1662 = vrot.lane.b32.xlu0 %v504, 16
  %v1663 = vpop.permute.xlu0 %1662
  %1664 = vrot.lane.b32.xlu0 %v505, 16
  %v1665 = vpop.permute.xlu0 %1664
  %1666 = vrot.lane.b32.xlu0 %v506, 16
  %v1667 = vpop.permute.xlu0 %1666
  %1668 = vrot.lane.b32.xlu0 %v507, 16
  %v1669 = vpop.permute.xlu0 %1668
  %1670 = vrot.lane.b32.xlu0 %v508, 16
  %v1671 = vpop.permute.xlu0 %1670
  %1672 = vrot.lane.b32.xlu0 %v509, 16
  %v1673 = vpop.permute.xlu0 %1672
  %1674 = vrot.lane.b32.xlu0 %v510, 16
  %v1675 = vpop.permute.xlu0 %1674
  %1676 = vrot.lane.b32.xlu0 %v511, 16
  %v1677 = vpop.permute.xlu0 %1676
  %1678 = vrot.lane.b32.xlu0 %v512, 16
  %v1679 = vpop.permute.xlu0 %1678
  %1680 = vrot.lane.b32.xlu0 %v513, 16
  %v1681 = vpop.permute.xlu0 %1680
  %1682 = vrot.lane.b32.xlu0 %v514, 16
  %v1683 = vpop.permute.xlu0 %1682
  %1684 = vrot.lane.b32.xlu0 %v515, 16
  %v1685 = vpop.permute.xlu0 %1684
  %1686 = vrot.lane.b32.xlu0 %v516, 16
  %v1687 = vpop.permute.xlu0 %1686
  %1688 = vrot.lane.b32.xlu0 %v517, 16
  %v1689 = vpop.permute.xlu0 %1688
  %1690 = vrot.lane.b32.xlu0 %v518, 16
  %v1691 = vpop.permute.xlu0 %1690
  %1692 = vrot.lane.b32.xlu0 %v519, 16
  %v1693 = vpop.permute.xlu0 %1692
  %1694 = vrot.lane.b32.xlu0 %v520, 16
  %v1695 = vpop.permute.xlu0 %1694
  %1696 = vrot.lane.b32.xlu0 %v521, 16
  %v1697 = vpop.permute.xlu0 %1696
  %1698 = vrot.lane.b32.xlu0 %v522, 16
  %v1699 = vpop.permute.xlu0 %1698
  %1700 = vrot.lane.b32.xlu0 %v523, 16
  %v1701 = vpop.permute.xlu0 %1700
  %1702 = vrot.lane.b32.xlu0 %v524, 16
  %v1703 = vpop.permute.xlu0 %1702
  %1704 = vrot.lane.b32.xlu0 %v525, 16
  %v1705 = vpop.permute.xlu0 %1704
  %1706 = vrot.lane.b32.xlu0 %v526, 16
  %v1707 = vpop.permute.xlu0 %1706
  %1708 = vrot.lane.b32.xlu0 %v527, 16
  %v1709 = vpop.permute.xlu0 %1708
  %1710 = vrot.lane.b32.xlu0 %v528, 16
  %v1711 = vpop.permute.xlu0 %1710
  %1712 = vrot.lane.b32.xlu0 %v529, 16
  %v1713 = vpop.permute.xlu0 %1712
  %1714 = vrot.lane.b32.xlu0 %v530, 16
  %v1715 = vpop.permute.xlu0 %1714
  %1716 = vrot.lane.b32.xlu0 %v531, 16
  %v1717 = vpop.permute.xlu0 %1716
  %1718 = vrot.lane.b32.xlu0 %v532, 16
  %v1719 = vpop.permute.xlu0 %1718
  %1720 = vrot.lane.b32.xlu0 %v533, 16
  %v1721 = vpop.permute.xlu0 %1720
  %1722 = vrot.lane.b32.xlu0 %v534, 16
  %v1723 = vpop.permute.xlu0 %1722
  %1724 = vrot.lane.b32.xlu0 %v535, 16
  %v1725 = vpop.permute.xlu0 %1724
  %1726 = vrot.lane.b32.xlu0 %v536, 16
  %v1727 = vpop.permute.xlu0 %1726
  %1728 = vrot.lane.b32.xlu0 %v537, 16
  %v1729 = vpop.permute.xlu0 %1728
  %1730 = vrot.lane.b32.xlu0 %v538, 16
  %v1731 = vpop.permute.xlu0 %1730
  %1732 = vrot.lane.b32.xlu0 %v539, 16
  %v1733 = vpop.permute.xlu0 %1732
  %1734 = vrot.lane.b32.xlu0 %v540, 16
  %v1735 = vpop.permute.xlu0 %1734
  %1736 = vrot.lane.b32.xlu0 %v541, 16
  %v1737 = vpop.permute.xlu0 %1736
  %1738 = vrot.lane.b32.xlu0 %v542, 16
  %v1739 = vpop.permute.xlu0 %1738
  %1740 = vrot.lane.b32.xlu0 %v543, 16
  %v1741 = vpop.permute.xlu0 %1740
  %1742 = vrot.lane.b32.xlu0 %v544, 16
  %v1743 = vpop.permute.xlu0 %1742
  %1744 = vrot.lane.b32.xlu0 %v545, 16
  %v1745 = vpop.permute.xlu0 %1744
  %1746 = vrot.lane.b32.xlu0 %v546, 16
  %v1747 = vpop.permute.xlu0 %1746
  %1748 = vrot.lane.b32.xlu0 %v547, 16
  %v1749 = vpop.permute.xlu0 %1748
  %1750 = vrot.lane.b32.xlu0 %v548, 16
  %v1751 = vpop.permute.xlu0 %1750
  %1752 = vrot.lane.b32.xlu0 %v549, 16
  %v1753 = vpop.permute.xlu0 %1752
  %1754 = vrot.lane.b32.xlu0 %v550, 16
  %v1755 = vpop.permute.xlu0 %1754
  %1756 = vrot.lane.b32.xlu0 %v551, 16
  %v1757 = vpop.permute.xlu0 %1756
  %1758 = vrot.lane.b32.xlu0 %v552, 16
  %v1759 = vpop.permute.xlu0 %1758
  %1760 = vrot.lane.b32.xlu0 %v553, 16
  %v1761 = vpop.permute.xlu0 %1760
  %1762 = vrot.lane.b32.xlu0 %v554, 16
  %v1763 = vpop.permute.xlu0 %1762
  %1764 = vrot.lane.b32.xlu0 %v555, 16
  %v1765 = vpop.permute.xlu0 %1764
  %1766 = vrot.lane.b32.xlu0 %v556, 16
  %v1767 = vpop.permute.xlu0 %1766
  %1768 = vrot.lane.b32.xlu0 %v557, 16
  %v1769 = vpop.permute.xlu0 %1768
  %1770 = vrot.lane.b32.xlu0 %v558, 16
  %v1771 = vpop.permute.xlu0 %1770
  %1772 = vrot.lane.b32.xlu0 %v559, 16
  %v1773 = vpop.permute.xlu0 %1772
  %1774 = vrot.lane.b32.xlu0 %v560, 16
  %v1775 = vpop.permute.xlu0 %1774
  %1776 = vrot.lane.b32.xlu0 %v561, 16
  %v1777 = vpop.permute.xlu0 %1776
  %1778 = vrot.lane.b32.xlu0 %v562, 16
  %v1779 = vpop.permute.xlu0 %1778
  %1908 = vrot.lane.b32.xlu0 %v563, 20
  %v1909 = vpop.permute.xlu0 %1908
  %1910 = vrot.lane.b32.xlu0 %v564, 20
  %v1911 = vpop.permute.xlu0 %1910
  %1912 = vrot.lane.b32.xlu0 %v565, 20
  %v1913 = vpop.permute.xlu0 %1912
  %1914 = vrot.lane.b32.xlu0 %v566, 20
  %v1915 = vpop.permute.xlu0 %1914
  %1916 = vrot.lane.b32.xlu0 %v567, 20
  %v1917 = vpop.permute.xlu0 %1916
  %1918 = vrot.lane.b32.xlu0 %v568, 20
  %v1919 = vpop.permute.xlu0 %1918
  %1920 = vrot.lane.b32.xlu0 %v569, 20
  %v1921 = vpop.permute.xlu0 %1920
  %1922 = vrot.lane.b32.xlu0 %v570, 20
  %v1923 = vpop.permute.xlu0 %1922
  %1924 = vrot.lane.b32.xlu0 %v571, 20
  %v1925 = vpop.permute.xlu0 %1924
  %1926 = vrot.lane.b32.xlu0 %v572, 20
  %v1927 = vpop.permute.xlu0 %1926
  %1928 = vrot.lane.b32.xlu0 %v573, 20
  %v1929 = vpop.permute.xlu0 %1928
  %1930 = vrot.lane.b32.xlu0 %v574, 20
  %v1931 = vpop.permute.xlu0 %1930
  %1932 = vrot.lane.b32.xlu0 %v575, 20
  %v1933 = vpop.permute.xlu0 %1932
  %1934 = vrot.lane.b32.xlu0 %v576, 20
  %v1935 = vpop.permute.xlu0 %1934
  %1936 = vrot.lane.b32.xlu0 %v577, 20
  %v1937 = vpop.permute.xlu0 %1936
  %1938 = vrot.lane.b32.xlu0 %v578, 20
  %v1939 = vpop.permute.xlu0 %1938
  %1940 = vrot.lane.b32.xlu0 %v579, 20
  %v1941 = vpop.permute.xlu0 %1940
  %1942 = vrot.lane.b32.xlu0 %v580, 20
  %v1943 = vpop.permute.xlu0 %1942
  %1944 = vrot.lane.b32.xlu0 %v581, 20
  %v1945 = vpop.permute.xlu0 %1944
  %1946 = vrot.lane.b32.xlu0 %v582, 20
  %v1947 = vpop.permute.xlu0 %1946
  %1948 = vrot.lane.b32.xlu0 %v583, 20
  %v1949 = vpop.permute.xlu0 %1948
  %1950 = vrot.lane.b32.xlu0 %v584, 20
  %v1951 = vpop.permute.xlu0 %1950
  %1952 = vrot.lane.b32.xlu0 %v585, 20
  %v1953 = vpop.permute.xlu0 %1952
  %1954 = vrot.lane.b32.xlu0 %v586, 20
  %v1955 = vpop.permute.xlu0 %1954
  %1956 = vrot.lane.b32.xlu0 %v587, 20
  %v1957 = vpop.permute.xlu0 %1956
  %1958 = vrot.lane.b32.xlu0 %v588, 20
  %v1959 = vpop.permute.xlu0 %1958
  %1960 = vrot.lane.b32.xlu0 %v589, 20
  %v1961 = vpop.permute.xlu0 %1960
  %1962 = vrot.lane.b32.xlu0 %v590, 20
  %v1963 = vpop.permute.xlu0 %1962
  %1964 = vrot.lane.b32.xlu0 %v591, 20
  %v1965 = vpop.permute.xlu0 %1964
  %1966 = vrot.lane.b32.xlu0 %v592, 20
  %v1967 = vpop.permute.xlu0 %1966
  %1968 = vrot.lane.b32.xlu0 %v593, 20
  %v1969 = vpop.permute.xlu0 %1968
  %1970 = vrot.lane.b32.xlu0 %v594, 20
  %v1971 = vpop.permute.xlu0 %1970
  %1972 = vrot.lane.b32.xlu0 %v595, 20
  %v1973 = vpop.permute.xlu0 %1972
  %1974 = vrot.lane.b32.xlu0 %v596, 20
  %v1975 = vpop.permute.xlu0 %1974
  %1976 = vrot.lane.b32.xlu0 %v597, 20
  %v1977 = vpop.permute.xlu0 %1976
  %1978 = vrot.lane.b32.xlu0 %v598, 20
  %v1979 = vpop.permute.xlu0 %1978
  %1980 = vrot.lane.b32.xlu0 %v599, 20
  %v1981 = vpop.permute.xlu0 %1980
  %1982 = vrot.lane.b32.xlu0 %v600, 20
  %v1983 = vpop.permute.xlu0 %1982
  %1984 = vrot.lane.b32.xlu0 %v601, 20
  %v1985 = vpop.permute.xlu0 %1984
  %1986 = vrot.lane.b32.xlu0 %v602, 20
  %v1987 = vpop.permute.xlu0 %1986
  %1988 = vrot.lane.b32.xlu0 %v603, 20
  %v1989 = vpop.permute.xlu0 %1988
  %1990 = vrot.lane.b32.xlu0 %v604, 20
  %v1991 = vpop.permute.xlu0 %1990
  %1992 = vrot.lane.b32.xlu0 %v605, 20
  %v1993 = vpop.permute.xlu0 %1992
  %1994 = vrot.lane.b32.xlu0 %v606, 20
  %v1995 = vpop.permute.xlu0 %1994
  %1996 = vrot.lane.b32.xlu0 %v607, 20
  %v1997 = vpop.permute.xlu0 %1996
  %1998 = vrot.lane.b32.xlu0 %v608, 20
  %v1999 = vpop.permute.xlu0 %1998
  %2000 = vrot.lane.b32.xlu0 %v609, 20
  %v2001 = vpop.permute.xlu0 %2000
  %2002 = vrot.lane.b32.xlu0 %v610, 20
  %v2003 = vpop.permute.xlu0 %2002
  %2004 = vrot.lane.b32.xlu0 %v611, 20
  %v2005 = vpop.permute.xlu0 %2004
  %2006 = vrot.lane.b32.xlu0 %v612, 20
  %v2007 = vpop.permute.xlu0 %2006
  %2008 = vrot.lane.b32.xlu0 %v613, 20
  %v2009 = vpop.permute.xlu0 %2008
  %2010 = vrot.lane.b32.xlu0 %v614, 20
  %v2011 = vpop.permute.xlu0 %2010
  %2012 = vrot.lane.b32.xlu0 %v615, 20
  %v2013 = vpop.permute.xlu0 %2012
  %2014 = vrot.lane.b32.xlu0 %v616, 20
  %v2015 = vpop.permute.xlu0 %2014
  %2016 = vrot.lane.b32.xlu0 %v617, 20
  %v2017 = vpop.permute.xlu0 %2016
  %2018 = vrot.lane.b32.xlu0 %v618, 20
  %v2019 = vpop.permute.xlu0 %2018
  %2020 = vrot.lane.b32.xlu0 %v619, 20
  %v2021 = vpop.permute.xlu0 %2020
  %2022 = vrot.lane.b32.xlu0 %v620, 20
  %v2023 = vpop.permute.xlu0 %2022
  %2024 = vrot.lane.b32.xlu0 %v621, 20
  %v2025 = vpop.permute.xlu0 %2024
  %2026 = vrot.lane.b32.xlu0 %v622, 20
  %v2027 = vpop.permute.xlu0 %2026
  %2028 = vrot.lane.b32.xlu0 %v623, 20
  %v2029 = vpop.permute.xlu0 %2028
  %2030 = vrot.lane.b32.xlu0 %v624, 20
  %v2031 = vpop.permute.xlu0 %2030
  %2032 = vrot.lane.b32.xlu0 %v625, 20
  %v2033 = vpop.permute.xlu0 %2032
  %2034 = vrot.lane.b32.xlu0 %v626, 20
  %v2035 = vpop.permute.xlu0 %2034
  %2164 = vrot.lane.b32.xlu0 %v628, 24
  %v2165 = vpop.permute.xlu0 %2164
  %2166 = vrot.lane.b32.xlu0 %v629, 24
  %v2167 = vpop.permute.xlu0 %2166
  %2168 = vrot.lane.b32.xlu0 %v630, 24
  %v2169 = vpop.permute.xlu0 %2168
  %2170 = vrot.lane.b32.xlu0 %v631, 24
  %v2171 = vpop.permute.xlu0 %2170
  %2172 = vrot.lane.b32.xlu0 %v632, 24
  %v2173 = vpop.permute.xlu0 %2172
  %2174 = vrot.lane.b32.xlu0 %v633, 24
  %v2175 = vpop.permute.xlu0 %2174
  %2176 = vrot.lane.b32.xlu0 %v634, 24
  %v2177 = vpop.permute.xlu0 %2176
  %2178 = vrot.lane.b32.xlu0 %v635, 24
  %v2179 = vpop.permute.xlu0 %2178
  %2180 = vrot.lane.b32.xlu0 %v636, 24
  %v2181 = vpop.permute.xlu0 %2180
  %2182 = vrot.lane.b32.xlu0 %v637, 24
  %v2183 = vpop.permute.xlu0 %2182
  %2184 = vrot.lane.b32.xlu0 %v638, 24
  %v2185 = vpop.permute.xlu0 %2184
  %2186 = vrot.lane.b32.xlu0 %v639, 24
  %v2187 = vpop.permute.xlu0 %2186
  %2188 = vrot.lane.b32.xlu0 %v640, 24
  %v2189 = vpop.permute.xlu0 %2188
  %2190 = vrot.lane.b32.xlu0 %v641, 24
  %v2191 = vpop.permute.xlu0 %2190
  %2192 = vrot.lane.b32.xlu0 %v642, 24
  %v2193 = vpop.permute.xlu0 %2192
  %2194 = vrot.lane.b32.xlu0 %v643, 24
  %v2195 = vpop.permute.xlu0 %2194
  %2196 = vrot.lane.b32.xlu0 %v644, 24
  %v2197 = vpop.permute.xlu0 %2196
  %2198 = vrot.lane.b32.xlu0 %v645, 24
  %v2199 = vpop.permute.xlu0 %2198
  %2200 = vrot.lane.b32.xlu0 %v646, 24
  %v2201 = vpop.permute.xlu0 %2200
  %2202 = vrot.lane.b32.xlu0 %v647, 24
  %v2203 = vpop.permute.xlu0 %2202
  %2204 = vrot.lane.b32.xlu0 %v648, 24
  %v2205 = vpop.permute.xlu0 %2204
  %2206 = vrot.lane.b32.xlu0 %v649, 24
  %v2207 = vpop.permute.xlu0 %2206
  %2208 = vrot.lane.b32.xlu0 %v650, 24
  %v2209 = vpop.permute.xlu0 %2208
  %2210 = vrot.lane.b32.xlu0 %v651, 24
  %v2211 = vpop.permute.xlu0 %2210
  %2212 = vrot.lane.b32.xlu0 %v652, 24
  %v2213 = vpop.permute.xlu0 %2212
  %2214 = vrot.lane.b32.xlu0 %v653, 24
  %v2215 = vpop.permute.xlu0 %2214
  %2216 = vrot.lane.b32.xlu0 %v654, 24
  %v2217 = vpop.permute.xlu0 %2216
  %2218 = vrot.lane.b32.xlu0 %v655, 24
  %v2219 = vpop.permute.xlu0 %2218
  %2220 = vrot.lane.b32.xlu0 %v656, 24
  %v2221 = vpop.permute.xlu0 %2220
  %2222 = vrot.lane.b32.xlu0 %v657, 24
  %v2223 = vpop.permute.xlu0 %2222
  %2224 = vrot.lane.b32.xlu0 %v658, 24
  %v2225 = vpop.permute.xlu0 %2224
  %2226 = vrot.lane.b32.xlu0 %v659, 24
  %v2227 = vpop.permute.xlu0 %2226
  %2228 = vrot.lane.b32.xlu0 %v660, 24
  %v2229 = vpop.permute.xlu0 %2228
  %2230 = vrot.lane.b32.xlu0 %v661, 24
  %v2231 = vpop.permute.xlu0 %2230
  %2232 = vrot.lane.b32.xlu0 %v662, 24
  %v2233 = vpop.permute.xlu0 %2232
  %2234 = vrot.lane.b32.xlu0 %v663, 24
  %v2235 = vpop.permute.xlu0 %2234
  %2236 = vrot.lane.b32.xlu0 %v664, 24
  %v2237 = vpop.permute.xlu0 %2236
  %2238 = vrot.lane.b32.xlu0 %v665, 24
  %v2239 = vpop.permute.xlu0 %2238
  %2240 = vrot.lane.b32.xlu0 %v666, 24
  %v2241 = vpop.permute.xlu0 %2240
  %2242 = vrot.lane.b32.xlu0 %v667, 24
  %v2243 = vpop.permute.xlu0 %2242
  %2244 = vrot.lane.b32.xlu0 %v668, 24
  %v2245 = vpop.permute.xlu0 %2244
  %2246 = vrot.lane.b32.xlu0 %v669, 24
  %v2247 = vpop.permute.xlu0 %2246
  %2248 = vrot.lane.b32.xlu0 %v670, 24
  %v2249 = vpop.permute.xlu0 %2248
  %2250 = vrot.lane.b32.xlu0 %v671, 24
  %v2251 = vpop.permute.xlu0 %2250
  %2252 = vrot.lane.b32.xlu0 %v672, 24
  %v2253 = vpop.permute.xlu0 %2252
  %2254 = vrot.lane.b32.xlu0 %v673, 24
  %v2255 = vpop.permute.xlu0 %2254
  %2256 = vrot.lane.b32.xlu0 %v674, 24
  %v2257 = vpop.permute.xlu0 %2256
  %2258 = vrot.lane.b32.xlu0 %v675, 24
  %v2259 = vpop.permute.xlu0 %2258
  %2260 = vrot.lane.b32.xlu0 %v676, 24
  %v2261 = vpop.permute.xlu0 %2260
  %2262 = vrot.lane.b32.xlu0 %v677, 24
  %v2263 = vpop.permute.xlu0 %2262
  %2264 = vrot.lane.b32.xlu0 %v678, 24
  %v2265 = vpop.permute.xlu0 %2264
  %2266 = vrot.lane.b32.xlu0 %v679, 24
  %v2267 = vpop.permute.xlu0 %2266
  %2268 = vrot.lane.b32.xlu0 %v680, 24
  %v2269 = vpop.permute.xlu0 %2268
  %2270 = vrot.lane.b32.xlu0 %v681, 24
  %v2271 = vpop.permute.xlu0 %2270
  %2272 = vrot.lane.b32.xlu0 %v682, 24
  %v2273 = vpop.permute.xlu0 %2272
  %2274 = vrot.lane.b32.xlu0 %v683, 24
  %v2275 = vpop.permute.xlu0 %2274
  %2276 = vrot.lane.b32.xlu0 %v684, 24
  %v2277 = vpop.permute.xlu0 %2276
  %2278 = vrot.lane.b32.xlu0 %v685, 24
  %v2279 = vpop.permute.xlu0 %2278
  %2280 = vrot.lane.b32.xlu0 %v686, 24
  %v2281 = vpop.permute.xlu0 %2280
  %2282 = vrot.lane.b32.xlu0 %v687, 24
  %v2283 = vpop.permute.xlu0 %2282
  %2284 = vrot.lane.b32.xlu0 %v688, 24
  %v2285 = vpop.permute.xlu0 %2284
  %2286 = vrot.lane.b32.xlu0 %v689, 24
  %v2287 = vpop.permute.xlu0 %2286
  %2288 = vrot.lane.b32.xlu0 %v690, 24
  %v2289 = vpop.permute.xlu0 %2288
  %2290 = vrot.lane.b32.xlu0 %v691, 24
  %v2291 = vpop.permute.xlu0 %2290
  %2420 = vrot.lane.b32.xlu0 %v692, 28
  %v2421 = vpop.permute.xlu0 %2420
  %2422 = vrot.lane.b32.xlu0 %v693, 28
  %v2423 = vpop.permute.xlu0 %2422
  %2424 = vrot.lane.b32.xlu0 %v694, 28
  %v2425 = vpop.permute.xlu0 %2424
  %2426 = vrot.lane.b32.xlu0 %v695, 28
  %v2427 = vpop.permute.xlu0 %2426
  %2428 = vrot.lane.b32.xlu0 %v696, 28
  %v2429 = vpop.permute.xlu0 %2428
  %2430 = vrot.lane.b32.xlu0 %v697, 28
  %v2431 = vpop.permute.xlu0 %2430
  %2432 = vrot.lane.b32.xlu0 %v698, 28
  %v2433 = vpop.permute.xlu0 %2432
  %2434 = vrot.lane.b32.xlu0 %v699, 28
  %v2435 = vpop.permute.xlu0 %2434
  %2436 = vrot.lane.b32.xlu0 %v700, 28
  %v2437 = vpop.permute.xlu0 %2436
  %2438 = vrot.lane.b32.xlu0 %v701, 28
  %v2439 = vpop.permute.xlu0 %2438
  %2440 = vrot.lane.b32.xlu0 %v702, 28
  %v2441 = vpop.permute.xlu0 %2440
  %2442 = vrot.lane.b32.xlu0 %v703, 28
  %v2443 = vpop.permute.xlu0 %2442
  %2444 = vrot.lane.b32.xlu0 %v704, 28
  %v2445 = vpop.permute.xlu0 %2444
  %2446 = vrot.lane.b32.xlu0 %v705, 28
  %v2447 = vpop.permute.xlu0 %2446
  %2448 = vrot.lane.b32.xlu0 %v706, 28
  %v2449 = vpop.permute.xlu0 %2448
  %2450 = vrot.lane.b32.xlu0 %v707, 28
  %v2451 = vpop.permute.xlu0 %2450
  %2452 = vrot.lane.b32.xlu0 %v708, 28
  %v2453 = vpop.permute.xlu0 %2452
  %2454 = vrot.lane.b32.xlu0 %v709, 28
  %v2455 = vpop.permute.xlu0 %2454
  %2456 = vrot.lane.b32.xlu0 %v710, 28
  %v2457 = vpop.permute.xlu0 %2456
  %2458 = vrot.lane.b32.xlu0 %v711, 28
  %v2459 = vpop.permute.xlu0 %2458
  %2460 = vrot.lane.b32.xlu0 %v712, 28
  %v2461 = vpop.permute.xlu0 %2460
  %2462 = vrot.lane.b32.xlu0 %v713, 28
  %v2463 = vpop.permute.xlu0 %2462
  %2464 = vrot.lane.b32.xlu0 %v714, 28
  %v2465 = vpop.permute.xlu0 %2464
  %2466 = vrot.lane.b32.xlu0 %v715, 28
  %v2467 = vpop.permute.xlu0 %2466
  %2468 = vrot.lane.b32.xlu0 %v716, 28
  %v2469 = vpop.permute.xlu0 %2468
  %2470 = vrot.lane.b32.xlu0 %v717, 28
  %v2471 = vpop.permute.xlu0 %2470
  %2472 = vrot.lane.b32.xlu0 %v718, 28
  %v2473 = vpop.permute.xlu0 %2472
  %2474 = vrot.lane.b32.xlu0 %v719, 28
  %v2475 = vpop.permute.xlu0 %2474
  %2476 = vrot.lane.b32.xlu0 %v720, 28
  %v2477 = vpop.permute.xlu0 %2476
  %2478 = vrot.lane.b32.xlu0 %v721, 28
  %v2479 = vpop.permute.xlu0 %2478
  %2480 = vrot.lane.b32.xlu0 %v722, 28
  %v2481 = vpop.permute.xlu0 %2480
  %2482 = vrot.lane.b32.xlu0 %v723, 28
  %v2483 = vpop.permute.xlu0 %2482
  %2484 = vrot.lane.b32.xlu0 %v724, 28
  %v2485 = vpop.permute.xlu0 %2484
  %2486 = vrot.lane.b32.xlu0 %v725, 28
  %v2487 = vpop.permute.xlu0 %2486
  %2488 = vrot.lane.b32.xlu0 %v726, 28
  %v2489 = vpop.permute.xlu0 %2488
  %2490 = vrot.lane.b32.xlu0 %v727, 28
  %v2491 = vpop.permute.xlu0 %2490
  %2492 = vrot.lane.b32.xlu0 %v728, 28
  %v2493 = vpop.permute.xlu0 %2492
  %2494 = vrot.lane.b32.xlu0 %v729, 28
  %v2495 = vpop.permute.xlu0 %2494
  %2496 = vrot.lane.b32.xlu0 %v730, 28
  %v2497 = vpop.permute.xlu0 %2496
  %2498 = vrot.lane.b32.xlu0 %v731, 28
  %v2499 = vpop.permute.xlu0 %2498
  %2500 = vrot.lane.b32.xlu0 %v732, 28
  %v2501 = vpop.permute.xlu0 %2500
  %2502 = vrot.lane.b32.xlu0 %v733, 28
  %v2503 = vpop.permute.xlu0 %2502
  %2504 = vrot.lane.b32.xlu0 %v734, 28
  %v2505 = vpop.permute.xlu0 %2504
  %2506 = vrot.lane.b32.xlu0 %v735, 28
  %v2507 = vpop.permute.xlu0 %2506
  %2508 = vrot.lane.b32.xlu0 %v736, 28
  %v2509 = vpop.permute.xlu0 %2508
  %2510 = vrot.lane.b32.xlu0 %v737, 28
  %v2511 = vpop.permute.xlu0 %2510
  %2512 = vrot.lane.b32.xlu0 %v738, 28
  %v2513 = vpop.permute.xlu0 %2512
  %2514 = vrot.lane.b32.xlu0 %v739, 28
  %v2515 = vpop.permute.xlu0 %2514
  %2516 = vrot.lane.b32.xlu0 %v740, 28
  %v2517 = vpop.permute.xlu0 %2516
  %2518 = vrot.lane.b32.xlu0 %v741, 28
  %v2519 = vpop.permute.xlu0 %2518
  %2520 = vrot.lane.b32.xlu0 %v742, 28
  %v2521 = vpop.permute.xlu0 %2520
  %2522 = vrot.lane.b32.xlu0 %v743, 28
  %v2523 = vpop.permute.xlu0 %2522
  %2524 = vrot.lane.b32.xlu0 %v744, 28
  %v2525 = vpop.permute.xlu0 %2524
  %2526 = vrot.lane.b32.xlu0 %v745, 28
  %v2527 = vpop.permute.xlu0 %2526
  %2528 = vrot.lane.b32.xlu0 %v746, 28
  %v2529 = vpop.permute.xlu0 %2528
  %2530 = vrot.lane.b32.xlu0 %v747, 28
  %v2531 = vpop.permute.xlu0 %2530
  %2532 = vrot.lane.b32.xlu0 %v748, 28
  %v2533 = vpop.permute.xlu0 %2532
  %2534 = vrot.lane.b32.xlu0 %v749, 28
  %v2535 = vpop.permute.xlu0 %2534
  %2536 = vrot.lane.b32.xlu0 %v750, 28
  %v2537 = vpop.permute.xlu0 %2536
  %2538 = vrot.lane.b32.xlu0 %v751, 28
  %v2539 = vpop.permute.xlu0 %2538
  %2540 = vrot.lane.b32.xlu0 %v752, 28
  %v2541 = vpop.permute.xlu0 %2540
  %2542 = vrot.lane.b32.xlu0 %v753, 28
  %v2543 = vpop.permute.xlu0 %2542
  %2544 = vrot.lane.b32.xlu0 %v754, 28
  %v2545 = vpop.permute.xlu0 %2544
  %2546 = vrot.lane.b32.xlu0 %v755, 28
  %v2547 = vpop.permute.xlu0 %2546
  %2676 = vrot.lane.b32.xlu0 %v756, 32
  %v2677 = vpop.permute.xlu0 %2676
  %2678 = vrot.lane.b32.xlu0 %v757, 32
  %v2679 = vpop.permute.xlu0 %2678
  %2680 = vrot.lane.b32.xlu0 %v758, 32
  %v2681 = vpop.permute.xlu0 %2680
  %2682 = vrot.lane.b32.xlu0 %v759, 32
  %v2683 = vpop.permute.xlu0 %2682
  %2684 = vrot.lane.b32.xlu0 %v760, 32
  %v2685 = vpop.permute.xlu0 %2684
  %2686 = vrot.lane.b32.xlu0 %v761, 32
  %v2687 = vpop.permute.xlu0 %2686
  %2688 = vrot.lane.b32.xlu0 %v762, 32
  %v2689 = vpop.permute.xlu0 %2688
  %2690 = vrot.lane.b32.xlu0 %v763, 32
  %v2691 = vpop.permute.xlu0 %2690
  %2692 = vrot.lane.b32.xlu0 %v764, 32
  %v2693 = vpop.permute.xlu0 %2692
  %2694 = vrot.lane.b32.xlu0 %v765, 32
  %v2695 = vpop.permute.xlu0 %2694
  %2696 = vrot.lane.b32.xlu0 %v766, 32
  %v2697 = vpop.permute.xlu0 %2696
  %2698 = vrot.lane.b32.xlu0 %v767, 32
  %v2699 = vpop.permute.xlu0 %2698
  %2700 = vrot.lane.b32.xlu0 %v768, 32
  %v2701 = vpop.permute.xlu0 %2700
  %2702 = vrot.lane.b32.xlu0 %v769, 32
  %v2703 = vpop.permute.xlu0 %2702
  %2704 = vrot.lane.b32.xlu0 %v770, 32
  %v2705 = vpop.permute.xlu0 %2704
  %2706 = vrot.lane.b32.xlu0 %v771, 32
  %v2707 = vpop.permute.xlu0 %2706
  %2708 = vrot.lane.b32.xlu0 %v772, 32
  %v2709 = vpop.permute.xlu0 %2708
  %2710 = vrot.lane.b32.xlu0 %v773, 32
  %v2711 = vpop.permute.xlu0 %2710
  %2712 = vrot.lane.b32.xlu0 %v774, 32
  %v2713 = vpop.permute.xlu0 %2712
  %2714 = vrot.lane.b32.xlu0 %v775, 32
  %v2715 = vpop.permute.xlu0 %2714
  %2716 = vrot.lane.b32.xlu0 %v776, 32
  %v2717 = vpop.permute.xlu0 %2716
  %2718 = vrot.lane.b32.xlu0 %v777, 32
  %v2719 = vpop.permute.xlu0 %2718
  %2720 = vrot.lane.b32.xlu0 %v778, 32
  %v2721 = vpop.permute.xlu0 %2720
  %2722 = vrot.lane.b32.xlu0 %v779, 32
  %v2723 = vpop.permute.xlu0 %2722
  %2724 = vrot.lane.b32.xlu0 %v780, 32
  %v2725 = vpop.permute.xlu0 %2724
  %2726 = vrot.lane.b32.xlu0 %v781, 32
  %v2727 = vpop.permute.xlu0 %2726
  %2728 = vrot.lane.b32.xlu0 %v782, 32
  %v2729 = vpop.permute.xlu0 %2728
  %2730 = vrot.lane.b32.xlu0 %v783, 32
  %v2731 = vpop.permute.xlu0 %2730
  %2732 = vrot.lane.b32.xlu0 %v784, 32
  %v2733 = vpop.permute.xlu0 %2732
  %2734 = vrot.lane.b32.xlu0 %v785, 32
  %v2735 = vpop.permute.xlu0 %2734
  %2736 = vrot.lane.b32.xlu0 %v786, 32
  %v2737 = vpop.permute.xlu0 %2736
  %2738 = vrot.lane.b32.xlu0 %v787, 32
  %v2739 = vpop.permute.xlu0 %2738
  %2740 = vrot.lane.b32.xlu0 %v788, 32
  %v2741 = vpop.permute.xlu0 %2740
  %2742 = vrot.lane.b32.xlu0 %v789, 32
  %v2743 = vpop.permute.xlu0 %2742
  %2744 = vrot.lane.b32.xlu0 %v790, 32
  %v2745 = vpop.permute.xlu0 %2744
  %2746 = vrot.lane.b32.xlu0 %v791, 32
  %v2747 = vpop.permute.xlu0 %2746
  %2748 = vrot.lane.b32.xlu0 %v792, 32
  %v2749 = vpop.permute.xlu0 %2748
  %2750 = vrot.lane.b32.xlu0 %v793, 32
  %v2751 = vpop.permute.xlu0 %2750
  %2752 = vrot.lane.b32.xlu0 %v794, 32
  %v2753 = vpop.permute.xlu0 %2752
  %2754 = vrot.lane.b32.xlu0 %v795, 32
  %v2755 = vpop.permute.xlu0 %2754
  %2756 = vrot.lane.b32.xlu0 %v796, 32
  %v2757 = vpop.permute.xlu0 %2756
  %2758 = vrot.lane.b32.xlu0 %v797, 32
  %v2759 = vpop.permute.xlu0 %2758
  %2760 = vrot.lane.b32.xlu0 %v798, 32
  %v2761 = vpop.permute.xlu0 %2760
  %2762 = vrot.lane.b32.xlu0 %v799, 32
  %v2763 = vpop.permute.xlu0 %2762
  %2764 = vrot.lane.b32.xlu0 %v800, 32
  %v2765 = vpop.permute.xlu0 %2764
  %2766 = vrot.lane.b32.xlu0 %v801, 32
  %v2767 = vpop.permute.xlu0 %2766
  %2768 = vrot.lane.b32.xlu0 %v802, 32
  %v2769 = vpop.permute.xlu0 %2768
  %2770 = vrot.lane.b32.xlu0 %v803, 32
  %v2771 = vpop.permute.xlu0 %2770
  %2772 = vrot.lane.b32.xlu0 %v804, 32
  %v2773 = vpop.permute.xlu0 %2772
  %2774 = vrot.lane.b32.xlu0 %v805, 32
  %v2775 = vpop.permute.xlu0 %2774
  %2776 = vrot.lane.b32.xlu0 %v806, 32
  %v2777 = vpop.permute.xlu0 %2776
  %2778 = vrot.lane.b32.xlu0 %v807, 32
  %v2779 = vpop.permute.xlu0 %2778
  %2780 = vrot.lane.b32.xlu0 %v808, 32
  %v2781 = vpop.permute.xlu0 %2780
  %2782 = vrot.lane.b32.xlu0 %v809, 32
  %v2783 = vpop.permute.xlu0 %2782
  %2784 = vrot.lane.b32.xlu0 %v810, 32
  %v2785 = vpop.permute.xlu0 %2784
  %2786 = vrot.lane.b32.xlu0 %v811, 32
  %v2787 = vpop.permute.xlu0 %2786
  %2788 = vrot.lane.b32.xlu0 %v812, 32
  %v2789 = vpop.permute.xlu0 %2788
  %2790 = vrot.lane.b32.xlu0 %v813, 32
  %v2791 = vpop.permute.xlu0 %2790
  %2792 = vrot.lane.b32.xlu0 %v814, 32
  %v2793 = vpop.permute.xlu0 %2792
  %2794 = vrot.lane.b32.xlu0 %v815, 32
  %v2795 = vpop.permute.xlu0 %2794
  %2796 = vrot.lane.b32.xlu0 %v816, 32
  %v2797 = vpop.permute.xlu0 %2796
  %2798 = vrot.lane.b32.xlu0 %v817, 32
  %v2799 = vpop.permute.xlu0 %2798
  %2800 = vrot.lane.b32.xlu0 %v818, 32
  %v2801 = vpop.permute.xlu0 %2800
  %2802 = vrot.lane.b32.xlu0 %v819, 32
  %v2803 = vpop.permute.xlu0 %2802
  %v2868 = vsel %vm26, %v243, %v885
  %v2869 = vsel %vm26, %v244, %v887
  %v2870 = vsel %vm26, %v245, %v889
  %v2871 = vsel %vm26, %v246, %v891
  %v2872 = vsel %vm26, %v247, %v893
  %v2873 = vsel %vm26, %v248, %v895
  %v2874 = vsel %vm26, %v249, %v897
  %v2875 = vsel %vm26, %v250, %v899
  %v2876 = vsel %vm26, %v251, %v901
  %v2877 = vsel %vm26, %v252, %v903
  %v2878 = vsel %vm26, %v253, %v905
  %v2879 = vsel %vm26, %v254, %v907
  %v2880 = vsel %vm26, %v255, %v909
  %v2881 = vsel %vm26, %v256, %v911
  %v2882 = vsel %vm26, %v257, %v913
  %v2883 = vsel %vm26, %v258, %v915
  %v2884 = vsel %vm26, %v259, %v917
  %v2885 = vsel %vm26, %v260, %v919
  %v2886 = vsel %vm26, %v261, %v921
  %v2887 = vsel %vm26, %v262, %v923
  %v2888 = vsel %vm26, %v263, %v925
  %v2889 = vsel %vm26, %v264, %v927
  %v2890 = vsel %vm26, %v265, %v929
  %v2891 = vsel %vm26, %v266, %v931
  %v2892 = vsel %vm26, %v267, %v933
  %v2893 = vsel %vm26, %v268, %v935
  %v2894 = vsel %vm26, %v269, %v937
  %v2895 = vsel %vm26, %v270, %v939
  %v2896 = vsel %vm26, %v271, %v941
  %v2897 = vsel %vm26, %v272, %v943
  %v2898 = vsel %vm26, %v273, %v945
  %v2899 = vsel %vm26, %v274, %v947
  %v2900 = vsel %vm26, %v275, %v949
  %v2901 = vsel %vm26, %v276, %v951
  %v2902 = vsel %vm26, %v277, %v953
  %v2903 = vsel %vm26, %v278, %v955
  %v2904 = vsel %vm26, %v279, %v957
  %v2905 = vsel %vm26, %v280, %v959
  %v2906 = vsel %vm26, %v281, %v961
  %v2907 = vsel %vm26, %v282, %v963
  %v2908 = vsel %vm26, %v283, %v965
  %v2909 = vsel %vm26, %v284, %v967
  %v2910 = vsel %vm26, %v285, %v969
  %v2911 = vsel %vm26, %v286, %v971
  %v2912 = vsel %vm26, %v287, %v973
  %v2913 = vsel %vm26, %v288, %v975
  %v2914 = vsel %vm26, %v289, %v977
  %v2915 = vsel %vm26, %v290, %v979
  %v2916 = vsel %vm26, %v291, %v981
  %v2917 = vsel %vm26, %v292, %v983
  %v2918 = vsel %vm26, %v293, %v985
  %v2919 = vsel %vm26, %v294, %v987
  %v2920 = vsel %vm26, %v295, %v989
  %v2921 = vsel %vm26, %v296, %v991
  %v2922 = vsel %vm26, %v297, %v993
  %v2923 = vsel %vm26, %v298, %v995
  %v2924 = vsel %vm26, %v299, %v997
  %v2925 = vsel %vm26, %v300, %v999
  %v2926 = vsel %vm26, %v301, %v1001
  %v2927 = vsel %vm26, %v302, %v1003
  %v2928 = vsel %vm26, %v303, %v1005
  %v2929 = vsel %vm26, %v304, %v1007
  %v2930 = vsel %vm26, %v305, %v1009
  %v2931 = vsel %vm26, %v306, %v1011
  %vm2932 = vcmask 64512
  %v2933 = vsel %vm2932, %v2868, %v1141
  %v2934 = vsel %vm2932, %v2869, %v1143
  %v2935 = vsel %vm2932, %v2870, %v1145
  %v2936 = vsel %vm2932, %v2871, %v1147
  %v2937 = vsel %vm2932, %v2872, %v1149
  %v2938 = vsel %vm2932, %v2873, %v1151
  %v2939 = vsel %vm2932, %v2874, %v1153
  %v2940 = vsel %vm2932, %v2875, %v1155
  %v2941 = vsel %vm2932, %v2876, %v1157
  %v2942 = vsel %vm2932, %v2877, %v1159
  %v2943 = vsel %vm2932, %v2878, %v1161
  %v2944 = vsel %vm2932, %v2879, %v1163
  %v2945 = vsel %vm2932, %v2880, %v1165
  %v2946 = vsel %vm2932, %v2881, %v1167
  %v2947 = vsel %vm2932, %v2882, %v1169
  %v2948 = vsel %vm2932, %v2883, %v1171
  %v2949 = vsel %vm2932, %v2884, %v1173
  %v2950 = vsel %vm2932, %v2885, %v1175
  %v2951 = vsel %vm2932, %v2886, %v1177
  %v2952 = vsel %vm2932, %v2887, %v1179
  %v2953 = vsel %vm2932, %v2888, %v1181
  %v2954 = vsel %vm2932, %v2889, %v1183
  %v2955 = vsel %vm2932, %v2890, %v1185
  %v2956 = vsel %vm2932, %v2891, %v1187
  %v2957 = vsel %vm2932, %v2892, %v1189
  %v2958 = vsel %vm2932, %v2893, %v1191
  %v2959 = vsel %vm2932, %v2894, %v1193
  %v2960 = vsel %vm2932, %v2895, %v1195
  %v2961 = vsel %vm2932, %v2896, %v1197
  %v2962 = vsel %vm2932, %v2897, %v1199
  %v2963 = vsel %vm2932, %v2898, %v1201
  %v2964 = vsel %vm2932, %v2899, %v1203
  %v2965 = vsel %vm2932, %v2900, %v1205
  %v2966 = vsel %vm2932, %v2901, %v1207
  %v2967 = vsel %vm2932, %v2902, %v1209
  %v2968 = vsel %vm2932, %v2903, %v1211
  %v2969 = vsel %vm2932, %v2904, %v1213
  %v2970 = vsel %vm2932, %v2905, %v1215
  %v2971 = vsel %vm2932, %v2906, %v1217
  %v2972 = vsel %vm2932, %v2907, %v1219
  %v2973 = vsel %vm2932, %v2908, %v1221
  %v2974 = vsel %vm2932, %v2909, %v1223
  %v2975 = vsel %vm2932, %v2910, %v1225
  %v2976 = vsel %vm2932, %v2911, %v1227
  %v2977 = vsel %vm2932, %v2912, %v1229
  %v2978 = vsel %vm2932, %v2913, %v1231
  %v2979 = vsel %vm2932, %v2914, %v1233
  %v2980 = vsel %vm2932, %v2915, %v1235
  %v2981 = vsel %vm2932, %v2916, %v1237
  %v2982 = vsel %vm2932, %v2917, %v1239
  %v2983 = vsel %vm2932, %v2918, %v1241
  %v2984 = vsel %vm2932, %v2919, %v1243
  %v2985 = vsel %vm2932, %v2920, %v1245
  %v2986 = vsel %vm2932, %v2921, %v1247
  %v2987 = vsel %vm2932, %v2922, %v1249
  %v2988 = vsel %vm2932, %v2923, %v1251
  %v2989 = vsel %vm2932, %v2924, %v1253
  %v2990 = vsel %vm2932, %v2925, %v1255
  %v2991 = vsel %vm2932, %v2926, %v1257
  %v2992 = vsel %vm2932, %v2927, %v1259
  %v2993 = vsel %vm2932, %v2928, %v1261
  %v2994 = vsel %vm2932, %v2929, %v1263
  %v2995 = vsel %vm2932, %v2930, %v1265
  %v2996 = vsel %vm2932, %v2931, %v1267
  %vm2997 = vcmask 97280
  %v2998 = vsel %vm2997, %v2933, %v1397
  %v2999 = vsel %vm2997, %v2934, %v1399
  %v3000 = vsel %vm2997, %v2935, %v1401
  %v3001 = vsel %vm2997, %v2936, %v1403
  %v3002 = vsel %vm2997, %v2937, %v1405
  %v3003 = vsel %vm2997, %v2938, %v1407
  %v3004 = vsel %vm2997, %v2939, %v1409
  %v3005 = vsel %vm2997, %v2940, %v1411
  %v3006 = vsel %vm2997, %v2941, %v1413
  %v3007 = vsel %vm2997, %v2942, %v1415
  %v3008 = vsel %vm2997, %v2943, %v1417
  %v3009 = vsel %vm2997, %v2944, %v1419
  %v3010 = vsel %vm2997, %v2945, %v1421
  %v3011 = vsel %vm2997, %v2946, %v1423
  %v3012 = vsel %vm2997, %v2947, %v1425
  %v3013 = vsel %vm2997, %v2948, %v1427
  %v3014 = vsel %vm2997, %v2949, %v1429
  %v3015 = vsel %vm2997, %v2950, %v1431
  %v3016 = vsel %vm2997, %v2951, %v1433
  %v3017 = vsel %vm2997, %v2952, %v1435
  %v3018 = vsel %vm2997, %v2953, %v1437
  %v3019 = vsel %vm2997, %v2954, %v1439
  %v3020 = vsel %vm2997, %v2955, %v1441
  %v3021 = vsel %vm2997, %v2956, %v1443
  %v3022 = vsel %vm2997, %v2957, %v1445
  %v3023 = vsel %vm2997, %v2958, %v1447
  %v3024 = vsel %vm2997, %v2959, %v1449
  %v3025 = vsel %vm2997, %v2960, %v1451
  %v3026 = vsel %vm2997, %v2961, %v1453
  %v3027 = vsel %vm2997, %v2962, %v1455
  %v3028 = vsel %vm2997, %v2963, %v1457
  %v3029 = vsel %vm2997, %v2964, %v1459
  %v3030 = vsel %vm2997, %v2965, %v1461
  %v3031 = vsel %vm2997, %v2966, %v1463
  %v3032 = vsel %vm2997, %v2967, %v1465
  %v3033 = vsel %vm2997, %v2968, %v1467
  %v3034 = vsel %vm2997, %v2969, %v1469
  %v3035 = vsel %vm2997, %v2970, %v1471
  %v3036 = vsel %vm2997, %v2971, %v1473
  %v3037 = vsel %vm2997, %v2972, %v1475
  %v3038 = vsel %vm2997, %v2973, %v1477
  %v3039 = vsel %vm2997, %v2974, %v1479
  %v3040 = vsel %vm2997, %v2975, %v1481
  %v3041 = vsel %vm2997, %v2976, %v1483
  %v3042 = vsel %vm2997, %v2977, %v1485
  %v3043 = vsel %vm2997, %v2978, %v1487
  %v3044 = vsel %vm2997, %v2979, %v1489
  %v3045 = vsel %vm2997, %v2980, %v1491
  %v3046 = vsel %vm2997, %v2981, %v1493
  %v3047 = vsel %vm2997, %v2982, %v1495
  %v3048 = vsel %vm2997, %v2983, %v1497
  %v3049 = vsel %vm2997, %v2984, %v1499
  %v3050 = vsel %vm2997, %v2985, %v1501
  %v3051 = vsel %vm2997, %v2986, %v1503
  %v3052 = vsel %vm2997, %v2987, %v1505
  %v3053 = vsel %vm2997, %v2988, %v1507
  %v3054 = vsel %vm2997, %v2989, %v1509
  %v3055 = vsel %vm2997, %v2990, %v1511
  %v3056 = vsel %vm2997, %v2991, %v1513
  %v3057 = vsel %vm2997, %v2992, %v1515
  %v3058 = vsel %vm2997, %v2993, %v1517
  %v3059 = vsel %vm2997, %v2994, %v1519
  %v3060 = vsel %vm2997, %v2995, %v1521
  %v3061 = vsel %vm2997, %v2996, %v1523
  %vm3062 = vcmask 130048
  %v3063 = vsel %vm3062, %v2998, %v1653
  %v3064 = vsel %vm3062, %v2999, %v1655
  %v3065 = vsel %vm3062, %v3000, %v1657
  %v3066 = vsel %vm3062, %v3001, %v1659
  %v3067 = vsel %vm3062, %v3002, %v1661
  %v3068 = vsel %vm3062, %v3003, %v1663
  %v3069 = vsel %vm3062, %v3004, %v1665
  %v3070 = vsel %vm3062, %v3005, %v1667
  %v3071 = vsel %vm3062, %v3006, %v1669
  %v3072 = vsel %vm3062, %v3007, %v1671
  %v3073 = vsel %vm3062, %v3008, %v1673
  %v3074 = vsel %vm3062, %v3009, %v1675
  %v3075 = vsel %vm3062, %v3010, %v1677
  %v3076 = vsel %vm3062, %v3011, %v1679
  %v3077 = vsel %vm3062, %v3012, %v1681
  %v3078 = vsel %vm3062, %v3013, %v1683
  %v3079 = vsel %vm3062, %v3014, %v1685
  %v3080 = vsel %vm3062, %v3015, %v1687
  %v3081 = vsel %vm3062, %v3016, %v1689
  %v3082 = vsel %vm3062, %v3017, %v1691
  %v3083 = vsel %vm3062, %v3018, %v1693
  %v3084 = vsel %vm3062, %v3019, %v1695
  %v3085 = vsel %vm3062, %v3020, %v1697
  %v3086 = vsel %vm3062, %v3021, %v1699
  %v3087 = vsel %vm3062, %v3022, %v1701
  %v3088 = vsel %vm3062, %v3023, %v1703
  %v3089 = vsel %vm3062, %v3024, %v1705
  %v3090 = vsel %vm3062, %v3025, %v1707
  %v3091 = vsel %vm3062, %v3026, %v1709
  %v3092 = vsel %vm3062, %v3027, %v1711
  %v3093 = vsel %vm3062, %v3028, %v1713
  %v3094 = vsel %vm3062, %v3029, %v1715
  %v3095 = vsel %vm3062, %v3030, %v1717
  %v3096 = vsel %vm3062, %v3031, %v1719
  %v3097 = vsel %vm3062, %v3032, %v1721
  %v3098 = vsel %vm3062, %v3033, %v1723
  %v3099 = vsel %vm3062, %v3034, %v1725
  %v3100 = vsel %vm3062, %v3035, %v1727
  %v3101 = vsel %vm3062, %v3036, %v1729
  %v3102 = vsel %vm3062, %v3037, %v1731
  %v3103 = vsel %vm3062, %v3038, %v1733
  %v3104 = vsel %vm3062, %v3039, %v1735
  %v3105 = vsel %vm3062, %v3040, %v1737
  %v3106 = vsel %vm3062, %v3041, %v1739
  %v3107 = vsel %vm3062, %v3042, %v1741
  %v3108 = vsel %vm3062, %v3043, %v1743
  %v3109 = vsel %vm3062, %v3044, %v1745
  %v3110 = vsel %vm3062, %v3045, %v1747
  %v3111 = vsel %vm3062, %v3046, %v1749
  %v3112 = vsel %vm3062, %v3047, %v1751
  %v3113 = vsel %vm3062, %v3048, %v1753
  %v3114 = vsel %vm3062, %v3049, %v1755
  %v3115 = vsel %vm3062, %v3050, %v1757
  %v3116 = vsel %vm3062, %v3051, %v1759
  %v3117 = vsel %vm3062, %v3052, %v1761
  %v3118 = vsel %vm3062, %v3053, %v1763
  %v3119 = vsel %vm3062, %v3054, %v1765
  %v3120 = vsel %vm3062, %v3055, %v1767
  %v3121 = vsel %vm3062, %v3056, %v1769
  %v3122 = vsel %vm3062, %v3057, %v1771
  %v3123 = vsel %vm3062, %v3058, %v1773
  %v3124 = vsel %vm3062, %v3059, %v1775
  %v3125 = vsel %vm3062, %v3060, %v1777
  %v3126 = vsel %vm3062, %v3061, %v1779
  %vm3127 = vcmask 162816
  %v3128 = vsel %vm3127, %v3063, %v1909
  %v3129 = vsel %vm3127, %v3064, %v1911
  %v3130 = vsel %vm3127, %v3065, %v1913
  %v3131 = vsel %vm3127, %v3066, %v1915
  %v3132 = vsel %vm3127, %v3067, %v1917
  %v3133 = vsel %vm3127, %v3068, %v1919
  %v3134 = vsel %vm3127, %v3069, %v1921
  %v3135 = vsel %vm3127, %v3070, %v1923
  %v3136 = vsel %vm3127, %v3071, %v1925
  %v3137 = vsel %vm3127, %v3072, %v1927
  %v3138 = vsel %vm3127, %v3073, %v1929
  %v3139 = vsel %vm3127, %v3074, %v1931
  %v3140 = vsel %vm3127, %v3075, %v1933
  %v3141 = vsel %vm3127, %v3076, %v1935
  %v3142 = vsel %vm3127, %v3077, %v1937
  %v3143 = vsel %vm3127, %v3078, %v1939
  %v3144 = vsel %vm3127, %v3079, %v1941
  %v3145 = vsel %vm3127, %v3080, %v1943
  %v3146 = vsel %vm3127, %v3081, %v1945
  %v3147 = vsel %vm3127, %v3082, %v1947
  %v3148 = vsel %vm3127, %v3083, %v1949
  %v3149 = vsel %vm3127, %v3084, %v1951
  %v3150 = vsel %vm3127, %v3085, %v1953
  %v3151 = vsel %vm3127, %v3086, %v1955
  %v3152 = vsel %vm3127, %v3087, %v1957
  %v3153 = vsel %vm3127, %v3088, %v1959
  %v3154 = vsel %vm3127, %v3089, %v1961
  %v3155 = vsel %vm3127, %v3090, %v1963
  %v3156 = vsel %vm3127, %v3091, %v1965
  %v3157 = vsel %vm3127, %v3092, %v1967
  %v3158 = vsel %vm3127, %v3093, %v1969
  %v3159 = vsel %vm3127, %v3094, %v1971
  %v3160 = vsel %vm3127, %v3095, %v1973
  %v3161 = vsel %vm3127, %v3096, %v1975
  %v3162 = vsel %vm3127, %v3097, %v1977
  %v3163 = vsel %vm3127, %v3098, %v1979
  %v3164 = vsel %vm3127, %v3099, %v1981
  %v3165 = vsel %vm3127, %v3100, %v1983
  %v3166 = vsel %vm3127, %v3101, %v1985
  %v3167 = vsel %vm3127, %v3102, %v1987
  %v3168 = vsel %vm3127, %v3103, %v1989
  %v3169 = vsel %vm3127, %v3104, %v1991
  %v3170 = vsel %vm3127, %v3105, %v1993
  %v3171 = vsel %vm3127, %v3106, %v1995
  %v3172 = vsel %vm3127, %v3107, %v1997
  %v3173 = vsel %vm3127, %v3108, %v1999
  %v3174 = vsel %vm3127, %v3109, %v2001
  %v3175 = vsel %vm3127, %v3110, %v2003
  %v3176 = vsel %vm3127, %v3111, %v2005
  %v3177 = vsel %vm3127, %v3112, %v2007
  %v3178 = vsel %vm3127, %v3113, %v2009
  %v3179 = vsel %vm3127, %v3114, %v2011
  %v3180 = vsel %vm3127, %v3115, %v2013
  %v3181 = vsel %vm3127, %v3116, %v2015
  %v3182 = vsel %vm3127, %v3117, %v2017
  %v3183 = vsel %vm3127, %v3118, %v2019
  %v3184 = vsel %vm3127, %v3119, %v2021
  %v3185 = vsel %vm3127, %v3120, %v2023
  %v3186 = vsel %vm3127, %v3121, %v2025
  %v3187 = vsel %vm3127, %v3122, %v2027
  %v3188 = vsel %vm3127, %v3123, %v2029
  %v3189 = vsel %vm3127, %v3124, %v2031
  %v3190 = vsel %vm3127, %v3125, %v2033
  %v3191 = vsel %vm3127, %v3126, %v2035
  %vm3192 = vcmask 195584
  %v3193 = vsel %vm3192, %v3128, %v2165
  %v3194 = vsel %vm3192, %v3129, %v2167
  %v3195 = vsel %vm3192, %v3130, %v2169
  %v3196 = vsel %vm3192, %v3131, %v2171
  %v3197 = vsel %vm3192, %v3132, %v2173
  %v3198 = vsel %vm3192, %v3133, %v2175
  %v3199 = vsel %vm3192, %v3134, %v2177
  %v3200 = vsel %vm3192, %v3135, %v2179
  %v3201 = vsel %vm3192, %v3136, %v2181
  %v3202 = vsel %vm3192, %v3137, %v2183
  %v3203 = vsel %vm3192, %v3138, %v2185
  %v3204 = vsel %vm3192, %v3139, %v2187
  %v3205 = vsel %vm3192, %v3140, %v2189
  %v3206 = vsel %vm3192, %v3141, %v2191
  %v3207 = vsel %vm3192, %v3142, %v2193
  %v3208 = vsel %vm3192, %v3143, %v2195
  %v3209 = vsel %vm3192, %v3144, %v2197
  %v3210 = vsel %vm3192, %v3145, %v2199
  %v3211 = vsel %vm3192, %v3146, %v2201
  %v3212 = vsel %vm3192, %v3147, %v2203
  %v3213 = vsel %vm3192, %v3148, %v2205
  %v3214 = vsel %vm3192, %v3149, %v2207
  %v3215 = vsel %vm3192, %v3150, %v2209
  %v3216 = vsel %vm3192, %v3151, %v2211
  %v3217 = vsel %vm3192, %v3152, %v2213
  %v3218 = vsel %vm3192, %v3153, %v2215
  %v3219 = vsel %vm3192, %v3154, %v2217
  %v3220 = vsel %vm3192, %v3155, %v2219
  %v3221 = vsel %vm3192, %v3156, %v2221
  %v3222 = vsel %vm3192, %v3157, %v2223
  %v3223 = vsel %vm3192, %v3158, %v2225
  %v3224 = vsel %vm3192, %v3159, %v2227
  %v3225 = vsel %vm3192, %v3160, %v2229
  %v3226 = vsel %vm3192, %v3161, %v2231
  %v3227 = vsel %vm3192, %v3162, %v2233
  %v3228 = vsel %vm3192, %v3163, %v2235
  %v3229 = vsel %vm3192, %v3164, %v2237
  %v3230 = vsel %vm3192, %v3165, %v2239
  %v3231 = vsel %vm3192, %v3166, %v2241
  %v3232 = vsel %vm3192, %v3167, %v2243
  %v3233 = vsel %vm3192, %v3168, %v2245
  %v3234 = vsel %vm3192, %v3169, %v2247
  %v3235 = vsel %vm3192, %v3170, %v2249
  %v3236 = vsel %vm3192, %v3171, %v2251
  %v3237 = vsel %vm3192, %v3172, %v2253
  %v3238 = vsel %vm3192, %v3173, %v2255
  %v3239 = vsel %vm3192, %v3174, %v2257
  %v3240 = vsel %vm3192, %v3175, %v2259
  %v3241 = vsel %vm3192, %v3176, %v2261
  %v3242 = vsel %vm3192, %v3177, %v2263
  %v3243 = vsel %vm3192, %v3178, %v2265
  %v3244 = vsel %vm3192, %v3179, %v2267
  %v3245 = vsel %vm3192, %v3180, %v2269
  %v3246 = vsel %vm3192, %v3181, %v2271
  %v3247 = vsel %vm3192, %v3182, %v2273
  %v3248 = vsel %vm3192, %v3183, %v2275
  %v3249 = vsel %vm3192, %v3184, %v2277
  %v3250 = vsel %vm3192, %v3185, %v2279
  %v3251 = vsel %vm3192, %v3186, %v2281
  %v3252 = vsel %vm3192, %v3187, %v2283
  %v3253 = vsel %vm3192, %v3188, %v2285
  %v3254 = vsel %vm3192, %v3189, %v2287
  %v3255 = vsel %vm3192, %v3190, %v2289
  %v3256 = vsel %vm3192, %v3191, %v2291
  %vm3257 = vcmask 228352
  %v3258 = vsel %vm3257, %v3193, %v2421
  %v3259 = vsel %vm3257, %v3194, %v2423
  %v3260 = vsel %vm3257, %v3195, %v2425
  %v3261 = vsel %vm3257, %v3196, %v2427
  %v3262 = vsel %vm3257, %v3197, %v2429
  %v3263 = vsel %vm3257, %v3198, %v2431
  %v3264 = vsel %vm3257, %v3199, %v2433
  %v3265 = vsel %vm3257, %v3200, %v2435
  %v3266 = vsel %vm3257, %v3201, %v2437
  %v3267 = vsel %vm3257, %v3202, %v2439
  %v3268 = vsel %vm3257, %v3203, %v2441
  %v3269 = vsel %vm3257, %v3204, %v2443
  %v3270 = vsel %vm3257, %v3205, %v2445
  %v3271 = vsel %vm3257, %v3206, %v2447
  %v3272 = vsel %vm3257, %v3207, %v2449
  %v3273 = vsel %vm3257, %v3208, %v2451
  %v3274 = vsel %vm3257, %v3209, %v2453
  %v3275 = vsel %vm3257, %v3210, %v2455
  %v3276 = vsel %vm3257, %v3211, %v2457
  %v3277 = vsel %vm3257, %v3212, %v2459
  %v3278 = vsel %vm3257, %v3213, %v2461
  %v3279 = vsel %vm3257, %v3214, %v2463
  %v3280 = vsel %vm3257, %v3215, %v2465
  %v3281 = vsel %vm3257, %v3216, %v2467
  %v3282 = vsel %vm3257, %v3217, %v2469
  %v3283 = vsel %vm3257, %v3218, %v2471
  %v3284 = vsel %vm3257, %v3219, %v2473
  %v3285 = vsel %vm3257, %v3220, %v2475
  %v3286 = vsel %vm3257, %v3221, %v2477
  %v3287 = vsel %vm3257, %v3222, %v2479
  %v3288 = vsel %vm3257, %v3223, %v2481
  %v3289 = vsel %vm3257, %v3224, %v2483
  %v3290 = vsel %vm3257, %v3225, %v2485
  %v3291 = vsel %vm3257, %v3226, %v2487
  %v3292 = vsel %vm3257, %v3227, %v2489
  %v3293 = vsel %vm3257, %v3228, %v2491
  %v3294 = vsel %vm3257, %v3229, %v2493
  %v3295 = vsel %vm3257, %v3230, %v2495
  %v3296 = vsel %vm3257, %v3231, %v2497
  %v3297 = vsel %vm3257, %v3232, %v2499
  %v3298 = vsel %vm3257, %v3233, %v2501
  %v3299 = vsel %vm3257, %v3234, %v2503
  %v3300 = vsel %vm3257, %v3235, %v2505
  %v3301 = vsel %vm3257, %v3236, %v2507
  %v3302 = vsel %vm3257, %v3237, %v2509
  %v3303 = vsel %vm3257, %v3238, %v2511
  %v3304 = vsel %vm3257, %v3239, %v2513
  %v3305 = vsel %vm3257, %v3240, %v2515
  %v3306 = vsel %vm3257, %v3241, %v2517
  %v3307 = vsel %vm3257, %v3242, %v2519
  %v3308 = vsel %vm3257, %v3243, %v2521
  %v3309 = vsel %vm3257, %v3244, %v2523
  %v3310 = vsel %vm3257, %v3245, %v2525
  %v3311 = vsel %vm3257, %v3246, %v2527
  %v3312 = vsel %vm3257, %v3247, %v2529
  %v3313 = vsel %vm3257, %v3248, %v2531
  %v3314 = vsel %vm3257, %v3249, %v2533
  %v3315 = vsel %vm3257, %v3250, %v2535
  %v3316 = vsel %vm3257, %v3251, %v2537
  %v3317 = vsel %vm3257, %v3252, %v2539
  %v3318 = vsel %vm3257, %v3253, %v2541
  %v3319 = vsel %vm3257, %v3254, %v2543
  %v3320 = vsel %vm3257, %v3255, %v2545
  %v3321 = vsel %vm3257, %v3256, %v2547
  %vm3322 = vcmask 261120
  %v3323 = vsel %vm3322, %v3258, %v2677
  %v3324 = vsel %vm3322, %v3259, %v2679
  %v3325 = vsel %vm3322, %v3260, %v2681
  %v3326 = vsel %vm3322, %v3261, %v2683
  %v3327 = vsel %vm3322, %v3262, %v2685
  %v3328 = vsel %vm3322, %v3263, %v2687
  %v3329 = vsel %vm3322, %v3264, %v2689
  %v3330 = vsel %vm3322, %v3265, %v2691
  %v3331 = vsel %vm3322, %v3266, %v2693
  %v3332 = vsel %vm3322, %v3267, %v2695
  %v3333 = vsel %vm3322, %v3268, %v2697
  %v3334 = vsel %vm3322, %v3269, %v2699
  %v3335 = vsel %vm3322, %v3270, %v2701
  %v3336 = vsel %vm3322, %v3271, %v2703
  %v3337 = vsel %vm3322, %v3272, %v2705
  %v3338 = vsel %vm3322, %v3273, %v2707
  %v3339 = vsel %vm3322, %v3274, %v2709
  %v3340 = vsel %vm3322, %v3275, %v2711
  %v3341 = vsel %vm3322, %v3276, %v2713
  %v3342 = vsel %vm3322, %v3277, %v2715
  %v3343 = vsel %vm3322, %v3278, %v2717
  %v3344 = vsel %vm3322, %v3279, %v2719
  %v3345 = vsel %vm3322, %v3280, %v2721
  %v3346 = vsel %vm3322, %v3281, %v2723
  %v3347 = vsel %vm3322, %v3282, %v2725
  %v3348 = vsel %vm3322, %v3283, %v2727
  %v3349 = vsel %vm3322, %v3284, %v2729
  %v3350 = vsel %vm3322, %v3285, %v2731
  %v3351 = vsel %vm3322, %v3286, %v2733
  %v3352 = vsel %vm3322, %v3287, %v2735
  %v3353 = vsel %vm3322, %v3288, %v2737
  %v3354 = vsel %vm3322, %v3289, %v2739
  %v3355 = vsel %vm3322, %v3290, %v2741
  %v3356 = vsel %vm3322, %v3291, %v2743
  %v3357 = vsel %vm3322, %v3292, %v2745
  %v3358 = vsel %vm3322, %v3293, %v2747
  %v3359 = vsel %vm3322, %v3294, %v2749
  %v3360 = vsel %vm3322, %v3295, %v2751
  %v3361 = vsel %vm3322, %v3296, %v2753
  %v3362 = vsel %vm3322, %v3297, %v2755
  %v3363 = vsel %vm3322, %v3298, %v2757
  %v3364 = vsel %vm3322, %v3299, %v2759
  %v3365 = vsel %vm3322, %v3300, %v2761
  %v3366 = vsel %vm3322, %v3301, %v2763
  %v3367 = vsel %vm3322, %v3302, %v2765
  %v3368 = vsel %vm3322, %v3303, %v2767
  %v3369 = vsel %vm3322, %v3304, %v2769
  %v3370 = vsel %vm3322, %v3305, %v2771
  %v3371 = vsel %vm3322, %v3306, %v2773
  %v3372 = vsel %vm3322, %v3307, %v2775
  %v3373 = vsel %vm3322, %v3308, %v2777
  %v3374 = vsel %vm3322, %v3309, %v2779
  %v3375 = vsel %vm3322, %v3310, %v2781
  %v3376 = vsel %vm3322, %v3311, %v2783
  %v3377 = vsel %vm3322, %v3312, %v2785
  %v3378 = vsel %vm3322, %v3313, %v2787
  %v3379 = vsel %vm3322, %v3314, %v2789
  %v3380 = vsel %vm3322, %v3315, %v2791
  %v3381 = vsel %vm3322, %v3316, %v2793
  %v3382 = vsel %vm3322, %v3317, %v2795
  %v3383 = vsel %vm3322, %v3318, %v2797
  %v3384 = vsel %vm3322, %v3319, %v2799
  %v3385 = vsel %vm3322, %v3320, %v2801
  %v3386 = vsel %vm3322, %v3321, %v2803
  %v3387 = vld [vmem:[%s1] sm:$0xff]
  %v3388 = vld [vmem:[%s1 + $0x8] sm:$0xff]
  %v3389 = vld [vmem:[%s1 + $0x10] sm:$0xff]
  %v3390 = vld [vmem:[%s1 + $0x18] sm:$0xff]
  %v3391 = vld [vmem:[%s1 + $0x20] sm:$0xf]
  %vm3392 = vcmask 293888
  %v3394 = vsel %vm3392, %v3323, 0
  %v3397 = vsel %vm3392, %v3324, 0
  %v3400 = vsel %vm3392, %v3325, 0
  %v3403 = vsel %vm3392, %v3326, 0
  %v3406 = vsel %vm3392, %v3327, 0
  %v3409 = vsel %vm3392, %v3328, 0
  %v3412 = vsel %vm3392, %v3329, 0
  %v3415 = vsel %vm3392, %v3330, 0
  %v3418 = vsel %vm3392, %v3331, 0
  %v3421 = vsel %vm3392, %v3332, 0
  %v3424 = vsel %vm3392, %v3333, 0
  %v3427 = vsel %vm3392, %v3334, 0
  %v3430 = vsel %vm3392, %v3335, 0
  %v3433 = vsel %vm3392, %v3336, 0
  %v3436 = vsel %vm3392, %v3337, 0
  %v3439 = vsel %vm3392, %v3338, 0
  %v3442 = vsel %vm3392, %v3339, 0
  %v3445 = vsel %vm3392, %v3340, 0
  %v3448 = vsel %vm3392, %v3341, 0
  %v3451 = vsel %vm3392, %v3342, 0
  %v3454 = vsel %vm3392, %v3343, 0
  %v3457 = vsel %vm3392, %v3344, 0
  %v3460 = vsel %vm3392, %v3345, 0
  %v3463 = vsel %vm3392, %v3346, 0
  %v3466 = vsel %vm3392, %v3347, 0
  %v3469 = vsel %vm3392, %v3348, 0
  %v3472 = vsel %vm3392, %v3349, 0
  %v3475 = vsel %vm3392, %v3350, 0
  %v3478 = vsel %vm3392, %v3351, 0
  %v3481 = vsel %vm3392, %v3352, 0
  %v3484 = vsel %vm3392, %v3353, 0
  %v3487 = vsel %vm3392, %v3354, 0
  %v3490 = vsel %vm3392, %v3355, 0
  %v3493 = vsel %vm3392, %v3356, 0
  %v3496 = vsel %vm3392, %v3357, 0
  %v3499 = vsel %vm3392, %v3358, 0
  %v3502 = vsel %vm3392, %v3359, 0
  %v3505 = vsel %vm3392, %v3360, 0
  %v3508 = vsel %vm3392, %v3361, 0
  %v3511 = vsel %vm3392, %v3362, 0
  %v3514 = vsel %vm3392, %v3363, 0
  %v3517 = vsel %vm3392, %v3364, 0
  %v3520 = vsel %vm3392, %v3365, 0
  %v3523 = vsel %vm3392, %v3366, 0
  %v3526 = vsel %vm3392, %v3367, 0
  %v3529 = vsel %vm3392, %v3368, 0
  %v3532 = vsel %vm3392, %v3369, 0
  %v3535 = vsel %vm3392, %v3370, 0
  %v3538 = vsel %vm3392, %v3371, 0
  %v3541 = vsel %vm3392, %v3372, 0
  %v3544 = vsel %vm3392, %v3373, 0
  %v3547 = vsel %vm3392, %v3374, 0
  %v3550 = vsel %vm3392, %v3375, 0
  %v3553 = vsel %vm3392, %v3376, 0
  %v3556 = vsel %vm3392, %v3377, 0
  %v3559 = vsel %vm3392, %v3378, 0
  %v3562 = vsel %vm3392, %v3379, 0
  %v3565 = vsel %vm3392, %v3380, 0
  %v3568 = vsel %vm3392, %v3381, 0
  %v3571 = vsel %vm3392, %v3382, 0
  %v3574 = vsel %vm3392, %v3383, 0
  %v3577 = vsel %vm3392, %v3384, 0
  %v3580 = vsel %vm3392, %v3385, 0
  %v3583 = vsel %vm3392, %v3386, 0
  %vm3585 = vcmask 1043456
  %v3587 = vsel %vm3585, %v3391, 0
  %3589 = vmatprep.subr.mxu0 0.0
  %3590 = vmatpush1.msra.mxu0 %v3387
  %3591 = vmatprep.subr.mxu0 0.0
  %3592 = vmatpush1.msra.mxu0 %v3388
  %3593 = vmatprep.subr.mxu0 0.0
  %3594 = vmatpush1.msra.mxu0 %v3389
  %3595 = vmatprep.subr.mxu0 0.0
  %3596 = vmatpush1.msra.mxu0 %v3390
  %3597 = vmatprep.subr.mxu0 0.0
  %3598 = vmatpush1.msra.mxu0 %v3587
  %3599 = vmatprep.subr.mxu0 0.0
  %3600 = vmatpush1.msra.mxu0 0.0
  %3601 = vmatprep.subr.mxu0 0.0
  %3602 = vmatpush1.msra.mxu0 0.0
  %3603 = vmatprep.subr.mxu0 0.0
  %3604 = vmatpush1.msra.mxu0 0.0
  %3605 = vmatprep.subr.mxu0 0.0
  %3606 = vmatpush1.msra.mxu0 0.0
  %3607 = vmatprep.subr.mxu0 0.0
  %3608 = vmatpush1.msra.mxu0 0.0
  %3609 = vmatprep.subr.mxu0 0.0
  %3610 = vmatpush1.msra.mxu0 0.0
  %3611 = vmatprep.subr.mxu0 0.0
  %3612 = vmatpush1.msra.mxu0 0.0
  %3613 = vmatprep.subr.mxu0 0.0
  %3614 = vmatpush1.msra.mxu0 0.0
  %3615 = vmatprep.subr.mxu0 0.0
  %3616 = vmatpush1.msra.mxu0 0.0
  %3617 = vmatprep.subr.mxu0 0.0
  %3618 = vmatpush1.msra.mxu0 0.0
  %3619 = vmatprep.subr.mxu0 0.0
  %3620 = vmatpush1.msra.mxu0 0.0
  %3621 = vmatprep.subr.mxu0 0.0
  %3622 = vmatpush1.msra.mxu0 0.0
  %3623 = vmatprep.subr.mxu0 0.0
  %3624 = vmatpush1.msra.mxu0 0.0
  %3625 = vmatprep.subr.mxu0 0.0
  %3626 = vmatpush1.msra.mxu0 0.0
  %3627 = vmatprep.subr.mxu0 0.0
  %3628 = vmatpush1.msra.mxu0 0.0
  %3629 = vmatprep.subr.mxu0 0.0
  %3630 = vmatpush1.msra.mxu0 0.0
  %3631 = vmatprep.subr.mxu0 0.0
  %3632 = vmatpush1.msra.mxu0 0.0
  %3633 = vmatprep.subr.mxu0 0.0
  %3634 = vmatpush1.msra.mxu0 0.0
  %3635 = vmatprep.subr.mxu0 0.0
  %3636 = vmatpush1.msra.mxu0 0.0
  %3637 = vmatprep.subr.mxu0 0.0
  %3638 = vmatpush1.msra.mxu0 0.0
  %3639 = vmatprep.subr.mxu0 0.0
  %3640 = vmatpush1.msra.mxu0 0.0
  %3641 = vmatprep.subr.mxu0 0.0
  %3642 = vmatpush1.msra.mxu0 0.0
  %3643 = vmatprep.subr.mxu0 0.0
  %3644 = vmatpush1.msra.mxu0 0.0
  %3645 = vmatprep.subr.mxu0 0.0
  %3646 = vmatpush1.msra.mxu0 0.0
  %3647 = vmatprep.subr.mxu0 0.0
  %3648 = vmatpush1.msra.mxu0 0.0
  %3649 = vmatprep.subr.mxu0 0.0
  %3650 = vmatpush1.msra.mxu0 0.0
  %3651 = vmatprep.subr.mxu0 0.0
  %3652 = vmatpush1.msra.mxu0 0.0
  %3653 = vmatprep.mubr.f32.mxu0 0.0
  %3654 = vmatmul.mubr.f32.gmra.mrb[0].mxu0 %v3394
  %v3655 = vpop.f32.mrb[0].mxu0
  %v3656 = vadd.f32 0.0, %v3655
  %v3657 = vpop.f32.mrb[0].mxu0
  %3658 = vmatprep.mubr.f32.mxu0 0.0
  %3659 = vmatmul.mubr.f32.gmra.mrb[0].mxu0 %v3397
  %v3660 = vpop.f32.mrb[0].mxu0
  %v3661 = vadd.f32 0.0, %v3660
  %v3662 = vpop.f32.mrb[0].mxu0
  %3663 = vmatprep.mubr.f32.mxu0 0.0
  %3664 = vmatmul.mubr.f32.gmra.mrb[0].mxu0 %v3400
  %v3665 = vpop.f32.mrb[0].mxu0
  %v3666 = vadd.f32 0.0, %v3665
  %v3667 = vpop.f32.mrb[0].mxu0
  %3668 = vmatprep.mubr.f32.mxu0 0.0
  %3669 = vmatmul.mubr.f32.gmra.mrb[0].mxu0 %v3403
  %v3670 = vpop.f32.mrb[0].mxu0
  %v3671 = vadd.f32 0.0, %v3670
  %v3672 = vpop.f32.mrb[0].mxu0
  %3673 = vmatprep.mubr.f32.mxu0 0.0
  %3674 = vmatmul.mubr.f32.gmra.mrb[0].mxu0 %v3406
  %v3675 = vpop.f32.mrb[0].mxu0
  %v3676 = vadd.f32 0.0, %v3675
  %v3677 = vpop.f32.mrb[0].mxu0
  %3678 = vmatprep.mubr.f32.mxu0 0.0
  %3679 = vmatmul.mubr.f32.gmra.mrb[0].mxu0 %v3409
  %v3680 = vpop.f32.mrb[0].mxu0
  %v3681 = vadd.f32 0.0, %v3680
  %v3682 = vpop.f32.mrb[0].mxu0
  %3683 = vmatprep.mubr.f32.mxu0 0.0
  %3684 = vmatmul.mubr.f32.gmra.mrb[0].mxu0 %v3412
  %v3685 = vpop.f32.mrb[0].mxu0
  %v3686 = vadd.f32 0.0, %v3685
  %v3687 = vpop.f32.mrb[0].mxu0
  %3688 = vmatprep.mubr.f32.mxu0 0.0
  %3689 = vmatmul.mubr.f32.gmra.mrb[0].mxu0 %v3415
  %v3690 = vpop.f32.mrb[0].mxu0
  %v3691 = vadd.f32 0.0, %v3690
  %v3692 = vpop.f32.mrb[0].mxu0
  %3693 = vmatprep.mubr.f32.mxu0 0.0
  %3694 = vmatmul.mubr.f32.gmra.mrb[0].mxu0 %v3418
  %v3695 = vpop.f32.mrb[0].mxu0
  %v3696 = vadd.f32 0.0, %v3695
  %v3697 = vpop.f32.mrb[0].mxu0
  %3698 = vmatprep.mubr.f32.mxu0 0.0
  %3699 = vmatmul.mubr.f32.gmra.mrb[0].mxu0 %v3421
  %v3700 = vpop.f32.mrb[0].mxu0
  %v3701 = vadd.f32 0.0, %v3700
  %v3702 = vpop.f32.mrb[0].mxu0
  %3703 = vmatprep.mubr.f32.mxu0 0.0
  %3704 = vmatmul.mubr.f32.gmra.mrb[0].mxu0 %v3424
  %v3705 = vpop.f32.mrb[0].mxu0
  %v3706 = vadd.f32 0.0, %v3705
  %v3707 = vpop.f32.mrb[0].mxu0
  %3708 = vmatprep.mubr.f32.mxu0 0.0
  %3709 = vmatmul.mubr.f32.gmra.mrb[0].mxu0 %v3427
  %v3710 = vpop.f32.mrb[0].mxu0
  %v3711 = vadd.f32 0.0, %v3710
  %v3712 = vpop.f32.mrb[0].mxu0
  %3713 = vmatprep.mubr.f32.mxu0 0.0
  %3714 = vmatmul.mubr.f32.gmra.mrb[0].mxu0 %v3430
  %v3715 = vpop.f32.mrb[0].mxu0
  %v3716 = vadd.f32 0.0, %v3715
  %v3717 = vpop.f32.mrb[0].mxu0
  %3718 = vmatprep.mubr.f32.mxu0 0.0
  %3719 = vmatmul.mubr.f32.gmra.mrb[0].mxu0 %v3433
  %v3720 = vpop.f32.mrb[0].mxu0
  %v3721 = vadd.f32 0.0, %v3720
  %v3722 = vpop.f32.mrb[0].mxu0
  %3723 = vmatprep.mubr.f32.mxu0 0.0
  %3724 = vmatmul.mubr.f32.gmra.mrb[0].mxu0 %v3436
  %v3725 = vpop.f32.mrb[0].mxu0
  %v3726 = vadd.f32 0.0, %v3725
  %v3727 = vpop.f32.mrb[0].mxu0
  %3728 = vmatprep.mubr.f32.mxu0 0.0
  %3729 = vmatmul.mubr.f32.gmra.mrb[0].mxu0 %v3439
  %v3730 = vpop.f32.mrb[0].mxu0
  %v3731 = vadd.f32 0.0, %v3730
  %v3732 = vpop.f32.mrb[0].mxu0
  %3733 = vmatprep.mubr.f32.mxu0 0.0
  %3734 = vmatmul.mubr.f32.gmra.mrb[0].mxu0 %v3442
  %v3735 = vpop.f32.mrb[0].mxu0
  %v3736 = vadd.f32 0.0, %v3735
  %v3737 = vpop.f32.mrb[0].mxu0
  %3738 = vmatprep.mubr.f32.mxu0 0.0
  %3739 = vmatmul.mubr.f32.gmra.mrb[0].mxu0 %v3445
  %v3740 = vpop.f32.mrb[0].mxu0
  %v3741 = vadd.f32 0.0, %v3740
  %v3742 = vpop.f32.mrb[0].mxu0
  %3743 = vmatprep.mubr.f32.mxu0 0.0
  %3744 = vmatmul.mubr.f32.gmra.mrb[0].mxu0 %v3448
  %v3745 = vpop.f32.mrb[0].mxu0
  %v3746 = vadd.f32 0.0, %v3745
  %v3747 = vpop.f32.mrb[0].mxu0
  %3748 = vmatprep.mubr.f32.mxu0 0.0
  %3749 = vmatmul.mubr.f32.gmra.mrb[0].mxu0 %v3451
  %v3750 = vpop.f32.mrb[0].mxu0
  %v3751 = vadd.f32 0.0, %v3750
  %v3752 = vpop.f32.mrb[0].mxu0
  %3753 = vmatprep.mubr.f32.mxu0 0.0
  %3754 = vmatmul.mubr.f32.gmra.mrb[0].mxu0 %v3454
  %v3755 = vpop.f32.mrb[0].mxu0
  %v3756 = vadd.f32 0.0, %v3755
  %v3757 = vpop.f32.mrb[0].mxu0
  %3758 = vmatprep.mubr.f32.mxu0 0.0
  %3759 = vmatmul.mubr.f32.gmra.mrb[0].mxu0 %v3457
  %v3760 = vpop.f32.mrb[0].mxu0
  %v3761 = vadd.f32 0.0, %v3760
  %v3762 = vpop.f32.mrb[0].mxu0
  %3763 = vmatprep.mubr.f32.mxu0 0.0
  %3764 = vmatmul.mubr.f32.gmra.mrb[0].mxu0 %v3460
  %v3765 = vpop.f32.mrb[0].mxu0
  %v3766 = vadd.f32 0.0, %v3765
  %v3767 = vpop.f32.mrb[0].mxu0
  %3768 = vmatprep.mubr.f32.mxu0 0.0
  %3769 = vmatmul.mubr.f32.gmra.mrb[0].mxu0 %v3463
  %v3770 = vpop.f32.mrb[0].mxu0
  %v3771 = vadd.f32 0.0, %v3770
  %v3772 = vpop.f32.mrb[0].mxu0
  %3773 = vmatprep.mubr.f32.mxu0 0.0
  %3774 = vmatmul.mubr.f32.gmra.mrb[0].mxu0 %v3466
  %v3775 = vpop.f32.mrb[0].mxu0
  %v3776 = vadd.f32 0.0, %v3775
  %v3777 = vpop.f32.mrb[0].mxu0
  %3778 = vmatprep.mubr.f32.mxu0 0.0
  %3779 = vmatmul.mubr.f32.gmra.mrb[0].mxu0 %v3469
  %v3780 = vpop.f32.mrb[0].mxu0
  %v3781 = vadd.f32 0.0, %v3780
  %v3782 = vpop.f32.mrb[0].mxu0
  %3783 = vmatprep.mubr.f32.mxu0 0.0
  %3784 = vmatmul.mubr.f32.gmra.mrb[0].mxu0 %v3472
  %v3785 = vpop.f32.mrb[0].mxu0
  %v3786 = vadd.f32 0.0, %v3785
  %v3787 = vpop.f32.mrb[0].mxu0
  %3788 = vmatprep.mubr.f32.mxu0 0.0
  %3789 = vmatmul.mubr.f32.gmra.mrb[0].mxu0 %v3475
  %v3790 = vpop.f32.mrb[0].mxu0
  %v3791 = vadd.f32 0.0, %v3790
  %v3792 = vpop.f32.mrb[0].mxu0
  %3793 = vmatprep.mubr.f32.mxu0 0.0
  %3794 = vmatmul.mubr.f32.gmra.mrb[0].mxu0 %v3478
  %v3795 = vpop.f32.mrb[0].mxu0
  %v3796 = vadd.f32 0.0, %v3795
  %v3797 = vpop.f32.mrb[0].mxu0
  %3798 = vmatprep.mubr.f32.mxu0 0.0
  %3799 = vmatmul.mubr.f32.gmra.mrb[0].mxu0 %v3481
  %v3800 = vpop.f32.mrb[0].mxu0
  %v3801 = vadd.f32 0.0, %v3800
  %v3802 = vpop.f32.mrb[0].mxu0
  %3803 = vmatprep.mubr.f32.mxu0 0.0
  %3804 = vmatmul.mubr.f32.gmra.mrb[0].mxu0 %v3484
  %v3805 = vpop.f32.mrb[0].mxu0
  %v3806 = vadd.f32 0.0, %v3805
  %v3807 = vpop.f32.mrb[0].mxu0
  %3808 = vmatprep.mubr.f32.mxu0 0.0
  %3809 = vmatmul.mubr.f32.gmra.mrb[0].mxu0 %v3487
  %v3810 = vpop.f32.mrb[0].mxu0
  %v3811 = vadd.f32 0.0, %v3810
  %v3812 = vpop.f32.mrb[0].mxu0
  %3813 = vmatprep.mubr.f32.mxu0 0.0
  %3814 = vmatmul.mubr.f32.gmra.mrb[0].mxu0 %v3490
  %v3815 = vpop.f32.mrb[0].mxu0
  %v3816 = vadd.f32 0.0, %v3815
  %v3817 = vpop.f32.mrb[0].mxu0
  %3818 = vmatprep.mubr.f32.mxu0 0.0
  %3819 = vmatmul.mubr.f32.gmra.mrb[0].mxu0 %v3493
  %v3820 = vpop.f32.mrb[0].mxu0
  %v3821 = vadd.f32 0.0, %v3820
  %v3822 = vpop.f32.mrb[0].mxu0
  %3823 = vmatprep.mubr.f32.mxu0 0.0
  %3824 = vmatmul.mubr.f32.gmra.mrb[0].mxu0 %v3496
  %v3825 = vpop.f32.mrb[0].mxu0
  %v3826 = vadd.f32 0.0, %v3825
  %v3827 = vpop.f32.mrb[0].mxu0
  %3828 = vmatprep.mubr.f32.mxu0 0.0
  %3829 = vmatmul.mubr.f32.gmra.mrb[0].mxu0 %v3499
  %v3830 = vpop.f32.mrb[0].mxu0
  %v3831 = vadd.f32 0.0, %v3830
  %v3832 = vpop.f32.mrb[0].mxu0
  %3833 = vmatprep.mubr.f32.mxu0 0.0
  %3834 = vmatmul.mubr.f32.gmra.mrb[0].mxu0 %v3502
  %v3835 = vpop.f32.mrb[0].mxu0
  %v3836 = vadd.f32 0.0, %v3835
  %v3837 = vpop.f32.mrb[0].mxu0
  %3838 = vmatprep.mubr.f32.mxu0 0.0
  %3839 = vmatmul.mubr.f32.gmra.mrb[0].mxu0 %v3505
  %v3840 = vpop.f32.mrb[0].mxu0
  %v3841 = vadd.f32 0.0, %v3840
  %v3842 = vpop.f32.mrb[0].mxu0
  %3843 = vmatprep.mubr.f32.mxu0 0.0
  %3844 = vmatmul.mubr.f32.gmra.mrb[0].mxu0 %v3508
  %v3845 = vpop.f32.mrb[0].mxu0
  %v3846 = vadd.f32 0.0, %v3845
  %v3847 = vpop.f32.mrb[0].mxu0
  %3848 = vmatprep.mubr.f32.mxu0 0.0
  %3849 = vmatmul.mubr.f32.gmra.mrb[0].mxu0 %v3511
  %v3850 = vpop.f32.mrb[0].mxu0
  %v3851 = vadd.f32 0.0, %v3850
  %v3852 = vpop.f32.mrb[0].mxu0
  %3853 = vmatprep.mubr.f32.mxu0 0.0
  %3854 = vmatmul.mubr.f32.gmra.mrb[0].mxu0 %v3514
  %v3855 = vpop.f32.mrb[0].mxu0
  %v3856 = vadd.f32 0.0, %v3855
  %v3857 = vpop.f32.mrb[0].mxu0
  %3858 = vmatprep.mubr.f32.mxu0 0.0
  %3859 = vmatmul.mubr.f32.gmra.mrb[0].mxu0 %v3517
  %v3860 = vpop.f32.mrb[0].mxu0
  %v3861 = vadd.f32 0.0, %v3860
  %v3862 = vpop.f32.mrb[0].mxu0
  %3863 = vmatprep.mubr.f32.mxu0 0.0
  %3864 = vmatmul.mubr.f32.gmra.mrb[0].mxu0 %v3520
  %v3865 = vpop.f32.mrb[0].mxu0
  %v3866 = vadd.f32 0.0, %v3865
  %v3867 = vpop.f32.mrb[0].mxu0
  %3868 = vmatprep.mubr.f32.mxu0 0.0
  %3869 = vmatmul.mubr.f32.gmra.mrb[0].mxu0 %v3523
  %v3870 = vpop.f32.mrb[0].mxu0
  %v3871 = vadd.f32 0.0, %v3870
  %v3872 = vpop.f32.mrb[0].mxu0
  %3873 = vmatprep.mubr.f32.mxu0 0.0
  %3874 = vmatmul.mubr.f32.gmra.mrb[0].mxu0 %v3526
  %v3875 = vpop.f32.mrb[0].mxu0
  %v3876 = vadd.f32 0.0, %v3875
  %v3877 = vpop.f32.mrb[0].mxu0
  %3878 = vmatprep.mubr.f32.mxu0 0.0
  %3879 = vmatmul.mubr.f32.gmra.mrb[0].mxu0 %v3529
  %v3880 = vpop.f32.mrb[0].mxu0
  %v3881 = vadd.f32 0.0, %v3880
  %v3882 = vpop.f32.mrb[0].mxu0
  %3883 = vmatprep.mubr.f32.mxu0 0.0
  %3884 = vmatmul.mubr.f32.gmra.mrb[0].mxu0 %v3532
  %v3885 = vpop.f32.mrb[0].mxu0
  %v3886 = vadd.f32 0.0, %v3885
  %v3887 = vpop.f32.mrb[0].mxu0
  %3888 = vmatprep.mubr.f32.mxu0 0.0
  %3889 = vmatmul.mubr.f32.gmra.mrb[0].mxu0 %v3535
  %v3890 = vpop.f32.mrb[0].mxu0
  %v3891 = vadd.f32 0.0, %v3890
  %v3892 = vpop.f32.mrb[0].mxu0
  %3893 = vmatprep.mubr.f32.mxu0 0.0
  %3894 = vmatmul.mubr.f32.gmra.mrb[0].mxu0 %v3538
  %v3895 = vpop.f32.mrb[0].mxu0
  %v3896 = vadd.f32 0.0, %v3895
  %v3897 = vpop.f32.mrb[0].mxu0
  %3898 = vmatprep.mubr.f32.mxu0 0.0
  %3899 = vmatmul.mubr.f32.gmra.mrb[0].mxu0 %v3541
  %v3900 = vpop.f32.mrb[0].mxu0
  %v3901 = vadd.f32 0.0, %v3900
  %v3902 = vpop.f32.mrb[0].mxu0
  %3903 = vmatprep.mubr.f32.mxu0 0.0
  %3904 = vmatmul.mubr.f32.gmra.mrb[0].mxu0 %v3544
  %v3905 = vpop.f32.mrb[0].mxu0
  %v3906 = vadd.f32 0.0, %v3905
  %v3907 = vpop.f32.mrb[0].mxu0
  %3908 = vmatprep.mubr.f32.mxu0 0.0
  %3909 = vmatmul.mubr.f32.gmra.mrb[0].mxu0 %v3547
  %v3910 = vpop.f32.mrb[0].mxu0
  %v3911 = vadd.f32 0.0, %v3910
  %v3912 = vpop.f32.mrb[0].mxu0
  %3913 = vmatprep.mubr.f32.mxu0 0.0
  %3914 = vmatmul.mubr.f32.gmra.mrb[0].mxu0 %v3550
  %v3915 = vpop.f32.mrb[0].mxu0
  %v3916 = vadd.f32 0.0, %v3915
  %v3917 = vpop.f32.mrb[0].mxu0
  %3918 = vmatprep.mubr.f32.mxu0 0.0
  %3919 = vmatmul.mubr.f32.gmra.mrb[0].mxu0 %v3553
  %v3920 = vpop.f32.mrb[0].mxu0
  %v3921 = vadd.f32 0.0, %v3920
  %v3922 = vpop.f32.mrb[0].mxu0
  %3923 = vmatprep.mubr.f32.mxu0 0.0
  %3924 = vmatmul.mubr.f32.gmra.mrb[0].mxu0 %v3556
  %v3925 = vpop.f32.mrb[0].mxu0
  %v3926 = vadd.f32 0.0, %v3925
  %v3927 = vpop.f32.mrb[0].mxu0
  %3928 = vmatprep.mubr.f32.mxu0 0.0
  %3929 = vmatmul.mubr.f32.gmra.mrb[0].mxu0 %v3559
  %v3930 = vpop.f32.mrb[0].mxu0
  %v3931 = vadd.f32 0.0, %v3930
  %v3932 = vpop.f32.mrb[0].mxu0
  %3933 = vmatprep.mubr.f32.mxu0 0.0
  %3934 = vmatmul.mubr.f32.gmra.mrb[0].mxu0 %v3562
  %v3935 = vpop.f32.mrb[0].mxu0
  %v3936 = vadd.f32 0.0, %v3935
  %v3937 = vpop.f32.mrb[0].mxu0
  %3938 = vmatprep.mubr.f32.mxu0 0.0
  %3939 = vmatmul.mubr.f32.gmra.mrb[0].mxu0 %v3565
  %v3940 = vpop.f32.mrb[0].mxu0
  %v3941 = vadd.f32 0.0, %v3940
  %v3942 = vpop.f32.mrb[0].mxu0
  %3943 = vmatprep.mubr.f32.mxu0 0.0
  %3944 = vmatmul.mubr.f32.gmra.mrb[0].mxu0 %v3568
  %v3945 = vpop.f32.mrb[0].mxu0
  %v3946 = vadd.f32 0.0, %v3945
  %v3947 = vpop.f32.mrb[0].mxu0
  %3948 = vmatprep.mubr.f32.mxu0 0.0
  %3949 = vmatmul.mubr.f32.gmra.mrb[0].mxu0 %v3571
  %v3950 = vpop.f32.mrb[0].mxu0
  %v3951 = vadd.f32 0.0, %v3950
  %v3952 = vpop.f32.mrb[0].mxu0
  %3953 = vmatprep.mubr.f32.mxu0 0.0
  %3954 = vmatmul.mubr.f32.gmra.mrb[0].mxu0 %v3574
  %v3955 = vpop.f32.mrb[0].mxu0
  %v3956 = vadd.f32 0.0, %v3955
  %v3957 = vpop.f32.mrb[0].mxu0
  %3958 = vmatprep.mubr.f32.mxu0 0.0
  %3959 = vmatmul.mubr.f32.gmra.mrb[0].mxu0 %v3577
  %v3960 = vpop.f32.mrb[0].mxu0
  %v3961 = vadd.f32 0.0, %v3960
  %v3962 = vpop.f32.mrb[0].mxu0
  %3963 = vmatprep.mubr.f32.mxu0 0.0
  %3964 = vmatmul.mubr.f32.gmra.mrb[0].mxu0 %v3580
  %v3965 = vpop.f32.mrb[0].mxu0
  %v3966 = vadd.f32 0.0, %v3965
  %v3967 = vpop.f32.mrb[0].mxu0
  %3968 = vmatprep.mubr.f32.mxu0 0.0
  %3969 = vmatmul.mubr.f32.gmra.mrb[0].mxu0 %v3583
  %v3970 = vpop.f32.mrb[0].mxu0
  %v3971 = vadd.f32 0.0, %v3970
  %v3972 = vpop.f32.mrb[0].mxu0
  %3973 = vdwg.mxu0
  %v3974 = vadd.f32 %v3656, %v3661
  %v3975 = vadd.f32 %v3974, %v3666
  %v3976 = vadd.f32 %v3975, %v3671
  %v3977 = vadd.f32 %v3976, %v3676
  %v3978 = vadd.f32 %v3977, %v3681
  %v3979 = vadd.f32 %v3978, %v3686
  %v3980 = vadd.f32 %v3979, %v3691
  %v3981 = vadd.f32 %v3980, %v3696
  %v3982 = vadd.f32 %v3981, %v3701
  %v3983 = vadd.f32 %v3982, %v3706
  %v3984 = vadd.f32 %v3983, %v3711
  %v3985 = vadd.f32 %v3984, %v3716
  %v3986 = vadd.f32 %v3985, %v3721
  %v3987 = vadd.f32 %v3986, %v3726
  %v3988 = vadd.f32 %v3987, %v3731
  %v3989 = vadd.f32 %v3988, %v3736
  %v3990 = vadd.f32 %v3989, %v3741
  %v3991 = vadd.f32 %v3990, %v3746
  %v3992 = vadd.f32 %v3991, %v3751
  %v3993 = vadd.f32 %v3992, %v3756
  %v3994 = vadd.f32 %v3993, %v3761
  %v3995 = vadd.f32 %v3994, %v3766
  %v3996 = vadd.f32 %v3995, %v3771
  %v3997 = vadd.f32 %v3996, %v3776
  %v3998 = vadd.f32 %v3997, %v3781
  %v3999 = vadd.f32 %v3998, %v3786
  %v4000 = vadd.f32 %v3999, %v3791
  %v4001 = vadd.f32 %v4000, %v3796
  %v4002 = vadd.f32 %v4001, %v3801
  %v4003 = vadd.f32 %v4002, %v3806
  %v4004 = vadd.f32 %v4003, %v3811
  %v4005 = vadd.f32 %v4004, %v3816
  %v4006 = vadd.f32 %v4005, %v3821
  %v4007 = vadd.f32 %v4006, %v3826
  %v4008 = vadd.f32 %v4007, %v3831
  %v4009 = vadd.f32 %v4008, %v3836
  %v4010 = vadd.f32 %v4009, %v3841
  %v4011 = vadd.f32 %v4010, %v3846
  %v4012 = vadd.f32 %v4011, %v3851
  %v4013 = vadd.f32 %v4012, %v3856
  %v4014 = vadd.f32 %v4013, %v3861
  %v4015 = vadd.f32 %v4014, %v3866
  %v4016 = vadd.f32 %v4015, %v3871
  %v4017 = vadd.f32 %v4016, %v3876
  %v4018 = vadd.f32 %v4017, %v3881
  %v4019 = vadd.f32 %v4018, %v3886
  %v4020 = vadd.f32 %v4019, %v3891
  %v4021 = vadd.f32 %v4020, %v3896
  %v4022 = vadd.f32 %v4021, %v3901
  %v4023 = vadd.f32 %v4022, %v3906
  %v4024 = vadd.f32 %v4023, %v3911
  %v4025 = vadd.f32 %v4024, %v3916
  %v4026 = vadd.f32 %v4025, %v3921
  %v4027 = vadd.f32 %v4026, %v3926
  %v4028 = vadd.f32 %v4027, %v3931
  %v4029 = vadd.f32 %v4028, %v3936
  %v4030 = vadd.f32 %v4029, %v3941
  %v4031 = vadd.f32 %v4030, %v3946
  %v4032 = vadd.f32 %v4031, %v3951
  %v4033 = vadd.f32 %v4032, %v3956
  %v4034 = vadd.f32 %v4033, %v3961
  %v4035 = vadd.f32 %v4034, %v3966
  %v4036 = vadd.f32 %v4035, %v3971
  %v4037 = vrot.slane %v4036, 4
  %v4038 = vadd.f32 %v4036, %v4037
  %v4039 = vrot.slane %v4038, 2
  %v4040 = vadd.f32 %v4038, %v4039
  %v4041 = vrot.slane %v4040, 1
  %v4042 = vadd.f32 %v4040, %v4041
  %v4043 = vmul.f32 %v4042, 0.001953125
  %v4044 = vmul.f32 %v3656, %v3656
  %v4045 = vmul.f32 %v3661, %v3661
  %v4046 = vmul.f32 %v3666, %v3666
  %v4047 = vmul.f32 %v3671, %v3671
  %v4048 = vmul.f32 %v3676, %v3676
  %v4049 = vmul.f32 %v3681, %v3681
  %v4050 = vmul.f32 %v3686, %v3686
  %v4051 = vmul.f32 %v3691, %v3691
  %v4052 = vmul.f32 %v3696, %v3696
  %v4053 = vmul.f32 %v3701, %v3701
  %v4054 = vmul.f32 %v3706, %v3706
  %v4055 = vmul.f32 %v3711, %v3711
  %v4056 = vmul.f32 %v3716, %v3716
  %v4057 = vmul.f32 %v3721, %v3721
  %v4058 = vmul.f32 %v3726, %v3726
  %v4059 = vmul.f32 %v3731, %v3731
  %v4060 = vmul.f32 %v3736, %v3736
  %v4061 = vmul.f32 %v3741, %v3741
  %v4062 = vmul.f32 %v3746, %v3746
  %v4063 = vmul.f32 %v3751, %v3751
  %v4064 = vmul.f32 %v3756, %v3756
  %v4065 = vmul.f32 %v3761, %v3761
  %v4066 = vmul.f32 %v3766, %v3766
  %v4067 = vmul.f32 %v3771, %v3771
  %v4068 = vmul.f32 %v3776, %v3776
  %v4069 = vmul.f32 %v3781, %v3781
  %v4070 = vmul.f32 %v3786, %v3786
  %v4071 = vmul.f32 %v3791, %v3791
  %v4072 = vmul.f32 %v3796, %v3796
  %v4073 = vmul.f32 %v3801, %v3801
  %v4074 = vmul.f32 %v3806, %v3806
  %v4075 = vmul.f32 %v3811, %v3811
  %v4076 = vmul.f32 %v3816, %v3816
  %v4077 = vmul.f32 %v3821, %v3821
  %v4078 = vmul.f32 %v3826, %v3826
  %v4079 = vmul.f32 %v3831, %v3831
  %v4080 = vmul.f32 %v3836, %v3836
  %v4081 = vmul.f32 %v3841, %v3841
  %v4082 = vmul.f32 %v3846, %v3846
  %v4083 = vmul.f32 %v3851, %v3851
  %v4084 = vmul.f32 %v3856, %v3856
  %v4085 = vmul.f32 %v3861, %v3861
  %v4086 = vmul.f32 %v3866, %v3866
  %v4087 = vmul.f32 %v3871, %v3871
  %v4088 = vmul.f32 %v3876, %v3876
  %v4089 = vmul.f32 %v3881, %v3881
  %v4090 = vmul.f32 %v3886, %v3886
  %v4091 = vmul.f32 %v3891, %v3891
  %v4092 = vmul.f32 %v3896, %v3896
  %v4093 = vmul.f32 %v3901, %v3901
  %v4094 = vmul.f32 %v3906, %v3906
  %v4095 = vmul.f32 %v3911, %v3911
  %v4096 = vmul.f32 %v3916, %v3916
  %v4097 = vmul.f32 %v3921, %v3921
  %v4098 = vmul.f32 %v3926, %v3926
  %v4099 = vmul.f32 %v3931, %v3931
  %v4100 = vmul.f32 %v3936, %v3936
  %v4101 = vmul.f32 %v3941, %v3941
  %v4102 = vmul.f32 %v3946, %v3946
  %v4103 = vmul.f32 %v3951, %v3951
  %v4104 = vmul.f32 %v3956, %v3956
  %v4105 = vmul.f32 %v3961, %v3961
  %v4106 = vmul.f32 %v3966, %v3966
  %v4107 = vmul.f32 %v3971, %v3971
  %v4108 = vadd.f32 %v4044, %v4045
  %v4109 = vadd.f32 %v4108, %v4046
  %v4110 = vadd.f32 %v4109, %v4047
  %v4111 = vadd.f32 %v4110, %v4048
  %v4112 = vadd.f32 %v4111, %v4049
  %v4113 = vadd.f32 %v4112, %v4050
  %v4114 = vadd.f32 %v4113, %v4051
  %v4115 = vadd.f32 %v4114, %v4052
  %v4116 = vadd.f32 %v4115, %v4053
  %v4117 = vadd.f32 %v4116, %v4054
  %v4118 = vadd.f32 %v4117, %v4055
  %v4119 = vadd.f32 %v4118, %v4056
  %v4120 = vadd.f32 %v4119, %v4057
  %v4121 = vadd.f32 %v4120, %v4058
  %v4122 = vadd.f32 %v4121, %v4059
  %v4123 = vadd.f32 %v4122, %v4060
  %v4124 = vadd.f32 %v4123, %v4061
  %v4125 = vadd.f32 %v4124, %v4062
  %v4126 = vadd.f32 %v4125, %v4063
  %v4127 = vadd.f32 %v4126, %v4064
  %v4128 = vadd.f32 %v4127, %v4065
  %v4129 = vadd.f32 %v4128, %v4066
  %v4130 = vadd.f32 %v4129, %v4067
  %v4131 = vadd.f32 %v4130, %v4068
  %v4132 = vadd.f32 %v4131, %v4069
  %v4133 = vadd.f32 %v4132, %v4070
  %v4134 = vadd.f32 %v4133, %v4071
  %v4135 = vadd.f32 %v4134, %v4072
  %v4136 = vadd.f32 %v4135, %v4073
  %v4137 = vadd.f32 %v4136, %v4074
  %v4138 = vadd.f32 %v4137, %v4075
  %v4139 = vadd.f32 %v4138, %v4076
  %v4140 = vadd.f32 %v4139, %v4077
  %v4141 = vadd.f32 %v4140, %v4078
  %v4142 = vadd.f32 %v4141, %v4079
  %v4143 = vadd.f32 %v4142, %v4080
  %v4144 = vadd.f32 %v4143, %v4081
  %v4145 = vadd.f32 %v4144, %v4082
  %v4146 = vadd.f32 %v4145, %v4083
  %v4147 = vadd.f32 %v4146, %v4084
  %v4148 = vadd.f32 %v4147, %v4085
  %v4149 = vadd.f32 %v4148, %v4086
  %v4150 = vadd.f32 %v4149, %v4087
  %v4151 = vadd.f32 %v4150, %v4088
  %v4152 = vadd.f32 %v4151, %v4089
  %v4153 = vadd.f32 %v4152, %v4090
  %v4154 = vadd.f32 %v4153, %v4091
  %v4155 = vadd.f32 %v4154, %v4092
  %v4156 = vadd.f32 %v4155, %v4093
  %v4157 = vadd.f32 %v4156, %v4094
  %v4158 = vadd.f32 %v4157, %v4095
  %v4159 = vadd.f32 %v4158, %v4096
  %v4160 = vadd.f32 %v4159, %v4097
  %v4161 = vadd.f32 %v4160, %v4098
  %v4162 = vadd.f32 %v4161, %v4099
  %v4163 = vadd.f32 %v4162, %v4100
  %v4164 = vadd.f32 %v4163, %v4101
  %v4165 = vadd.f32 %v4164, %v4102
  %v4166 = vadd.f32 %v4165, %v4103
  %v4167 = vadd.f32 %v4166, %v4104
  %v4168 = vadd.f32 %v4167, %v4105
  %v4169 = vadd.f32 %v4168, %v4106
  %v4170 = vadd.f32 %v4169, %v4107
  %v4171 = vrot.slane %v4170, 4
  %v4172 = vadd.f32 %v4170, %v4171
  %v4173 = vrot.slane %v4172, 2
  %v4174 = vadd.f32 %v4172, %v4173
  %v4175 = vrot.slane %v4174, 1
  %v4176 = vadd.f32 %v4174, %v4175
  %v4177 = vmul.f32 %v4176, 0.001953125
  %v4178 = vmul.f32 %v4043, %v4043
  %v4179 = vsub.f32 %v4177, %v4178
  %v4180 = vmax.f32 %v4179, 0.0
  %v4181 = vsub.f32 %v3656, %v4043
  %v4182 = vsub.f32 %v3661, %v4043
  %v4183 = vsub.f32 %v3666, %v4043
  %v4184 = vsub.f32 %v3671, %v4043
  %v4185 = vsub.f32 %v3676, %v4043
  %v4186 = vsub.f32 %v3681, %v4043
  %v4187 = vsub.f32 %v3686, %v4043
  %v4188 = vsub.f32 %v3691, %v4043
  %v4189 = vsub.f32 %v3696, %v4043
  %v4190 = vsub.f32 %v3701, %v4043
  %v4191 = vsub.f32 %v3706, %v4043
  %v4192 = vsub.f32 %v3711, %v4043
  %v4193 = vsub.f32 %v3716, %v4043
  %v4194 = vsub.f32 %v3721, %v4043
  %v4195 = vsub.f32 %v3726, %v4043
  %v4196 = vsub.f32 %v3731, %v4043
  %v4197 = vsub.f32 %v3736, %v4043
  %v4198 = vsub.f32 %v3741, %v4043
  %v4199 = vsub.f32 %v3746, %v4043
  %v4200 = vsub.f32 %v3751, %v4043
  %v4201 = vsub.f32 %v3756, %v4043
  %v4202 = vsub.f32 %v3761, %v4043
  %v4203 = vsub.f32 %v3766, %v4043
  %v4204 = vsub.f32 %v3771, %v4043
  %v4205 = vsub.f32 %v3776, %v4043
  %v4206 = vsub.f32 %v3781, %v4043
  %v4207 = vsub.f32 %v3786, %v4043
  %v4208 = vsub.f32 %v3791, %v4043
  %v4209 = vsub.f32 %v3796, %v4043
  %v4210 = vsub.f32 %v3801, %v4043
  %v4211 = vsub.f32 %v3806, %v4043
  %v4212 = vsub.f32 %v3811, %v4043
  %v4213 = vsub.f32 %v3816, %v4043
  %v4214 = vsub.f32 %v3821, %v4043
  %v4215 = vsub.f32 %v3826, %v4043
  %v4216 = vsub.f32 %v3831, %v4043
  %v4217 = vsub.f32 %v3836, %v4043
  %v4218 = vsub.f32 %v3841, %v4043
  %v4219 = vsub.f32 %v3846, %v4043
  %v4220 = vsub.f32 %v3851, %v4043
  %v4221 = vsub.f32 %v3856, %v4043
  %v4222 = vsub.f32 %v3861, %v4043
  %v4223 = vsub.f32 %v3866, %v4043
  %v4224 = vsub.f32 %v3871, %v4043
  %v4225 = vsub.f32 %v3876, %v4043
  %v4226 = vsub.f32 %v3881, %v4043
  %v4227 = vsub.f32 %v3886, %v4043
  %v4228 = vsub.f32 %v3891, %v4043
  %v4229 = vsub.f32 %v3896, %v4043
  %v4230 = vsub.f32 %v3901, %v4043
  %v4231 = vsub.f32 %v3906, %v4043
  %v4232 = vsub.f32 %v3911, %v4043
  %v4233 = vsub.f32 %v3916, %v4043
  %v4234 = vsub.f32 %v3921, %v4043
  %v4235 = vsub.f32 %v3926, %v4043
  %v4236 = vsub.f32 %v3931, %v4043
  %v4237 = vsub.f32 %v3936, %v4043
  %v4238 = vsub.f32 %v3941, %v4043
  %v4239 = vsub.f32 %v3946, %v4043
  %v4240 = vsub.f32 %v3951, %v4043
  %v4241 = vsub.f32 %v3956, %v4043
  %v4242 = vsub.f32 %v3961, %v4043
  %v4243 = vsub.f32 %v3966, %v4043
  %v4244 = vsub.f32 %v3971, %v4043
  %v4245 = vadd.f32 %v4180, 1e-05
  %v4246 = vrsqrt.pop %v4245
  %v4247 = vmul.f32 %v4181, %v4246
  %v4248 = vmul.f32 %v4182, %v4246
  %v4249 = vmul.f32 %v4183, %v4246
  %v4250 = vmul.f32 %v4184, %v4246
  %v4251 = vmul.f32 %v4185, %v4246
  %v4252 = vmul.f32 %v4186, %v4246
  %v4253 = vmul.f32 %v4187, %v4246
  %v4254 = vmul.f32 %v4188, %v4246
  %v4255 = vmul.f32 %v4189, %v4246
  %v4256 = vmul.f32 %v4190, %v4246
  %v4257 = vmul.f32 %v4191, %v4246
  %v4258 = vmul.f32 %v4192, %v4246
  %v4259 = vmul.f32 %v4193, %v4246
  %v4260 = vmul.f32 %v4194, %v4246
  %v4261 = vmul.f32 %v4195, %v4246
  %v4262 = vmul.f32 %v4196, %v4246
  %v4263 = vmul.f32 %v4197, %v4246
  %v4264 = vmul.f32 %v4198, %v4246
  %v4265 = vmul.f32 %v4199, %v4246
  %v4266 = vmul.f32 %v4200, %v4246
  %v4267 = vmul.f32 %v4201, %v4246
  %v4268 = vmul.f32 %v4202, %v4246
  %v4269 = vmul.f32 %v4203, %v4246
  %v4270 = vmul.f32 %v4204, %v4246
  %v4271 = vmul.f32 %v4205, %v4246
  %v4272 = vmul.f32 %v4206, %v4246
  %v4273 = vmul.f32 %v4207, %v4246
  %v4274 = vmul.f32 %v4208, %v4246
  %v4275 = vmul.f32 %v4209, %v4246
  %v4276 = vmul.f32 %v4210, %v4246
  %v4277 = vmul.f32 %v4211, %v4246
  %v4278 = vmul.f32 %v4212, %v4246
  %v4279 = vmul.f32 %v4213, %v4246
  %v4280 = vmul.f32 %v4214, %v4246
  %v4281 = vmul.f32 %v4215, %v4246
  %v4282 = vmul.f32 %v4216, %v4246
  %v4283 = vmul.f32 %v4217, %v4246
  %v4284 = vmul.f32 %v4218, %v4246
  %v4285 = vmul.f32 %v4219, %v4246
  %v4286 = vmul.f32 %v4220, %v4246
  %v4287 = vmul.f32 %v4221, %v4246
  %v4288 = vmul.f32 %v4222, %v4246
  %v4289 = vmul.f32 %v4223, %v4246
  %v4290 = vmul.f32 %v4224, %v4246
  %v4291 = vmul.f32 %v4225, %v4246
  %v4292 = vmul.f32 %v4226, %v4246
  %v4293 = vmul.f32 %v4227, %v4246
  %v4294 = vmul.f32 %v4228, %v4246
  %v4295 = vmul.f32 %v4229, %v4246
  %v4296 = vmul.f32 %v4230, %v4246
  %v4297 = vmul.f32 %v4231, %v4246
  %v4298 = vmul.f32 %v4232, %v4246
  %v4299 = vmul.f32 %v4233, %v4246
  %v4300 = vmul.f32 %v4234, %v4246
  %v4301 = vmul.f32 %v4235, %v4246
  %v4302 = vmul.f32 %v4236, %v4246
  %v4303 = vmul.f32 %v4237, %v4246
  %v4304 = vmul.f32 %v4238, %v4246
  %v4305 = vmul.f32 %v4239, %v4246
  %v4306 = vmul.f32 %v4240, %v4246
  %v4307 = vmul.f32 %v4241, %v4246
  %v4308 = vmul.f32 %v4242, %v4246
  %v4309 = vmul.f32 %v4243, %v4246
  %v4310 = vmul.f32 %v4244, %v4246
  %v4311 = vld [vmem:[%s2] sm:$0x1]
  %v4313 = vlaneseq
  %v4314 = vshrl.u32 %v4313, 7
  %v4315 = vsub.s32 0, %v4314
  %v4316 = vrot.slane %v4311, %v4315
  %v4318 = vmul.f32 %v4247, %v4316
  %v4319 = vmul.f32 %v4248, %v4316
  %v4320 = vmul.f32 %v4249, %v4316
  %v4321 = vmul.f32 %v4250, %v4316
  %v4322 = vmul.f32 %v4251, %v4316
  %v4323 = vmul.f32 %v4252, %v4316
  %v4324 = vmul.f32 %v4253, %v4316
  %v4325 = vmul.f32 %v4254, %v4316
  %v4326 = vmul.f32 %v4255, %v4316
  %v4327 = vmul.f32 %v4256, %v4316
  %v4328 = vmul.f32 %v4257, %v4316
  %v4329 = vmul.f32 %v4258, %v4316
  %v4330 = vmul.f32 %v4259, %v4316
  %v4331 = vmul.f32 %v4260, %v4316
  %v4332 = vmul.f32 %v4261, %v4316
  %v4333 = vmul.f32 %v4262, %v4316
  %v4334 = vmul.f32 %v4263, %v4316
  %v4335 = vmul.f32 %v4264, %v4316
  %v4336 = vmul.f32 %v4265, %v4316
  %v4337 = vmul.f32 %v4266, %v4316
  %v4338 = vmul.f32 %v4267, %v4316
  %v4339 = vmul.f32 %v4268, %v4316
  %v4340 = vmul.f32 %v4269, %v4316
  %v4341 = vmul.f32 %v4270, %v4316
  %v4342 = vmul.f32 %v4271, %v4316
  %v4343 = vmul.f32 %v4272, %v4316
  %v4344 = vmul.f32 %v4273, %v4316
  %v4345 = vmul.f32 %v4274, %v4316
  %v4346 = vmul.f32 %v4275, %v4316
  %v4347 = vmul.f32 %v4276, %v4316
  %v4348 = vmul.f32 %v4277, %v4316
  %v4349 = vmul.f32 %v4278, %v4316
  %v4350 = vmul.f32 %v4279, %v4316
  %v4351 = vmul.f32 %v4280, %v4316
  %v4352 = vmul.f32 %v4281, %v4316
  %v4353 = vmul.f32 %v4282, %v4316
  %v4354 = vmul.f32 %v4283, %v4316
  %v4355 = vmul.f32 %v4284, %v4316
  %v4356 = vmul.f32 %v4285, %v4316
  %v4357 = vmul.f32 %v4286, %v4316
  %v4358 = vmul.f32 %v4287, %v4316
  %v4359 = vmul.f32 %v4288, %v4316
  %v4360 = vmul.f32 %v4289, %v4316
  %v4361 = vmul.f32 %v4290, %v4316
  %v4362 = vmul.f32 %v4291, %v4316
  %v4363 = vmul.f32 %v4292, %v4316
  %v4364 = vmul.f32 %v4293, %v4316
  %v4365 = vmul.f32 %v4294, %v4316
  %v4366 = vmul.f32 %v4295, %v4316
  %v4367 = vmul.f32 %v4296, %v4316
  %v4368 = vmul.f32 %v4297, %v4316
  %v4369 = vmul.f32 %v4298, %v4316
  %v4370 = vmul.f32 %v4299, %v4316
  %v4371 = vmul.f32 %v4300, %v4316
  %v4372 = vmul.f32 %v4301, %v4316
  %v4373 = vmul.f32 %v4302, %v4316
  %v4374 = vmul.f32 %v4303, %v4316
  %v4375 = vmul.f32 %v4304, %v4316
  %v4376 = vmul.f32 %v4305, %v4316
  %v4377 = vmul.f32 %v4306, %v4316
  %v4378 = vmul.f32 %v4307, %v4316
  %v4379 = vmul.f32 %v4308, %v4316
  %v4380 = vmul.f32 %v4309, %v4316
  %v4381 = vmul.f32 %v4310, %v4316
  %v4382 = vld [vmem:[%s3] sm:$0x1]
  %v4384 = vlaneseq
  %v4385 = vshrl.u32 %v4384, 7
  %v4386 = vsub.s32 0, %v4385
  %v4387 = vrot.slane %v4382, %v4386
  %v4389 = vadd.f32 %v4318, %v4387
  %v4390 = vadd.f32 %v4319, %v4387
  %v4391 = vadd.f32 %v4320, %v4387
  %v4392 = vadd.f32 %v4321, %v4387
  %v4393 = vadd.f32 %v4322, %v4387
  %v4394 = vadd.f32 %v4323, %v4387
  %v4395 = vadd.f32 %v4324, %v4387
  %v4396 = vadd.f32 %v4325, %v4387
  %v4397 = vadd.f32 %v4326, %v4387
  %v4398 = vadd.f32 %v4327, %v4387
  %v4399 = vadd.f32 %v4328, %v4387
  %v4400 = vadd.f32 %v4329, %v4387
  %v4401 = vadd.f32 %v4330, %v4387
  %v4402 = vadd.f32 %v4331, %v4387
  %v4403 = vadd.f32 %v4332, %v4387
  %v4404 = vadd.f32 %v4333, %v4387
  %v4405 = vadd.f32 %v4334, %v4387
  %v4406 = vadd.f32 %v4335, %v4387
  %v4407 = vadd.f32 %v4336, %v4387
  %v4408 = vadd.f32 %v4337, %v4387
  %v4409 = vadd.f32 %v4338, %v4387
  %v4410 = vadd.f32 %v4339, %v4387
  %v4411 = vadd.f32 %v4340, %v4387
  %v4412 = vadd.f32 %v4341, %v4387
  %v4413 = vadd.f32 %v4342, %v4387
  %v4414 = vadd.f32 %v4343, %v4387
  %v4415 = vadd.f32 %v4344, %v4387
  %v4416 = vadd.f32 %v4345, %v4387
  %v4417 = vadd.f32 %v4346, %v4387
  %v4418 = vadd.f32 %v4347, %v4387
  %v4419 = vadd.f32 %v4348, %v4387
  %v4420 = vadd.f32 %v4349, %v4387
  %v4421 = vadd.f32 %v4350, %v4387
  %v4422 = vadd.f32 %v4351, %v4387
  %v4423 = vadd.f32 %v4352, %v4387
  %v4424 = vadd.f32 %v4353, %v4387
  %v4425 = vadd.f32 %v4354, %v4387
  %v4426 = vadd.f32 %v4355, %v4387
  %v4427 = vadd.f32 %v4356, %v4387
  %v4428 = vadd.f32 %v4357, %v4387
  %v4429 = vadd.f32 %v4358, %v4387
  %v4430 = vadd.f32 %v4359, %v4387
  %v4431 = vadd.f32 %v4360, %v4387
  %v4432 = vadd.f32 %v4361, %v4387
  %v4433 = vadd.f32 %v4362, %v4387
  %v4434 = vadd.f32 %v4363, %v4387
  %v4435 = vadd.f32 %v4364, %v4387
  %v4436 = vadd.f32 %v4365, %v4387
  %v4437 = vadd.f32 %v4366, %v4387
  %v4438 = vadd.f32 %v4367, %v4387
  %v4439 = vadd.f32 %v4368, %v4387
  %v4440 = vadd.f32 %v4369, %v4387
  %v4441 = vadd.f32 %v4370, %v4387
  %v4442 = vadd.f32 %v4371, %v4387
  %v4443 = vadd.f32 %v4372, %v4387
  %v4444 = vadd.f32 %v4373, %v4387
  %v4445 = vadd.f32 %v4374, %v4387
  %v4446 = vadd.f32 %v4375, %v4387
  %v4447 = vadd.f32 %v4376, %v4387
  %v4448 = vadd.f32 %v4377, %v4387
  %v4449 = vadd.f32 %v4378, %v4387
  %v4450 = vadd.f32 %v4379, %v4387
  %v4451 = vadd.f32 %v4380, %v4387
  %v4452 = vadd.f32 %v4381, %v4387
  %v4453 = vmax.f32 %v4389, 0.0
  %v4454 = vmax.f32 %v4390, 0.0
  %v4455 = vmax.f32 %v4391, 0.0
  %v4456 = vmax.f32 %v4392, 0.0
  %v4457 = vmax.f32 %v4393, 0.0
  %v4458 = vmax.f32 %v4394, 0.0
  %v4459 = vmax.f32 %v4395, 0.0
  %v4460 = vmax.f32 %v4396, 0.0
  %v4461 = vmax.f32 %v4397, 0.0
  %v4462 = vmax.f32 %v4398, 0.0
  %v4463 = vmax.f32 %v4399, 0.0
  %v4464 = vmax.f32 %v4400, 0.0
  %v4465 = vmax.f32 %v4401, 0.0
  %v4466 = vmax.f32 %v4402, 0.0
  %v4467 = vmax.f32 %v4403, 0.0
  %v4468 = vmax.f32 %v4404, 0.0
  %v4469 = vmax.f32 %v4405, 0.0
  %v4470 = vmax.f32 %v4406, 0.0
  %v4471 = vmax.f32 %v4407, 0.0
  %v4472 = vmax.f32 %v4408, 0.0
  %v4473 = vmax.f32 %v4409, 0.0
  %v4474 = vmax.f32 %v4410, 0.0
  %v4475 = vmax.f32 %v4411, 0.0
  %v4476 = vmax.f32 %v4412, 0.0
  %v4477 = vmax.f32 %v4413, 0.0
  %v4478 = vmax.f32 %v4414, 0.0
  %v4479 = vmax.f32 %v4415, 0.0
  %v4480 = vmax.f32 %v4416, 0.0
  %v4481 = vmax.f32 %v4417, 0.0
  %v4482 = vmax.f32 %v4418, 0.0
  %v4483 = vmax.f32 %v4419, 0.0
  %v4484 = vmax.f32 %v4420, 0.0
  %v4485 = vmax.f32 %v4421, 0.0
  %v4486 = vmax.f32 %v4422, 0.0
  %v4487 = vmax.f32 %v4423, 0.0
  %v4488 = vmax.f32 %v4424, 0.0
  %v4489 = vmax.f32 %v4425, 0.0
  %v4490 = vmax.f32 %v4426, 0.0
  %v4491 = vmax.f32 %v4427, 0.0
  %v4492 = vmax.f32 %v4428, 0.0
  %v4493 = vmax.f32 %v4429, 0.0
  %v4494 = vmax.f32 %v4430, 0.0
  %v4495 = vmax.f32 %v4431, 0.0
  %v4496 = vmax.f32 %v4432, 0.0
  %v4497 = vmax.f32 %v4433, 0.0
  %v4498 = vmax.f32 %v4434, 0.0
  %v4499 = vmax.f32 %v4435, 0.0
  %v4500 = vmax.f32 %v4436, 0.0
  %v4501 = vmax.f32 %v4437, 0.0
  %v4502 = vmax.f32 %v4438, 0.0
  %v4503 = vmax.f32 %v4439, 0.0
  %v4504 = vmax.f32 %v4440, 0.0
  %v4505 = vmax.f32 %v4441, 0.0
  %v4506 = vmax.f32 %v4442, 0.0
  %v4507 = vmax.f32 %v4443, 0.0
  %v4508 = vmax.f32 %v4444, 0.0
  %v4509 = vmax.f32 %v4445, 0.0
  %v4510 = vmax.f32 %v4446, 0.0
  %v4511 = vmax.f32 %v4447, 0.0
  %v4512 = vmax.f32 %v4448, 0.0
  %v4513 = vmax.f32 %v4449, 0.0
  %v4514 = vmax.f32 %v4450, 0.0
  %v4515 = vmax.f32 %v4451, 0.0
  %v4516 = vmax.f32 %v4452, 0.0
  %4517 = vst [vmem:[#allocation3] sm:$0xff] 0.0
  %4518 = vst [vmem:[#allocation3 + $0x8] sm:$0xff] 0.0
  %4519 = vst [vmem:[#allocation3 + $0x10] sm:$0x3] 0.0
  %4520 = vst [vmem:[#allocation3 + $0x1b0] sm:$0xff] 0.0
  %4521 = vst [vmem:[#allocation3 + $0x1b8] sm:$0xff] 0.0
  %4522 = vst [vmem:[#allocation3 + $0x1c0] sm:$0x3] 0.0
  %s4523 = scalar_lea.vmem [#allocation3], 408
  %4524 = vst [vmem:[%s4523] sm:$0xff] 0.0
  %4525 = vst [vmem:[%s4523 + $0x8] sm:$0xff] 0.0
  %4526 = vst [vmem:[%s4523 + $0x10] sm:$0x3] 0.0
  %4527 = vst [vmem:[%s4523 + $0x1b0] sm:$0xff] 0.0
  %4528 = vst [vmem:[%s4523 + $0x1b8] sm:$0xff] 0.0
  %4529 = vst [vmem:[%s4523 + $0x1c0] sm:$0x3] 0.0
  %4530 = vst [vmem:[#allocation3] sm:$0x1] 0.0
  %4531 = vst [vmem:[#allocation3 + $0x18] sm:$0x1] 0.0
  %4532 = vst [vmem:[#allocation3 + $0x30] sm:$0x1] 0.0
  %4533 = vst [vmem:[#allocation3 + $0x48] sm:$0x1] 0.0
  %4534 = vst [vmem:[#allocation3 + $0x60] sm:$0x1] 0.0
  %4535 = vst [vmem:[#allocation3 + $0x78] sm:$0x1] 0.0
  %4536 = vst [vmem:[#allocation3 + $0x90] sm:$0x1] 0.0
  %4537 = vst [vmem:[#allocation3 + $0xa8] sm:$0x1] 0.0
  %4538 = vst [vmem:[#allocation3 + $0xc0] sm:$0x1] 0.0
  %4539 = vst [vmem:[#allocation3 + $0xd8] sm:$0x1] 0.0
  %4540 = vst [vmem:[#allocation3 + $0xf0] sm:$0x1] 0.0
  %4541 = vst [vmem:[#allocation3 + $0x108] sm:$0x1] 0.0
  %4542 = vst [vmem:[#allocation3 + $0x120] sm:$0x1] 0.0
  %4543 = vst [vmem:[#allocation3 + $0x138] sm:$0x1] 0.0
  %4544 = vst [vmem:[#allocation3 + $0x150] sm:$0x1] 0.0
  %4545 = vst [vmem:[#allocation3 + $0x168] sm:$0x1] 0.0
  %4546 = vst [vmem:[#allocation3 + $0x180] sm:$0x1] 0.0
  %4547 = vst [vmem:[#allocation3 + $0x198] sm:$0x1] 0.0
  %4548 = vst [vmem:[#allocation3 + $0x1b0] sm:$0x1] 0.0
  %4549 = vst [vmem:[#allocation3 + $0x1c8] sm:$0x1] 0.0
  %4550 = vst [vmem:[#allocation3 + $0x1e0] sm:$0x1] 0.0
  %4551 = vst [vmem:[#allocation3 + $0x1f8] sm:$0x1] 0.0
  %4552 = vst [vmem:[#allocation3 + $0x210] sm:$0x1] 0.0
  %4553 = vst [vmem:[#allocation3 + $0x228] sm:$0x1] 0.0
  %4554 = vst [vmem:[#allocation3 + $0x240] sm:$0x1] 0.0
  %4555 = vst [vmem:[#allocation3 + $0x258] sm:$0x1] 0.0
  %4556 = vst [vmem:[#allocation3 + $0x270] sm:$0x1] 0.0
  %4557 = vst [vmem:[#allocation3 + $0x288] sm:$0x1] 0.0
  %4558 = vst [vmem:[#allocation3 + $0x2a0] sm:$0x1] 0.0
  %4559 = vst [vmem:[#allocation3 + $0x2b8] sm:$0x1] 0.0
  %4560 = vst [vmem:[#allocation3 + $0x2d0] sm:$0x1] 0.0
  %4561 = vst [vmem:[#allocation3 + $0x2e8] sm:$0x1] 0.0
  %4562 = vst [vmem:[#allocation3 + $0x300] sm:$0x1] 0.0
  %4563 = vst [vmem:[#allocation3 + $0x318] sm:$0x1] 0.0
  %4564 = vst [vmem:[#allocation3 + $0x330] sm:$0x1] 0.0
  %4565 = vst [vmem:[#allocation3 + $0x348] sm:$0x1] 0.0
  %4566 = vst [vmem:[#allocation3 + $0x11] sm:$0x1] 0.0
  %4567 = vst [vmem:[#allocation3 + $0x29] sm:$0x1] 0.0
  %4568 = vst [vmem:[#allocation3 + $0x41] sm:$0x1] 0.0
  %4569 = vst [vmem:[#allocation3 + $0x59] sm:$0x1] 0.0
  %4570 = vst [vmem:[#allocation3 + $0x71] sm:$0x1] 0.0
  %4571 = vst [vmem:[#allocation3 + $0x89] sm:$0x1] 0.0
  %4572 = vst [vmem:[#allocation3 + $0xa1] sm:$0x1] 0.0
  %4573 = vst [vmem:[#allocation3 + $0xb9] sm:$0x1] 0.0
  %4574 = vst [vmem:[#allocation3 + $0xd1] sm:$0x1] 0.0
  %4575 = vst [vmem:[#allocation3 + $0xe9] sm:$0x1] 0.0
  %4576 = vst [vmem:[#allocation3 + $0x101] sm:$0x1] 0.0
  %4577 = vst [vmem:[#allocation3 + $0x119] sm:$0x1] 0.0
  %4578 = vst [vmem:[#allocation3 + $0x131] sm:$0x1] 0.0
  %4579 = vst [vmem:[#allocation3 + $0x149] sm:$0x1] 0.0
  %4580 = vst [vmem:[#allocation3 + $0x161] sm:$0x1] 0.0
  %4581 = vst [vmem:[#allocation3 + $0x179] sm:$0x1] 0.0
  %4582 = vst [vmem:[#allocation3 + $0x191] sm:$0x1] 0.0
  %4583 = vst [vmem:[#allocation3 + $0x1a9] sm:$0x1] 0.0
  %4584 = vst [vmem:[#allocation3 + $0x1c1] sm:$0x1] 0.0
  %4585 = vst [vmem:[#allocation3 + $0x1d9] sm:$0x1] 0.0
  %4586 = vst [vmem:[#allocation3 + $0x1f1] sm:$0x1] 0.0
  %4587 = vst [vmem:[#allocation3 + $0x209] sm:$0x1] 0.0
  %4588 = vst [vmem:[#allocation3 + $0x221] sm:$0x1] 0.0
  %4589 = vst [vmem:[#allocation3 + $0x239] sm:$0x1] 0.0
  %4590 = vst [vmem:[#allocation3 + $0x251] sm:$0x1] 0.0
  %4591 = vst [vmem:[#allocation3 + $0x269] sm:$0x1] 0.0
  %4592 = vst [vmem:[#allocation3 + $0x281] sm:$0x1] 0.0
  %4593 = vst [vmem:[#allocation3 + $0x299] sm:$0x1] 0.0
  %4594 = vst [vmem:[#allocation3 + $0x2b1] sm:$0x1] 0.0
  %4595 = vst [vmem:[#allocation3 + $0x2c9] sm:$0x1] 0.0
  %4596 = vst [vmem:[#allocation3 + $0x2e1] sm:$0x1] 0.0
  %4597 = vst [vmem:[#allocation3 + $0x2f9] sm:$0x1] 0.0
  %4598 = vst [vmem:[#allocation3 + $0x311] sm:$0x1] 0.0
  %4599 = vst [vmem:[#allocation3 + $0x329] sm:$0x1] 0.0
  %4600 = vst [vmem:[#allocation3 + $0x341] sm:$0x1] 0.0
  %4601 = vst [vmem:[#allocation3 + $0x359] sm:$0x1] 0.0
  %s4602 = scalar_lea.vmem [#allocation3], 24
  %4603 = vst [vmem:[%s4602 + $0x1] sm:$0xff] %v4453
  %4604 = vst [vmem:[%s4602 + $0x9] sm:$0xff] %v4454
  %4605 = vst [vmem:[%s4602 + $0x19] sm:$0xff] %v4455
  %4606 = vst [vmem:[%s4602 + $0x21] sm:$0xff] %v4456
  %4607 = vst [vmem:[%s4602 + $0x31] sm:$0xff] %v4457
  %4608 = vst [vmem:[%s4602 + $0x39] sm:$0xff] %v4458
  %4609 = vst [vmem:[%s4602 + $0x49] sm:$0xff] %v4459
  %4610 = vst [vmem:[%s4602 + $0x51] sm:$0xff] %v4460
  %4611 = vst [vmem:[%s4602 + $0x61] sm:$0xff] %v4461
  %4612 = vst [vmem:[%s4602 + $0x69] sm:$0xff] %v4462
  %4613 = vst [vmem:[%s4602 + $0x79] sm:$0xff] %v4463
  %4614 = vst [vmem:[%s4602 + $0x81] sm:$0xff] %v4464
  %4615 = vst [vmem:[%s4602 + $0x91] sm:$0xff] %v4465
  %4616 = vst [vmem:[%s4602 + $0x99] sm:$0xff] %v4466
  %4617 = vst [vmem:[%s4602 + $0xa9] sm:$0xff] %v4467
  %4618 = vst [vmem:[%s4602 + $0xb1] sm:$0xff] %v4468
  %4619 = vst [vmem:[%s4602 + $0xc1] sm:$0xff] %v4469
  %4620 = vst [vmem:[%s4602 + $0xc9] sm:$0xff] %v4470
  %4621 = vst [vmem:[%s4602 + $0xd9] sm:$0xff] %v4471
  %4622 = vst [vmem:[%s4602 + $0xe1] sm:$0xff] %v4472
  %4623 = vst [vmem:[%s4602 + $0xf1] sm:$0xff] %v4473
  %4624 = vst [vmem:[%s4602 + $0xf9] sm:$0xff] %v4474
  %4625 = vst [vmem:[%s4602 + $0x109] sm:$0xff] %v4475
  %4626 = vst [vmem:[%s4602 + $0x111] sm:$0xff] %v4476
  %4627 = vst [vmem:[%s4602 + $0x121] sm:$0xff] %v4477
  %4628 = vst [vmem:[%s4602 + $0x129] sm:$0xff] %v4478
  %4629 = vst [vmem:[%s4602 + $0x139] sm:$0xff] %v4479
  %4630 = vst [vmem:[%s4602 + $0x141] sm:$0xff] %v4480
  %4631 = vst [vmem:[%s4602 + $0x151] sm:$0xff] %v4481
  %4632 = vst [vmem:[%s4602 + $0x159] sm:$0xff] %v4482
  %4633 = vst [vmem:[%s4602 + $0x169] sm:$0xff] %v4483
  %4634 = vst [vmem:[%s4602 + $0x171] sm:$0xff] %v4484
  %4635 = vst [vmem:[%s4602 + $0x1b1] sm:$0xff] %v4485
  %4636 = vst [vmem:[%s4602 + $0x1b9] sm:$0xff] %v4486
  %4637 = vst [vmem:[%s4602 + $0x1c9] sm:$0xff] %v4487
  %4638 = vst [vmem:[%s4602 + $0x1d1] sm:$0xff] %v4488
  %4639 = vst [vmem:[%s4602 + $0x1e1] sm:$0xff] %v4489
  %4640 = vst [vmem:[%s4602 + $0x1e9] sm:$0xff] %v4490
  %4641 = vst [vmem:[%s4602 + $0x1f9] sm:$0xff] %v4491
  %4642 = vst [vmem:[%s4602 + $0x201] sm:$0xff] %v4492
  %4643 = vst [vmem:[%s4602 + $0x211] sm:$0xff] %v4493
  %4644 = vst [vmem:[%s4602 + $0x219] sm:$0xff] %v4494
  %4645 = vst [vmem:[%s4602 + $0x229] sm:$0xff] %v4495
  %4646 = vst [vmem:[%s4602 + $0x231] sm:$0xff] %v4496
  %4647 = vst [vmem:[%s4602 + $0x241] sm:$0xff] %v4497
  %4648 = vst [vmem:[%s4602 + $0x249] sm:$0xff] %v4498
  %4649 = vst [vmem:[%s4602 + $0x259] sm:$0xff] %v4499
  %4650 = vst [vmem:[%s4602 + $0x261] sm:$0xff] %v4500
  %4651 = vst [vmem:[%s4602 + $0x271] sm:$0xff] %v4501
  %4652 = vst [vmem:[%s4602 + $0x279] sm:$0xff] %v4502
  %4653 = vst [vmem:[%s4602 + $0x289] sm:$0xff] %v4503
  %4654 = vst [vmem:[%s4602 + $0x291] sm:$0xff] %v4504
  %4655 = vst [vmem:[%s4602 + $0x2a1] sm:$0xff] %v4505
  %4656 = vst [vmem:[%s4602 + $0x2a9] sm:$0xff] %v4506
  %4657 = vst [vmem:[%s4602 + $0x2b9] sm:$0xff] %v4507
  %4658 = vst [vmem:[%s4602 + $0x2c1] sm:$0xff] %v4508
  %4659 = vst [vmem:[%s4602 + $0x2d1] sm:$0xff] %v4509
  %4660 = vst [vmem:[%s4602 + $0x2d9] sm:$0xff] %v4510
  %4661 = vst [vmem:[%s4602 + $0x2e9] sm:$0xff] %v4511
  %4662 = vst [vmem:[%s4602 + $0x2f1] sm:$0xff] %v4512
  %4663 = vst [vmem:[%s4602 + $0x301] sm:$0xff] %v4513
  %4664 = vst [vmem:[%s4602 + $0x309] sm:$0xff] %v4514
  %4665 = vst [vmem:[%s4602 + $0x319] sm:$0xff] %v4515
  %4666 = vst [vmem:[%s4602 + $0x321] sm:$0xff] %v4516
  %v4667 = vld [vmem:[#allocation3] sm:$0xff]
  %v4668 = vld [vmem:[#allocation3 + $0x8] sm:$0xff]
  %v4669 = vld [vmem:[#allocation3 + $0x18] sm:$0xff]
  %v4670 = vld [vmem:[#allocation3 + $0x20] sm:$0xff]
  %v4671 = vld [vmem:[#allocation3 + $0x30] sm:$0xff]
  %v4672 = vld [vmem:[#allocation3 + $0x38] sm:$0xff]
  %v4673 = vld [vmem:[#allocation3 + $0x48] sm:$0xff]
  %v4674 = vld [vmem:[#allocation3 + $0x50] sm:$0xff]
  %v4675 = vld [vmem:[#allocation3 + $0x60] sm:$0xff]
  %v4676 = vld [vmem:[#allocation3 + $0x68] sm:$0xff]
  %v4677 = vld [vmem:[#allocation3 + $0x78] sm:$0xff]
  %v4678 = vld [vmem:[#allocation3 + $0x80] sm:$0xff]
  %v4679 = vld [vmem:[#allocation3 + $0x90] sm:$0xff]
  %v4680 = vld [vmem:[#allocation3 + $0x98] sm:$0xff]
  %v4681 = vld [vmem:[#allocation3 + $0xa8] sm:$0xff]
  %v4682 = vld [vmem:[#allocation3 + $0xb0] sm:$0xff]
  %v4683 = vld [vmem:[#allocation3 + $0xc0] sm:$0xff]
  %v4684 = vld [vmem:[#allocation3 + $0xc8] sm:$0xff]
  %v4685 = vld [vmem:[#allocation3 + $0xd8] sm:$0xff]
  %v4686 = vld [vmem:[#allocation3 + $0xe0] sm:$0xff]
  %v4687 = vld [vmem:[#allocation3 + $0xf0] sm:$0xff]
  %v4688 = vld [vmem:[#allocation3 + $0xf8] sm:$0xff]
  %v4689 = vld [vmem:[#allocation3 + $0x108] sm:$0xff]
  %v4690 = vld [vmem:[#allocation3 + $0x110] sm:$0xff]
  %v4691 = vld [vmem:[#allocation3 + $0x120] sm:$0xff]
  %v4692 = vld [vmem:[#allocation3 + $0x128] sm:$0xff]
  %v4693 = vld [vmem:[#allocation3 + $0x138] sm:$0xff]
  %v4694 = vld [vmem:[#allocation3 + $0x140] sm:$0xff]
  %v4695 = vld [vmem:[#allocation3 + $0x150] sm:$0xff]
  %v4696 = vld [vmem:[#allocation3 + $0x158] sm:$0xff]
  %v4697 = vld [vmem:[#allocation3 + $0x168] sm:$0xff]
  %v4698 = vld [vmem:[#allocation3 + $0x170] sm:$0xff]
  %v4699 = vld [vmem:[#allocation3 + $0x1b0] sm:$0xff]
  %v4700 = vld [vmem:[#allocation3 + $0x1b8] sm:$0xff]
  %v4701 = vld [vmem:[#allocation3 + $0x1c8] sm:$0xff]
  %v4702 = vld [vmem:[#allocation3 + $0x1d0] sm:$0xff]
  %v4703 = vld [vmem:[#allocation3 + $0x1e0] sm:$0xff]
  %v4704 = vld [vmem:[#allocation3 + $0x1e8] sm:$0xff]
  %v4705 = vld [vmem:[#allocation3 + $0x1f8] sm:$0xff]
  %v4706 = vld [vmem:[#allocation3 + $0x200] sm:$0xff]
  %v4707 = vld [vmem:[#allocation3 + $0x210] sm:$0xff]
  %v4708 = vld [vmem:[#allocation3 + $0x218] sm:$0xff]
  %v4709 = vld [vmem:[#allocation3 + $0x228] sm:$0xff]
  %v4710 = vld [vmem:[#allocation3 + $0x230] sm:$0xff]
  %v4711 = vld [vmem:[#allocation3 + $0x240] sm:$0xff]
  %v4712 = vld [vmem:[#allocation3 + $0x248] sm:$0xff]
  %v4713 = vld [vmem:[#allocation3 + $0x258] sm:$0xff]
  %v4714 = vld [vmem:[#allocation3 + $0x260] sm:$0xff]
  %v4715 = vld [vmem:[#allocation3 + $0x270] sm:$0xff]
  %v4716 = vld [vmem:[#allocation3 + $0x278] sm:$0xff]
  %v4717 = vld [vmem:[#allocation3 + $0x288] sm:$0xff]
  %v4718 = vld [vmem:[#allocation3 + $0x290] sm:$0xff]
  %v4719 = vld [vmem:[#allocation3 + $0x2a0] sm:$0xff]
  %v4720 = vld [vmem:[#allocation3 + $0x2a8] sm:$0xff]
  %v4721 = vld [vmem:[#allocation3 + $0x2b8] sm:$0xff]
  %v4722 = vld [vmem:[#allocation3 + $0x2c0] sm:$0xff]
  %v4723 = vld [vmem:[#allocation3 + $0x2d0] sm:$0xff]
  %v4724 = vld [vmem:[#allocation3 + $0x2d8] sm:$0xff]
  %v4725 = vld [vmem:[#allocation3 + $0x2e8] sm:$0xff]
  %v4726 = vld [vmem:[#allocation3 + $0x2f0] sm:$0xff]
  %v4727 = vld [vmem:[#allocation3 + $0x300] sm:$0xff]
  %v4728 = vld [vmem:[#allocation3 + $0x308] sm:$0xff]
  %v4729 = vld [vmem:[#allocation3 + $0x318] sm:$0xff]
  %v4730 = vld [vmem:[#allocation3 + $0x320] sm:$0xff]
  %v4731 = vld [vmem:[%s4] sm:$0xff]
  %v4732 = vld [vmem:[%s4 + $0x8] sm:$0xff]
  %v4733 = vld [vmem:[%s4 + $0x10] sm:$0xff]
  %v4734 = vld [vmem:[%s4 + $0x18] sm:$0xff]
  %v4735 = vld [vmem:[%s4 + $0x20] sm:$0xff]
  %v4736 = vld [vmem:[%s4 + $0x28] sm:$0xff]
  %v4737 = vld [vmem:[%s4 + $0x30] sm:$0xff]
  %v4738 = vld [vmem:[%s4 + $0x38] sm:$0xff]
  %v4739 = vld [vmem:[%s4 + $0x40] sm:$0xff]
  %v4740 = vld [vmem:[%s4 + $0x48] sm:$0xff]
  %v4741 = vld [vmem:[%s4 + $0x50] sm:$0xff]
  %v4742 = vld [vmem:[%s4 + $0x58] sm:$0xff]
  %v4743 = vld [vmem:[%s4 + $0x60] sm:$0xff]
  %v4744 = vld [vmem:[%s4 + $0x68] sm:$0xff]
  %v4745 = vld [vmem:[%s4 + $0x70] sm:$0xff]
  %v4746 = vld [vmem:[%s4 + $0x78] sm:$0xff]
  %v4747 = vld [vmem:[#allocation3 + $0x1] sm:$0xff]
  %v4748 = vld [vmem:[#allocation3 + $0x9] sm:$0xff]
  %v4749 = vld [vmem:[#allocation3 + $0x19] sm:$0xff]
  %v4750 = vld [vmem:[#allocation3 + $0x21] sm:$0xff]
  %v4751 = vld [vmem:[#allocation3 + $0x31] sm:$0xff]
  %v4752 = vld [vmem:[#allocation3 + $0x39] sm:$0xff]
  %v4753 = vld [vmem:[#allocation3 + $0x49] sm:$0xff]
  %v4754 = vld [vmem:[#allocation3 + $0x51] sm:$0xff]
  %v4755 = vld [vmem:[#allocation3 + $0x61] sm:$0xff]
  %v4756 = vld [vmem:[#allocation3 + $0x69] sm:$0xff]
  %v4757 = vld [vmem:[#allocation3 + $0x79] sm:$0xff]
  %v4758 = vld [vmem:[#allocation3 + $0x81] sm:$0xff]
  %v4759 = vld [vmem:[#allocation3 + $0x91] sm:$0xff]
  %v4760 = vld [vmem:[#allocation3 + $0x99] sm:$0xff]
  %v4761 = vld [vmem:[#allocation3 + $0xa9] sm:$0xff]
  %v4762 = vld [vmem:[#allocation3 + $0xb1] sm:$0xff]
  %v4763 = vld [vmem:[#allocation3 + $0xc1] sm:$0xff]
  %v4764 = vld [vmem:[#allocation3 + $0xc9] sm:$0xff]
  %v4765 = vld [vmem:[#allocation3 + $0xd9] sm:$0xff]
  %v4766 = vld [vmem:[#allocation3 + $0xe1] sm:$0xff]
  %v4767 = vld [vmem:[#allocation3 + $0xf1] sm:$0xff]
  %v4768 = vld [vmem:[#allocation3 + $0xf9] sm:$0xff]
  %v4769 = vld [vmem:[#allocation3 + $0x109] sm:$0xff]
  %v4770 = vld [vmem:[#allocation3 + $0x111] sm:$0xff]
  %v4771 = vld [vmem:[#allocation3 + $0x121] sm:$0xff]
  %v4772 = vld [vmem:[#allocation3 + $0x129] sm:$0xff]
  %v4773 = vld [vmem:[#allocation3 + $0x139] sm:$0xff]
  %v4774 = vld [vmem:[#allocation3 + $0x141] sm:$0xff]
  %v4775 = vld [vmem:[#allocation3 + $0x151] sm:$0xff]
  %v4776 = vld [vmem:[#allocation3 + $0x159] sm:$0xff]
  %v4777 = vld [vmem:[#allocation3 + $0x169] sm:$0xff]
  %v4778 = vld [vmem:[#allocation3 + $0x171] sm:$0xff]
  %v4779 = vld [vmem:[#allocation3 + $0x1b1] sm:$0xff]
  %v4780 = vld [vmem:[#allocation3 + $0x1b9] sm:$0xff]
  %v4781 = vld [vmem:[#allocation3 + $0x1c9] sm:$0xff]
  %v4782 = vld [vmem:[#allocation3 + $0x1d1] sm:$0xff]
  %v4783 = vld [vmem:[#allocation3 + $0x1e1] sm:$0xff]
  %v4784 = vld [vmem:[#allocation3 + $0x1e9] sm:$0xff]
  %v4785 = vld [vmem:[#allocation3 + $0x1f9] sm:$0xff]
  %v4786 = vld [vmem:[#allocation3 + $0x201] sm:$0xff]
  %v4787 = vld [vmem:[#allocation3 + $0x211] sm:$0xff]
  %v4788 = vld [vmem:[#allocation3 + $0x219] sm:$0xff]
  %v4789 = vld [vmem:[#allocation3 + $0x229] sm:$0xff]
  %v4790 = vld [vmem:[#allocation3 + $0x231] sm:$0xff]
  %v4791 = vld [vmem:[#allocation3 + $0x241] sm:$0xff]
  %v4792 = vld [vmem:[#allocation3 + $0x249] sm:$0xff]
  %v4793 = vld [vmem:[#allocation3 + $0x259] sm:$0xff]
  %v4794 = vld [vmem:[#allocation3 + $0x261] sm:$0xff]
  %v4795 = vld [vmem:[#allocation3 + $0x271] sm:$0xff]
  %v4796 = vld [vmem:[#allocation3 + $0x279] sm:$0xff]
  %v4797 = vld [vmem:[#allocation3 + $0x289] sm:$0xff]
  %v4798 = vld [vmem:[#allocation3 + $0x291] sm:$0xff]
  %v4799 = vld [vmem:[#allocation3 + $0x2a1] sm:$0xff]
  %v4800 = vld [vmem:[#allocation3 + $0x2a9] sm:$0xff]
  %v4801 = vld [vmem:[#allocation3 + $0x2b9] sm:$0xff]
  %v4802 = vld [vmem:[#allocation3 + $0x2c1] sm:$0xff]
  %v4803 = vld [vmem:[#allocation3 + $0x2d1] sm:$0xff]
  %v4804 = vld [vmem:[#allocation3 + $0x2d9] sm:$0xff]
  %v4805 = vld [vmem:[#allocation3 + $0x2e9] sm:$0xff]
  %v4806 = vld [vmem:[#allocation3 + $0x2f1] sm:$0xff]
  %v4807 = vld [vmem:[#allocation3 + $0x301] sm:$0xff]
  %v4808 = vld [vmem:[#allocation3 + $0x309] sm:$0xff]
  %v4809 = vld [vmem:[#allocation3 + $0x319] sm:$0xff]
  %v4810 = vld [vmem:[#allocation3 + $0x321] sm:$0xff]
  %s4811 = scalar_lea.vmem %s4, 128
  %v4812 = vld [vmem:[%s4811] sm:$0xff]
  %v4813 = vld [vmem:[%s4811 + $0x8] sm:$0xff]
  %v4814 = vld [vmem:[%s4811 + $0x10] sm:$0xff]
  %v4815 = vld [vmem:[%s4811 + $0x18] sm:$0xff]
  %v4816 = vld [vmem:[%s4811 + $0x20] sm:$0xff]
  %v4817 = vld [vmem:[%s4811 + $0x28] sm:$0xff]
  %v4818 = vld [vmem:[%s4811 + $0x30] sm:$0xff]
  %v4819 = vld [vmem:[%s4811 + $0x38] sm:$0xff]
  %v4820 = vld [vmem:[%s4811 + $0x40] sm:$0xff]
  %v4821 = vld [vmem:[%s4811 + $0x48] sm:$0xff]
  %v4822 = vld [vmem:[%s4811 + $0x50] sm:$0xff]
  %v4823 = vld [vmem:[%s4811 + $0x58] sm:$0xff]
  %v4824 = vld [vmem:[%s4811 + $0x60] sm:$0xff]
  %v4825 = vld [vmem:[%s4811 + $0x68] sm:$0xff]
  %v4826 = vld [vmem:[%s4811 + $0x70] sm:$0xff]
  %v4827 = vld [vmem:[%s4811 + $0x78] sm:$0xff]
  %4828 = vmatprep.subr.mxu0 0.0
  %4829 = vmatpush1.msra.mxu0 %v4812
  %4830 = vmatprep.subr.mxu0 0.0
  %4831 = vmatpush1.msra.mxu0 %v4813
  %4832 = vmatprep.subr.mxu0 0.0
  %4833 = vmatpush1.msra.mxu0 %v4814
  %4834 = vmatprep.subr.mxu0 0.0
  %4835 = vmatpush1.msra.mxu0 %v4815
  %4836 = vmatprep.subr.mxu0 0.0
  %4837 = vmatpush1.msra.mxu0 %v4816
  %4838 = vmatprep.subr.mxu0 0.0
  %4839 = vmatpush1.msra.mxu0 %v4817
  %4840 = vmatprep.subr.mxu0 0.0
  %4841 = vmatpush1.msra.mxu0 %v4818
  %4842 = vmatprep.subr.mxu0 0.0
  %4843 = vmatpush1.msra.mxu0 %v4819
  %4844 = vmatprep.subr.mxu0 0.0
  %4845 = vmatpush1.msra.mxu0 %v4820
  %4846 = vmatprep.subr.mxu0 0.0
  %4847 = vmatpush1.msra.mxu0 %v4821
  %4848 = vmatprep.subr.mxu0 0.0
  %4849 = vmatpush1.msra.mxu0 %v4822
  %4850 = vmatprep.subr.mxu0 0.0
  %4851 = vmatpush1.msra.mxu0 %v4823
  %4852 = vmatprep.subr.mxu0 0.0
  %4853 = vmatpush1.msra.mxu0 %v4824
  %4854 = vmatprep.subr.mxu0 0.0
  %4855 = vmatpush1.msra.mxu0 %v4825
  %4856 = vmatprep.subr.mxu0 0.0
  %4857 = vmatpush1.msra.mxu0 %v4826
  %4858 = vmatprep.subr.mxu0 0.0
  %4859 = vmatpush1.msra.mxu0 %v4827
  %4860 = vmatprep.subr.mxu0 0.0
  %4861 = vmatpush1.msra.mxu0 0.0
  %4862 = vmatprep.subr.mxu0 0.0
  %4863 = vmatpush1.msra.mxu0 0.0
  %4864 = vmatprep.subr.mxu0 0.0
  %4865 = vmatpush1.msra.mxu0 0.0
  %4866 = vmatprep.subr.mxu0 0.0
  %4867 = vmatpush1.msra.mxu0 0.0
  %4868 = vmatprep.subr.mxu0 0.0
  %4869 = vmatpush1.msra.mxu0 0.0
  %4870 = vmatprep.subr.mxu0 0.0
  %4871 = vmatpush1.msra.mxu0 0.0
  %4872 = vmatprep.subr.mxu0 0.0
  %4873 = vmatpush1.msra.mxu0 0.0
  %4874 = vmatprep.subr.mxu0 0.0
  %4875 = vmatpush1.msra.mxu0 0.0
  %4876 = vmatprep.subr.mxu0 0.0
  %4877 = vmatpush1.msra.mxu0 0.0
  %4878 = vmatprep.subr.mxu0 0.0
  %4879 = vmatpush1.msra.mxu0 0.0
  %4880 = vmatprep.subr.mxu0 0.0
  %4881 = vmatpush1.msra.mxu0 0.0
  %4882 = vmatprep.subr.mxu0 0.0
  %4883 = vmatpush1.msra.mxu0 0.0
  %4884 = vmatprep.subr.mxu0 0.0
  %4885 = vmatpush1.msra.mxu0 0.0
  %4886 = vmatprep.subr.mxu0 0.0
  %4887 = vmatpush1.msra.mxu0 0.0
  %4888 = vmatprep.subr.mxu0 0.0
  %4889 = vmatpush1.msra.mxu0 0.0
  %4890 = vmatprep.subr.mxu0 0.0
  %4891 = vmatpush1.msra.mxu0 0.0
  %4892 = vmatprep.mubr.f32.mxu0 0.0
  %4893 = vmatmul.mubr.f32.gmra.mrb[0].mxu0 %v4747
  %v4894 = vpop.f32.mrb[0].mxu0
  %v4895 = vadd.f32 0.0, %v4894
  %v4896 = vpop.f32.mrb[0].mxu0
  %4897 = vmatprep.mubr.f32.mxu0 0.0
  %4898 = vmatmul.mubr.f32.gmra.mrb[0].mxu0 %v4748
  %v4899 = vpop.f32.mrb[0].mxu0
  %v4900 = vadd.f32 0.0, %v4899
  %v4901 = vpop.f32.mrb[0].mxu0
  %4902 = vmatprep.mubr.f32.mxu0 0.0
  %4903 = vmatmul.mubr.f32.gmra.mrb[0].mxu0 %v4749
  %v4904 = vpop.f32.mrb[0].mxu0
  %v4905 = vadd.f32 0.0, %v4904
  %v4906 = vpop.f32.mrb[0].mxu0
  %4907 = vmatprep.mubr.f32.mxu0 0.0
  %4908 = vmatmul.mubr.f32.gmra.mrb[0].mxu0 %v4750
  %v4909 = vpop.f32.mrb[0].mxu0
  %v4910 = vadd.f32 0.0, %v4909
  %v4911 = vpop.f32.mrb[0].mxu0
  %4912 = vmatprep.mubr.f32.mxu0 0.0
  %4913 = vmatmul.mubr.f32.gmra.mrb[0].mxu0 %v4751
  %v4914 = vpop.f32.mrb[0].mxu0
  %v4915 = vadd.f32 0.0, %v4914
  %v4916 = vpop.f32.mrb[0].mxu0
  %4917 = vmatprep.mubr.f32.mxu0 0.0
  %4918 = vmatmul.mubr.f32.gmra.mrb[0].mxu0 %v4752
  %v4919 = vpop.f32.mrb[0].mxu0
  %v4920 = vadd.f32 0.0, %v4919
  %v4921 = vpop.f32.mrb[0].mxu0
  %4922 = vmatprep.mubr.f32.mxu0 0.0
  %4923 = vmatmul.mubr.f32.gmra.mrb[0].mxu0 %v4753
  %v4924 = vpop.f32.mrb[0].mxu0
  %v4925 = vadd.f32 0.0, %v4924
  %v4926 = vpop.f32.mrb[0].mxu0
  %4927 = vmatprep.mubr.f32.mxu0 0.0
  %4928 = vmatmul.mubr.f32.gmra.mrb[0].mxu0 %v4754
  %v4929 = vpop.f32.mrb[0].mxu0
  %v4930 = vadd.f32 0.0, %v4929
  %v4931 = vpop.f32.mrb[0].mxu0
  %4932 = vmatprep.mubr.f32.mxu0 0.0
  %4933 = vmatmul.mubr.f32.gmra.mrb[0].mxu0 %v4755
  %v4934 = vpop.f32.mrb[0].mxu0
  %v4935 = vadd.f32 0.0, %v4934
  %v4936 = vpop.f32.mrb[0].mxu0
  %4937 = vmatprep.mubr.f32.mxu0 0.0
  %4938 = vmatmul.mubr.f32.gmra.mrb[0].mxu0 %v4756
  %v4939 = vpop.f32.mrb[0].mxu0
  %v4940 = vadd.f32 0.0, %v4939
  %v4941 = vpop.f32.mrb[0].mxu0
  %4942 = vmatprep.mubr.f32.mxu0 0.0
  %4943 = vmatmul.mubr.f32.gmra.mrb[0].mxu0 %v4757
  %v4944 = vpop.f32.mrb[0].mxu0
  %v4945 = vadd.f32 0.0, %v4944
  %v4946 = vpop.f32.mrb[0].mxu0
  %4947 = vmatprep.mubr.f32.mxu0 0.0
  %4948 = vmatmul.mubr.f32.gmra.mrb[0].mxu0 %v4758
  %v4949 = vpop.f32.mrb[0].mxu0
  %v4950 = vadd.f32 0.0, %v4949
  %v4951 = vpop.f32.mrb[0].mxu0
  %4952 = vmatprep.mubr.f32.mxu0 0.0
  %4953 = vmatmul.mubr.f32.gmra.mrb[0].mxu0 %v4759
  %v4954 = vpop.f32.mrb[0].mxu0
  %v4955 = vadd.f32 0.0, %v4954
  %v4956 = vpop.f32.mrb[0].mxu0
  %4957 = vmatprep.mubr.f32.mxu0 0.0
  %4958 = vmatmul.mubr.f32.gmra.mrb[0].mxu0 %v4760
  %v4959 = vpop.f32.mrb[0].mxu0
  %v4960 = vadd.f32 0.0, %v4959
  %v4961 = vpop.f32.mrb[0].mxu0
  %4962 = vmatprep.mubr.f32.mxu0 0.0
  %4963 = vmatmul.mubr.f32.gmra.mrb[0].mxu0 %v4761
  %v4964 = vpop.f32.mrb[0].mxu0
  %v4965 = vadd.f32 0.0, %v4964
  %v4966 = vpop.f32.mrb[0].mxu0
  %4967 = vmatprep.mubr.f32.mxu0 0.0
  %4968 = vmatmul.mubr.f32.gmra.mrb[0].mxu0 %v4762
  %v4969 = vpop.f32.mrb[0].mxu0
  %v4970 = vadd.f32 0.0, %v4969
  %v4971 = vpop.f32.mrb[0].mxu0
  %4972 = vmatprep.mubr.f32.mxu0 0.0
  %4973 = vmatmul.mubr.f32.gmra.mrb[0].mxu0 %v4763
  %v4974 = vpop.f32.mrb[0].mxu0
  %v4975 = vadd.f32 0.0, %v4974
  %v4976 = vpop.f32.mrb[0].mxu0
  %4977 = vmatprep.mubr.f32.mxu0 0.0
  %4978 = vmatmul.mubr.f32.gmra.mrb[0].mxu0 %v4764
  %v4979 = vpop.f32.mrb[0].mxu0
  %v4980 = vadd.f32 0.0, %v4979
  %v4981 = vpop.f32.mrb[0].mxu0
  %4982 = vmatprep.mubr.f32.mxu0 0.0
  %4983 = vmatmul.mubr.f32.gmra.mrb[0].mxu0 %v4765
  %v4984 = vpop.f32.mrb[0].mxu0
  %v4985 = vadd.f32 0.0, %v4984
  %v4986 = vpop.f32.mrb[0].mxu0
  %4987 = vmatprep.mubr.f32.mxu0 0.0
  %4988 = vmatmul.mubr.f32.gmra.mrb[0].mxu0 %v4766
  %v4989 = vpop.f32.mrb[0].mxu0
  %v4990 = vadd.f32 0.0, %v4989
  %v4991 = vpop.f32.mrb[0].mxu0
  %4992 = vmatprep.mubr.f32.mxu0 0.0
  %4993 = vmatmul.mubr.f32.gmra.mrb[0].mxu0 %v4767
  %v4994 = vpop.f32.mrb[0].mxu0
  %v4995 = vadd.f32 0.0, %v4994
  %v4996 = vpop.f32.mrb[0].mxu0
  %4997 = vmatprep.mubr.f32.mxu0 0.0
  %4998 = vmatmul.mubr.f32.gmra.mrb[0].mxu0 %v4768
  %v4999 = vpop.f32.mrb[0].mxu0
  %v5000 = vadd.f32 0.0, %v4999
  %v5001 = vpop.f32.mrb[0].mxu0
  %5002 = vmatprep.mubr.f32.mxu0 0.0
  %5003 = vmatmul.mubr.f32.gmra.mrb[0].mxu0 %v4769
  %v5004 = vpop.f32.mrb[0].mxu0
  %v5005 = vadd.f32 0.0, %v5004
  %v5006 = vpop.f32.mrb[0].mxu0
  %5007 = vmatprep.mubr.f32.mxu0 0.0
  %5008 = vmatmul.mubr.f32.gmra.mrb[0].mxu0 %v4770
  %v5009 = vpop.f32.mrb[0].mxu0
  %v5010 = vadd.f32 0.0, %v5009
  %v5011 = vpop.f32.mrb[0].mxu0
  %5012 = vmatprep.mubr.f32.mxu0 0.0
  %5013 = vmatmul.mubr.f32.gmra.mrb[0].mxu0 %v4771
  %v5014 = vpop.f32.mrb[0].mxu0
  %v5015 = vadd.f32 0.0, %v5014
  %v5016 = vpop.f32.mrb[0].mxu0
  %5017 = vmatprep.mubr.f32.mxu0 0.0
  %5018 = vmatmul.mubr.f32.gmra.mrb[0].mxu0 %v4772
  %v5019 = vpop.f32.mrb[0].mxu0
  %v5020 = vadd.f32 0.0, %v5019
  %v5021 = vpop.f32.mrb[0].mxu0
  %5022 = vmatprep.mubr.f32.mxu0 0.0
  %5023 = vmatmul.mubr.f32.gmra.mrb[0].mxu0 %v4773
  %v5024 = vpop.f32.mrb[0].mxu0
  %v5025 = vadd.f32 0.0, %v5024
  %v5026 = vpop.f32.mrb[0].mxu0
  %5027 = vmatprep.mubr.f32.mxu0 0.0
  %5028 = vmatmul.mubr.f32.gmra.mrb[0].mxu0 %v4774
  %v5029 = vpop.f32.mrb[0].mxu0
  %v5030 = vadd.f32 0.0, %v5029
  %v5031 = vpop.f32.mrb[0].mxu0
  %5032 = vmatprep.mubr.f32.mxu0 0.0
  %5033 = vmatmul.mubr.f32.gmra.mrb[0].mxu0 %v4775
  %v5034 = vpop.f32.mrb[0].mxu0
  %v5035 = vadd.f32 0.0, %v5034
  %v5036 = vpop.f32.mrb[0].mxu0
  %5037 = vmatprep.mubr.f32.mxu0 0.0
  %5038 = vmatmul.mubr.f32.gmra.mrb[0].mxu0 %v4776
  %v5039 = vpop.f32.mrb[0].mxu0
  %v5040 = vadd.f32 0.0, %v5039
  %v5041 = vpop.f32.mrb[0].mxu0
  %5042 = vmatprep.mubr.f32.mxu0 0.0
  %5043 = vmatmul.mubr.f32.gmra.mrb[0].mxu0 %v4777
  %v5044 = vpop.f32.mrb[0].mxu0
  %v5045 = vadd.f32 0.0, %v5044
  %v5046 = vpop.f32.mrb[0].mxu0
  %5047 = vmatprep.mubr.f32.mxu0 0.0
  %5048 = vmatmul.mubr.f32.gmra.mrb[0].mxu0 %v4778
  %v5049 = vpop.f32.mrb[0].mxu0
  %v5050 = vadd.f32 0.0, %v5049
  %v5051 = vpop.f32.mrb[0].mxu0
  %5052 = vmatprep.mubr.f32.mxu0 0.0
  %5053 = vmatmul.mubr.f32.gmra.mrb[0].mxu0 %v4779
  %v5054 = vpop.f32.mrb[0].mxu0
  %v5055 = vadd.f32 0.0, %v5054
  %v5056 = vpop.f32.mrb[0].mxu0
  %5057 = vmatprep.mubr.f32.mxu0 0.0
  %5058 = vmatmul.mubr.f32.gmra.mrb[0].mxu0 %v4780
  %v5059 = vpop.f32.mrb[0].mxu0
  %v5060 = vadd.f32 0.0, %v5059
  %v5061 = vpop.f32.mrb[0].mxu0
  %5062 = vmatprep.mubr.f32.mxu0 0.0
  %5063 = vmatmul.mubr.f32.gmra.mrb[0].mxu0 %v4781
  %v5064 = vpop.f32.mrb[0].mxu0
  %v5065 = vadd.f32 0.0, %v5064
  %v5066 = vpop.f32.mrb[0].mxu0
  %5067 = vmatprep.mubr.f32.mxu0 0.0
  %5068 = vmatmul.mubr.f32.gmra.mrb[0].mxu0 %v4782
  %v5069 = vpop.f32.mrb[0].mxu0
  %v5070 = vadd.f32 0.0, %v5069
  %v5071 = vpop.f32.mrb[0].mxu0
  %5072 = vmatprep.mubr.f32.mxu0 0.0
  %5073 = vmatmul.mubr.f32.gmra.mrb[0].mxu0 %v4783
  %v5074 = vpop.f32.mrb[0].mxu0
  %v5075 = vadd.f32 0.0, %v5074
  %v5076 = vpop.f32.mrb[0].mxu0
  %5077 = vmatprep.mubr.f32.mxu0 0.0
  %5078 = vmatmul.mubr.f32.gmra.mrb[0].mxu0 %v4784
  %v5079 = vpop.f32.mrb[0].mxu0
  %v5080 = vadd.f32 0.0, %v5079
  %v5081 = vpop.f32.mrb[0].mxu0
  %5082 = vmatprep.mubr.f32.mxu0 0.0
  %5083 = vmatmul.mubr.f32.gmra.mrb[0].mxu0 %v4785
  %v5084 = vpop.f32.mrb[0].mxu0
  %v5085 = vadd.f32 0.0, %v5084
  %v5086 = vpop.f32.mrb[0].mxu0
  %5087 = vmatprep.mubr.f32.mxu0 0.0
  %5088 = vmatmul.mubr.f32.gmra.mrb[0].mxu0 %v4786
  %v5089 = vpop.f32.mrb[0].mxu0
  %v5090 = vadd.f32 0.0, %v5089
  %v5091 = vpop.f32.mrb[0].mxu0
  %5092 = vmatprep.mubr.f32.mxu0 0.0
  %5093 = vmatmul.mubr.f32.gmra.mrb[0].mxu0 %v4787
  %v5094 = vpop.f32.mrb[0].mxu0
  %v5095 = vadd.f32 0.0, %v5094
  %v5096 = vpop.f32.mrb[0].mxu0
  %5097 = vmatprep.mubr.f32.mxu0 0.0
  %5098 = vmatmul.mubr.f32.gmra.mrb[0].mxu0 %v4788
  %v5099 = vpop.f32.mrb[0].mxu0
  %v5100 = vadd.f32 0.0, %v5099
  %v5101 = vpop.f32.mrb[0].mxu0
  %5102 = vmatprep.mubr.f32.mxu0 0.0
  %5103 = vmatmul.mubr.f32.gmra.mrb[0].mxu0 %v4789
  %v5104 = vpop.f32.mrb[0].mxu0
  %v5105 = vadd.f32 0.0, %v5104
  %v5106 = vpop.f32.mrb[0].mxu0
  %5107 = vmatprep.mubr.f32.mxu0 0.0
  %5108 = vmatmul.mubr.f32.gmra.mrb[0].mxu0 %v4790
  %v5109 = vpop.f32.mrb[0].mxu0
  %v5110 = vadd.f32 0.0, %v5109
  %v5111 = vpop.f32.mrb[0].mxu0
  %5112 = vmatprep.mubr.f32.mxu0 0.0
  %5113 = vmatmul.mubr.f32.gmra.mrb[0].mxu0 %v4791
  %v5114 = vpop.f32.mrb[0].mxu0
  %v5115 = vadd.f32 0.0, %v5114
  %v5116 = vpop.f32.mrb[0].mxu0
  %5117 = vmatprep.mubr.f32.mxu0 0.0
  %5118 = vmatmul.mubr.f32.gmra.mrb[0].mxu0 %v4792
  %v5119 = vpop.f32.mrb[0].mxu0
  %v5120 = vadd.f32 0.0, %v5119
  %v5121 = vpop.f32.mrb[0].mxu0
  %5122 = vmatprep.mubr.f32.mxu0 0.0
  %5123 = vmatmul.mubr.f32.gmra.mrb[0].mxu0 %v4793
  %v5124 = vpop.f32.mrb[0].mxu0
  %v5125 = vadd.f32 0.0, %v5124
  %v5126 = vpop.f32.mrb[0].mxu0
  %5127 = vmatprep.mubr.f32.mxu0 0.0
  %5128 = vmatmul.mubr.f32.gmra.mrb[0].mxu0 %v4794
  %v5129 = vpop.f32.mrb[0].mxu0
  %v5130 = vadd.f32 0.0, %v5129
  %v5131 = vpop.f32.mrb[0].mxu0
  %5132 = vmatprep.mubr.f32.mxu0 0.0
  %5133 = vmatmul.mubr.f32.gmra.mrb[0].mxu0 %v4795
  %v5134 = vpop.f32.mrb[0].mxu0
  %v5135 = vadd.f32 0.0, %v5134
  %v5136 = vpop.f32.mrb[0].mxu0
  %5137 = vmatprep.mubr.f32.mxu0 0.0
  %5138 = vmatmul.mubr.f32.gmra.mrb[0].mxu0 %v4796
  %v5139 = vpop.f32.mrb[0].mxu0
  %v5140 = vadd.f32 0.0, %v5139
  %v5141 = vpop.f32.mrb[0].mxu0
  %5142 = vmatprep.mubr.f32.mxu0 0.0
  %5143 = vmatmul.mubr.f32.gmra.mrb[0].mxu0 %v4797
  %v5144 = vpop.f32.mrb[0].mxu0
  %v5145 = vadd.f32 0.0, %v5144
  %v5146 = vpop.f32.mrb[0].mxu0
  %5147 = vmatprep.mubr.f32.mxu0 0.0
  %5148 = vmatmul.mubr.f32.gmra.mrb[0].mxu0 %v4798
  %v5149 = vpop.f32.mrb[0].mxu0
  %v5150 = vadd.f32 0.0, %v5149
  %v5151 = vpop.f32.mrb[0].mxu0
  %5152 = vmatprep.mubr.f32.mxu0 0.0
  %5153 = vmatmul.mubr.f32.gmra.mrb[0].mxu0 %v4799
  %v5154 = vpop.f32.mrb[0].mxu0
  %v5155 = vadd.f32 0.0, %v5154
  %v5156 = vpop.f32.mrb[0].mxu0
  %5157 = vmatprep.mubr.f32.mxu0 0.0
  %5158 = vmatmul.mubr.f32.gmra.mrb[0].mxu0 %v4800
  %v5159 = vpop.f32.mrb[0].mxu0
  %v5160 = vadd.f32 0.0, %v5159
  %v5161 = vpop.f32.mrb[0].mxu0
  %5162 = vmatprep.mubr.f32.mxu0 0.0
  %5163 = vmatmul.mubr.f32.gmra.mrb[0].mxu0 %v4801
  %v5164 = vpop.f32.mrb[0].mxu0
  %v5165 = vadd.f32 0.0, %v5164
  %v5166 = vpop.f32.mrb[0].mxu0
  %5167 = vmatprep.mubr.f32.mxu0 0.0
  %5168 = vmatmul.mubr.f32.gmra.mrb[0].mxu0 %v4802
  %v5169 = vpop.f32.mrb[0].mxu0
  %v5170 = vadd.f32 0.0, %v5169
  %v5171 = vpop.f32.mrb[0].mxu0
  %5172 = vmatprep.mubr.f32.mxu0 0.0
  %5173 = vmatmul.mubr.f32.gmra.mrb[0].mxu0 %v4803
  %v5174 = vpop.f32.mrb[0].mxu0
  %v5175 = vadd.f32 0.0, %v5174
  %v5176 = vpop.f32.mrb[0].mxu0
  %5177 = vmatprep.mubr.f32.mxu0 0.0
  %5178 = vmatmul.mubr.f32.gmra.mrb[0].mxu0 %v4804
  %v5179 = vpop.f32.mrb[0].mxu0
  %v5180 = vadd.f32 0.0, %v5179
  %v5181 = vpop.f32.mrb[0].mxu0
  %5182 = vmatprep.mubr.f32.mxu0 0.0
  %5183 = vmatmul.mubr.f32.gmra.mrb[0].mxu0 %v4805
  %v5184 = vpop.f32.mrb[0].mxu0
  %v5185 = vadd.f32 0.0, %v5184
  %v5186 = vpop.f32.mrb[0].mxu0
  %5187 = vmatprep.mubr.f32.mxu0 0.0
  %5188 = vmatmul.mubr.f32.gmra.mrb[0].mxu0 %v4806
  %v5189 = vpop.f32.mrb[0].mxu0
  %v5190 = vadd.f32 0.0, %v5189
  %v5191 = vpop.f32.mrb[0].mxu0
  %5192 = vmatprep.mubr.f32.mxu0 0.0
  %5193 = vmatmul.mubr.f32.gmra.mrb[0].mxu0 %v4807
  %v5194 = vpop.f32.mrb[0].mxu0
  %v5195 = vadd.f32 0.0, %v5194
  %v5196 = vpop.f32.mrb[0].mxu0
  %5197 = vmatprep.mubr.f32.mxu0 0.0
  %5198 = vmatmul.mubr.f32.gmra.mrb[0].mxu0 %v4808
  %v5199 = vpop.f32.mrb[0].mxu0
  %v5200 = vadd.f32 0.0, %v5199
  %v5201 = vpop.f32.mrb[0].mxu0
  %5202 = vmatprep.mubr.f32.mxu0 0.0
  %5203 = vmatmul.mubr.f32.gmra.mrb[0].mxu0 %v4809
  %v5204 = vpop.f32.mrb[0].mxu0
  %v5205 = vadd.f32 0.0, %v5204
  %v5206 = vpop.f32.mrb[0].mxu0
  %5207 = vmatprep.mubr.f32.mxu0 0.0
  %5208 = vmatmul.mubr.f32.gmra.mrb[0].mxu0 %v4810
  %v5209 = vpop.f32.mrb[0].mxu0
  %v5210 = vadd.f32 0.0, %v5209
  %v5211 = vpop.f32.mrb[0].mxu0
  %5212 = vdwg.mxu0
  %5213 = vmatprep.subr.mxu0 0.0
  %5214 = vmatpush1.msra.mxu0 %v4731
  %5215 = vmatprep.subr.mxu0 0.0
  %5216 = vmatpush1.msra.mxu0 %v4732
  %5217 = vmatprep.subr.mxu0 0.0
  %5218 = vmatpush1.msra.mxu0 %v4733
  %5219 = vmatprep.subr.mxu0 0.0
  %5220 = vmatpush1.msra.mxu0 %v4734
  %5221 = vmatprep.subr.mxu0 0.0
  %5222 = vmatpush1.msra.mxu0 %v4735
  %5223 = vmatprep.subr.mxu0 0.0
  %5224 = vmatpush1.msra.mxu0 %v4736
  %5225 = vmatprep.subr.mxu0 0.0
  %5226 = vmatpush1.msra.mxu0 %v4737
  %5227 = vmatprep.subr.mxu0 0.0
  %5228 = vmatpush1.msra.mxu0 %v4738
  %5229 = vmatprep.subr.mxu0 0.0
  %5230 = vmatpush1.msra.mxu0 %v4739
  %5231 = vmatprep.subr.mxu0 0.0
  %5232 = vmatpush1.msra.mxu0 %v4740
  %5233 = vmatprep.subr.mxu0 0.0
  %5234 = vmatpush1.msra.mxu0 %v4741
  %5235 = vmatprep.subr.mxu0 0.0
  %5236 = vmatpush1.msra.mxu0 %v4742
  %5237 = vmatprep.subr.mxu0 0.0
  %5238 = vmatpush1.msra.mxu0 %v4743
  %5239 = vmatprep.subr.mxu0 0.0
  %5240 = vmatpush1.msra.mxu0 %v4744
  %5241 = vmatprep.subr.mxu0 0.0
  %5242 = vmatpush1.msra.mxu0 %v4745
  %5243 = vmatprep.subr.mxu0 0.0
  %5244 = vmatpush1.msra.mxu0 %v4746
  %5245 = vmatprep.subr.mxu0 0.0
  %5246 = vmatpush1.msra.mxu0 0.0
  %5247 = vmatprep.subr.mxu0 0.0
  %5248 = vmatpush1.msra.mxu0 0.0
  %5249 = vmatprep.subr.mxu0 0.0
  %5250 = vmatpush1.msra.mxu0 0.0
  %5251 = vmatprep.subr.mxu0 0.0
  %5252 = vmatpush1.msra.mxu0 0.0
  %5253 = vmatprep.subr.mxu0 0.0
  %5254 = vmatpush1.msra.mxu0 0.0
  %5255 = vmatprep.subr.mxu0 0.0
  %5256 = vmatpush1.msra.mxu0 0.0
  %5257 = vmatprep.subr.mxu0 0.0
  %5258 = vmatpush1.msra.mxu0 0.0
  %5259 = vmatprep.subr.mxu0 0.0
  %5260 = vmatpush1.msra.mxu0 0.0
  %5261 = vmatprep.subr.mxu0 0.0
  %5262 = vmatpush1.msra.mxu0 0.0
  %5263 = vmatprep.subr.mxu0 0.0
  %5264 = vmatpush1.msra.mxu0 0.0
  %5265 = vmatprep.subr.mxu0 0.0
  %5266 = vmatpush1.msra.mxu0 0.0
  %5267 = vmatprep.subr.mxu0 0.0
  %5268 = vmatpush1.msra.mxu0 0.0
  %5269 = vmatprep.subr.mxu0 0.0
  %5270 = vmatpush1.msra.mxu0 0.0
  %5271 = vmatprep.subr.mxu0 0.0
  %5272 = vmatpush1.msra.mxu0 0.0
  %5273 = vmatprep.subr.mxu0 0.0
  %5274 = vmatpush1.msra.mxu0 0.0
  %5275 = vmatprep.subr.mxu0 0.0
  %5276 = vmatpush1.msra.mxu0 0.0
  %5277 = vmatprep.mubr.f32.mxu0 0.0
  %5278 = vmatmul.mubr.f32.gmra.mrb[0].mxu0 %v4667
  %v5279 = vpop.f32.mrb[0].mxu0
  %v5280 = vadd.f32 %v4895, %v5279
  %v5281 = vpop.f32.mrb[0].mxu0
  %5282 = vmatprep.mubr.f32.mxu0 0.0
  %5283 = vmatmul.mubr.f32.gmra.mrb[0].mxu0 %v4668
  %v5284 = vpop.f32.mrb[0].mxu0
  %v5285 = vadd.f32 %v4900, %v5284
  %v5286 = vpop.f32.mrb[0].mxu0
  %5287 = vmatprep.mubr.f32.mxu0 0.0
  %5288 = vmatmul.mubr.f32.gmra.mrb[0].mxu0 %v4669
  %v5289 = vpop.f32.mrb[0].mxu0
  %v5290 = vadd.f32 %v4905, %v5289
  %v5291 = vpop.f32.mrb[0].mxu0
  %5292 = vmatprep.mubr.f32.mxu0 0.0
  %5293 = vmatmul.mubr.f32.gmra.mrb[0].mxu0 %v4670
  %v5294 = vpop.f32.mrb[0].mxu0
  %v5295 = vadd.f32 %v4910, %v5294
  %v5296 = vpop.f32.mrb[0].mxu0
  %5297 = vmatprep.mubr.f32.mxu0 0.0
  %5298 = vmatmul.mubr.f32.gmra.mrb[0].mxu0 %v4671
  %v5299 = vpop.f32.mrb[0].mxu0
  %v5300 = vadd.f32 %v4915, %v5299
  %v5301 = vpop.f32.mrb[0].mxu0
  %5302 = vmatprep.mubr.f32.mxu0 0.0
  %5303 = vmatmul.mubr.f32.gmra.mrb[0].mxu0 %v4672
  %v5304 = vpop.f32.mrb[0].mxu0
  %v5305 = vadd.f32 %v4920, %v5304
  %v5306 = vpop.f32.mrb[0].mxu0
  %5307 = vmatprep.mubr.f32.mxu0 0.0
  %5308 = vmatmul.mubr.f32.gmra.mrb[0].mxu0 %v4673
  %v5309 = vpop.f32.mrb[0].mxu0
  %v5310 = vadd.f32 %v4925, %v5309
  %v5311 = vpop.f32.mrb[0].mxu0
  %5312 = vmatprep.mubr.f32.mxu0 0.0
  %5313 = vmatmul.mubr.f32.gmra.mrb[0].mxu0 %v4674
  %v5314 = vpop.f32.mrb[0].mxu0
  %v5315 = vadd.f32 %v4930, %v5314
  %v5316 = vpop.f32.mrb[0].mxu0
  %5317 = vmatprep.mubr.f32.mxu0 0.0
  %5318 = vmatmul.mubr.f32.gmra.mrb[0].mxu0 %v4675
  %v5319 = vpop.f32.mrb[0].mxu0
  %v5320 = vadd.f32 %v4935, %v5319
  %v5321 = vpop.f32.mrb[0].mxu0
  %5322 = vmatprep.mubr.f32.mxu0 0.0
  %5323 = vmatmul.mubr.f32.gmra.mrb[0].mxu0 %v4676
  %v5324 = vpop.f32.mrb[0].mxu0
  %v5325 = vadd.f32 %v4940, %v5324
  %v5326 = vpop.f32.mrb[0].mxu0
  %5327 = vmatprep.mubr.f32.mxu0 0.0
  %5328 = vmatmul.mubr.f32.gmra.mrb[0].mxu0 %v4677
  %v5329 = vpop.f32.mrb[0].mxu0
  %v5330 = vadd.f32 %v4945, %v5329
  %v5331 = vpop.f32.mrb[0].mxu0
  %5332 = vmatprep.mubr.f32.mxu0 0.0
  %5333 = vmatmul.mubr.f32.gmra.mrb[0].mxu0 %v4678
  %v5334 = vpop.f32.mrb[0].mxu0
  %v5335 = vadd.f32 %v4950, %v5334
  %v5336 = vpop.f32.mrb[0].mxu0
  %5337 = vmatprep.mubr.f32.mxu0 0.0
  %5338 = vmatmul.mubr.f32.gmra.mrb[0].mxu0 %v4679
  %v5339 = vpop.f32.mrb[0].mxu0
  %v5340 = vadd.f32 %v4955, %v5339
  %v5341 = vpop.f32.mrb[0].mxu0
  %5342 = vmatprep.mubr.f32.mxu0 0.0
  %5343 = vmatmul.mubr.f32.gmra.mrb[0].mxu0 %v4680
  %v5344 = vpop.f32.mrb[0].mxu0
  %v5345 = vadd.f32 %v4960, %v5344
  %v5346 = vpop.f32.mrb[0].mxu0
  %5347 = vmatprep.mubr.f32.mxu0 0.0
  %5348 = vmatmul.mubr.f32.gmra.mrb[0].mxu0 %v4681
  %v5349 = vpop.f32.mrb[0].mxu0
  %v5350 = vadd.f32 %v4965, %v5349
  %v5351 = vpop.f32.mrb[0].mxu0
  %5352 = vmatprep.mubr.f32.mxu0 0.0
  %5353 = vmatmul.mubr.f32.gmra.mrb[0].mxu0 %v4682
  %v5354 = vpop.f32.mrb[0].mxu0
  %v5355 = vadd.f32 %v4970, %v5354
  %v5356 = vpop.f32.mrb[0].mxu0
  %5357 = vmatprep.mubr.f32.mxu0 0.0
  %5358 = vmatmul.mubr.f32.gmra.mrb[0].mxu0 %v4683
  %v5359 = vpop.f32.mrb[0].mxu0
  %v5360 = vadd.f32 %v4975, %v5359
  %v5361 = vpop.f32.mrb[0].mxu0
  %5362 = vmatprep.mubr.f32.mxu0 0.0
  %5363 = vmatmul.mubr.f32.gmra.mrb[0].mxu0 %v4684
  %v5364 = vpop.f32.mrb[0].mxu0
  %v5365 = vadd.f32 %v4980, %v5364
  %v5366 = vpop.f32.mrb[0].mxu0
  %5367 = vmatprep.mubr.f32.mxu0 0.0
  %5368 = vmatmul.mubr.f32.gmra.mrb[0].mxu0 %v4685
  %v5369 = vpop.f32.mrb[0].mxu0
  %v5370 = vadd.f32 %v4985, %v5369
  %v5371 = vpop.f32.mrb[0].mxu0
  %5372 = vmatprep.mubr.f32.mxu0 0.0
  %5373 = vmatmul.mubr.f32.gmra.mrb[0].mxu0 %v4686
  %v5374 = vpop.f32.mrb[0].mxu0
  %v5375 = vadd.f32 %v4990, %v5374
  %v5376 = vpop.f32.mrb[0].mxu0
  %5377 = vmatprep.mubr.f32.mxu0 0.0
  %5378 = vmatmul.mubr.f32.gmra.mrb[0].mxu0 %v4687
  %v5379 = vpop.f32.mrb[0].mxu0
  %v5380 = vadd.f32 %v4995, %v5379
  %v5381 = vpop.f32.mrb[0].mxu0
  %5382 = vmatprep.mubr.f32.mxu0 0.0
  %5383 = vmatmul.mubr.f32.gmra.mrb[0].mxu0 %v4688
  %v5384 = vpop.f32.mrb[0].mxu0
  %v5385 = vadd.f32 %v5000, %v5384
  %v5386 = vpop.f32.mrb[0].mxu0
  %5387 = vmatprep.mubr.f32.mxu0 0.0
  %5388 = vmatmul.mubr.f32.gmra.mrb[0].mxu0 %v4689
  %v5389 = vpop.f32.mrb[0].mxu0
  %v5390 = vadd.f32 %v5005, %v5389
  %v5391 = vpop.f32.mrb[0].mxu0
  %5392 = vmatprep.mubr.f32.mxu0 0.0
  %5393 = vmatmul.mubr.f32.gmra.mrb[0].mxu0 %v4690
  %v5394 = vpop.f32.mrb[0].mxu0
  %v5395 = vadd.f32 %v5010, %v5394
  %v5396 = vpop.f32.mrb[0].mxu0
  %5397 = vmatprep.mubr.f32.mxu0 0.0
  %5398 = vmatmul.mubr.f32.gmra.mrb[0].mxu0 %v4691
  %v5399 = vpop.f32.mrb[0].mxu0
  %v5400 = vadd.f32 %v5015, %v5399
  %v5401 = vpop.f32.mrb[0].mxu0
  %5402 = vmatprep.mubr.f32.mxu0 0.0
  %5403 = vmatmul.mubr.f32.gmra.mrb[0].mxu0 %v4692
  %v5404 = vpop.f32.mrb[0].mxu0
  %v5405 = vadd.f32 %v5020, %v5404
  %v5406 = vpop.f32.mrb[0].mxu0
  %5407 = vmatprep.mubr.f32.mxu0 0.0
  %5408 = vmatmul.mubr.f32.gmra.mrb[0].mxu0 %v4693
  %v5409 = vpop.f32.mrb[0].mxu0
  %v5410 = vadd.f32 %v5025, %v5409
  %v5411 = vpop.f32.mrb[0].mxu0
  %5412 = vmatprep.mubr.f32.mxu0 0.0
  %5413 = vmatmul.mubr.f32.gmra.mrb[0].mxu0 %v4694
  %v5414 = vpop.f32.mrb[0].mxu0
  %v5415 = vadd.f32 %v5030, %v5414
  %v5416 = vpop.f32.mrb[0].mxu0
  %5417 = vmatprep.mubr.f32.mxu0 0.0
  %5418 = vmatmul.mubr.f32.gmra.mrb[0].mxu0 %v4695
  %v5419 = vpop.f32.mrb[0].mxu0
  %v5420 = vadd.f32 %v5035, %v5419
  %v5421 = vpop.f32.mrb[0].mxu0
  %5422 = vmatprep.mubr.f32.mxu0 0.0
  %5423 = vmatmul.mubr.f32.gmra.mrb[0].mxu0 %v4696
  %v5424 = vpop.f32.mrb[0].mxu0
  %v5425 = vadd.f32 %v5040, %v5424
  %v5426 = vpop.f32.mrb[0].mxu0
  %5427 = vmatprep.mubr.f32.mxu0 0.0
  %5428 = vmatmul.mubr.f32.gmra.mrb[0].mxu0 %v4697
  %v5429 = vpop.f32.mrb[0].mxu0
  %v5430 = vadd.f32 %v5045, %v5429
  %v5431 = vpop.f32.mrb[0].mxu0
  %5432 = vmatprep.mubr.f32.mxu0 0.0
  %5433 = vmatmul.mubr.f32.gmra.mrb[0].mxu0 %v4698
  %v5434 = vpop.f32.mrb[0].mxu0
  %v5435 = vadd.f32 %v5050, %v5434
  %v5436 = vpop.f32.mrb[0].mxu0
  %5437 = vmatprep.mubr.f32.mxu0 0.0
  %5438 = vmatmul.mubr.f32.gmra.mrb[0].mxu0 %v4699
  %v5439 = vpop.f32.mrb[0].mxu0
  %v5440 = vadd.f32 %v5055, %v5439
  %v5441 = vpop.f32.mrb[0].mxu0
  %5442 = vmatprep.mubr.f32.mxu0 0.0
  %5443 = vmatmul.mubr.f32.gmra.mrb[0].mxu0 %v4700
  %v5444 = vpop.f32.mrb[0].mxu0
  %v5445 = vadd.f32 %v5060, %v5444
  %v5446 = vpop.f32.mrb[0].mxu0
  %5447 = vmatprep.mubr.f32.mxu0 0.0
  %5448 = vmatmul.mubr.f32.gmra.mrb[0].mxu0 %v4701
  %v5449 = vpop.f32.mrb[0].mxu0
  %v5450 = vadd.f32 %v5065, %v5449
  %v5451 = vpop.f32.mrb[0].mxu0
  %5452 = vmatprep.mubr.f32.mxu0 0.0
  %5453 = vmatmul.mubr.f32.gmra.mrb[0].mxu0 %v4702
  %v5454 = vpop.f32.mrb[0].mxu0
  %v5455 = vadd.f32 %v5070, %v5454
  %v5456 = vpop.f32.mrb[0].mxu0
  %5457 = vmatprep.mubr.f32.mxu0 0.0
  %5458 = vmatmul.mubr.f32.gmra.mrb[0].mxu0 %v4703
  %v5459 = vpop.f32.mrb[0].mxu0
  %v5460 = vadd.f32 %v5075, %v5459
  %v5461 = vpop.f32.mrb[0].mxu0
  %5462 = vmatprep.mubr.f32.mxu0 0.0
  %5463 = vmatmul.mubr.f32.gmra.mrb[0].mxu0 %v4704
  %v5464 = vpop.f32.mrb[0].mxu0
  %v5465 = vadd.f32 %v5080, %v5464
  %v5466 = vpop.f32.mrb[0].mxu0
  %5467 = vmatprep.mubr.f32.mxu0 0.0
  %5468 = vmatmul.mubr.f32.gmra.mrb[0].mxu0 %v4705
  %v5469 = vpop.f32.mrb[0].mxu0
  %v5470 = vadd.f32 %v5085, %v5469
  %v5471 = vpop.f32.mrb[0].mxu0
  %5472 = vmatprep.mubr.f32.mxu0 0.0
  %5473 = vmatmul.mubr.f32.gmra.mrb[0].mxu0 %v4706
  %v5474 = vpop.f32.mrb[0].mxu0
  %v5475 = vadd.f32 %v5090, %v5474
  %v5476 = vpop.f32.mrb[0].mxu0
  %5477 = vmatprep.mubr.f32.mxu0 0.0
  %5478 = vmatmul.mubr.f32.gmra.mrb[0].mxu0 %v4707
  %v5479 = vpop.f32.mrb[0].mxu0
  %v5480 = vadd.f32 %v5095, %v5479
  %v5481 = vpop.f32.mrb[0].mxu0
  %5482 = vmatprep.mubr.f32.mxu0 0.0
  %5483 = vmatmul.mubr.f32.gmra.mrb[0].mxu0 %v4708
  %v5484 = vpop.f32.mrb[0].mxu0
  %v5485 = vadd.f32 %v5100, %v5484
  %v5486 = vpop.f32.mrb[0].mxu0
  %5487 = vmatprep.mubr.f32.mxu0 0.0
  %5488 = vmatmul.mubr.f32.gmra.mrb[0].mxu0 %v4709
  %v5489 = vpop.f32.mrb[0].mxu0
  %v5490 = vadd.f32 %v5105, %v5489
  %v5491 = vpop.f32.mrb[0].mxu0
  %5492 = vmatprep.mubr.f32.mxu0 0.0
  %5493 = vmatmul.mubr.f32.gmra.mrb[0].mxu0 %v4710
  %v5494 = vpop.f32.mrb[0].mxu0
  %v5495 = vadd.f32 %v5110, %v5494
  %v5496 = vpop.f32.mrb[0].mxu0
  %5497 = vmatprep.mubr.f32.mxu0 0.0
  %5498 = vmatmul.mubr.f32.gmra.mrb[0].mxu0 %v4711
  %v5499 = vpop.f32.mrb[0].mxu0
  %v5500 = vadd.f32 %v5115, %v5499
  %v5501 = vpop.f32.mrb[0].mxu0
  %5502 = vmatprep.mubr.f32.mxu0 0.0
  %5503 = vmatmul.mubr.f32.gmra.mrb[0].mxu0 %v4712
  %v5504 = vpop.f32.mrb[0].mxu0
  %v5505 = vadd.f32 %v5120, %v5504
  %v5506 = vpop.f32.mrb[0].mxu0
  %5507 = vmatprep.mubr.f32.mxu0 0.0
  %5508 = vmatmul.mubr.f32.gmra.mrb[0].mxu0 %v4713
  %v5509 = vpop.f32.mrb[0].mxu0
  %v5510 = vadd.f32 %v5125, %v5509
  %v5511 = vpop.f32.mrb[0].mxu0
  %5512 = vmatprep.mubr.f32.mxu0 0.0
  %5513 = vmatmul.mubr.f32.gmra.mrb[0].mxu0 %v4714
  %v5514 = vpop.f32.mrb[0].mxu0
  %v5515 = vadd.f32 %v5130, %v5514
  %v5516 = vpop.f32.mrb[0].mxu0
  %5517 = vmatprep.mubr.f32.mxu0 0.0
  %5518 = vmatmul.mubr.f32.gmra.mrb[0].mxu0 %v4715
  %v5519 = vpop.f32.mrb[0].mxu0
  %v5520 = vadd.f32 %v5135, %v5519
  %v5521 = vpop.f32.mrb[0].mxu0
  %5522 = vmatprep.mubr.f32.mxu0 0.0
  %5523 = vmatmul.mubr.f32.gmra.mrb[0].mxu0 %v4716
  %v5524 = vpop.f32.mrb[0].mxu0
  %v5525 = vadd.f32 %v5140, %v5524
  %v5526 = vpop.f32.mrb[0].mxu0
  %5527 = vmatprep.mubr.f32.mxu0 0.0
  %5528 = vmatmul.mubr.f32.gmra.mrb[0].mxu0 %v4717
  %v5529 = vpop.f32.mrb[0].mxu0
  %v5530 = vadd.f32 %v5145, %v5529
  %v5531 = vpop.f32.mrb[0].mxu0
  %5532 = vmatprep.mubr.f32.mxu0 0.0
  %5533 = vmatmul.mubr.f32.gmra.mrb[0].mxu0 %v4718
  %v5534 = vpop.f32.mrb[0].mxu0
  %v5535 = vadd.f32 %v5150, %v5534
  %v5536 = vpop.f32.mrb[0].mxu0
  %5537 = vmatprep.mubr.f32.mxu0 0.0
  %5538 = vmatmul.mubr.f32.gmra.mrb[0].mxu0 %v4719
  %v5539 = vpop.f32.mrb[0].mxu0
  %v5540 = vadd.f32 %v5155, %v5539
  %v5541 = vpop.f32.mrb[0].mxu0
  %5542 = vmatprep.mubr.f32.mxu0 0.0
  %5543 = vmatmul.mubr.f32.gmra.mrb[0].mxu0 %v4720
  %v5544 = vpop.f32.mrb[0].mxu0
  %v5545 = vadd.f32 %v5160, %v5544
  %v5546 = vpop.f32.mrb[0].mxu0
  %5547 = vmatprep.mubr.f32.mxu0 0.0
  %5548 = vmatmul.mubr.f32.gmra.mrb[0].mxu0 %v4721
  %v5549 = vpop.f32.mrb[0].mxu0
  %v5550 = vadd.f32 %v5165, %v5549
  %v5551 = vpop.f32.mrb[0].mxu0
  %5552 = vmatprep.mubr.f32.mxu0 0.0
  %5553 = vmatmul.mubr.f32.gmra.mrb[0].mxu0 %v4722
  %v5554 = vpop.f32.mrb[0].mxu0
  %v5555 = vadd.f32 %v5170, %v5554
  %v5556 = vpop.f32.mrb[0].mxu0
  %5557 = vmatprep.mubr.f32.mxu0 0.0
  %5558 = vmatmul.mubr.f32.gmra.mrb[0].mxu0 %v4723
  %v5559 = vpop.f32.mrb[0].mxu0
  %v5560 = vadd.f32 %v5175, %v5559
  %v5561 = vpop.f32.mrb[0].mxu0
  %5562 = vmatprep.mubr.f32.mxu0 0.0
  %5563 = vmatmul.mubr.f32.gmra.mrb[0].mxu0 %v4724
  %v5564 = vpop.f32.mrb[0].mxu0
  %v5565 = vadd.f32 %v5180, %v5564
  %v5566 = vpop.f32.mrb[0].mxu0
  %5567 = vmatprep.mubr.f32.mxu0 0.0
  %5568 = vmatmul.mubr.f32.gmra.mrb[0].mxu0 %v4725
  %v5569 = vpop.f32.mrb[0].mxu0
  %v5570 = vadd.f32 %v5185, %v5569
  %v5571 = vpop.f32.mrb[0].mxu0
  %5572 = vmatprep.mubr.f32.mxu0 0.0
  %5573 = vmatmul.mubr.f32.gmra.mrb[0].mxu0 %v4726
  %v5574 = vpop.f32.mrb[0].mxu0
  %v5575 = vadd.f32 %v5190, %v5574
  %v5576 = vpop.f32.mrb[0].mxu0
  %5577 = vmatprep.mubr.f32.mxu0 0.0
  %5578 = vmatmul.mubr.f32.gmra.mrb[0].mxu0 %v4727
  %v5579 = vpop.f32.mrb[0].mxu0
  %v5580 = vadd.f32 %v5195, %v5579
  %v5581 = vpop.f32.mrb[0].mxu0
  %5582 = vmatprep.mubr.f32.mxu0 0.0
  %5583 = vmatmul.mubr.f32.gmra.mrb[0].mxu0 %v4728
  %v5584 = vpop.f32.mrb[0].mxu0
  %v5585 = vadd.f32 %v5200, %v5584
  %v5586 = vpop.f32.mrb[0].mxu0
  %5587 = vmatprep.mubr.f32.mxu0 0.0
  %5588 = vmatmul.mubr.f32.gmra.mrb[0].mxu0 %v4729
  %v5589 = vpop.f32.mrb[0].mxu0
  %v5590 = vadd.f32 %v5205, %v5589
  %v5591 = vpop.f32.mrb[0].mxu0
  %5592 = vmatprep.mubr.f32.mxu0 0.0
  %5593 = vmatmul.mubr.f32.gmra.mrb[0].mxu0 %v4730
  %v5594 = vpop.f32.mrb[0].mxu0
  %v5595 = vadd.f32 %v5210, %v5594
  %v5596 = vpop.f32.mrb[0].mxu0
  %5597 = vdwg.mxu0
  %v5598 = vld [vmem:[#allocation3 + $0x2] sm:$0xff]
  %v5599 = vld [vmem:[#allocation3 + $0xa] sm:$0xff]
  %v5600 = vld [vmem:[#allocation3 + $0x1a] sm:$0xff]
  %v5601 = vld [vmem:[#allocation3 + $0x22] sm:$0xff]
  %v5602 = vld [vmem:[#allocation3 + $0x32] sm:$0xff]
  %v5603 = vld [vmem:[#allocation3 + $0x3a] sm:$0xff]
  %v5604 = vld [vmem:[#allocation3 + $0x4a] sm:$0xff]
  %v5605 = vld [vmem:[#allocation3 + $0x52] sm:$0xff]
  %v5606 = vld [vmem:[#allocation3 + $0x62] sm:$0xff]
  %v5607 = vld [vmem:[#allocation3 + $0x6a] sm:$0xff]
  %v5608 = vld [vmem:[#allocation3 + $0x7a] sm:$0xff]
  %v5609 = vld [vmem:[#allocation3 + $0x82] sm:$0xff]
  %v5610 = vld [vmem:[#allocation3 + $0x92] sm:$0xff]
  %v5611 = vld [vmem:[#allocation3 + $0x9a] sm:$0xff]
  %v5612 = vld [vmem:[#allocation3 + $0xaa] sm:$0xff]
  %v5613 = vld [vmem:[#allocation3 + $0xb2] sm:$0xff]
  %v5614 = vld [vmem:[#allocation3 + $0xc2] sm:$0xff]
  %v5615 = vld [vmem:[#allocation3 + $0xca] sm:$0xff]
  %v5616 = vld [vmem:[#allocation3 + $0xda] sm:$0xff]
  %v5617 = vld [vmem:[#allocation3 + $0xe2] sm:$0xff]
  %v5618 = vld [vmem:[#allocation3 + $0xf2] sm:$0xff]
  %v5619 = vld [vmem:[#allocation3 + $0xfa] sm:$0xff]
  %v5620 = vld [vmem:[#allocation3 + $0x10a] sm:$0xff]
  %v5621 = vld [vmem:[#allocation3 + $0x112] sm:$0xff]
  %v5622 = vld [vmem:[#allocation3 + $0x122] sm:$0xff]
  %v5623 = vld [vmem:[#allocation3 + $0x12a] sm:$0xff]
  %v5624 = vld [vmem:[#allocation3 + $0x13a] sm:$0xff]
  %v5625 = vld [vmem:[#allocation3 + $0x142] sm:$0xff]
  %v5626 = vld [vmem:[#allocation3 + $0x152] sm:$0xff]
  %v5627 = vld [vmem:[#allocation3 + $0x15a] sm:$0xff]
  %v5628 = vld [vmem:[#allocation3 + $0x16a] sm:$0xff]
  %v5629 = vld [vmem:[#allocation3 + $0x172] sm:$0xff]
  %v5630 = vld [vmem:[#allocation3 + $0x1b2] sm:$0xff]
  %v5631 = vld [vmem:[#allocation3 + $0x1ba] sm:$0xff]
  %v5632 = vld [vmem:[#allocation3 + $0x1ca] sm:$0xff]
  %v5633 = vld [vmem:[#allocation3 + $0x1d2] sm:$0xff]
  %v5634 = vld [vmem:[#allocation3 + $0x1e2] sm:$0xff]
  %v5635 = vld [vmem:[#allocation3 + $0x1ea] sm:$0xff]
  %v5636 = vld [vmem:[#allocation3 + $0x1fa] sm:$0xff]
  %v5637 = vld [vmem:[#allocation3 + $0x202] sm:$0xff]
  %v5638 = vld [vmem:[#allocation3 + $0x212] sm:$0xff]
  %v5639 = vld [vmem:[#allocation3 + $0x21a] sm:$0xff]
  %v5640 = vld [vmem:[#allocation3 + $0x22a] sm:$0xff]
  %v5641 = vld [vmem:[#allocation3 + $0x232] sm:$0xff]
  %v5642 = vld [vmem:[#allocation3 + $0x242] sm:$0xff]
  %v5643 = vld [vmem:[#allocation3 + $0x24a] sm:$0xff]
  %v5644 = vld [vmem:[#allocation3 + $0x25a] sm:$0xff]
  %v5645 = vld [vmem:[#allocation3 + $0x262] sm:$0xff]
  %v5646 = vld [vmem:[#allocation3 + $0x272] sm:$0xff]
  %v5647 = vld [vmem:[#allocation3 + $0x27a] sm:$0xff]
  %v5648 = vld [vmem:[#allocation3 + $0x28a] sm:$0xff]
  %v5649 = vld [vmem:[#allocation3 + $0x292] sm:$0xff]
  %v5650 = vld [vmem:[#allocation3 + $0x2a2] sm:$0xff]
  %v5651 = vld [vmem:[#allocation3 + $0x2aa] sm:$0xff]
  %v5652 = vld [vmem:[#allocation3 + $0x2ba] sm:$0xff]
  %v5653 = vld [vmem:[#allocation3 + $0x2c2] sm:$0xff]
  %v5654 = vld [vmem:[#allocation3 + $0x2d2] sm:$0xff]
  %v5655 = vld [vmem:[#allocation3 + $0x2da] sm:$0xff]
  %v5656 = vld [vmem:[#allocation3 + $0x2ea] sm:$0xff]
  %v5657 = vld [vmem:[#allocation3 + $0x2f2] sm:$0xff]
  %v5658 = vld [vmem:[#allocation3 + $0x302] sm:$0xff]
  %v5659 = vld [vmem:[#allocation3 + $0x30a] sm:$0xff]
  %v5660 = vld [vmem:[#allocation3 + $0x31a] sm:$0xff]
  %v5661 = vld [vmem:[#allocation3 + $0x322] sm:$0xff]
  %s5662 = scalar_lea.vmem %s4, 256
  %v5663 = vld [vmem:[%s5662] sm:$0xff]
  %v5664 = vld [vmem:[%s5662 + $0x8] sm:$0xff]
  %v5665 = vld [vmem:[%s5662 + $0x10] sm:$0xff]
  %v5666 = vld [vmem:[%s5662 + $0x18] sm:$0xff]
  %v5667 = vld [vmem:[%s5662 + $0x20] sm:$0xff]
  %v5668 = vld [vmem:[%s5662 + $0x28] sm:$0xff]
  %v5669 = vld [vmem:[%s5662 + $0x30] sm:$0xff]
  %v5670 = vld [vmem:[%s5662 + $0x38] sm:$0xff]
  %v5671 = vld [vmem:[%s5662 + $0x40] sm:$0xff]
  %v5672 = vld [vmem:[%s5662 + $0x48] sm:$0xff]
  %v5673 = vld [vmem:[%s5662 + $0x50] sm:$0xff]
  %v5674 = vld [vmem:[%s5662 + $0x58] sm:$0xff]
  %v5675 = vld [vmem:[%s5662 + $0x60] sm:$0xff]
  %v5676 = vld [vmem:[%s5662 + $0x68] sm:$0xff]
  %v5677 = vld [vmem:[%s5662 + $0x70] sm:$0xff]
  %v5678 = vld [vmem:[%s5662 + $0x78] sm:$0xff]
  %5679 = vmatprep.subr.mxu0 0.0
  %5680 = vmatpush1.msra.mxu0 %v5663
  %5681 = vmatprep.subr.mxu0 0.0
  %5682 = vmatpush1.msra.mxu0 %v5664
  %5683 = vmatprep.subr.mxu0 0.0
  %5684 = vmatpush1.msra.mxu0 %v5665
  %5685 = vmatprep.subr.mxu0 0.0
  %5686 = vmatpush1.msra.mxu0 %v5666
  %5687 = vmatprep.subr.mxu0 0.0
  %5688 = vmatpush1.msra.mxu0 %v5667
  %5689 = vmatprep.subr.mxu0 0.0
  %5690 = vmatpush1.msra.mxu0 %v5668
  %5691 = vmatprep.subr.mxu0 0.0
  %5692 = vmatpush1.msra.mxu0 %v5669
  %5693 = vmatprep.subr.mxu0 0.0
  %5694 = vmatpush1.msra.mxu0 %v5670
  %5695 = vmatprep.subr.mxu0 0.0
  %5696 = vmatpush1.msra.mxu0 %v5671
  %5697 = vmatprep.subr.mxu0 0.0
  %5698 = vmatpush1.msra.mxu0 %v5672
  %5699 = vmatprep.subr.mxu0 0.0
  %5700 = vmatpush1.msra.mxu0 %v5673
  %5701 = vmatprep.subr.mxu0 0.0
  %5702 = vmatpush1.msra.mxu0 %v5674
  %5703 = vmatprep.subr.mxu0 0.0
  %5704 = vmatpush1.msra.mxu0 %v5675
  %5705 = vmatprep.subr.mxu0 0.0
  %5706 = vmatpush1.msra.mxu0 %v5676
  %5707 = vmatprep.subr.mxu0 0.0
  %5708 = vmatpush1.msra.mxu0 %v5677
  %5709 = vmatprep.subr.mxu0 0.0
  %5710 = vmatpush1.msra.mxu0 %v5678
  %5711 = vmatprep.subr.mxu0 0.0
  %5712 = vmatpush1.msra.mxu0 0.0
  %5713 = vmatprep.subr.mxu0 0.0
  %5714 = vmatpush1.msra.mxu0 0.0
  %5715 = vmatprep.subr.mxu0 0.0
  %5716 = vmatpush1.msra.mxu0 0.0
  %5717 = vmatprep.subr.mxu0 0.0
  %5718 = vmatpush1.msra.mxu0 0.0
  %5719 = vmatprep.subr.mxu0 0.0
  %5720 = vmatpush1.msra.mxu0 0.0
  %5721 = vmatprep.subr.mxu0 0.0
  %5722 = vmatpush1.msra.mxu0 0.0
  %5723 = vmatprep.subr.mxu0 0.0
  %5724 = vmatpush1.msra.mxu0 0.0
  %5725 = vmatprep.subr.mxu0 0.0
  %5726 = vmatpush1.msra.mxu0 0.0
  %5727 = vmatprep.subr.mxu0 0.0
  %5728 = vmatpush1.msra.mxu0 0.0
  %5729 = vmatprep.subr.mxu0 0.0
  %5730 = vmatpush1.msra.mxu0 0.0
  %5731 = vmatprep.subr.mxu0 0.0
  %5732 = vmatpush1.msra.mxu0 0.0
  %5733 = vmatprep.subr.mxu0 0.0
  %5734 = vmatpush1.msra.mxu0 0.0
  %5735 = vmatprep.subr.mxu0 0.0
  %5736 = vmatpush1.msra.mxu0 0.0
  %5737 = vmatprep.subr.mxu0 0.0
  %5738 = vmatpush1.msra.mxu0 0.0
  %5739 = vmatprep.subr.mxu0 0.0
  %5740 = vmatpush1.msra.mxu0 0.0
  %5741 = vmatprep.subr.mxu0 0.0
  %5742 = vmatpush1.msra.mxu0 0.0
  %5743 = vmatprep.mubr.f32.mxu0 0.0
  %5744 = vmatmul.mubr.f32.gmra.mrb[0].mxu0 %v5598
  %v5745 = vpop.f32.mrb[0].mxu0
  %v5746 = vadd.f32 0.0, %v5745
  %v5747 = vpop.f32.mrb[0].mxu0
  %5748 = vmatprep.mubr.f32.mxu0 0.0
  %5749 = vmatmul.mubr.f32.gmra.mrb[0].mxu0 %v5599
  %v5750 = vpop.f32.mrb[0].mxu0
  %v5751 = vadd.f32 0.0, %v5750
  %v5752 = vpop.f32.mrb[0].mxu0
  %5753 = vmatprep.mubr.f32.mxu0 0.0
  %5754 = vmatmul.mubr.f32.gmra.mrb[0].mxu0 %v5600
  %v5755 = vpop.f32.mrb[0].mxu0
  %v5756 = vadd.f32 0.0, %v5755
  %v5757 = vpop.f32.mrb[0].mxu0
  %5758 = vmatprep.mubr.f32.mxu0 0.0
  %5759 = vmatmul.mubr.f32.gmra.mrb[0].mxu0 %v5601
  %v5760 = vpop.f32.mrb[0].mxu0
  %v5761 = vadd.f32 0.0, %v5760
  %v5762 = vpop.f32.mrb[0].mxu0
  %5763 = vmatprep.mubr.f32.mxu0 0.0
  %5764 = vmatmul.mubr.f32.gmra.mrb[0].mxu0 %v5602
  %v5765 = vpop.f32.mrb[0].mxu0
  %v5766 = vadd.f32 0.0, %v5765
  %v5767 = vpop.f32.mrb[0].mxu0
  %5768 = vmatprep.mubr.f32.mxu0 0.0
  %5769 = vmatmul.mubr.f32.gmra.mrb[0].mxu0 %v5603
  %v5770 = vpop.f32.mrb[0].mxu0
  %v5771 = vadd.f32 0.0, %v5770
  %v5772 = vpop.f32.mrb[0].mxu0
  %5773 = vmatprep.mubr.f32.mxu0 0.0
  %5774 = vmatmul.mubr.f32.gmra.mrb[0].mxu0 %v5604
  %v5775 = vpop.f32.mrb[0].mxu0
  %v5776 = vadd.f32 0.0, %v5775
  %v5777 = vpop.f32.mrb[0].mxu0
  %5778 = vmatprep.mubr.f32.mxu0 0.0
  %5779 = vmatmul.mubr.f32.gmra.mrb[0].mxu0 %v5605
  %v5780 = vpop.f32.mrb[0].mxu0
  %v5781 = vadd.f32 0.0, %v5780
  %v5782 = vpop.f32.mrb[0].mxu0
  %5783 = vmatprep.mubr.f32.mxu0 0.0
  %5784 = vmatmul.mubr.f32.gmra.mrb[0].mxu0 %v5606
  %v5785 = vpop.f32.mrb[0].mxu0
  %v5786 = vadd.f32 0.0, %v5785
  %v5787 = vpop.f32.mrb[0].mxu0
  %5788 = vmatprep.mubr.f32.mxu0 0.0
  %5789 = vmatmul.mubr.f32.gmra.mrb[0].mxu0 %v5607
  %v5790 = vpop.f32.mrb[0].mxu0
  %v5791 = vadd.f32 0.0, %v5790
  %v5792 = vpop.f32.mrb[0].mxu0
  %5793 = vmatprep.mubr.f32.mxu0 0.0
  %5794 = vmatmul.mubr.f32.gmra.mrb[0].mxu0 %v5608
  %v5795 = vpop.f32.mrb[0].mxu0
  %v5796 = vadd.f32 0.0, %v5795
  %v5797 = vpop.f32.mrb[0].mxu0
  %5798 = vmatprep.mubr.f32.mxu0 0.0
  %5799 = vmatmul.mubr.f32.gmra.mrb[0].mxu0 %v5609
  %v5800 = vpop.f32.mrb[0].mxu0
  %v5801 = vadd.f32 0.0, %v5800
  %v5802 = vpop.f32.mrb[0].mxu0
  %5803 = vmatprep.mubr.f32.mxu0 0.0
  %5804 = vmatmul.mubr.f32.gmra.mrb[0].mxu0 %v5610
  %v5805 = vpop.f32.mrb[0].mxu0
  %v5806 = vadd.f32 0.0, %v5805
  %v5807 = vpop.f32.mrb[0].mxu0
  %5808 = vmatprep.mubr.f32.mxu0 0.0
  %5809 = vmatmul.mubr.f32.gmra.mrb[0].mxu0 %v5611
  %v5810 = vpop.f32.mrb[0].mxu0
  %v5811 = vadd.f32 0.0, %v5810
  %v5812 = vpop.f32.mrb[0].mxu0
  %5813 = vmatprep.mubr.f32.mxu0 0.0
  %5814 = vmatmul.mubr.f32.gmra.mrb[0].mxu0 %v5612
  %v5815 = vpop.f32.mrb[0].mxu0
  %v5816 = vadd.f32 0.0, %v5815
  %v5817 = vpop.f32.mrb[0].mxu0
  %5818 = vmatprep.mubr.f32.mxu0 0.0
  %5819 = vmatmul.mubr.f32.gmra.mrb[0].mxu0 %v5613
  %v5820 = vpop.f32.mrb[0].mxu0
  %v5821 = vadd.f32 0.0, %v5820
  %v5822 = vpop.f32.mrb[0].mxu0
  %5823 = vmatprep.mubr.f32.mxu0 0.0
  %5824 = vmatmul.mubr.f32.gmra.mrb[0].mxu0 %v5614
  %v5825 = vpop.f32.mrb[0].mxu0
  %v5826 = vadd.f32 0.0, %v5825
  %v5827 = vpop.f32.mrb[0].mxu0
  %5828 = vmatprep.mubr.f32.mxu0 0.0
  %5829 = vmatmul.mubr.f32.gmra.mrb[0].mxu0 %v5615
  %v5830 = vpop.f32.mrb[0].mxu0
  %v5831 = vadd.f32 0.0, %v5830
  %v5832 = vpop.f32.mrb[0].mxu0
  %5833 = vmatprep.mubr.f32.mxu0 0.0
  %5834 = vmatmul.mubr.f32.gmra.mrb[0].mxu0 %v5616
  %v5835 = vpop.f32.mrb[0].mxu0
  %v5836 = vadd.f32 0.0, %v5835
  %v5837 = vpop.f32.mrb[0].mxu0
  %5838 = vmatprep.mubr.f32.mxu0 0.0
  %5839 = vmatmul.mubr.f32.gmra.mrb[0].mxu0 %v5617
  %v5840 = vpop.f32.mrb[0].mxu0
  %v5841 = vadd.f32 0.0, %v5840
  %v5842 = vpop.f32.mrb[0].mxu0
  %5843 = vmatprep.mubr.f32.mxu0 0.0
  %5844 = vmatmul.mubr.f32.gmra.mrb[0].mxu0 %v5618
  %v5845 = vpop.f32.mrb[0].mxu0
  %v5846 = vadd.f32 0.0, %v5845
  %v5847 = vpop.f32.mrb[0].mxu0
  %5848 = vmatprep.mubr.f32.mxu0 0.0
  %5849 = vmatmul.mubr.f32.gmra.mrb[0].mxu0 %v5619
  %v5850 = vpop.f32.mrb[0].mxu0
  %v5851 = vadd.f32 0.0, %v5850
  %v5852 = vpop.f32.mrb[0].mxu0
  %5853 = vmatprep.mubr.f32.mxu0 0.0
  %5854 = vmatmul.mubr.f32.gmra.mrb[0].mxu0 %v5620
  %v5855 = vpop.f32.mrb[0].mxu0
  %v5856 = vadd.f32 0.0, %v5855
  %v5857 = vpop.f32.mrb[0].mxu0
  %5858 = vmatprep.mubr.f32.mxu0 0.0
  %5859 = vmatmul.mubr.f32.gmra.mrb[0].mxu0 %v5621
  %v5860 = vpop.f32.mrb[0].mxu0
  %v5861 = vadd.f32 0.0, %v5860
  %v5862 = vpop.f32.mrb[0].mxu0
  %5863 = vmatprep.mubr.f32.mxu0 0.0
  %5864 = vmatmul.mubr.f32.gmra.mrb[0].mxu0 %v5622
  %v5865 = vpop.f32.mrb[0].mxu0
  %v5866 = vadd.f32 0.0, %v5865
  %v5867 = vpop.f32.mrb[0].mxu0
  %5868 = vmatprep.mubr.f32.mxu0 0.0
  %5869 = vmatmul.mubr.f32.gmra.mrb[0].mxu0 %v5623
  %v5870 = vpop.f32.mrb[0].mxu0
  %v5871 = vadd.f32 0.0, %v5870
  %v5872 = vpop.f32.mrb[0].mxu0
  %5873 = vmatprep.mubr.f32.mxu0 0.0
  %5874 = vmatmul.mubr.f32.gmra.mrb[0].mxu0 %v5624
  %v5875 = vpop.f32.mrb[0].mxu0
  %v5876 = vadd.f32 0.0, %v5875
  %v5877 = vpop.f32.mrb[0].mxu0
  %5878 = vmatprep.mubr.f32.mxu0 0.0
  %5879 = vmatmul.mubr.f32.gmra.mrb[0].mxu0 %v5625
  %v5880 = vpop.f32.mrb[0].mxu0
  %v5881 = vadd.f32 0.0, %v5880
  %v5882 = vpop.f32.mrb[0].mxu0
  %5883 = vmatprep.mubr.f32.mxu0 0.0
  %5884 = vmatmul.mubr.f32.gmra.mrb[0].mxu0 %v5626
  %v5885 = vpop.f32.mrb[0].mxu0
  %v5886 = vadd.f32 0.0, %v5885
  %v5887 = vpop.f32.mrb[0].mxu0
  %5888 = vmatprep.mubr.f32.mxu0 0.0
  %5889 = vmatmul.mubr.f32.gmra.mrb[0].mxu0 %v5627
  %v5890 = vpop.f32.mrb[0].mxu0
  %v5891 = vadd.f32 0.0, %v5890
  %v5892 = vpop.f32.mrb[0].mxu0
  %5893 = vmatprep.mubr.f32.mxu0 0.0
  %5894 = vmatmul.mubr.f32.gmra.mrb[0].mxu0 %v5628
  %v5895 = vpop.f32.mrb[0].mxu0
  %v5896 = vadd.f32 0.0, %v5895
  %v5897 = vpop.f32.mrb[0].mxu0
  %5898 = vmatprep.mubr.f32.mxu0 0.0
  %5899 = vmatmul.mubr.f32.gmra.mrb[0].mxu0 %v5629
  %v5900 = vpop.f32.mrb[0].mxu0
  %v5901 = vadd.f32 0.0, %v5900
  %v5902 = vpop.f32.mrb[0].mxu0
  %5903 = vmatprep.mubr.f32.mxu0 0.0
  %5904 = vmatmul.mubr.f32.gmra.mrb[0].mxu0 %v5630
  %v5905 = vpop.f32.mrb[0].mxu0
  %v5906 = vadd.f32 0.0, %v5905
  %v5907 = vpop.f32.mrb[0].mxu0
  %5908 = vmatprep.mubr.f32.mxu0 0.0
  %5909 = vmatmul.mubr.f32.gmra.mrb[0].mxu0 %v5631
  %v5910 = vpop.f32.mrb[0].mxu0
  %v5911 = vadd.f32 0.0, %v5910
  %v5912 = vpop.f32.mrb[0].mxu0
  %5913 = vmatprep.mubr.f32.mxu0 0.0
  %5914 = vmatmul.mubr.f32.gmra.mrb[0].mxu0 %v5632
  %v5915 = vpop.f32.mrb[0].mxu0
  %v5916 = vadd.f32 0.0, %v5915
  %v5917 = vpop.f32.mrb[0].mxu0
  %5918 = vmatprep.mubr.f32.mxu0 0.0
  %5919 = vmatmul.mubr.f32.gmra.mrb[0].mxu0 %v5633
  %v5920 = vpop.f32.mrb[0].mxu0
  %v5921 = vadd.f32 0.0, %v5920
  %v5922 = vpop.f32.mrb[0].mxu0
  %5923 = vmatprep.mubr.f32.mxu0 0.0
  %5924 = vmatmul.mubr.f32.gmra.mrb[0].mxu0 %v5634
  %v5925 = vpop.f32.mrb[0].mxu0
  %v5926 = vadd.f32 0.0, %v5925
  %v5927 = vpop.f32.mrb[0].mxu0
  %5928 = vmatprep.mubr.f32.mxu0 0.0
  %5929 = vmatmul.mubr.f32.gmra.mrb[0].mxu0 %v5635
  %v5930 = vpop.f32.mrb[0].mxu0
  %v5931 = vadd.f32 0.0, %v5930
  %v5932 = vpop.f32.mrb[0].mxu0
  %5933 = vmatprep.mubr.f32.mxu0 0.0
  %5934 = vmatmul.mubr.f32.gmra.mrb[0].mxu0 %v5636
  %v5935 = vpop.f32.mrb[0].mxu0
  %v5936 = vadd.f32 0.0, %v5935
  %v5937 = vpop.f32.mrb[0].mxu0
  %5938 = vmatprep.mubr.f32.mxu0 0.0
  %5939 = vmatmul.mubr.f32.gmra.mrb[0].mxu0 %v5637
  %v5940 = vpop.f32.mrb[0].mxu0
  %v5941 = vadd.f32 0.0, %v5940
  %v5942 = vpop.f32.mrb[0].mxu0
  %5943 = vmatprep.mubr.f32.mxu0 0.0
  %5944 = vmatmul.mubr.f32.gmra.mrb[0].mxu0 %v5638
  %v5945 = vpop.f32.mrb[0].mxu0
  %v5946 = vadd.f32 0.0, %v5945
  %v5947 = vpop.f32.mrb[0].mxu0
  %5948 = vmatprep.mubr.f32.mxu0 0.0
  %5949 = vmatmul.mubr.f32.gmra.mrb[0].mxu0 %v5639
  %v5950 = vpop.f32.mrb[0].mxu0
  %v5951 = vadd.f32 0.0, %v5950
  %v5952 = vpop.f32.mrb[0].mxu0
  %5953 = vmatprep.mubr.f32.mxu0 0.0
  %5954 = vmatmul.mubr.f32.gmra.mrb[0].mxu0 %v5640
  %v5955 = vpop.f32.mrb[0].mxu0
  %v5956 = vadd.f32 0.0, %v5955
  %v5957 = vpop.f32.mrb[0].mxu0
  %5958 = vmatprep.mubr.f32.mxu0 0.0
  %5959 = vmatmul.mubr.f32.gmra.mrb[0].mxu0 %v5641
  %v5960 = vpop.f32.mrb[0].mxu0
  %v5961 = vadd.f32 0.0, %v5960
  %v5962 = vpop.f32.mrb[0].mxu0
  %5963 = vmatprep.mubr.f32.mxu0 0.0
  %5964 = vmatmul.mubr.f32.gmra.mrb[0].mxu0 %v5642
  %v5965 = vpop.f32.mrb[0].mxu0
  %v5966 = vadd.f32 0.0, %v5965
  %v5967 = vpop.f32.mrb[0].mxu0
  %5968 = vmatprep.mubr.f32.mxu0 0.0
  %5969 = vmatmul.mubr.f32.gmra.mrb[0].mxu0 %v5643
  %v5970 = vpop.f32.mrb[0].mxu0
  %v5971 = vadd.f32 0.0, %v5970
  %v5972 = vpop.f32.mrb[0].mxu0
  %5973 = vmatprep.mubr.f32.mxu0 0.0
  %5974 = vmatmul.mubr.f32.gmra.mrb[0].mxu0 %v5644
  %v5975 = vpop.f32.mrb[0].mxu0
  %v5976 = vadd.f32 0.0, %v5975
  %v5977 = vpop.f32.mrb[0].mxu0
  %5978 = vmatprep.mubr.f32.mxu0 0.0
  %5979 = vmatmul.mubr.f32.gmra.mrb[0].mxu0 %v5645
  %v5980 = vpop.f32.mrb[0].mxu0
  %v5981 = vadd.f32 0.0, %v5980
  %v5982 = vpop.f32.mrb[0].mxu0
  %5983 = vmatprep.mubr.f32.mxu0 0.0
  %5984 = vmatmul.mubr.f32.gmra.mrb[0].mxu0 %v5646
  %v5985 = vpop.f32.mrb[0].mxu0
  %v5986 = vadd.f32 0.0, %v5985
  %v5987 = vpop.f32.mrb[0].mxu0
  %5988 = vmatprep.mubr.f32.mxu0 0.0
  %5989 = vmatmul.mubr.f32.gmra.mrb[0].mxu0 %v5647
  %v5990 = vpop.f32.mrb[0].mxu0
  %v5991 = vadd.f32 0.0, %v5990
  %v5992 = vpop.f32.mrb[0].mxu0
  %5993 = vmatprep.mubr.f32.mxu0 0.0
  %5994 = vmatmul.mubr.f32.gmra.mrb[0].mxu0 %v5648
  %v5995 = vpop.f32.mrb[0].mxu0
  %v5996 = vadd.f32 0.0, %v5995
  %v5997 = vpop.f32.mrb[0].mxu0
  %5998 = vmatprep.mubr.f32.mxu0 0.0
  %5999 = vmatmul.mubr.f32.gmra.mrb[0].mxu0 %v5649
  %v6000 = vpop.f32.mrb[0].mxu0
  %v6001 = vadd.f32 0.0, %v6000
  %v6002 = vpop.f32.mrb[0].mxu0
  %6003 = vmatprep.mubr.f32.mxu0 0.0
  %6004 = vmatmul.mubr.f32.gmra.mrb[0].mxu0 %v5650
  %v6005 = vpop.f32.mrb[0].mxu0
  %v6006 = vadd.f32 0.0, %v6005
  %v6007 = vpop.f32.mrb[0].mxu0
  %6008 = vmatprep.mubr.f32.mxu0 0.0
  %6009 = vmatmul.mubr.f32.gmra.mrb[0].mxu0 %v5651
  %v6010 = vpop.f32.mrb[0].mxu0
  %v6011 = vadd.f32 0.0, %v6010
  %v6012 = vpop.f32.mrb[0].mxu0
  %6013 = vmatprep.mubr.f32.mxu0 0.0
  %6014 = vmatmul.mubr.f32.gmra.mrb[0].mxu0 %v5652
  %v6015 = vpop.f32.mrb[0].mxu0
  %v6016 = vadd.f32 0.0, %v6015
  %v6017 = vpop.f32.mrb[0].mxu0
  %6018 = vmatprep.mubr.f32.mxu0 0.0
  %6019 = vmatmul.mubr.f32.gmra.mrb[0].mxu0 %v5653
  %v6020 = vpop.f32.mrb[0].mxu0
  %v6021 = vadd.f32 0.0, %v6020
  %v6022 = vpop.f32.mrb[0].mxu0
  %6023 = vmatprep.mubr.f32.mxu0 0.0
  %6024 = vmatmul.mubr.f32.gmra.mrb[0].mxu0 %v5654
  %v6025 = vpop.f32.mrb[0].mxu0
  %v6026 = vadd.f32 0.0, %v6025
  %v6027 = vpop.f32.mrb[0].mxu0
  %6028 = vmatprep.mubr.f32.mxu0 0.0
  %6029 = vmatmul.mubr.f32.gmra.mrb[0].mxu0 %v5655
  %v6030 = vpop.f32.mrb[0].mxu0
  %v6031 = vadd.f32 0.0, %v6030
  %v6032 = vpop.f32.mrb[0].mxu0
  %6033 = vmatprep.mubr.f32.mxu0 0.0
  %6034 = vmatmul.mubr.f32.gmra.mrb[0].mxu0 %v5656
  %v6035 = vpop.f32.mrb[0].mxu0
  %v6036 = vadd.f32 0.0, %v6035
  %v6037 = vpop.f32.mrb[0].mxu0
  %6038 = vmatprep.mubr.f32.mxu0 0.0
  %6039 = vmatmul.mubr.f32.gmra.mrb[0].mxu0 %v5657
  %v6040 = vpop.f32.mrb[0].mxu0
  %v6041 = vadd.f32 0.0, %v6040
  %v6042 = vpop.f32.mrb[0].mxu0
  %6043 = vmatprep.mubr.f32.mxu0 0.0
  %6044 = vmatmul.mubr.f32.gmra.mrb[0].mxu0 %v5658
  %v6045 = vpop.f32.mrb[0].mxu0
  %v6046 = vadd.f32 0.0, %v6045
  %v6047 = vpop.f32.mrb[0].mxu0
  %6048 = vmatprep.mubr.f32.mxu0 0.0
  %6049 = vmatmul.mubr.f32.gmra.mrb[0].mxu0 %v5659
  %v6050 = vpop.f32.mrb[0].mxu0
  %v6051 = vadd.f32 0.0, %v6050
  %v6052 = vpop.f32.mrb[0].mxu0
  %6053 = vmatprep.mubr.f32.mxu0 0.0
  %6054 = vmatmul.mubr.f32.gmra.mrb[0].mxu0 %v5660
  %v6055 = vpop.f32.mrb[0].mxu0
  %v6056 = vadd.f32 0.0, %v6055
  %v6057 = vpop.f32.mrb[0].mxu0
  %6058 = vmatprep.mubr.f32.mxu0 0.0
  %6059 = vmatmul.mubr.f32.gmra.mrb[0].mxu0 %v5661
  %v6060 = vpop.f32.mrb[0].mxu0
  %v6061 = vadd.f32 0.0, %v6060
  %v6062 = vpop.f32.mrb[0].mxu0
  %6063 = vdwg.mxu0
  %v6064 = vadd.f32 %v5280, %v5746
  %v6065 = vadd.f32 %v5285, %v5751
  %v6066 = vadd.f32 %v5290, %v5756
  %v6067 = vadd.f32 %v5295, %v5761
  %v6068 = vadd.f32 %v5300, %v5766
  %v6069 = vadd.f32 %v5305, %v5771
  %v6070 = vadd.f32 %v5310, %v5776
  %v6071 = vadd.f32 %v5315, %v5781
  %v6072 = vadd.f32 %v5320, %v5786
  %v6073 = vadd.f32 %v5325, %v5791
  %v6074 = vadd.f32 %v5330, %v5796
  %v6075 = vadd.f32 %v5335, %v5801
  %v6076 = vadd.f32 %v5340, %v5806
  %v6077 = vadd.f32 %v5345, %v5811
  %v6078 = vadd.f32 %v5350, %v5816
  %v6079 = vadd.f32 %v5355, %v5821
  %v6080 = vadd.f32 %v5360, %v5826
  %v6081 = vadd.f32 %v5365, %v5831
  %v6082 = vadd.f32 %v5370, %v5836
  %v6083 = vadd.f32 %v5375, %v5841
  %v6084 = vadd.f32 %v5380, %v5846
  %v6085 = vadd.f32 %v5385, %v5851
  %v6086 = vadd.f32 %v5390, %v5856
  %v6087 = vadd.f32 %v5395, %v5861
  %v6088 = vadd.f32 %v5400, %v5866
  %v6089 = vadd.f32 %v5405, %v5871
  %v6090 = vadd.f32 %v5410, %v5876
  %v6091 = vadd.f32 %v5415, %v5881
  %v6092 = vadd.f32 %v5420, %v5886
  %v6093 = vadd.f32 %v5425, %v5891
  %v6094 = vadd.f32 %v5430, %v5896
  %v6095 = vadd.f32 %v5435, %v5901
  %v6096 = vadd.f32 %v5440, %v5906
  %v6097 = vadd.f32 %v5445, %v5911
  %v6098 = vadd.f32 %v5450, %v5916
  %v6099 = vadd.f32 %v5455, %v5921
  %v6100 = vadd.f32 %v5460, %v5926
  %v6101 = vadd.f32 %v5465, %v5931
  %v6102 = vadd.f32 %v5470, %v5936
  %v6103 = vadd.f32 %v5475, %v5941
  %v6104 = vadd.f32 %v5480, %v5946
  %v6105 = vadd.f32 %v5485, %v5951
  %v6106 = vadd.f32 %v5490, %v5956
  %v6107 = vadd.f32 %v5495, %v5961
  %v6108 = vadd.f32 %v5500, %v5966
  %v6109 = vadd.f32 %v5505, %v5971
  %v6110 = vadd.f32 %v5510, %v5976
  %v6111 = vadd.f32 %v5515, %v5981
  %v6112 = vadd.f32 %v5520, %v5986
  %v6113 = vadd.f32 %v5525, %v5991
  %v6114 = vadd.f32 %v5530, %v5996
  %v6115 = vadd.f32 %v5535, %v6001
  %v6116 = vadd.f32 %v5540, %v6006
  %v6117 = vadd.f32 %v5545, %v6011
  %v6118 = vadd.f32 %v5550, %v6016
  %v6119 = vadd.f32 %v5555, %v6021
  %v6120 = vadd.f32 %v5560, %v6026
  %v6121 = vadd.f32 %v5565, %v6031
  %v6122 = vadd.f32 %v5570, %v6036
  %v6123 = vadd.f32 %v5575, %v6041
  %v6124 = vadd.f32 %v5580, %v6046
  %v6125 = vadd.f32 %v5585, %v6051
  %v6126 = vadd.f32 %v5590, %v6056
  %v6127 = vadd.f32 %v5595, %v6061
  %v6128 = vld [vmem:[%s4602] sm:$0xff]
  %v6129 = vld [vmem:[%s4602 + $0x8] sm:$0xff]
  %v6130 = vld [vmem:[%s4602 + $0x18] sm:$0xff]
  %v6131 = vld [vmem:[%s4602 + $0x20] sm:$0xff]
  %v6132 = vld [vmem:[%s4602 + $0x30] sm:$0xff]
  %v6133 = vld [vmem:[%s4602 + $0x38] sm:$0xff]
  %v6134 = vld [vmem:[%s4602 + $0x48] sm:$0xff]
  %v6135 = vld [vmem:[%s4602 + $0x50] sm:$0xff]
  %v6136 = vld [vmem:[%s4602 + $0x60] sm:$0xff]
  %v6137 = vld [vmem:[%s4602 + $0x68] sm:$0xff]
  %v6138 = vld [vmem:[%s4602 + $0x78] sm:$0xff]
  %v6139 = vld [vmem:[%s4602 + $0x80] sm:$0xff]
  %v6140 = vld [vmem:[%s4602 + $0x90] sm:$0xff]
  %v6141 = vld [vmem:[%s4602 + $0x98] sm:$0xff]
  %v6142 = vld [vmem:[%s4602 + $0xa8] sm:$0xff]
  %v6143 = vld [vmem:[%s4602 + $0xb0] sm:$0xff]
  %v6144 = vld [vmem:[%s4602 + $0xc0] sm:$0xff]
  %v6145 = vld [vmem:[%s4602 + $0xc8] sm:$0xff]
  %v6146 = vld [vmem:[%s4602 + $0xd8] sm:$0xff]
  %v6147 = vld [vmem:[%s4602 + $0xe0] sm:$0xff]
  %v6148 = vld [vmem:[%s4602 + $0xf0] sm:$0xff]
  %v6149 = vld [vmem:[%s4602 + $0xf8] sm:$0xff]
  %v6150 = vld [vmem:[%s4602 + $0x108] sm:$0xff]
  %v6151 = vld [vmem:[%s4602 + $0x110] sm:$0xff]
  %v6152 = vld [vmem:[%s4602 + $0x120] sm:$0xff]
  %v6153 = vld [vmem:[%s4602 + $0x128] sm:$0xff]
  %v6154 = vld [vmem:[%s4602 + $0x138] sm:$0xff]
  %v6155 = vld [vmem:[%s4602 + $0x140] sm:$0xff]
  %v6156 = vld [vmem:[%s4602 + $0x150] sm:$0xff]
  %v6157 = vld [vmem:[%s4602 + $0x158] sm:$0xff]
  %v6158 = vld [vmem:[%s4602 + $0x168] sm:$0xff]
  %v6159 = vld [vmem:[%s4602 + $0x170] sm:$0xff]
  %v6160 = vld [vmem:[%s4602 + $0x1b0] sm:$0xff]
  %v6161 = vld [vmem:[%s4602 + $0x1b8] sm:$0xff]
  %v6162 = vld [vmem:[%s4602 + $0x1c8] sm:$0xff]
  %v6163 = vld [vmem:[%s4602 + $0x1d0] sm:$0xff]
  %v6164 = vld [vmem:[%s4602 + $0x1e0] sm:$0xff]
  %v6165 = vld [vmem:[%s4602 + $0x1e8] sm:$0xff]
  %v6166 = vld [vmem:[%s4602 + $0x1f8] sm:$0xff]
  %v6167 = vld [vmem:[%s4602 + $0x200] sm:$0xff]
  %v6168 = vld [vmem:[%s4602 + $0x210] sm:$0xff]
  %v6169 = vld [vmem:[%s4602 + $0x218] sm:$0xff]
  %v6170 = vld [vmem:[%s4602 + $0x228] sm:$0xff]
  %v6171 = vld [vmem:[%s4602 + $0x230] sm:$0xff]
  %v6172 = vld [vmem:[%s4602 + $0x240] sm:$0xff]
  %v6173 = vld [vmem:[%s4602 + $0x248] sm:$0xff]
  %v6174 = vld [vmem:[%s4602 + $0x258] sm:$0xff]
  %v6175 = vld [vmem:[%s4602 + $0x260] sm:$0xff]
  %v6176 = vld [vmem:[%s4602 + $0x270] sm:$0xff]
  %v6177 = vld [vmem:[%s4602 + $0x278] sm:$0xff]
  %v6178 = vld [vmem:[%s4602 + $0x288] sm:$0xff]
  %v6179 = vld [vmem:[%s4602 + $0x290] sm:$0xff]
  %v6180 = vld [vmem:[%s4602 + $0x2a0] sm:$0xff]
  %v6181 = vld [vmem:[%s4602 + $0x2a8] sm:$0xff]
  %v6182 = vld [vmem:[%s4602 + $0x2b8] sm:$0xff]
  %v6183 = vld [vmem:[%s4602 + $0x2c0] sm:$0xff]
  %v6184 = vld [vmem:[%s4602 + $0x2d0] sm:$0xff]
  %v6185 = vld [vmem:[%s4602 + $0x2d8] sm:$0xff]
  %v6186 = vld [vmem:[%s4602 + $0x2e8] sm:$0xff]
  %v6187 = vld [vmem:[%s4602 + $0x2f0] sm:$0xff]
  %v6188 = vld [vmem:[%s4602 + $0x300] sm:$0xff]
  %v6189 = vld [vmem:[%s4602 + $0x308] sm:$0xff]
  %v6190 = vld [vmem:[%s4602 + $0x318] sm:$0xff]
  %v6191 = vld [vmem:[%s4602 + $0x320] sm:$0xff]
  %s6192 = scalar_lea.vmem %s4, 384
  %v6193 = vld [vmem:[%s6192] sm:$0xff]
  %v6194 = vld [vmem:[%s6192 + $0x8] sm:$0xff]
  %v6195 = vld [vmem:[%s6192 + $0x10] sm:$0xff]
  %v6196 = vld [vmem:[%s6192 + $0x18] sm:$0xff]
  %v6197 = vld [vmem:[%s6192 + $0x20] sm:$0xff]
  %v6198 = vld [vmem:[%s6192 + $0x28] sm:$0xff]
  %v6199 = vld [vmem:[%s6192 + $0x30] sm:$0xff]
  %v6200 = vld [vmem:[%s6192 + $0x38] sm:$0xff]
  %v6201 = vld [vmem:[%s6192 + $0x40] sm:$0xff]
  %v6202 = vld [vmem:[%s6192 + $0x48] sm:$0xff]
  %v6203 = vld [vmem:[%s6192 + $0x50] sm:$0xff]
  %v6204 = vld [vmem:[%s6192 + $0x58] sm:$0xff]
  %v6205 = vld [vmem:[%s6192 + $0x60] sm:$0xff]
  %v6206 = vld [vmem:[%s6192 + $0x68] sm:$0xff]
  %v6207 = vld [vmem:[%s6192 + $0x70] sm:$0xff]
  %v6208 = vld [vmem:[%s6192 + $0x78] sm:$0xff]
  %6209 = vmatprep.subr.mxu0 0.0
  %6210 = vmatpush1.msra.mxu0 %v6193
  %6211 = vmatprep.subr.mxu0 0.0
  %6212 = vmatpush1.msra.mxu0 %v6194
  %6213 = vmatprep.subr.mxu0 0.0
  %6214 = vmatpush1.msra.mxu0 %v6195
  %6215 = vmatprep.subr.mxu0 0.0
  %6216 = vmatpush1.msra.mxu0 %v6196
  %6217 = vmatprep.subr.mxu0 0.0
  %6218 = vmatpush1.msra.mxu0 %v6197
  %6219 = vmatprep.subr.mxu0 0.0
  %6220 = vmatpush1.msra.mxu0 %v6198
  %6221 = vmatprep.subr.mxu0 0.0
  %6222 = vmatpush1.msra.mxu0 %v6199
  %6223 = vmatprep.subr.mxu0 0.0
  %6224 = vmatpush1.msra.mxu0 %v6200
  %6225 = vmatprep.subr.mxu0 0.0
  %6226 = vmatpush1.msra.mxu0 %v6201
  %6227 = vmatprep.subr.mxu0 0.0
  %6228 = vmatpush1.msra.mxu0 %v6202
  %6229 = vmatprep.subr.mxu0 0.0
  %6230 = vmatpush1.msra.mxu0 %v6203
  %6231 = vmatprep.subr.mxu0 0.0
  %6232 = vmatpush1.msra.mxu0 %v6204
  %6233 = vmatprep.subr.mxu0 0.0
  %6234 = vmatpush1.msra.mxu0 %v6205
  %6235 = vmatprep.subr.mxu0 0.0
  %6236 = vmatpush1.msra.mxu0 %v6206
  %6237 = vmatprep.subr.mxu0 0.0
  %6238 = vmatpush1.msra.mxu0 %v6207
  %6239 = vmatprep.subr.mxu0 0.0
  %6240 = vmatpush1.msra.mxu0 %v6208
  %6241 = vmatprep.subr.mxu0 0.0
  %6242 = vmatpush1.msra.mxu0 0.0
  %6243 = vmatprep.subr.mxu0 0.0
  %6244 = vmatpush1.msra.mxu0 0.0
  %6245 = vmatprep.subr.mxu0 0.0
  %6246 = vmatpush1.msra.mxu0 0.0
  %6247 = vmatprep.subr.mxu0 0.0
  %6248 = vmatpush1.msra.mxu0 0.0
  %6249 = vmatprep.subr.mxu0 0.0
  %6250 = vmatpush1.msra.mxu0 0.0
  %6251 = vmatprep.subr.mxu0 0.0
  %6252 = vmatpush1.msra.mxu0 0.0
  %6253 = vmatprep.subr.mxu0 0.0
  %6254 = vmatpush1.msra.mxu0 0.0
  %6255 = vmatprep.subr.mxu0 0.0
  %6256 = vmatpush1.msra.mxu0 0.0
  %6257 = vmatprep.subr.mxu0 0.0
  %6258 = vmatpush1.msra.mxu0 0.0
  %6259 = vmatprep.subr.mxu0 0.0
  %6260 = vmatpush1.msra.mxu0 0.0
  %6261 = vmatprep.subr.mxu0 0.0
  %6262 = vmatpush1.msra.mxu0 0.0
  %6263 = vmatprep.subr.mxu0 0.0
  %6264 = vmatpush1.msra.mxu0 0.0
  %6265 = vmatprep.subr.mxu0 0.0
  %6266 = vmatpush1.msra.mxu0 0.0
  %6267 = vmatprep.subr.mxu0 0.0
  %6268 = vmatpush1.msra.mxu0 0.0
  %6269 = vmatprep.subr.mxu0 0.0
  %6270 = vmatpush1.msra.mxu0 0.0
  %6271 = vmatprep.subr.mxu0 0.0
  %6272 = vmatpush1.msra.mxu0 0.0
  %6273 = vmatprep.mubr.f32.mxu0 0.0
  %6274 = vmatmul.mubr.f32.gmra.mrb[0].mxu0 %v6128
  %v6275 = vpop.f32.mrb[0].mxu0
  %v6276 = vadd.f32 0.0, %v6275
  %v6277 = vpop.f32.mrb[0].mxu0
  %6278 = vmatprep.mubr.f32.mxu0 0.0
  %6279 = vmatmul.mubr.f32.gmra.mrb[0].mxu0 %v6129
  %v6280 = vpop.f32.mrb[0].mxu0
  %v6281 = vadd.f32 0.0, %v6280
  %v6282 = vpop.f32.mrb[0].mxu0
  %6283 = vmatprep.mubr.f32.mxu0 0.0
  %6284 = vmatmul.mubr.f32.gmra.mrb[0].mxu0 %v6130
  %v6285 = vpop.f32.mrb[0].mxu0
  %v6286 = vadd.f32 0.0, %v6285
  %v6287 = vpop.f32.mrb[0].mxu0
  %6288 = vmatprep.mubr.f32.mxu0 0.0
  %6289 = vmatmul.mubr.f32.gmra.mrb[0].mxu0 %v6131
  %v6290 = vpop.f32.mrb[0].mxu0
  %v6291 = vadd.f32 0.0, %v6290
  %v6292 = vpop.f32.mrb[0].mxu0
  %6293 = vmatprep.mubr.f32.mxu0 0.0
  %6294 = vmatmul.mubr.f32.gmra.mrb[0].mxu0 %v6132
  %v6295 = vpop.f32.mrb[0].mxu0
  %v6296 = vadd.f32 0.0, %v6295
  %v6297 = vpop.f32.mrb[0].mxu0
  %6298 = vmatprep.mubr.f32.mxu0 0.0
  %6299 = vmatmul.mubr.f32.gmra.mrb[0].mxu0 %v6133
  %v6300 = vpop.f32.mrb[0].mxu0
  %v6301 = vadd.f32 0.0, %v6300
  %v6302 = vpop.f32.mrb[0].mxu0
  %6303 = vmatprep.mubr.f32.mxu0 0.0
  %6304 = vmatmul.mubr.f32.gmra.mrb[0].mxu0 %v6134
  %v6305 = vpop.f32.mrb[0].mxu0
  %v6306 = vadd.f32 0.0, %v6305
  %v6307 = vpop.f32.mrb[0].mxu0
  %6308 = vmatprep.mubr.f32.mxu0 0.0
  %6309 = vmatmul.mubr.f32.gmra.mrb[0].mxu0 %v6135
  %v6310 = vpop.f32.mrb[0].mxu0
  %v6311 = vadd.f32 0.0, %v6310
  %v6312 = vpop.f32.mrb[0].mxu0
  %6313 = vmatprep.mubr.f32.mxu0 0.0
  %6314 = vmatmul.mubr.f32.gmra.mrb[0].mxu0 %v6136
  %v6315 = vpop.f32.mrb[0].mxu0
  %v6316 = vadd.f32 0.0, %v6315
  %v6317 = vpop.f32.mrb[0].mxu0
  %6318 = vmatprep.mubr.f32.mxu0 0.0
  %6319 = vmatmul.mubr.f32.gmra.mrb[0].mxu0 %v6137
  %v6320 = vpop.f32.mrb[0].mxu0
  %v6321 = vadd.f32 0.0, %v6320
  %v6322 = vpop.f32.mrb[0].mxu0
  %6323 = vmatprep.mubr.f32.mxu0 0.0
  %6324 = vmatmul.mubr.f32.gmra.mrb[0].mxu0 %v6138
  %v6325 = vpop.f32.mrb[0].mxu0
  %v6326 = vadd.f32 0.0, %v6325
  %v6327 = vpop.f32.mrb[0].mxu0
  %6328 = vmatprep.mubr.f32.mxu0 0.0
  %6329 = vmatmul.mubr.f32.gmra.mrb[0].mxu0 %v6139
  %v6330 = vpop.f32.mrb[0].mxu0
  %v6331 = vadd.f32 0.0, %v6330
  %v6332 = vpop.f32.mrb[0].mxu0
  %6333 = vmatprep.mubr.f32.mxu0 0.0
  %6334 = vmatmul.mubr.f32.gmra.mrb[0].mxu0 %v6140
  %v6335 = vpop.f32.mrb[0].mxu0
  %v6336 = vadd.f32 0.0, %v6335
  %v6337 = vpop.f32.mrb[0].mxu0
  %6338 = vmatprep.mubr.f32.mxu0 0.0
  %6339 = vmatmul.mubr.f32.gmra.mrb[0].mxu0 %v6141
  %v6340 = vpop.f32.mrb[0].mxu0
  %v6341 = vadd.f32 0.0, %v6340
  %v6342 = vpop.f32.mrb[0].mxu0
  %6343 = vmatprep.mubr.f32.mxu0 0.0
  %6344 = vmatmul.mubr.f32.gmra.mrb[0].mxu0 %v6142
  %v6345 = vpop.f32.mrb[0].mxu0
  %v6346 = vadd.f32 0.0, %v6345
  %v6347 = vpop.f32.mrb[0].mxu0
  %6348 = vmatprep.mubr.f32.mxu0 0.0
  %6349 = vmatmul.mubr.f32.gmra.mrb[0].mxu0 %v6143
  %v6350 = vpop.f32.mrb[0].mxu0
  %v6351 = vadd.f32 0.0, %v6350
  %v6352 = vpop.f32.mrb[0].mxu0
  %6353 = vmatprep.mubr.f32.mxu0 0.0
  %6354 = vmatmul.mubr.f32.gmra.mrb[0].mxu0 %v6144
  %v6355 = vpop.f32.mrb[0].mxu0
  %v6356 = vadd.f32 0.0, %v6355
  %v6357 = vpop.f32.mrb[0].mxu0
  %6358 = vmatprep.mubr.f32.mxu0 0.0
  %6359 = vmatmul.mubr.f32.gmra.mrb[0].mxu0 %v6145
  %v6360 = vpop.f32.mrb[0].mxu0
  %v6361 = vadd.f32 0.0, %v6360
  %v6362 = vpop.f32.mrb[0].mxu0
  %6363 = vmatprep.mubr.f32.mxu0 0.0
  %6364 = vmatmul.mubr.f32.gmra.mrb[0].mxu0 %v6146
  %v6365 = vpop.f32.mrb[0].mxu0
  %v6366 = vadd.f32 0.0, %v6365
  %v6367 = vpop.f32.mrb[0].mxu0
  %6368 = vmatprep.mubr.f32.mxu0 0.0
  %6369 = vmatmul.mubr.f32.gmra.mrb[0].mxu0 %v6147
  %v6370 = vpop.f32.mrb[0].mxu0
  %v6371 = vadd.f32 0.0, %v6370
  %v6372 = vpop.f32.mrb[0].mxu0
  %6373 = vmatprep.mubr.f32.mxu0 0.0
  %6374 = vmatmul.mubr.f32.gmra.mrb[0].mxu0 %v6148
  %v6375 = vpop.f32.mrb[0].mxu0
  %v6376 = vadd.f32 0.0, %v6375
  %v6377 = vpop.f32.mrb[0].mxu0
  %6378 = vmatprep.mubr.f32.mxu0 0.0
  %6379 = vmatmul.mubr.f32.gmra.mrb[0].mxu0 %v6149
  %v6380 = vpop.f32.mrb[0].mxu0
  %v6381 = vadd.f32 0.0, %v6380
  %v6382 = vpop.f32.mrb[0].mxu0
  %6383 = vmatprep.mubr.f32.mxu0 0.0
  %6384 = vmatmul.mubr.f32.gmra.mrb[0].mxu0 %v6150
  %v6385 = vpop.f32.mrb[0].mxu0
  %v6386 = vadd.f32 0.0, %v6385
  %v6387 = vpop.f32.mrb[0].mxu0
  %6388 = vmatprep.mubr.f32.mxu0 0.0
  %6389 = vmatmul.mubr.f32.gmra.mrb[0].mxu0 %v6151
  %v6390 = vpop.f32.mrb[0].mxu0
  %v6391 = vadd.f32 0.0, %v6390
  %v6392 = vpop.f32.mrb[0].mxu0
  %6393 = vmatprep.mubr.f32.mxu0 0.0
  %6394 = vmatmul.mubr.f32.gmra.mrb[0].mxu0 %v6152
  %v6395 = vpop.f32.mrb[0].mxu0
  %v6396 = vadd.f32 0.0, %v6395
  %v6397 = vpop.f32.mrb[0].mxu0
  %6398 = vmatprep.mubr.f32.mxu0 0.0
  %6399 = vmatmul.mubr.f32.gmra.mrb[0].mxu0 %v6153
  %v6400 = vpop.f32.mrb[0].mxu0
  %v6401 = vadd.f32 0.0, %v6400
  %v6402 = vpop.f32.mrb[0].mxu0
  %6403 = vmatprep.mubr.f32.mxu0 0.0
  %6404 = vmatmul.mubr.f32.gmra.mrb[0].mxu0 %v6154
  %v6405 = vpop.f32.mrb[0].mxu0
  %v6406 = vadd.f32 0.0, %v6405
  %v6407 = vpop.f32.mrb[0].mxu0
  %6408 = vmatprep.mubr.f32.mxu0 0.0
  %6409 = vmatmul.mubr.f32.gmra.mrb[0].mxu0 %v6155
  %v6410 = vpop.f32.mrb[0].mxu0
  %v6411 = vadd.f32 0.0, %v6410
  %v6412 = vpop.f32.mrb[0].mxu0
  %6413 = vmatprep.mubr.f32.mxu0 0.0
  %6414 = vmatmul.mubr.f32.gmra.mrb[0].mxu0 %v6156
  %v6415 = vpop.f32.mrb[0].mxu0
  %v6416 = vadd.f32 0.0, %v6415
  %v6417 = vpop.f32.mrb[0].mxu0
  %6418 = vmatprep.mubr.f32.mxu0 0.0
  %6419 = vmatmul.mubr.f32.gmra.mrb[0].mxu0 %v6157
  %v6420 = vpop.f32.mrb[0].mxu0
  %v6421 = vadd.f32 0.0, %v6420
  %v6422 = vpop.f32.mrb[0].mxu0
  %6423 = vmatprep.mubr.f32.mxu0 0.0
  %6424 = vmatmul.mubr.f32.gmra.mrb[0].mxu0 %v6158
  %v6425 = vpop.f32.mrb[0].mxu0
  %v6426 = vadd.f32 0.0, %v6425
  %v6427 = vpop.f32.mrb[0].mxu0
  %6428 = vmatprep.mubr.f32.mxu0 0.0
  %6429 = vmatmul.mubr.f32.gmra.mrb[0].mxu0 %v6159
  %v6430 = vpop.f32.mrb[0].mxu0
  %v6431 = vadd.f32 0.0, %v6430
  %v6432 = vpop.f32.mrb[0].mxu0
  %6433 = vmatprep.mubr.f32.mxu0 0.0
  %6434 = vmatmul.mubr.f32.gmra.mrb[0].mxu0 %v6160
  %v6435 = vpop.f32.mrb[0].mxu0
  %v6436 = vadd.f32 0.0, %v6435
  %v6437 = vpop.f32.mrb[0].mxu0
  %6438 = vmatprep.mubr.f32.mxu0 0.0
  %6439 = vmatmul.mubr.f32.gmra.mrb[0].mxu0 %v6161
  %v6440 = vpop.f32.mrb[0].mxu0
  %v6441 = vadd.f32 0.0, %v6440
  %v6442 = vpop.f32.mrb[0].mxu0
  %6443 = vmatprep.mubr.f32.mxu0 0.0
  %6444 = vmatmul.mubr.f32.gmra.mrb[0].mxu0 %v6162
  %v6445 = vpop.f32.mrb[0].mxu0
  %v6446 = vadd.f32 0.0, %v6445
  %v6447 = vpop.f32.mrb[0].mxu0
  %6448 = vmatprep.mubr.f32.mxu0 0.0
  %6449 = vmatmul.mubr.f32.gmra.mrb[0].mxu0 %v6163
  %v6450 = vpop.f32.mrb[0].mxu0
  %v6451 = vadd.f32 0.0, %v6450
  %v6452 = vpop.f32.mrb[0].mxu0
  %6453 = vmatprep.mubr.f32.mxu0 0.0
  %6454 = vmatmul.mubr.f32.gmra.mrb[0].mxu0 %v6164
  %v6455 = vpop.f32.mrb[0].mxu0
  %v6456 = vadd.f32 0.0, %v6455
  %v6457 = vpop.f32.mrb[0].mxu0
  %6458 = vmatprep.mubr.f32.mxu0 0.0
  %6459 = vmatmul.mubr.f32.gmra.mrb[0].mxu0 %v6165
  %v6460 = vpop.f32.mrb[0].mxu0
  %v6461 = vadd.f32 0.0, %v6460
  %v6462 = vpop.f32.mrb[0].mxu0
  %6463 = vmatprep.mubr.f32.mxu0 0.0
  %6464 = vmatmul.mubr.f32.gmra.mrb[0].mxu0 %v6166
  %v6465 = vpop.f32.mrb[0].mxu0
  %v6466 = vadd.f32 0.0, %v6465
  %v6467 = vpop.f32.mrb[0].mxu0
  %6468 = vmatprep.mubr.f32.mxu0 0.0
  %6469 = vmatmul.mubr.f32.gmra.mrb[0].mxu0 %v6167
  %v6470 = vpop.f32.mrb[0].mxu0
  %v6471 = vadd.f32 0.0, %v6470
  %v6472 = vpop.f32.mrb[0].mxu0
  %6473 = vmatprep.mubr.f32.mxu0 0.0
  %6474 = vmatmul.mubr.f32.gmra.mrb[0].mxu0 %v6168
  %v6475 = vpop.f32.mrb[0].mxu0
  %v6476 = vadd.f32 0.0, %v6475
  %v6477 = vpop.f32.mrb[0].mxu0
  %6478 = vmatprep.mubr.f32.mxu0 0.0
  %6479 = vmatmul.mubr.f32.gmra.mrb[0].mxu0 %v6169
  %v6480 = vpop.f32.mrb[0].mxu0
  %v6481 = vadd.f32 0.0, %v6480
  %v6482 = vpop.f32.mrb[0].mxu0
  %6483 = vmatprep.mubr.f32.mxu0 0.0
  %6484 = vmatmul.mubr.f32.gmra.mrb[0].mxu0 %v6170
  %v6485 = vpop.f32.mrb[0].mxu0
  %v6486 = vadd.f32 0.0, %v6485
  %v6487 = vpop.f32.mrb[0].mxu0
  %6488 = vmatprep.mubr.f32.mxu0 0.0
  %6489 = vmatmul.mubr.f32.gmra.mrb[0].mxu0 %v6171
  %v6490 = vpop.f32.mrb[0].mxu0
  %v6491 = vadd.f32 0.0, %v6490
  %v6492 = vpop.f32.mrb[0].mxu0
  %6493 = vmatprep.mubr.f32.mxu0 0.0
  %6494 = vmatmul.mubr.f32.gmra.mrb[0].mxu0 %v6172
  %v6495 = vpop.f32.mrb[0].mxu0
  %v6496 = vadd.f32 0.0, %v6495
  %v6497 = vpop.f32.mrb[0].mxu0
  %6498 = vmatprep.mubr.f32.mxu0 0.0
  %6499 = vmatmul.mubr.f32.gmra.mrb[0].mxu0 %v6173
  %v6500 = vpop.f32.mrb[0].mxu0
  %v6501 = vadd.f32 0.0, %v6500
  %v6502 = vpop.f32.mrb[0].mxu0
  %6503 = vmatprep.mubr.f32.mxu0 0.0
  %6504 = vmatmul.mubr.f32.gmra.mrb[0].mxu0 %v6174
  %v6505 = vpop.f32.mrb[0].mxu0
  %v6506 = vadd.f32 0.0, %v6505
  %v6507 = vpop.f32.mrb[0].mxu0
  %6508 = vmatprep.mubr.f32.mxu0 0.0
  %6509 = vmatmul.mubr.f32.gmra.mrb[0].mxu0 %v6175
  %v6510 = vpop.f32.mrb[0].mxu0
  %v6511 = vadd.f32 0.0, %v6510
  %v6512 = vpop.f32.mrb[0].mxu0
  %6513 = vmatprep.mubr.f32.mxu0 0.0
  %6514 = vmatmul.mubr.f32.gmra.mrb[0].mxu0 %v6176
  %v6515 = vpop.f32.mrb[0].mxu0
  %v6516 = vadd.f32 0.0, %v6515
  %v6517 = vpop.f32.mrb[0].mxu0
  %6518 = vmatprep.mubr.f32.mxu0 0.0
  %6519 = vmatmul.mubr.f32.gmra.mrb[0].mxu0 %v6177
  %v6520 = vpop.f32.mrb[0].mxu0
  %v6521 = vadd.f32 0.0, %v6520
  %v6522 = vpop.f32.mrb[0].mxu0
  %6523 = vmatprep.mubr.f32.mxu0 0.0
  %6524 = vmatmul.mubr.f32.gmra.mrb[0].mxu0 %v6178
  %v6525 = vpop.f32.mrb[0].mxu0
  %v6526 = vadd.f32 0.0, %v6525
  %v6527 = vpop.f32.mrb[0].mxu0
  %6528 = vmatprep.mubr.f32.mxu0 0.0
  %6529 = vmatmul.mubr.f32.gmra.mrb[0].mxu0 %v6179
  %v6530 = vpop.f32.mrb[0].mxu0
  %v6531 = vadd.f32 0.0, %v6530
  %v6532 = vpop.f32.mrb[0].mxu0
  %6533 = vmatprep.mubr.f32.mxu0 0.0
  %6534 = vmatmul.mubr.f32.gmra.mrb[0].mxu0 %v6180
  %v6535 = vpop.f32.mrb[0].mxu0
  %v6536 = vadd.f32 0.0, %v6535
  %v6537 = vpop.f32.mrb[0].mxu0
  %6538 = vmatprep.mubr.f32.mxu0 0.0
  %6539 = vmatmul.mubr.f32.gmra.mrb[0].mxu0 %v6181
  %v6540 = vpop.f32.mrb[0].mxu0
  %v6541 = vadd.f32 0.0, %v6540
  %v6542 = vpop.f32.mrb[0].mxu0
  %6543 = vmatprep.mubr.f32.mxu0 0.0
  %6544 = vmatmul.mubr.f32.gmra.mrb[0].mxu0 %v6182
  %v6545 = vpop.f32.mrb[0].mxu0
  %v6546 = vadd.f32 0.0, %v6545
  %v6547 = vpop.f32.mrb[0].mxu0
  %6548 = vmatprep.mubr.f32.mxu0 0.0
  %6549 = vmatmul.mubr.f32.gmra.mrb[0].mxu0 %v6183
  %v6550 = vpop.f32.mrb[0].mxu0
  %v6551 = vadd.f32 0.0, %v6550
  %v6552 = vpop.f32.mrb[0].mxu0
  %6553 = vmatprep.mubr.f32.mxu0 0.0
  %6554 = vmatmul.mubr.f32.gmra.mrb[0].mxu0 %v6184
  %v6555 = vpop.f32.mrb[0].mxu0
  %v6556 = vadd.f32 0.0, %v6555
  %v6557 = vpop.f32.mrb[0].mxu0
  %6558 = vmatprep.mubr.f32.mxu0 0.0
  %6559 = vmatmul.mubr.f32.gmra.mrb[0].mxu0 %v6185
  %v6560 = vpop.f32.mrb[0].mxu0
  %v6561 = vadd.f32 0.0, %v6560
  %v6562 = vpop.f32.mrb[0].mxu0
  %6563 = vmatprep.mubr.f32.mxu0 0.0
  %6564 = vmatmul.mubr.f32.gmra.mrb[0].mxu0 %v6186
  %v6565 = vpop.f32.mrb[0].mxu0
  %v6566 = vadd.f32 0.0, %v6565
  %v6567 = vpop.f32.mrb[0].mxu0
  %6568 = vmatprep.mubr.f32.mxu0 0.0
  %6569 = vmatmul.mubr.f32.gmra.mrb[0].mxu0 %v6187
  %v6570 = vpop.f32.mrb[0].mxu0
  %v6571 = vadd.f32 0.0, %v6570
  %v6572 = vpop.f32.mrb[0].mxu0
  %6573 = vmatprep.mubr.f32.mxu0 0.0
  %6574 = vmatmul.mubr.f32.gmra.mrb[0].mxu0 %v6188
  %v6575 = vpop.f32.mrb[0].mxu0
  %v6576 = vadd.f32 0.0, %v6575
  %v6577 = vpop.f32.mrb[0].mxu0
  %6578 = vmatprep.mubr.f32.mxu0 0.0
  %6579 = vmatmul.mubr.f32.gmra.mrb[0].mxu0 %v6189
  %v6580 = vpop.f32.mrb[0].mxu0
  %v6581 = vadd.f32 0.0, %v6580
  %v6582 = vpop.f32.mrb[0].mxu0
  %6583 = vmatprep.mubr.f32.mxu0 0.0
  %6584 = vmatmul.mubr.f32.gmra.mrb[0].mxu0 %v6190
  %v6585 = vpop.f32.mrb[0].mxu0
  %v6586 = vadd.f32 0.0, %v6585
  %v6587 = vpop.f32.mrb[0].mxu0
  %6588 = vmatprep.mubr.f32.mxu0 0.0
  %6589 = vmatmul.mubr.f32.gmra.mrb[0].mxu0 %v6191
  %v6590 = vpop.f32.mrb[0].mxu0
  %v6591 = vadd.f32 0.0, %v6590
  %v6592 = vpop.f32.mrb[0].mxu0
  %6593 = vdwg.mxu0
  %v6594 = vadd.f32 %v6064, %v6276
  %v6595 = vadd.f32 %v6065, %v6281
  %v6596 = vadd.f32 %v6066, %v6286
  %v6597 = vadd.f32 %v6067, %v6291
  %v6598 = vadd.f32 %v6068, %v6296
  %v6599 = vadd.f32 %v6069, %v6301
  %v6600 = vadd.f32 %v6070, %v6306
  %v6601 = vadd.f32 %v6071, %v6311
  %v6602 = vadd.f32 %v6072, %v6316
  %v6603 = vadd.f32 %v6073, %v6321
  %v6604 = vadd.f32 %v6074, %v6326
  %v6605 = vadd.f32 %v6075, %v6331
  %v6606 = vadd.f32 %v6076, %v6336
  %v6607 = vadd.f32 %v6077, %v6341
  %v6608 = vadd.f32 %v6078, %v6346
  %v6609 = vadd.f32 %v6079, %v6351
  %v6610 = vadd.f32 %v6080, %v6356
  %v6611 = vadd.f32 %v6081, %v6361
  %v6612 = vadd.f32 %v6082, %v6366
  %v6613 = vadd.f32 %v6083, %v6371
  %v6614 = vadd.f32 %v6084, %v6376
  %v6615 = vadd.f32 %v6085, %v6381
  %v6616 = vadd.f32 %v6086, %v6386
  %v6617 = vadd.f32 %v6087, %v6391
  %v6618 = vadd.f32 %v6088, %v6396
  %v6619 = vadd.f32 %v6089, %v6401
  %v6620 = vadd.f32 %v6090, %v6406
  %v6621 = vadd.f32 %v6091, %v6411
  %v6622 = vadd.f32 %v6092, %v6416
  %v6623 = vadd.f32 %v6093, %v6421
  %v6624 = vadd.f32 %v6094, %v6426
  %v6625 = vadd.f32 %v6095, %v6431
  %v6626 = vadd.f32 %v6096, %v6436
  %v6627 = vadd.f32 %v6097, %v6441
  %v6628 = vadd.f32 %v6098, %v6446
  %v6629 = vadd.f32 %v6099, %v6451
  %v6630 = vadd.f32 %v6100, %v6456
  %v6631 = vadd.f32 %v6101, %v6461
  %v6632 = vadd.f32 %v6102, %v6466
  %v6633 = vadd.f32 %v6103, %v6471
  %v6634 = vadd.f32 %v6104, %v6476
  %v6635 = vadd.f32 %v6105, %v6481
  %v6636 = vadd.f32 %v6106, %v6486
  %v6637 = vadd.f32 %v6107, %v6491
  %v6638 = vadd.f32 %v6108, %v6496
  %v6639 = vadd.f32 %v6109, %v6501
  %v6640 = vadd.f32 %v6110, %v6506
  %v6641 = vadd.f32 %v6111, %v6511
  %v6642 = vadd.f32 %v6112, %v6516
  %v6643 = vadd.f32 %v6113, %v6521
  %v6644 = vadd.f32 %v6114, %v6526
  %v6645 = vadd.f32 %v6115, %v6531
  %v6646 = vadd.f32 %v6116, %v6536
  %v6647 = vadd.f32 %v6117, %v6541
  %v6648 = vadd.f32 %v6118, %v6546
  %v6649 = vadd.f32 %v6119, %v6551
  %v6650 = vadd.f32 %v6120, %v6556
  %v6651 = vadd.f32 %v6121, %v6561
  %v6652 = vadd.f32 %v6122, %v6566
  %v6653 = vadd.f32 %v6123, %v6571
  %v6654 = vadd.f32 %v6124, %v6576
  %v6655 = vadd.f32 %v6125, %v6581
  %v6656 = vadd.f32 %v6126, %v6586
  %v6657 = vadd.f32 %v6127, %v6591
  %v6658 = vld [vmem:[%s4602 + $0x1] sm:$0xff]
  %v6659 = vld [vmem:[%s4602 + $0x9] sm:$0xff]
  %v6660 = vld [vmem:[%s4602 + $0x19] sm:$0xff]
  %v6661 = vld [vmem:[%s4602 + $0x21] sm:$0xff]
  %v6662 = vld [vmem:[%s4602 + $0x31] sm:$0xff]
  %v6663 = vld [vmem:[%s4602 + $0x39] sm:$0xff]
  %v6664 = vld [vmem:[%s4602 + $0x49] sm:$0xff]
  %v6665 = vld [vmem:[%s4602 + $0x51] sm:$0xff]
  %v6666 = vld [vmem:[%s4602 + $0x61] sm:$0xff]
  %v6667 = vld [vmem:[%s4602 + $0x69] sm:$0xff]
  %v6668 = vld [vmem:[%s4602 + $0x79] sm:$0xff]
  %v6669 = vld [vmem:[%s4602 + $0x81] sm:$0xff]
  %v6670 = vld [vmem:[%s4602 + $0x91] sm:$0xff]
  %v6671 = vld [vmem:[%s4602 + $0x99] sm:$0xff]
  %v6672 = vld [vmem:[%s4602 + $0xa9] sm:$0xff]
  %v6673 = vld [vmem:[%s4602 + $0xb1] sm:$0xff]
  %v6674 = vld [vmem:[%s4602 + $0xc1] sm:$0xff]
  %v6675 = vld [vmem:[%s4602 + $0xc9] sm:$0xff]
  %v6676 = vld [vmem:[%s4602 + $0xd9] sm:$0xff]
  %v6677 = vld [vmem:[%s4602 + $0xe1] sm:$0xff]
  %v6678 = vld [vmem:[%s4602 + $0xf1] sm:$0xff]
  %v6679 = vld [vmem:[%s4602 + $0xf9] sm:$0xff]
  %v6680 = vld [vmem:[%s4602 + $0x109] sm:$0xff]
  %v6681 = vld [vmem:[%s4602 + $0x111] sm:$0xff]
  %v6682 = vld [vmem:[%s4602 + $0x121] sm:$0xff]
  %v6683 = vld [vmem:[%s4602 + $0x129] sm:$0xff]
  %v6684 = vld [vmem:[%s4602 + $0x139] sm:$0xff]
  %v6685 = vld [vmem:[%s4602 + $0x141] sm:$0xff]
  %v6686 = vld [vmem:[%s4602 + $0x151] sm:$0xff]
  %v6687 = vld [vmem:[%s4602 + $0x159] sm:$0xff]
  %v6688 = vld [vmem:[%s4602 + $0x169] sm:$0xff]
  %v6689 = vld [vmem:[%s4602 + $0x171] sm:$0xff]
  %v6690 = vld [vmem:[%s4602 + $0x1b1] sm:$0xff]
  %v6691 = vld [vmem:[%s4602 + $0x1b9] sm:$0xff]
  %v6692 = vld [vmem:[%s4602 + $0x1c9] sm:$0xff]
  %v6693 = vld [vmem:[%s4602 + $0x1d1] sm:$0xff]
  %v6694 = vld [vmem:[%s4602 + $0x1e1] sm:$0xff]
  %v6695 = vld [vmem:[%s4602 + $0x1e9] sm:$0xff]
  %v6696 = vld [vmem:[%s4602 + $0x1f9] sm:$0xff]
  %v6697 = vld [vmem:[%s4602 + $0x201] sm:$0xff]
  %v6698 = vld [vmem:[%s4602 + $0x211] sm:$0xff]
  %v6699 = vld [vmem:[%s4602 + $0x219] sm:$0xff]
  %v6700 = vld [vmem:[%s4602 + $0x229] sm:$0xff]
  %v6701 = vld [vmem:[%s4602 + $0x231] sm:$0xff]
  %v6702 = vld [vmem:[%s4602 + $0x241] sm:$0xff]
  %v6703 = vld [vmem:[%s4602 + $0x249] sm:$0xff]
  %v6704 = vld [vmem:[%s4602 + $0x259] sm:$0xff]
  %v6705 = vld [vmem:[%s4602 + $0x261] sm:$0xff]
  %v6706 = vld [vmem:[%s4602 + $0x271] sm:$0xff]
  %v6707 = vld [vmem:[%s4602 + $0x279] sm:$0xff]
  %v6708 = vld [vmem:[%s4602 + $0x289] sm:$0xff]
  %v6709 = vld [vmem:[%s4602 + $0x291] sm:$0xff]
  %v6710 = vld [vmem:[%s4602 + $0x2a1] sm:$0xff]
  %v6711 = vld [vmem:[%s4602 + $0x2a9] sm:$0xff]
  %v6712 = vld [vmem:[%s4602 + $0x2b9] sm:$0xff]
  %v6713 = vld [vmem:[%s4602 + $0x2c1] sm:$0xff]
  %v6714 = vld [vmem:[%s4602 + $0x2d1] sm:$0xff]
  %v6715 = vld [vmem:[%s4602 + $0x2d9] sm:$0xff]
  %v6716 = vld [vmem:[%s4602 + $0x2e9] sm:$0xff]
  %v6717 = vld [vmem:[%s4602 + $0x2f1] sm:$0xff]
  %v6718 = vld [vmem:[%s4602 + $0x301] sm:$0xff]
  %v6719 = vld [vmem:[%s4602 + $0x309] sm:$0xff]
  %v6720 = vld [vmem:[%s4602 + $0x319] sm:$0xff]
  %v6721 = vld [vmem:[%s4602 + $0x321] sm:$0xff]
  %s6722 = scalar_lea.vmem %s4, 512
  %v6723 = vld [vmem:[%s6722] sm:$0xff]
  %v6724 = vld [vmem:[%s6722 + $0x8] sm:$0xff]
  %v6725 = vld [vmem:[%s6722 + $0x10] sm:$0xff]
  %v6726 = vld [vmem:[%s6722 + $0x18] sm:$0xff]
  %v6727 = vld [vmem:[%s6722 + $0x20] sm:$0xff]
  %v6728 = vld [vmem:[%s6722 + $0x28] sm:$0xff]
  %v6729 = vld [vmem:[%s6722 + $0x30] sm:$0xff]
  %v6730 = vld [vmem:[%s6722 + $0x38] sm:$0xff]
  %v6731 = vld [vmem:[%s6722 + $0x40] sm:$0xff]
  %v6732 = vld [vmem:[%s6722 + $0x48] sm:$0xff]
  %v6733 = vld [vmem:[%s6722 + $0x50] sm:$0xff]
  %v6734 = vld [vmem:[%s6722 + $0x58] sm:$0xff]
  %v6735 = vld [vmem:[%s6722 + $0x60] sm:$0xff]
  %v6736 = vld [vmem:[%s6722 + $0x68] sm:$0xff]
  %v6737 = vld [vmem:[%s6722 + $0x70] sm:$0xff]
  %v6738 = vld [vmem:[%s6722 + $0x78] sm:$0xff]
  %6739 = vmatprep.subr.mxu0 0.0
  %6740 = vmatpush1.msra.mxu0 %v6723
  %6741 = vmatprep.subr.mxu0 0.0
  %6742 = vmatpush1.msra.mxu0 %v6724
  %6743 = vmatprep.subr.mxu0 0.0
  %6744 = vmatpush1.msra.mxu0 %v6725
  %6745 = vmatprep.subr.mxu0 0.0
  %6746 = vmatpush1.msra.mxu0 %v6726
  %6747 = vmatprep.subr.mxu0 0.0
  %6748 = vmatpush1.msra.mxu0 %v6727
  %6749 = vmatprep.subr.mxu0 0.0
  %6750 = vmatpush1.msra.mxu0 %v6728
  %6751 = vmatprep.subr.mxu0 0.0
  %6752 = vmatpush1.msra.mxu0 %v6729
  %6753 = vmatprep.subr.mxu0 0.0
  %6754 = vmatpush1.msra.mxu0 %v6730
  %6755 = vmatprep.subr.mxu0 0.0
  %6756 = vmatpush1.msra.mxu0 %v6731
  %6757 = vmatprep.subr.mxu0 0.0
  %6758 = vmatpush1.msra.mxu0 %v6732
  %6759 = vmatprep.subr.mxu0 0.0
  %6760 = vmatpush1.msra.mxu0 %v6733
  %6761 = vmatprep.subr.mxu0 0.0
  %6762 = vmatpush1.msra.mxu0 %v6734
  %6763 = vmatprep.subr.mxu0 0.0
  %6764 = vmatpush1.msra.mxu0 %v6735
  %6765 = vmatprep.subr.mxu0 0.0
  %6766 = vmatpush1.msra.mxu0 %v6736
  %6767 = vmatprep.subr.mxu0 0.0
  %6768 = vmatpush1.msra.mxu0 %v6737
  %6769 = vmatprep.subr.mxu0 0.0
  %6770 = vmatpush1.msra.mxu0 %v6738
  %6771 = vmatprep.subr.mxu0 0.0
  %6772 = vmatpush1.msra.mxu0 0.0
  %6773 = vmatprep.subr.mxu0 0.0
  %6774 = vmatpush1.msra.mxu0 0.0
  %6775 = vmatprep.subr.mxu0 0.0
  %6776 = vmatpush1.msra.mxu0 0.0
  %6777 = vmatprep.subr.mxu0 0.0
  %6778 = vmatpush1.msra.mxu0 0.0
  %6779 = vmatprep.subr.mxu0 0.0
  %6780 = vmatpush1.msra.mxu0 0.0
  %6781 = vmatprep.subr.mxu0 0.0
  %6782 = vmatpush1.msra.mxu0 0.0
  %6783 = vmatprep.subr.mxu0 0.0
  %6784 = vmatpush1.msra.mxu0 0.0
  %6785 = vmatprep.subr.mxu0 0.0
  %6786 = vmatpush1.msra.mxu0 0.0
  %6787 = vmatprep.subr.mxu0 0.0
  %6788 = vmatpush1.msra.mxu0 0.0
  %6789 = vmatprep.subr.mxu0 0.0
  %6790 = vmatpush1.msra.mxu0 0.0
  %6791 = vmatprep.subr.mxu0 0.0
  %6792 = vmatpush1.msra.mxu0 0.0
  %6793 = vmatprep.subr.mxu0 0.0
  %6794 = vmatpush1.msra.mxu0 0.0
  %6795 = vmatprep.subr.mxu0 0.0
  %6796 = vmatpush1.msra.mxu0 0.0
  %6797 = vmatprep.subr.mxu0 0.0
  %6798 = vmatpush1.msra.mxu0 0.0
  %6799 = vmatprep.subr.mxu0 0.0
  %6800 = vmatpush1.msra.mxu0 0.0
  %6801 = vmatprep.subr.mxu0 0.0
  %6802 = vmatpush1.msra.mxu0 0.0
  %6803 = vmatprep.mubr.f32.mxu0 0.0
  %6804 = vmatmul.mubr.f32.gmra.mrb[0].mxu0 %v6658
  %v6805 = vpop.f32.mrb[0].mxu0
  %v6806 = vadd.f32 0.0, %v6805
  %v6807 = vpop.f32.mrb[0].mxu0
  %6808 = vmatprep.mubr.f32.mxu0 0.0
  %6809 = vmatmul.mubr.f32.gmra.mrb[0].mxu0 %v6659
  %v6810 = vpop.f32.mrb[0].mxu0
  %v6811 = vadd.f32 0.0, %v6810
  %v6812 = vpop.f32.mrb[0].mxu0
  %6813 = vmatprep.mubr.f32.mxu0 0.0
  %6814 = vmatmul.mubr.f32.gmra.mrb[0].mxu0 %v6660
  %v6815 = vpop.f32.mrb[0].mxu0
  %v6816 = vadd.f32 0.0, %v6815
  %v6817 = vpop.f32.mrb[0].mxu0
  %6818 = vmatprep.mubr.f32.mxu0 0.0
  %6819 = vmatmul.mubr.f32.gmra.mrb[0].mxu0 %v6661
  %v6820 = vpop.f32.mrb[0].mxu0
  %v6821 = vadd.f32 0.0, %v6820
  %v6822 = vpop.f32.mrb[0].mxu0
  %6823 = vmatprep.mubr.f32.mxu0 0.0
  %6824 = vmatmul.mubr.f32.gmra.mrb[0].mxu0 %v6662
  %v6825 = vpop.f32.mrb[0].mxu0
  %v6826 = vadd.f32 0.0, %v6825
  %v6827 = vpop.f32.mrb[0].mxu0
  %6828 = vmatprep.mubr.f32.mxu0 0.0
  %6829 = vmatmul.mubr.f32.gmra.mrb[0].mxu0 %v6663
  %v6830 = vpop.f32.mrb[0].mxu0
  %v6831 = vadd.f32 0.0, %v6830
  %v6832 = vpop.f32.mrb[0].mxu0
  %6833 = vmatprep.mubr.f32.mxu0 0.0
  %6834 = vmatmul.mubr.f32.gmra.mrb[0].mxu0 %v6664
  %v6835 = vpop.f32.mrb[0].mxu0
  %v6836 = vadd.f32 0.0, %v6835
  %v6837 = vpop.f32.mrb[0].mxu0
  %6838 = vmatprep.mubr.f32.mxu0 0.0
  %6839 = vmatmul.mubr.f32.gmra.mrb[0].mxu0 %v6665
  %v6840 = vpop.f32.mrb[0].mxu0
  %v6841 = vadd.f32 0.0, %v6840
  %v6842 = vpop.f32.mrb[0].mxu0
  %6843 = vmatprep.mubr.f32.mxu0 0.0
  %6844 = vmatmul.mubr.f32.gmra.mrb[0].mxu0 %v6666
  %v6845 = vpop.f32.mrb[0].mxu0
  %v6846 = vadd.f32 0.0, %v6845
  %v6847 = vpop.f32.mrb[0].mxu0
  %6848 = vmatprep.mubr.f32.mxu0 0.0
  %6849 = vmatmul.mubr.f32.gmra.mrb[0].mxu0 %v6667
  %v6850 = vpop.f32.mrb[0].mxu0
  %v6851 = vadd.f32 0.0, %v6850
  %v6852 = vpop.f32.mrb[0].mxu0
  %6853 = vmatprep.mubr.f32.mxu0 0.0
  %6854 = vmatmul.mubr.f32.gmra.mrb[0].mxu0 %v6668
  %v6855 = vpop.f32.mrb[0].mxu0
  %v6856 = vadd.f32 0.0, %v6855
  %v6857 = vpop.f32.mrb[0].mxu0
  %6858 = vmatprep.mubr.f32.mxu0 0.0
  %6859 = vmatmul.mubr.f32.gmra.mrb[0].mxu0 %v6669
  %v6860 = vpop.f32.mrb[0].mxu0
  %v6861 = vadd.f32 0.0, %v6860
  %v6862 = vpop.f32.mrb[0].mxu0
  %6863 = vmatprep.mubr.f32.mxu0 0.0
  %6864 = vmatmul.mubr.f32.gmra.mrb[0].mxu0 %v6670
  %v6865 = vpop.f32.mrb[0].mxu0
  %v6866 = vadd.f32 0.0, %v6865
  %v6867 = vpop.f32.mrb[0].mxu0
  %6868 = vmatprep.mubr.f32.mxu0 0.0
  %6869 = vmatmul.mubr.f32.gmra.mrb[0].mxu0 %v6671
  %v6870 = vpop.f32.mrb[0].mxu0
  %v6871 = vadd.f32 0.0, %v6870
  %v6872 = vpop.f32.mrb[0].mxu0
  %6873 = vmatprep.mubr.f32.mxu0 0.0
  %6874 = vmatmul.mubr.f32.gmra.mrb[0].mxu0 %v6672
  %v6875 = vpop.f32.mrb[0].mxu0
  %v6876 = vadd.f32 0.0, %v6875
  %v6877 = vpop.f32.mrb[0].mxu0
  %6878 = vmatprep.mubr.f32.mxu0 0.0
  %6879 = vmatmul.mubr.f32.gmra.mrb[0].mxu0 %v6673
  %v6880 = vpop.f32.mrb[0].mxu0
  %v6881 = vadd.f32 0.0, %v6880
  %v6882 = vpop.f32.mrb[0].mxu0
  %6883 = vmatprep.mubr.f32.mxu0 0.0
  %6884 = vmatmul.mubr.f32.gmra.mrb[0].mxu0 %v6674
  %v6885 = vpop.f32.mrb[0].mxu0
  %v6886 = vadd.f32 0.0, %v6885
  %v6887 = vpop.f32.mrb[0].mxu0
  %6888 = vmatprep.mubr.f32.mxu0 0.0
  %6889 = vmatmul.mubr.f32.gmra.mrb[0].mxu0 %v6675
  %v6890 = vpop.f32.mrb[0].mxu0
  %v6891 = vadd.f32 0.0, %v6890
  %v6892 = vpop.f32.mrb[0].mxu0
  %6893 = vmatprep.mubr.f32.mxu0 0.0
  %6894 = vmatmul.mubr.f32.gmra.mrb[0].mxu0 %v6676
  %v6895 = vpop.f32.mrb[0].mxu0
  %v6896 = vadd.f32 0.0, %v6895
  %v6897 = vpop.f32.mrb[0].mxu0
  %6898 = vmatprep.mubr.f32.mxu0 0.0
  %6899 = vmatmul.mubr.f32.gmra.mrb[0].mxu0 %v6677
  %v6900 = vpop.f32.mrb[0].mxu0
  %v6901 = vadd.f32 0.0, %v6900
  %v6902 = vpop.f32.mrb[0].mxu0
  %6903 = vmatprep.mubr.f32.mxu0 0.0
  %6904 = vmatmul.mubr.f32.gmra.mrb[0].mxu0 %v6678
  %v6905 = vpop.f32.mrb[0].mxu0
  %v6906 = vadd.f32 0.0, %v6905
  %v6907 = vpop.f32.mrb[0].mxu0
  %6908 = vmatprep.mubr.f32.mxu0 0.0
  %6909 = vmatmul.mubr.f32.gmra.mrb[0].mxu0 %v6679
  %v6910 = vpop.f32.mrb[0].mxu0
  %v6911 = vadd.f32 0.0, %v6910
  %v6912 = vpop.f32.mrb[0].mxu0
  %6913 = vmatprep.mubr.f32.mxu0 0.0
  %6914 = vmatmul.mubr.f32.gmra.mrb[0].mxu0 %v6680
  %v6915 = vpop.f32.mrb[0].mxu0
  %v6916 = vadd.f32 0.0, %v6915
  %v6917 = vpop.f32.mrb[0].mxu0
  %6918 = vmatprep.mubr.f32.mxu0 0.0
  %6919 = vmatmul.mubr.f32.gmra.mrb[0].mxu0 %v6681
  %v6920 = vpop.f32.mrb[0].mxu0
  %v6921 = vadd.f32 0.0, %v6920
  %v6922 = vpop.f32.mrb[0].mxu0
  %6923 = vmatprep.mubr.f32.mxu0 0.0
  %6924 = vmatmul.mubr.f32.gmra.mrb[0].mxu0 %v6682
  %v6925 = vpop.f32.mrb[0].mxu0
  %v6926 = vadd.f32 0.0, %v6925
  %v6927 = vpop.f32.mrb[0].mxu0
  %6928 = vmatprep.mubr.f32.mxu0 0.0
  %6929 = vmatmul.mubr.f32.gmra.mrb[0].mxu0 %v6683
  %v6930 = vpop.f32.mrb[0].mxu0
  %v6931 = vadd.f32 0.0, %v6930
  %v6932 = vpop.f32.mrb[0].mxu0
  %6933 = vmatprep.mubr.f32.mxu0 0.0
  %6934 = vmatmul.mubr.f32.gmra.mrb[0].mxu0 %v6684
  %v6935 = vpop.f32.mrb[0].mxu0
  %v6936 = vadd.f32 0.0, %v6935
  %v6937 = vpop.f32.mrb[0].mxu0
  %6938 = vmatprep.mubr.f32.mxu0 0.0
  %6939 = vmatmul.mubr.f32.gmra.mrb[0].mxu0 %v6685
  %v6940 = vpop.f32.mrb[0].mxu0
  %v6941 = vadd.f32 0.0, %v6940
  %v6942 = vpop.f32.mrb[0].mxu0
  %6943 = vmatprep.mubr.f32.mxu0 0.0
  %6944 = vmatmul.mubr.f32.gmra.mrb[0].mxu0 %v6686
  %v6945 = vpop.f32.mrb[0].mxu0
  %v6946 = vadd.f32 0.0, %v6945
  %v6947 = vpop.f32.mrb[0].mxu0
  %6948 = vmatprep.mubr.f32.mxu0 0.0
  %6949 = vmatmul.mubr.f32.gmra.mrb[0].mxu0 %v6687
  %v6950 = vpop.f32.mrb[0].mxu0
  %v6951 = vadd.f32 0.0, %v6950
  %v6952 = vpop.f32.mrb[0].mxu0
  %6953 = vmatprep.mubr.f32.mxu0 0.0
  %6954 = vmatmul.mubr.f32.gmra.mrb[0].mxu0 %v6688
  %v6955 = vpop.f32.mrb[0].mxu0
  %v6956 = vadd.f32 0.0, %v6955
  %v6957 = vpop.f32.mrb[0].mxu0
  %6958 = vmatprep.mubr.f32.mxu0 0.0
  %6959 = vmatmul.mubr.f32.gmra.mrb[0].mxu0 %v6689
  %v6960 = vpop.f32.mrb[0].mxu0
  %v6961 = vadd.f32 0.0, %v6960
  %v6962 = vpop.f32.mrb[0].mxu0
  %6963 = vmatprep.mubr.f32.mxu0 0.0
  %6964 = vmatmul.mubr.f32.gmra.mrb[0].mxu0 %v6690
  %v6965 = vpop.f32.mrb[0].mxu0
  %v6966 = vadd.f32 0.0, %v6965
  %v6967 = vpop.f32.mrb[0].mxu0
  %6968 = vmatprep.mubr.f32.mxu0 0.0
  %6969 = vmatmul.mubr.f32.gmra.mrb[0].mxu0 %v6691
  %v6970 = vpop.f32.mrb[0].mxu0
  %v6971 = vadd.f32 0.0, %v6970
  %v6972 = vpop.f32.mrb[0].mxu0
  %6973 = vmatprep.mubr.f32.mxu0 0.0
  %6974 = vmatmul.mubr.f32.gmra.mrb[0].mxu0 %v6692
  %v6975 = vpop.f32.mrb[0].mxu0
  %v6976 = vadd.f32 0.0, %v6975
  %v6977 = vpop.f32.mrb[0].mxu0
  %6978 = vmatprep.mubr.f32.mxu0 0.0
  %6979 = vmatmul.mubr.f32.gmra.mrb[0].mxu0 %v6693
  %v6980 = vpop.f32.mrb[0].mxu0
  %v6981 = vadd.f32 0.0, %v6980
  %v6982 = vpop.f32.mrb[0].mxu0
  %6983 = vmatprep.mubr.f32.mxu0 0.0
  %6984 = vmatmul.mubr.f32.gmra.mrb[0].mxu0 %v6694
  %v6985 = vpop.f32.mrb[0].mxu0
  %v6986 = vadd.f32 0.0, %v6985
  %v6987 = vpop.f32.mrb[0].mxu0
  %6988 = vmatprep.mubr.f32.mxu0 0.0
  %6989 = vmatmul.mubr.f32.gmra.mrb[0].mxu0 %v6695
  %v6990 = vpop.f32.mrb[0].mxu0
  %v6991 = vadd.f32 0.0, %v6990
  %v6992 = vpop.f32.mrb[0].mxu0
  %6993 = vmatprep.mubr.f32.mxu0 0.0
  %6994 = vmatmul.mubr.f32.gmra.mrb[0].mxu0 %v6696
  %v6995 = vpop.f32.mrb[0].mxu0
  %v6996 = vadd.f32 0.0, %v6995
  %v6997 = vpop.f32.mrb[0].mxu0
  %6998 = vmatprep.mubr.f32.mxu0 0.0
  %6999 = vmatmul.mubr.f32.gmra.mrb[0].mxu0 %v6697
  %v7000 = vpop.f32.mrb[0].mxu0
  %v7001 = vadd.f32 0.0, %v7000
  %v7002 = vpop.f32.mrb[0].mxu0
  %7003 = vmatprep.mubr.f32.mxu0 0.0
  %7004 = vmatmul.mubr.f32.gmra.mrb[0].mxu0 %v6698
  %v7005 = vpop.f32.mrb[0].mxu0
  %v7006 = vadd.f32 0.0, %v7005
  %v7007 = vpop.f32.mrb[0].mxu0
  %7008 = vmatprep.mubr.f32.mxu0 0.0
  %7009 = vmatmul.mubr.f32.gmra.mrb[0].mxu0 %v6699
  %v7010 = vpop.f32.mrb[0].mxu0
  %v7011 = vadd.f32 0.0, %v7010
  %v7012 = vpop.f32.mrb[0].mxu0
  %7013 = vmatprep.mubr.f32.mxu0 0.0
  %7014 = vmatmul.mubr.f32.gmra.mrb[0].mxu0 %v6700
  %v7015 = vpop.f32.mrb[0].mxu0
  %v7016 = vadd.f32 0.0, %v7015
  %v7017 = vpop.f32.mrb[0].mxu0
  %7018 = vmatprep.mubr.f32.mxu0 0.0
  %7019 = vmatmul.mubr.f32.gmra.mrb[0].mxu0 %v6701
  %v7020 = vpop.f32.mrb[0].mxu0
  %v7021 = vadd.f32 0.0, %v7020
  %v7022 = vpop.f32.mrb[0].mxu0
  %7023 = vmatprep.mubr.f32.mxu0 0.0
  %7024 = vmatmul.mubr.f32.gmra.mrb[0].mxu0 %v6702
  %v7025 = vpop.f32.mrb[0].mxu0
  %v7026 = vadd.f32 0.0, %v7025
  %v7027 = vpop.f32.mrb[0].mxu0
  %7028 = vmatprep.mubr.f32.mxu0 0.0
  %7029 = vmatmul.mubr.f32.gmra.mrb[0].mxu0 %v6703
  %v7030 = vpop.f32.mrb[0].mxu0
  %v7031 = vadd.f32 0.0, %v7030
  %v7032 = vpop.f32.mrb[0].mxu0
  %7033 = vmatprep.mubr.f32.mxu0 0.0
  %7034 = vmatmul.mubr.f32.gmra.mrb[0].mxu0 %v6704
  %v7035 = vpop.f32.mrb[0].mxu0
  %v7036 = vadd.f32 0.0, %v7035
  %v7037 = vpop.f32.mrb[0].mxu0
  %7038 = vmatprep.mubr.f32.mxu0 0.0
  %7039 = vmatmul.mubr.f32.gmra.mrb[0].mxu0 %v6705
  %v7040 = vpop.f32.mrb[0].mxu0
  %v7041 = vadd.f32 0.0, %v7040
  %v7042 = vpop.f32.mrb[0].mxu0
  %7043 = vmatprep.mubr.f32.mxu0 0.0
  %7044 = vmatmul.mubr.f32.gmra.mrb[0].mxu0 %v6706
  %v7045 = vpop.f32.mrb[0].mxu0
  %v7046 = vadd.f32 0.0, %v7045
  %v7047 = vpop.f32.mrb[0].mxu0
  %7048 = vmatprep.mubr.f32.mxu0 0.0
  %7049 = vmatmul.mubr.f32.gmra.mrb[0].mxu0 %v6707
  %v7050 = vpop.f32.mrb[0].mxu0
  %v7051 = vadd.f32 0.0, %v7050
  %v7052 = vpop.f32.mrb[0].mxu0
  %7053 = vmatprep.mubr.f32.mxu0 0.0
  %7054 = vmatmul.mubr.f32.gmra.mrb[0].mxu0 %v6708
  %v7055 = vpop.f32.mrb[0].mxu0
  %v7056 = vadd.f32 0.0, %v7055
  %v7057 = vpop.f32.mrb[0].mxu0
  %7058 = vmatprep.mubr.f32.mxu0 0.0
  %7059 = vmatmul.mubr.f32.gmra.mrb[0].mxu0 %v6709
  %v7060 = vpop.f32.mrb[0].mxu0
  %v7061 = vadd.f32 0.0, %v7060
  %v7062 = vpop.f32.mrb[0].mxu0
  %7063 = vmatprep.mubr.f32.mxu0 0.0
  %7064 = vmatmul.mubr.f32.gmra.mrb[0].mxu0 %v6710
  %v7065 = vpop.f32.mrb[0].mxu0
  %v7066 = vadd.f32 0.0, %v7065
  %v7067 = vpop.f32.mrb[0].mxu0
  %7068 = vmatprep.mubr.f32.mxu0 0.0
  %7069 = vmatmul.mubr.f32.gmra.mrb[0].mxu0 %v6711
  %v7070 = vpop.f32.mrb[0].mxu0
  %v7071 = vadd.f32 0.0, %v7070
  %v7072 = vpop.f32.mrb[0].mxu0
  %7073 = vmatprep.mubr.f32.mxu0 0.0
  %7074 = vmatmul.mubr.f32.gmra.mrb[0].mxu0 %v6712
  %v7075 = vpop.f32.mrb[0].mxu0
  %v7076 = vadd.f32 0.0, %v7075
  %v7077 = vpop.f32.mrb[0].mxu0
  %7078 = vmatprep.mubr.f32.mxu0 0.0
  %7079 = vmatmul.mubr.f32.gmra.mrb[0].mxu0 %v6713
  %v7080 = vpop.f32.mrb[0].mxu0
  %v7081 = vadd.f32 0.0, %v7080
  %v7082 = vpop.f32.mrb[0].mxu0
  %7083 = vmatprep.mubr.f32.mxu0 0.0
  %7084 = vmatmul.mubr.f32.gmra.mrb[0].mxu0 %v6714
  %v7085 = vpop.f32.mrb[0].mxu0
  %v7086 = vadd.f32 0.0, %v7085
  %v7087 = vpop.f32.mrb[0].mxu0
  %7088 = vmatprep.mubr.f32.mxu0 0.0
  %7089 = vmatmul.mubr.f32.gmra.mrb[0].mxu0 %v6715
  %v7090 = vpop.f32.mrb[0].mxu0
  %v7091 = vadd.f32 0.0, %v7090
  %v7092 = vpop.f32.mrb[0].mxu0
  %7093 = vmatprep.mubr.f32.mxu0 0.0
  %7094 = vmatmul.mubr.f32.gmra.mrb[0].mxu0 %v6716
  %v7095 = vpop.f32.mrb[0].mxu0
  %v7096 = vadd.f32 0.0, %v7095
  %v7097 = vpop.f32.mrb[0].mxu0
  %7098 = vmatprep.mubr.f32.mxu0 0.0
  %7099 = vmatmul.mubr.f32.gmra.mrb[0].mxu0 %v6717
  %v7100 = vpop.f32.mrb[0].mxu0
  %v7101 = vadd.f32 0.0, %v7100
  %v7102 = vpop.f32.mrb[0].mxu0
  %7103 = vmatprep.mubr.f32.mxu0 0.0
  %7104 = vmatmul.mubr.f32.gmra.mrb[0].mxu0 %v6718
  %v7105 = vpop.f32.mrb[0].mxu0
  %v7106 = vadd.f32 0.0, %v7105
  %v7107 = vpop.f32.mrb[0].mxu0
  %7108 = vmatprep.mubr.f32.mxu0 0.0
  %7109 = vmatmul.mubr.f32.gmra.mrb[0].mxu0 %v6719
  %v7110 = vpop.f32.mrb[0].mxu0
  %v7111 = vadd.f32 0.0, %v7110
  %v7112 = vpop.f32.mrb[0].mxu0
  %7113 = vmatprep.mubr.f32.mxu0 0.0
  %7114 = vmatmul.mubr.f32.gmra.mrb[0].mxu0 %v6720
  %v7115 = vpop.f32.mrb[0].mxu0
  %v7116 = vadd.f32 0.0, %v7115
  %v7117 = vpop.f32.mrb[0].mxu0
  %7118 = vmatprep.mubr.f32.mxu0 0.0
  %7119 = vmatmul.mubr.f32.gmra.mrb[0].mxu0 %v6721
  %v7120 = vpop.f32.mrb[0].mxu0
  %v7121 = vadd.f32 0.0, %v7120
  %v7122 = vpop.f32.mrb[0].mxu0
  %7123 = vdwg.mxu0
  %v7124 = vadd.f32 %v6594, %v6806
  %v7125 = vadd.f32 %v6595, %v6811
  %v7126 = vadd.f32 %v6596, %v6816
  %v7127 = vadd.f32 %v6597, %v6821
  %v7128 = vadd.f32 %v6598, %v6826
  %v7129 = vadd.f32 %v6599, %v6831
  %v7130 = vadd.f32 %v6600, %v6836
  %v7131 = vadd.f32 %v6601, %v6841
  %v7132 = vadd.f32 %v6602, %v6846
  %v7133 = vadd.f32 %v6603, %v6851
  %v7134 = vadd.f32 %v6604, %v6856
  %v7135 = vadd.f32 %v6605, %v6861
  %v7136 = vadd.f32 %v6606, %v6866
  %v7137 = vadd.f32 %v6607, %v6871
  %v7138 = vadd.f32 %v6608, %v6876
  %v7139 = vadd.f32 %v6609, %v6881
  %v7140 = vadd.f32 %v6610, %v6886
  %v7141 = vadd.f32 %v6611, %v6891
  %v7142 = vadd.f32 %v6612, %v6896
  %v7143 = vadd.f32 %v6613, %v6901
  %v7144 = vadd.f32 %v6614, %v6906
  %v7145 = vadd.f32 %v6615, %v6911
  %v7146 = vadd.f32 %v6616, %v6916
  %v7147 = vadd.f32 %v6617, %v6921
  %v7148 = vadd.f32 %v6618, %v6926
  %v7149 = vadd.f32 %v6619, %v6931
  %v7150 = vadd.f32 %v6620, %v6936
  %v7151 = vadd.f32 %v6621, %v6941
  %v7152 = vadd.f32 %v6622, %v6946
  %v7153 = vadd.f32 %v6623, %v6951
  %v7154 = vadd.f32 %v6624, %v6956
  %v7155 = vadd.f32 %v6625, %v6961
  %v7156 = vadd.f32 %v6626, %v6966
  %v7157 = vadd.f32 %v6627, %v6971
  %v7158 = vadd.f32 %v6628, %v6976
  %v7159 = vadd.f32 %v6629, %v6981
  %v7160 = vadd.f32 %v6630, %v6986
  %v7161 = vadd.f32 %v6631, %v6991
  %v7162 = vadd.f32 %v6632, %v6996
  %v7163 = vadd.f32 %v6633, %v7001
  %v7164 = vadd.f32 %v6634, %v7006
  %v7165 = vadd.f32 %v6635, %v7011
  %v7166 = vadd.f32 %v6636, %v7016
  %v7167 = vadd.f32 %v6637, %v7021
  %v7168 = vadd.f32 %v6638, %v7026
  %v7169 = vadd.f32 %v6639, %v7031
  %v7170 = vadd.f32 %v6640, %v7036
  %v7171 = vadd.f32 %v6641, %v7041
  %v7172 = vadd.f32 %v6642, %v7046
  %v7173 = vadd.f32 %v6643, %v7051
  %v7174 = vadd.f32 %v6644, %v7056
  %v7175 = vadd.f32 %v6645, %v7061
  %v7176 = vadd.f32 %v6646, %v7066
  %v7177 = vadd.f32 %v6647, %v7071
  %v7178 = vadd.f32 %v6648, %v7076
  %v7179 = vadd.f32 %v6649, %v7081
  %v7180 = vadd.f32 %v6650, %v7086
  %v7181 = vadd.f32 %v6651, %v7091
  %v7182 = vadd.f32 %v6652, %v7096
  %v7183 = vadd.f32 %v6653, %v7101
  %v7184 = vadd.f32 %v6654, %v7106
  %v7185 = vadd.f32 %v6655, %v7111
  %v7186 = vadd.f32 %v6656, %v7116
  %v7187 = vadd.f32 %v6657, %v7121
  %v7188 = vld [vmem:[%s4602 + $0x2] sm:$0xff]
  %v7189 = vld [vmem:[%s4602 + $0xa] sm:$0xff]
  %v7190 = vld [vmem:[%s4602 + $0x1a] sm:$0xff]
  %v7191 = vld [vmem:[%s4602 + $0x22] sm:$0xff]
  %v7192 = vld [vmem:[%s4602 + $0x32] sm:$0xff]
  %v7193 = vld [vmem:[%s4602 + $0x3a] sm:$0xff]
  %v7194 = vld [vmem:[%s4602 + $0x4a] sm:$0xff]
  %v7195 = vld [vmem:[%s4602 + $0x52] sm:$0xff]
  %v7196 = vld [vmem:[%s4602 + $0x62] sm:$0xff]
  %v7197 = vld [vmem:[%s4602 + $0x6a] sm:$0xff]
  %v7198 = vld [vmem:[%s4602 + $0x7a] sm:$0xff]
  %v7199 = vld [vmem:[%s4602 + $0x82] sm:$0xff]
  %v7200 = vld [vmem:[%s4602 + $0x92] sm:$0xff]
  %v7201 = vld [vmem:[%s4602 + $0x9a] sm:$0xff]
  %v7202 = vld [vmem:[%s4602 + $0xaa] sm:$0xff]
  %v7203 = vld [vmem:[%s4602 + $0xb2] sm:$0xff]
  %v7204 = vld [vmem:[%s4602 + $0xc2] sm:$0xff]
  %v7205 = vld [vmem:[%s4602 + $0xca] sm:$0xff]
  %v7206 = vld [vmem:[%s4602 + $0xda] sm:$0xff]
  %v7207 = vld [vmem:[%s4602 + $0xe2] sm:$0xff]
  %v7208 = vld [vmem:[%s4602 + $0xf2] sm:$0xff]
  %v7209 = vld [vmem:[%s4602 + $0xfa] sm:$0xff]
  %v7210 = vld [vmem:[%s4602 + $0x10a] sm:$0xff]
  %v7211 = vld [vmem:[%s4602 + $0x112] sm:$0xff]
  %v7212 = vld [vmem:[%s4602 + $0x122] sm:$0xff]
  %v7213 = vld [vmem:[%s4602 + $0x12a] sm:$0xff]
  %v7214 = vld [vmem:[%s4602 + $0x13a] sm:$0xff]
  %v7215 = vld [vmem:[%s4602 + $0x142] sm:$0xff]
  %v7216 = vld [vmem:[%s4602 + $0x152] sm:$0xff]
  %v7217 = vld [vmem:[%s4602 + $0x15a] sm:$0xff]
  %v7218 = vld [vmem:[%s4602 + $0x16a] sm:$0xff]
  %v7219 = vld [vmem:[%s4602 + $0x172] sm:$0xff]
  %v7220 = vld [vmem:[%s4602 + $0x1b2] sm:$0xff]
  %v7221 = vld [vmem:[%s4602 + $0x1ba] sm:$0xff]
  %v7222 = vld [vmem:[%s4602 + $0x1ca] sm:$0xff]
  %v7223 = vld [vmem:[%s4602 + $0x1d2] sm:$0xff]
  %v7224 = vld [vmem:[%s4602 + $0x1e2] sm:$0xff]
  %v7225 = vld [vmem:[%s4602 + $0x1ea] sm:$0xff]
  %v7226 = vld [vmem:[%s4602 + $0x1fa] sm:$0xff]
  %v7227 = vld [vmem:[%s4602 + $0x202] sm:$0xff]
  %v7228 = vld [vmem:[%s4602 + $0x212] sm:$0xff]
  %v7229 = vld [vmem:[%s4602 + $0x21a] sm:$0xff]
  %v7230 = vld [vmem:[%s4602 + $0x22a] sm:$0xff]
  %v7231 = vld [vmem:[%s4602 + $0x232] sm:$0xff]
  %v7232 = vld [vmem:[%s4602 + $0x242] sm:$0xff]
  %v7233 = vld [vmem:[%s4602 + $0x24a] sm:$0xff]
  %v7234 = vld [vmem:[%s4602 + $0x25a] sm:$0xff]
  %v7235 = vld [vmem:[%s4602 + $0x262] sm:$0xff]
  %v7236 = vld [vmem:[%s4602 + $0x272] sm:$0xff]
  %v7237 = vld [vmem:[%s4602 + $0x27a] sm:$0xff]
  %v7238 = vld [vmem:[%s4602 + $0x28a] sm:$0xff]
  %v7239 = vld [vmem:[%s4602 + $0x292] sm:$0xff]
  %v7240 = vld [vmem:[%s4602 + $0x2a2] sm:$0xff]
  %v7241 = vld [vmem:[%s4602 + $0x2aa] sm:$0xff]
  %v7242 = vld [vmem:[%s4602 + $0x2ba] sm:$0xff]
  %v7243 = vld [vmem:[%s4602 + $0x2c2] sm:$0xff]
  %v7244 = vld [vmem:[%s4602 + $0x2d2] sm:$0xff]
  %v7245 = vld [vmem:[%s4602 + $0x2da] sm:$0xff]
  %v7246 = vld [vmem:[%s4602 + $0x2ea] sm:$0xff]
  %v7247 = vld [vmem:[%s4602 + $0x2f2] sm:$0xff]
  %v7248 = vld [vmem:[%s4602 + $0x302] sm:$0xff]
  %v7249 = vld [vmem:[%s4602 + $0x30a] sm:$0xff]
  %v7250 = vld [vmem:[%s4602 + $0x31a] sm:$0xff]
  %v7251 = vld [vmem:[%s4602 + $0x322] sm:$0xff]
  %s7252 = scalar_lea.vmem %s4, 640
  %v7253 = vld [vmem:[%s7252] sm:$0xff]
  %v7254 = vld [vmem:[%s7252 + $0x8] sm:$0xff]
  %v7255 = vld [vmem:[%s7252 + $0x10] sm:$0xff]
  %v7256 = vld [vmem:[%s7252 + $0x18] sm:$0xff]
  %v7257 = vld [vmem:[%s7252 + $0x20] sm:$0xff]
  %v7258 = vld [vmem:[%s7252 + $0x28] sm:$0xff]
  %v7259 = vld [vmem:[%s7252 + $0x30] sm:$0xff]
  %v7260 = vld [vmem:[%s7252 + $0x38] sm:$0xff]
  %v7261 = vld [vmem:[%s7252 + $0x40] sm:$0xff]
  %v7262 = vld [vmem:[%s7252 + $0x48] sm:$0xff]
  %v7263 = vld [vmem:[%s7252 + $0x50] sm:$0xff]
  %v7264 = vld [vmem:[%s7252 + $0x58] sm:$0xff]
  %v7265 = vld [vmem:[%s7252 + $0x60] sm:$0xff]
  %v7266 = vld [vmem:[%s7252 + $0x68] sm:$0xff]
  %v7267 = vld [vmem:[%s7252 + $0x70] sm:$0xff]
  %v7268 = vld [vmem:[%s7252 + $0x78] sm:$0xff]
  %7269 = vmatprep.subr.mxu0 0.0
  %7270 = vmatpush1.msra.mxu0 %v7253
  %7271 = vmatprep.subr.mxu0 0.0
  %7272 = vmatpush1.msra.mxu0 %v7254
  %7273 = vmatprep.subr.mxu0 0.0
  %7274 = vmatpush1.msra.mxu0 %v7255
  %7275 = vmatprep.subr.mxu0 0.0
  %7276 = vmatpush1.msra.mxu0 %v7256
  %7277 = vmatprep.subr.mxu0 0.0
  %7278 = vmatpush1.msra.mxu0 %v7257
  %7279 = vmatprep.subr.mxu0 0.0
  %7280 = vmatpush1.msra.mxu0 %v7258
  %7281 = vmatprep.subr.mxu0 0.0
  %7282 = vmatpush1.msra.mxu0 %v7259
  %7283 = vmatprep.subr.mxu0 0.0
  %7284 = vmatpush1.msra.mxu0 %v7260
  %7285 = vmatprep.subr.mxu0 0.0
  %7286 = vmatpush1.msra.mxu0 %v7261
  %7287 = vmatprep.subr.mxu0 0.0
  %7288 = vmatpush1.msra.mxu0 %v7262
  %7289 = vmatprep.subr.mxu0 0.0
  %7290 = vmatpush1.msra.mxu0 %v7263
  %7291 = vmatprep.subr.mxu0 0.0
  %7292 = vmatpush1.msra.mxu0 %v7264
  %7293 = vmatprep.subr.mxu0 0.0
  %7294 = vmatpush1.msra.mxu0 %v7265
  %7295 = vmatprep.subr.mxu0 0.0
  %7296 = vmatpush1.msra.mxu0 %v7266
  %7297 = vmatprep.subr.mxu0 0.0
  %7298 = vmatpush1.msra.mxu0 %v7267
  %7299 = vmatprep.subr.mxu0 0.0
  %7300 = vmatpush1.msra.mxu0 %v7268
  %7301 = vmatprep.subr.mxu0 0.0
  %7302 = vmatpush1.msra.mxu0 0.0
  %7303 = vmatprep.subr.mxu0 0.0
  %7304 = vmatpush1.msra.mxu0 0.0
  %7305 = vmatprep.subr.mxu0 0.0
  %7306 = vmatpush1.msra.mxu0 0.0
  %7307 = vmatprep.subr.mxu0 0.0
  %7308 = vmatpush1.msra.mxu0 0.0
  %7309 = vmatprep.subr.mxu0 0.0
  %7310 = vmatpush1.msra.mxu0 0.0
  %7311 = vmatprep.subr.mxu0 0.0
  %7312 = vmatpush1.msra.mxu0 0.0
  %7313 = vmatprep.subr.mxu0 0.0
  %7314 = vmatpush1.msra.mxu0 0.0
  %7315 = vmatprep.subr.mxu0 0.0
  %7316 = vmatpush1.msra.mxu0 0.0
  %7317 = vmatprep.subr.mxu0 0.0
  %7318 = vmatpush1.msra.mxu0 0.0
  %7319 = vmatprep.subr.mxu0 0.0
  %7320 = vmatpush1.msra.mxu0 0.0
  %7321 = vmatprep.subr.mxu0 0.0
  %7322 = vmatpush1.msra.mxu0 0.0
  %7323 = vmatprep.subr.mxu0 0.0
  %7324 = vmatpush1.msra.mxu0 0.0
  %7325 = vmatprep.subr.mxu0 0.0
  %7326 = vmatpush1.msra.mxu0 0.0
  %7327 = vmatprep.subr.mxu0 0.0
  %7328 = vmatpush1.msra.mxu0 0.0
  %7329 = vmatprep.subr.mxu0 0.0
  %7330 = vmatpush1.msra.mxu0 0.0
  %7331 = vmatprep.subr.mxu0 0.0
  %7332 = vmatpush1.msra.mxu0 0.0
  %7333 = vmatprep.mubr.f32.mxu0 0.0
  %7334 = vmatmul.mubr.f32.gmra.mrb[0].mxu0 %v7188
  %v7335 = vpop.f32.mrb[0].mxu0
  %v7336 = vadd.f32 0.0, %v7335
  %v7337 = vpop.f32.mrb[0].mxu0
  %7338 = vmatprep.mubr.f32.mxu0 0.0
  %7339 = vmatmul.mubr.f32.gmra.mrb[0].mxu0 %v7189
  %v7340 = vpop.f32.mrb[0].mxu0
  %v7341 = vadd.f32 0.0, %v7340
  %v7342 = vpop.f32.mrb[0].mxu0
  %7343 = vmatprep.mubr.f32.mxu0 0.0
  %7344 = vmatmul.mubr.f32.gmra.mrb[0].mxu0 %v7190
  %v7345 = vpop.f32.mrb[0].mxu0
  %v7346 = vadd.f32 0.0, %v7345
  %v7347 = vpop.f32.mrb[0].mxu0
  %7348 = vmatprep.mubr.f32.mxu0 0.0
  %7349 = vmatmul.mubr.f32.gmra.mrb[0].mxu0 %v7191
  %v7350 = vpop.f32.mrb[0].mxu0
  %v7351 = vadd.f32 0.0, %v7350
  %v7352 = vpop.f32.mrb[0].mxu0
  %7353 = vmatprep.mubr.f32.mxu0 0.0
  %7354 = vmatmul.mubr.f32.gmra.mrb[0].mxu0 %v7192
  %v7355 = vpop.f32.mrb[0].mxu0
  %v7356 = vadd.f32 0.0, %v7355
  %v7357 = vpop.f32.mrb[0].mxu0
  %7358 = vmatprep.mubr.f32.mxu0 0.0
  %7359 = vmatmul.mubr.f32.gmra.mrb[0].mxu0 %v7193
  %v7360 = vpop.f32.mrb[0].mxu0
  %v7361 = vadd.f32 0.0, %v7360
  %v7362 = vpop.f32.mrb[0].mxu0
  %7363 = vmatprep.mubr.f32.mxu0 0.0
  %7364 = vmatmul.mubr.f32.gmra.mrb[0].mxu0 %v7194
  %v7365 = vpop.f32.mrb[0].mxu0
  %v7366 = vadd.f32 0.0, %v7365
  %v7367 = vpop.f32.mrb[0].mxu0
  %7368 = vmatprep.mubr.f32.mxu0 0.0
  %7369 = vmatmul.mubr.f32.gmra.mrb[0].mxu0 %v7195
  %v7370 = vpop.f32.mrb[0].mxu0
  %v7371 = vadd.f32 0.0, %v7370
  %v7372 = vpop.f32.mrb[0].mxu0
  %7373 = vmatprep.mubr.f32.mxu0 0.0
  %7374 = vmatmul.mubr.f32.gmra.mrb[0].mxu0 %v7196
  %v7375 = vpop.f32.mrb[0].mxu0
  %v7376 = vadd.f32 0.0, %v7375
  %v7377 = vpop.f32.mrb[0].mxu0
  %7378 = vmatprep.mubr.f32.mxu0 0.0
  %7379 = vmatmul.mubr.f32.gmra.mrb[0].mxu0 %v7197
  %v7380 = vpop.f32.mrb[0].mxu0
  %v7381 = vadd.f32 0.0, %v7380
  %v7382 = vpop.f32.mrb[0].mxu0
  %7383 = vmatprep.mubr.f32.mxu0 0.0
  %7384 = vmatmul.mubr.f32.gmra.mrb[0].mxu0 %v7198
  %v7385 = vpop.f32.mrb[0].mxu0
  %v7386 = vadd.f32 0.0, %v7385
  %v7387 = vpop.f32.mrb[0].mxu0
  %7388 = vmatprep.mubr.f32.mxu0 0.0
  %7389 = vmatmul.mubr.f32.gmra.mrb[0].mxu0 %v7199
  %v7390 = vpop.f32.mrb[0].mxu0
  %v7391 = vadd.f32 0.0, %v7390
  %v7392 = vpop.f32.mrb[0].mxu0
  %7393 = vmatprep.mubr.f32.mxu0 0.0
  %7394 = vmatmul.mubr.f32.gmra.mrb[0].mxu0 %v7200
  %v7395 = vpop.f32.mrb[0].mxu0
  %v7396 = vadd.f32 0.0, %v7395
  %v7397 = vpop.f32.mrb[0].mxu0
  %7398 = vmatprep.mubr.f32.mxu0 0.0
  %7399 = vmatmul.mubr.f32.gmra.mrb[0].mxu0 %v7201
  %v7400 = vpop.f32.mrb[0].mxu0
  %v7401 = vadd.f32 0.0, %v7400
  %v7402 = vpop.f32.mrb[0].mxu0
  %7403 = vmatprep.mubr.f32.mxu0 0.0
  %7404 = vmatmul.mubr.f32.gmra.mrb[0].mxu0 %v7202
  %v7405 = vpop.f32.mrb[0].mxu0
  %v7406 = vadd.f32 0.0, %v7405
  %v7407 = vpop.f32.mrb[0].mxu0
  %7408 = vmatprep.mubr.f32.mxu0 0.0
  %7409 = vmatmul.mubr.f32.gmra.mrb[0].mxu0 %v7203
  %v7410 = vpop.f32.mrb[0].mxu0
  %v7411 = vadd.f32 0.0, %v7410
  %v7412 = vpop.f32.mrb[0].mxu0
  %7413 = vmatprep.mubr.f32.mxu0 0.0
  %7414 = vmatmul.mubr.f32.gmra.mrb[0].mxu0 %v7204
  %v7415 = vpop.f32.mrb[0].mxu0
  %v7416 = vadd.f32 0.0, %v7415
  %v7417 = vpop.f32.mrb[0].mxu0
  %7418 = vmatprep.mubr.f32.mxu0 0.0
  %7419 = vmatmul.mubr.f32.gmra.mrb[0].mxu0 %v7205
  %v7420 = vpop.f32.mrb[0].mxu0
  %v7421 = vadd.f32 0.0, %v7420
  %v7422 = vpop.f32.mrb[0].mxu0
  %7423 = vmatprep.mubr.f32.mxu0 0.0
  %7424 = vmatmul.mubr.f32.gmra.mrb[0].mxu0 %v7206
  %v7425 = vpop.f32.mrb[0].mxu0
  %v7426 = vadd.f32 0.0, %v7425
  %v7427 = vpop.f32.mrb[0].mxu0
  %7428 = vmatprep.mubr.f32.mxu0 0.0
  %7429 = vmatmul.mubr.f32.gmra.mrb[0].mxu0 %v7207
  %v7430 = vpop.f32.mrb[0].mxu0
  %v7431 = vadd.f32 0.0, %v7430
  %v7432 = vpop.f32.mrb[0].mxu0
  %7433 = vmatprep.mubr.f32.mxu0 0.0
  %7434 = vmatmul.mubr.f32.gmra.mrb[0].mxu0 %v7208
  %v7435 = vpop.f32.mrb[0].mxu0
  %v7436 = vadd.f32 0.0, %v7435
  %v7437 = vpop.f32.mrb[0].mxu0
  %7438 = vmatprep.mubr.f32.mxu0 0.0
  %7439 = vmatmul.mubr.f32.gmra.mrb[0].mxu0 %v7209
  %v7440 = vpop.f32.mrb[0].mxu0
  %v7441 = vadd.f32 0.0, %v7440
  %v7442 = vpop.f32.mrb[0].mxu0
  %7443 = vmatprep.mubr.f32.mxu0 0.0
  %7444 = vmatmul.mubr.f32.gmra.mrb[0].mxu0 %v7210
  %v7445 = vpop.f32.mrb[0].mxu0
  %v7446 = vadd.f32 0.0, %v7445
  %v7447 = vpop.f32.mrb[0].mxu0
  %7448 = vmatprep.mubr.f32.mxu0 0.0
  %7449 = vmatmul.mubr.f32.gmra.mrb[0].mxu0 %v7211
  %v7450 = vpop.f32.mrb[0].mxu0
  %v7451 = vadd.f32 0.0, %v7450
  %v7452 = vpop.f32.mrb[0].mxu0
  %7453 = vmatprep.mubr.f32.mxu0 0.0
  %7454 = vmatmul.mubr.f32.gmra.mrb[0].mxu0 %v7212
  %v7455 = vpop.f32.mrb[0].mxu0
  %v7456 = vadd.f32 0.0, %v7455
  %v7457 = vpop.f32.mrb[0].mxu0
  %7458 = vmatprep.mubr.f32.mxu0 0.0
  %7459 = vmatmul.mubr.f32.gmra.mrb[0].mxu0 %v7213
  %v7460 = vpop.f32.mrb[0].mxu0
  %v7461 = vadd.f32 0.0, %v7460
  %v7462 = vpop.f32.mrb[0].mxu0
  %7463 = vmatprep.mubr.f32.mxu0 0.0
  %7464 = vmatmul.mubr.f32.gmra.mrb[0].mxu0 %v7214
  %v7465 = vpop.f32.mrb[0].mxu0
  %v7466 = vadd.f32 0.0, %v7465
  %v7467 = vpop.f32.mrb[0].mxu0
  %7468 = vmatprep.mubr.f32.mxu0 0.0
  %7469 = vmatmul.mubr.f32.gmra.mrb[0].mxu0 %v7215
  %v7470 = vpop.f32.mrb[0].mxu0
  %v7471 = vadd.f32 0.0, %v7470
  %v7472 = vpop.f32.mrb[0].mxu0
  %7473 = vmatprep.mubr.f32.mxu0 0.0
  %7474 = vmatmul.mubr.f32.gmra.mrb[0].mxu0 %v7216
  %v7475 = vpop.f32.mrb[0].mxu0
  %v7476 = vadd.f32 0.0, %v7475
  %v7477 = vpop.f32.mrb[0].mxu0
  %7478 = vmatprep.mubr.f32.mxu0 0.0
  %7479 = vmatmul.mubr.f32.gmra.mrb[0].mxu0 %v7217
  %v7480 = vpop.f32.mrb[0].mxu0
  %v7481 = vadd.f32 0.0, %v7480
  %v7482 = vpop.f32.mrb[0].mxu0
  %7483 = vmatprep.mubr.f32.mxu0 0.0
  %7484 = vmatmul.mubr.f32.gmra.mrb[0].mxu0 %v7218
  %v7485 = vpop.f32.mrb[0].mxu0
  %v7486 = vadd.f32 0.0, %v7485
  %v7487 = vpop.f32.mrb[0].mxu0
  %7488 = vmatprep.mubr.f32.mxu0 0.0
  %7489 = vmatmul.mubr.f32.gmra.mrb[0].mxu0 %v7219
  %v7490 = vpop.f32.mrb[0].mxu0
  %v7491 = vadd.f32 0.0, %v7490
  %v7492 = vpop.f32.mrb[0].mxu0
  %7493 = vmatprep.mubr.f32.mxu0 0.0
  %7494 = vmatmul.mubr.f32.gmra.mrb[0].mxu0 %v7220
  %v7495 = vpop.f32.mrb[0].mxu0
  %v7496 = vadd.f32 0.0, %v7495
  %v7497 = vpop.f32.mrb[0].mxu0
  %7498 = vmatprep.mubr.f32.mxu0 0.0
  %7499 = vmatmul.mubr.f32.gmra.mrb[0].mxu0 %v7221
  %v7500 = vpop.f32.mrb[0].mxu0
  %v7501 = vadd.f32 0.0, %v7500
  %v7502 = vpop.f32.mrb[0].mxu0
  %7503 = vmatprep.mubr.f32.mxu0 0.0
  %7504 = vmatmul.mubr.f32.gmra.mrb[0].mxu0 %v7222
  %v7505 = vpop.f32.mrb[0].mxu0
  %v7506 = vadd.f32 0.0, %v7505
  %v7507 = vpop.f32.mrb[0].mxu0
  %7508 = vmatprep.mubr.f32.mxu0 0.0
  %7509 = vmatmul.mubr.f32.gmra.mrb[0].mxu0 %v7223
  %v7510 = vpop.f32.mrb[0].mxu0
  %v7511 = vadd.f32 0.0, %v7510
  %v7512 = vpop.f32.mrb[0].mxu0
  %7513 = vmatprep.mubr.f32.mxu0 0.0
  %7514 = vmatmul.mubr.f32.gmra.mrb[0].mxu0 %v7224
  %v7515 = vpop.f32.mrb[0].mxu0
  %v7516 = vadd.f32 0.0, %v7515
  %v7517 = vpop.f32.mrb[0].mxu0
  %7518 = vmatprep.mubr.f32.mxu0 0.0
  %7519 = vmatmul.mubr.f32.gmra.mrb[0].mxu0 %v7225
  %v7520 = vpop.f32.mrb[0].mxu0
  %v7521 = vadd.f32 0.0, %v7520
  %v7522 = vpop.f32.mrb[0].mxu0
  %7523 = vmatprep.mubr.f32.mxu0 0.0
  %7524 = vmatmul.mubr.f32.gmra.mrb[0].mxu0 %v7226
  %v7525 = vpop.f32.mrb[0].mxu0
  %v7526 = vadd.f32 0.0, %v7525
  %v7527 = vpop.f32.mrb[0].mxu0
  %7528 = vmatprep.mubr.f32.mxu0 0.0
  %7529 = vmatmul.mubr.f32.gmra.mrb[0].mxu0 %v7227
  %v7530 = vpop.f32.mrb[0].mxu0
  %v7531 = vadd.f32 0.0, %v7530
  %v7532 = vpop.f32.mrb[0].mxu0
  %7533 = vmatprep.mubr.f32.mxu0 0.0
  %7534 = vmatmul.mubr.f32.gmra.mrb[0].mxu0 %v7228
  %v7535 = vpop.f32.mrb[0].mxu0
  %v7536 = vadd.f32 0.0, %v7535
  %v7537 = vpop.f32.mrb[0].mxu0
  %7538 = vmatprep.mubr.f32.mxu0 0.0
  %7539 = vmatmul.mubr.f32.gmra.mrb[0].mxu0 %v7229
  %v7540 = vpop.f32.mrb[0].mxu0
  %v7541 = vadd.f32 0.0, %v7540
  %v7542 = vpop.f32.mrb[0].mxu0
  %7543 = vmatprep.mubr.f32.mxu0 0.0
  %7544 = vmatmul.mubr.f32.gmra.mrb[0].mxu0 %v7230
  %v7545 = vpop.f32.mrb[0].mxu0
  %v7546 = vadd.f32 0.0, %v7545
  %v7547 = vpop.f32.mrb[0].mxu0
  %7548 = vmatprep.mubr.f32.mxu0 0.0
  %7549 = vmatmul.mubr.f32.gmra.mrb[0].mxu0 %v7231
  %v7550 = vpop.f32.mrb[0].mxu0
  %v7551 = vadd.f32 0.0, %v7550
  %v7552 = vpop.f32.mrb[0].mxu0
  %7553 = vmatprep.mubr.f32.mxu0 0.0
  %7554 = vmatmul.mubr.f32.gmra.mrb[0].mxu0 %v7232
  %v7555 = vpop.f32.mrb[0].mxu0
  %v7556 = vadd.f32 0.0, %v7555
  %v7557 = vpop.f32.mrb[0].mxu0
  %7558 = vmatprep.mubr.f32.mxu0 0.0
  %7559 = vmatmul.mubr.f32.gmra.mrb[0].mxu0 %v7233
  %v7560 = vpop.f32.mrb[0].mxu0
  %v7561 = vadd.f32 0.0, %v7560
  %v7562 = vpop.f32.mrb[0].mxu0
  %7563 = vmatprep.mubr.f32.mxu0 0.0
  %7564 = vmatmul.mubr.f32.gmra.mrb[0].mxu0 %v7234
  %v7565 = vpop.f32.mrb[0].mxu0
  %v7566 = vadd.f32 0.0, %v7565
  %v7567 = vpop.f32.mrb[0].mxu0
  %7568 = vmatprep.mubr.f32.mxu0 0.0
  %7569 = vmatmul.mubr.f32.gmra.mrb[0].mxu0 %v7235
  %v7570 = vpop.f32.mrb[0].mxu0
  %v7571 = vadd.f32 0.0, %v7570
  %v7572 = vpop.f32.mrb[0].mxu0
  %7573 = vmatprep.mubr.f32.mxu0 0.0
  %7574 = vmatmul.mubr.f32.gmra.mrb[0].mxu0 %v7236
  %v7575 = vpop.f32.mrb[0].mxu0
  %v7576 = vadd.f32 0.0, %v7575
  %v7577 = vpop.f32.mrb[0].mxu0
  %7578 = vmatprep.mubr.f32.mxu0 0.0
  %7579 = vmatmul.mubr.f32.gmra.mrb[0].mxu0 %v7237
  %v7580 = vpop.f32.mrb[0].mxu0
  %v7581 = vadd.f32 0.0, %v7580
  %v7582 = vpop.f32.mrb[0].mxu0
  %7583 = vmatprep.mubr.f32.mxu0 0.0
  %7584 = vmatmul.mubr.f32.gmra.mrb[0].mxu0 %v7238
  %v7585 = vpop.f32.mrb[0].mxu0
  %v7586 = vadd.f32 0.0, %v7585
  %v7587 = vpop.f32.mrb[0].mxu0
  %7588 = vmatprep.mubr.f32.mxu0 0.0
  %7589 = vmatmul.mubr.f32.gmra.mrb[0].mxu0 %v7239
  %v7590 = vpop.f32.mrb[0].mxu0
  %v7591 = vadd.f32 0.0, %v7590
  %v7592 = vpop.f32.mrb[0].mxu0
  %7593 = vmatprep.mubr.f32.mxu0 0.0
  %7594 = vmatmul.mubr.f32.gmra.mrb[0].mxu0 %v7240
  %v7595 = vpop.f32.mrb[0].mxu0
  %v7596 = vadd.f32 0.0, %v7595
  %v7597 = vpop.f32.mrb[0].mxu0
  %7598 = vmatprep.mubr.f32.mxu0 0.0
  %7599 = vmatmul.mubr.f32.gmra.mrb[0].mxu0 %v7241
  %v7600 = vpop.f32.mrb[0].mxu0
  %v7601 = vadd.f32 0.0, %v7600
  %v7602 = vpop.f32.mrb[0].mxu0
  %7603 = vmatprep.mubr.f32.mxu0 0.0
  %7604 = vmatmul.mubr.f32.gmra.mrb[0].mxu0 %v7242
  %v7605 = vpop.f32.mrb[0].mxu0
  %v7606 = vadd.f32 0.0, %v7605
  %v7607 = vpop.f32.mrb[0].mxu0
  %7608 = vmatprep.mubr.f32.mxu0 0.0
  %7609 = vmatmul.mubr.f32.gmra.mrb[0].mxu0 %v7243
  %v7610 = vpop.f32.mrb[0].mxu0
  %v7611 = vadd.f32 0.0, %v7610
  %v7612 = vpop.f32.mrb[0].mxu0
  %7613 = vmatprep.mubr.f32.mxu0 0.0
  %7614 = vmatmul.mubr.f32.gmra.mrb[0].mxu0 %v7244
  %v7615 = vpop.f32.mrb[0].mxu0
  %v7616 = vadd.f32 0.0, %v7615
  %v7617 = vpop.f32.mrb[0].mxu0
  %7618 = vmatprep.mubr.f32.mxu0 0.0
  %7619 = vmatmul.mubr.f32.gmra.mrb[0].mxu0 %v7245
  %v7620 = vpop.f32.mrb[0].mxu0
  %v7621 = vadd.f32 0.0, %v7620
  %v7622 = vpop.f32.mrb[0].mxu0
  %7623 = vmatprep.mubr.f32.mxu0 0.0
  %7624 = vmatmul.mubr.f32.gmra.mrb[0].mxu0 %v7246
  %v7625 = vpop.f32.mrb[0].mxu0
  %v7626 = vadd.f32 0.0, %v7625
  %v7627 = vpop.f32.mrb[0].mxu0
  %7628 = vmatprep.mubr.f32.mxu0 0.0
  %7629 = vmatmul.mubr.f32.gmra.mrb[0].mxu0 %v7247
  %v7630 = vpop.f32.mrb[0].mxu0
  %v7631 = vadd.f32 0.0, %v7630
  %v7632 = vpop.f32.mrb[0].mxu0
  %7633 = vmatprep.mubr.f32.mxu0 0.0
  %7634 = vmatmul.mubr.f32.gmra.mrb[0].mxu0 %v7248
  %v7635 = vpop.f32.mrb[0].mxu0
  %v7636 = vadd.f32 0.0, %v7635
  %v7637 = vpop.f32.mrb[0].mxu0
  %7638 = vmatprep.mubr.f32.mxu0 0.0
  %7639 = vmatmul.mubr.f32.gmra.mrb[0].mxu0 %v7249
  %v7640 = vpop.f32.mrb[0].mxu0
  %v7641 = vadd.f32 0.0, %v7640
  %v7642 = vpop.f32.mrb[0].mxu0
  %7643 = vmatprep.mubr.f32.mxu0 0.0
  %7644 = vmatmul.mubr.f32.gmra.mrb[0].mxu0 %v7250
  %v7645 = vpop.f32.mrb[0].mxu0
  %v7646 = vadd.f32 0.0, %v7645
  %v7647 = vpop.f32.mrb[0].mxu0
  %7648 = vmatprep.mubr.f32.mxu0 0.0
  %7649 = vmatmul.mubr.f32.gmra.mrb[0].mxu0 %v7251
  %v7650 = vpop.f32.mrb[0].mxu0
  %v7651 = vadd.f32 0.0, %v7650
  %v7652 = vpop.f32.mrb[0].mxu0
  %7653 = vdwg.mxu0
  %v7654 = vadd.f32 %v7124, %v7336
  %v7655 = vadd.f32 %v7125, %v7341
  %v7656 = vadd.f32 %v7126, %v7346
  %v7657 = vadd.f32 %v7127, %v7351
  %v7658 = vadd.f32 %v7128, %v7356
  %v7659 = vadd.f32 %v7129, %v7361
  %v7660 = vadd.f32 %v7130, %v7366
  %v7661 = vadd.f32 %v7131, %v7371
  %v7662 = vadd.f32 %v7132, %v7376
  %v7663 = vadd.f32 %v7133, %v7381
  %v7664 = vadd.f32 %v7134, %v7386
  %v7665 = vadd.f32 %v7135, %v7391
  %v7666 = vadd.f32 %v7136, %v7396
  %v7667 = vadd.f32 %v7137, %v7401
  %v7668 = vadd.f32 %v7138, %v7406
  %v7669 = vadd.f32 %v7139, %v7411
  %v7670 = vadd.f32 %v7140, %v7416
  %v7671 = vadd.f32 %v7141, %v7421
  %v7672 = vadd.f32 %v7142, %v7426
  %v7673 = vadd.f32 %v7143, %v7431
  %v7674 = vadd.f32 %v7144, %v7436
  %v7675 = vadd.f32 %v7145, %v7441
  %v7676 = vadd.f32 %v7146, %v7446
  %v7677 = vadd.f32 %v7147, %v7451
  %v7678 = vadd.f32 %v7148, %v7456
  %v7679 = vadd.f32 %v7149, %v7461
  %v7680 = vadd.f32 %v7150, %v7466
  %v7681 = vadd.f32 %v7151, %v7471
  %v7682 = vadd.f32 %v7152, %v7476
  %v7683 = vadd.f32 %v7153, %v7481
  %v7684 = vadd.f32 %v7154, %v7486
  %v7685 = vadd.f32 %v7155, %v7491
  %v7686 = vadd.f32 %v7156, %v7496
  %v7687 = vadd.f32 %v7157, %v7501
  %v7688 = vadd.f32 %v7158, %v7506
  %v7689 = vadd.f32 %v7159, %v7511
  %v7690 = vadd.f32 %v7160, %v7516
  %v7691 = vadd.f32 %v7161, %v7521
  %v7692 = vadd.f32 %v7162, %v7526
  %v7693 = vadd.f32 %v7163, %v7531
  %v7694 = vadd.f32 %v7164, %v7536
  %v7695 = vadd.f32 %v7165, %v7541
  %v7696 = vadd.f32 %v7166, %v7546
  %v7697 = vadd.f32 %v7167, %v7551
  %v7698 = vadd.f32 %v7168, %v7556
  %v7699 = vadd.f32 %v7169, %v7561
  %v7700 = vadd.f32 %v7170, %v7566
  %v7701 = vadd.f32 %v7171, %v7571
  %v7702 = vadd.f32 %v7172, %v7576
  %v7703 = vadd.f32 %v7173, %v7581
  %v7704 = vadd.f32 %v7174, %v7586
  %v7705 = vadd.f32 %v7175, %v7591
  %v7706 = vadd.f32 %v7176, %v7596
  %v7707 = vadd.f32 %v7177, %v7601
  %v7708 = vadd.f32 %v7178, %v7606
  %v7709 = vadd.f32 %v7179, %v7611
  %v7710 = vadd.f32 %v7180, %v7616
  %v7711 = vadd.f32 %v7181, %v7621
  %v7712 = vadd.f32 %v7182, %v7626
  %v7713 = vadd.f32 %v7183, %v7631
  %v7714 = vadd.f32 %v7184, %v7636
  %v7715 = vadd.f32 %v7185, %v7641
  %v7716 = vadd.f32 %v7186, %v7646
  %v7717 = vadd.f32 %v7187, %v7651
  %s7718 = scalar_lea.vmem [#allocation3], 48
  %v7719 = vld [vmem:[%s7718] sm:$0xff]
  %v7720 = vld [vmem:[%s7718 + $0x8] sm:$0xff]
  %v7721 = vld [vmem:[%s7718 + $0x18] sm:$0xff]
  %v7722 = vld [vmem:[%s7718 + $0x20] sm:$0xff]
  %v7723 = vld [vmem:[%s7718 + $0x30] sm:$0xff]
  %v7724 = vld [vmem:[%s7718 + $0x38] sm:$0xff]
  %v7725 = vld [vmem:[%s7718 + $0x48] sm:$0xff]
  %v7726 = vld [vmem:[%s7718 + $0x50] sm:$0xff]
  %v7727 = vld [vmem:[%s7718 + $0x60] sm:$0xff]
  %v7728 = vld [vmem:[%s7718 + $0x68] sm:$0xff]
  %v7729 = vld [vmem:[%s7718 + $0x78] sm:$0xff]
  %v7730 = vld [vmem:[%s7718 + $0x80] sm:$0xff]
  %v7731 = vld [vmem:[%s7718 + $0x90] sm:$0xff]
  %v7732 = vld [vmem:[%s7718 + $0x98] sm:$0xff]
  %v7733 = vld [vmem:[%s7718 + $0xa8] sm:$0xff]
  %v7734 = vld [vmem:[%s7718 + $0xb0] sm:$0xff]
  %v7735 = vld [vmem:[%s7718 + $0xc0] sm:$0xff]
  %v7736 = vld [vmem:[%s7718 + $0xc8] sm:$0xff]
  %v7737 = vld [vmem:[%s7718 + $0xd8] sm:$0xff]
  %v7738 = vld [vmem:[%s7718 + $0xe0] sm:$0xff]
  %v7739 = vld [vmem:[%s7718 + $0xf0] sm:$0xff]
  %v7740 = vld [vmem:[%s7718 + $0xf8] sm:$0xff]
  %v7741 = vld [vmem:[%s7718 + $0x108] sm:$0xff]
  %v7742 = vld [vmem:[%s7718 + $0x110] sm:$0xff]
  %v7743 = vld [vmem:[%s7718 + $0x120] sm:$0xff]
  %v7744 = vld [vmem:[%s7718 + $0x128] sm:$0xff]
  %v7745 = vld [vmem:[%s7718 + $0x138] sm:$0xff]
  %v7746 = vld [vmem:[%s7718 + $0x140] sm:$0xff]
  %v7747 = vld [vmem:[%s7718 + $0x150] sm:$0xff]
  %v7748 = vld [vmem:[%s7718 + $0x158] sm:$0xff]
  %v7749 = vld [vmem:[%s7718 + $0x168] sm:$0xff]
  %v7750 = vld [vmem:[%s7718 + $0x170] sm:$0xff]
  %v7751 = vld [vmem:[%s7718 + $0x1b0] sm:$0xff]
  %v7752 = vld [vmem:[%s7718 + $0x1b8] sm:$0xff]
  %v7753 = vld [vmem:[%s7718 + $0x1c8] sm:$0xff]
  %v7754 = vld [vmem:[%s7718 + $0x1d0] sm:$0xff]
  %v7755 = vld [vmem:[%s7718 + $0x1e0] sm:$0xff]
  %v7756 = vld [vmem:[%s7718 + $0x1e8] sm:$0xff]
  %v7757 = vld [vmem:[%s7718 + $0x1f8] sm:$0xff]
  %v7758 = vld [vmem:[%s7718 + $0x200] sm:$0xff]
  %v7759 = vld [vmem:[%s7718 + $0x210] sm:$0xff]
  %v7760 = vld [vmem:[%s7718 + $0x218] sm:$0xff]
  %v7761 = vld [vmem:[%s7718 + $0x228] sm:$0xff]
  %v7762 = vld [vmem:[%s7718 + $0x230] sm:$0xff]
  %v7763 = vld [vmem:[%s7718 + $0x240] sm:$0xff]
  %v7764 = vld [vmem:[%s7718 + $0x248] sm:$0xff]
  %v7765 = vld [vmem:[%s7718 + $0x258] sm:$0xff]
  %v7766 = vld [vmem:[%s7718 + $0x260] sm:$0xff]
  %v7767 = vld [vmem:[%s7718 + $0x270] sm:$0xff]
  %v7768 = vld [vmem:[%s7718 + $0x278] sm:$0xff]
  %v7769 = vld [vmem:[%s7718 + $0x288] sm:$0xff]
  %v7770 = vld [vmem:[%s7718 + $0x290] sm:$0xff]
  %v7771 = vld [vmem:[%s7718 + $0x2a0] sm:$0xff]
  %v7772 = vld [vmem:[%s7718 + $0x2a8] sm:$0xff]
  %v7773 = vld [vmem:[%s7718 + $0x2b8] sm:$0xff]
  %v7774 = vld [vmem:[%s7718 + $0x2c0] sm:$0xff]
  %v7775 = vld [vmem:[%s7718 + $0x2d0] sm:$0xff]
  %v7776 = vld [vmem:[%s7718 + $0x2d8] sm:$0xff]
  %v7777 = vld [vmem:[%s7718 + $0x2e8] sm:$0xff]
  %v7778 = vld [vmem:[%s7718 + $0x2f0] sm:$0xff]
  %v7779 = vld [vmem:[%s7718 + $0x300] sm:$0xff]
  %v7780 = vld [vmem:[%s7718 + $0x308] sm:$0xff]
  %v7781 = vld [vmem:[%s7718 + $0x318] sm:$0xff]
  %v7782 = vld [vmem:[%s7718 + $0x320] sm:$0xff]
  %s7783 = scalar_lea.vmem %s4, 768
  %v7784 = vld [vmem:[%s7783] sm:$0xff]
  %v7785 = vld [vmem:[%s7783 + $0x8] sm:$0xff]
  %v7786 = vld [vmem:[%s7783 + $0x10] sm:$0xff]
  %v7787 = vld [vmem:[%s7783 + $0x18] sm:$0xff]
  %v7788 = vld [vmem:[%s7783 + $0x20] sm:$0xff]
  %v7789 = vld [vmem:[%s7783 + $0x28] sm:$0xff]
  %v7790 = vld [vmem:[%s7783 + $0x30] sm:$0xff]
  %v7791 = vld [vmem:[%s7783 + $0x38] sm:$0xff]
  %v7792 = vld [vmem:[%s7783 + $0x40] sm:$0xff]
  %v7793 = vld [vmem:[%s7783 + $0x48] sm:$0xff]
  %v7794 = vld [vmem:[%s7783 + $0x50] sm:$0xff]
  %v7795 = vld [vmem:[%s7783 + $0x58] sm:$0xff]
  %v7796 = vld [vmem:[%s7783 + $0x60] sm:$0xff]
  %v7797 = vld [vmem:[%s7783 + $0x68] sm:$0xff]
  %v7798 = vld [vmem:[%s7783 + $0x70] sm:$0xff]
  %v7799 = vld [vmem:[%s7783 + $0x78] sm:$0xff]
  %7800 = vmatprep.subr.mxu0 0.0
  %7801 = vmatpush1.msra.mxu0 %v7784
  %7802 = vmatprep.subr.mxu0 0.0
  %7803 = vmatpush1.msra.mxu0 %v7785
  %7804 = vmatprep.subr.mxu0 0.0
  %7805 = vmatpush1.msra.mxu0 %v7786
  %7806 = vmatprep.subr.mxu0 0.0
  %7807 = vmatpush1.msra.mxu0 %v7787
  %7808 = vmatprep.subr.mxu0 0.0
  %7809 = vmatpush1.msra.mxu0 %v7788
  %7810 = vmatprep.subr.mxu0 0.0
  %7811 = vmatpush1.msra.mxu0 %v7789
  %7812 = vmatprep.subr.mxu0 0.0
  %7813 = vmatpush1.msra.mxu0 %v7790
  %7814 = vmatprep.subr.mxu0 0.0
  %7815 = vmatpush1.msra.mxu0 %v7791
  %7816 = vmatprep.subr.mxu0 0.0
  %7817 = vmatpush1.msra.mxu0 %v7792
  %7818 = vmatprep.subr.mxu0 0.0
  %7819 = vmatpush1.msra.mxu0 %v7793
  %7820 = vmatprep.subr.mxu0 0.0
  %7821 = vmatpush1.msra.mxu0 %v7794
  %7822 = vmatprep.subr.mxu0 0.0
  %7823 = vmatpush1.msra.mxu0 %v7795
  %7824 = vmatprep.subr.mxu0 0.0
  %7825 = vmatpush1.msra.mxu0 %v7796
  %7826 = vmatprep.subr.mxu0 0.0
  %7827 = vmatpush1.msra.mxu0 %v7797
  %7828 = vmatprep.subr.mxu0 0.0
  %7829 = vmatpush1.msra.mxu0 %v7798
  %7830 = vmatprep.subr.mxu0 0.0
  %7831 = vmatpush1.msra.mxu0 %v7799
  %7832 = vmatprep.subr.mxu0 0.0
  %7833 = vmatpush1.msra.mxu0 0.0
  %7834 = vmatprep.subr.mxu0 0.0
  %7835 = vmatpush1.msra.mxu0 0.0
  %7836 = vmatprep.subr.mxu0 0.0
  %7837 = vmatpush1.msra.mxu0 0.0
  %7838 = vmatprep.subr.mxu0 0.0
  %7839 = vmatpush1.msra.mxu0 0.0
  %7840 = vmatprep.subr.mxu0 0.0
  %7841 = vmatpush1.msra.mxu0 0.0
  %7842 = vmatprep.subr.mxu0 0.0
  %7843 = vmatpush1.msra.mxu0 0.0
  %7844 = vmatprep.subr.mxu0 0.0
  %7845 = vmatpush1.msra.mxu0 0.0
  %7846 = vmatprep.subr.mxu0 0.0
  %7847 = vmatpush1.msra.mxu0 0.0
  %7848 = vmatprep.subr.mxu0 0.0
  %7849 = vmatpush1.msra.mxu0 0.0
  %7850 = vmatprep.subr.mxu0 0.0
  %7851 = vmatpush1.msra.mxu0 0.0
  %7852 = vmatprep.subr.mxu0 0.0
  %7853 = vmatpush1.msra.mxu0 0.0
  %7854 = vmatprep.subr.mxu0 0.0
  %7855 = vmatpush1.msra.mxu0 0.0
  %7856 = vmatprep.subr.mxu0 0.0
  %7857 = vmatpush1.msra.mxu0 0.0
  %7858 = vmatprep.subr.mxu0 0.0
  %7859 = vmatpush1.msra.mxu0 0.0
  %7860 = vmatprep.subr.mxu0 0.0
  %7861 = vmatpush1.msra.mxu0 0.0
  %7862 = vmatprep.subr.mxu0 0.0
  %7863 = vmatpush1.msra.mxu0 0.0
  %7864 = vmatprep.mubr.f32.mxu0 0.0
  %7865 = vmatmul.mubr.f32.gmra.mrb[0].mxu0 %v7719
  %v7866 = vpop.f32.mrb[0].mxu0
  %v7867 = vadd.f32 0.0, %v7866
  %v7868 = vpop.f32.mrb[0].mxu0
  %7869 = vmatprep.mubr.f32.mxu0 0.0
  %7870 = vmatmul.mubr.f32.gmra.mrb[0].mxu0 %v7720
  %v7871 = vpop.f32.mrb[0].mxu0
  %v7872 = vadd.f32 0.0, %v7871
  %v7873 = vpop.f32.mrb[0].mxu0
  %7874 = vmatprep.mubr.f32.mxu0 0.0
  %7875 = vmatmul.mubr.f32.gmra.mrb[0].mxu0 %v7721
  %v7876 = vpop.f32.mrb[0].mxu0
  %v7877 = vadd.f32 0.0, %v7876
  %v7878 = vpop.f32.mrb[0].mxu0
  %7879 = vmatprep.mubr.f32.mxu0 0.0
  %7880 = vmatmul.mubr.f32.gmra.mrb[0].mxu0 %v7722
  %v7881 = vpop.f32.mrb[0].mxu0
  %v7882 = vadd.f32 0.0, %v7881
  %v7883 = vpop.f32.mrb[0].mxu0
  %7884 = vmatprep.mubr.f32.mxu0 0.0
  %7885 = vmatmul.mubr.f32.gmra.mrb[0].mxu0 %v7723
  %v7886 = vpop.f32.mrb[0].mxu0
  %v7887 = vadd.f32 0.0, %v7886
  %v7888 = vpop.f32.mrb[0].mxu0
  %7889 = vmatprep.mubr.f32.mxu0 0.0
  %7890 = vmatmul.mubr.f32.gmra.mrb[0].mxu0 %v7724
  %v7891 = vpop.f32.mrb[0].mxu0
  %v7892 = vadd.f32 0.0, %v7891
  %v7893 = vpop.f32.mrb[0].mxu0
  %7894 = vmatprep.mubr.f32.mxu0 0.0
  %7895 = vmatmul.mubr.f32.gmra.mrb[0].mxu0 %v7725
  %v7896 = vpop.f32.mrb[0].mxu0
  %v7897 = vadd.f32 0.0, %v7896
  %v7898 = vpop.f32.mrb[0].mxu0
  %7899 = vmatprep.mubr.f32.mxu0 0.0
  %7900 = vmatmul.mubr.f32.gmra.mrb[0].mxu0 %v7726
  %v7901 = vpop.f32.mrb[0].mxu0
  %v7902 = vadd.f32 0.0, %v7901
  %v7903 = vpop.f32.mrb[0].mxu0
  %7904 = vmatprep.mubr.f32.mxu0 0.0
  %7905 = vmatmul.mubr.f32.gmra.mrb[0].mxu0 %v7727
  %v7906 = vpop.f32.mrb[0].mxu0
  %v7907 = vadd.f32 0.0, %v7906
  %v7908 = vpop.f32.mrb[0].mxu0
  %7909 = vmatprep.mubr.f32.mxu0 0.0
  %7910 = vmatmul.mubr.f32.gmra.mrb[0].mxu0 %v7728
  %v7911 = vpop.f32.mrb[0].mxu0
  %v7912 = vadd.f32 0.0, %v7911
  %v7913 = vpop.f32.mrb[0].mxu0
  %7914 = vmatprep.mubr.f32.mxu0 0.0
  %7915 = vmatmul.mubr.f32.gmra.mrb[0].mxu0 %v7729
  %v7916 = vpop.f32.mrb[0].mxu0
  %v7917 = vadd.f32 0.0, %v7916
  %v7918 = vpop.f32.mrb[0].mxu0
  %7919 = vmatprep.mubr.f32.mxu0 0.0
  %7920 = vmatmul.mubr.f32.gmra.mrb[0].mxu0 %v7730
  %v7921 = vpop.f32.mrb[0].mxu0
  %v7922 = vadd.f32 0.0, %v7921
  %v7923 = vpop.f32.mrb[0].mxu0
  %7924 = vmatprep.mubr.f32.mxu0 0.0
  %7925 = vmatmul.mubr.f32.gmra.mrb[0].mxu0 %v7731
  %v7926 = vpop.f32.mrb[0].mxu0
  %v7927 = vadd.f32 0.0, %v7926
  %v7928 = vpop.f32.mrb[0].mxu0
  %7929 = vmatprep.mubr.f32.mxu0 0.0
  %7930 = vmatmul.mubr.f32.gmra.mrb[0].mxu0 %v7732
  %v7931 = vpop.f32.mrb[0].mxu0
  %v7932 = vadd.f32 0.0, %v7931
  %v7933 = vpop.f32.mrb[0].mxu0
  %7934 = vmatprep.mubr.f32.mxu0 0.0
  %7935 = vmatmul.mubr.f32.gmra.mrb[0].mxu0 %v7733
  %v7936 = vpop.f32.mrb[0].mxu0
  %v7937 = vadd.f32 0.0, %v7936
  %v7938 = vpop.f32.mrb[0].mxu0
  %7939 = vmatprep.mubr.f32.mxu0 0.0
  %7940 = vmatmul.mubr.f32.gmra.mrb[0].mxu0 %v7734
  %v7941 = vpop.f32.mrb[0].mxu0
  %v7942 = vadd.f32 0.0, %v7941
  %v7943 = vpop.f32.mrb[0].mxu0
  %7944 = vmatprep.mubr.f32.mxu0 0.0
  %7945 = vmatmul.mubr.f32.gmra.mrb[0].mxu0 %v7735
  %v7946 = vpop.f32.mrb[0].mxu0
  %v7947 = vadd.f32 0.0, %v7946
  %v7948 = vpop.f32.mrb[0].mxu0
  %7949 = vmatprep.mubr.f32.mxu0 0.0
  %7950 = vmatmul.mubr.f32.gmra.mrb[0].mxu0 %v7736
  %v7951 = vpop.f32.mrb[0].mxu0
  %v7952 = vadd.f32 0.0, %v7951
  %v7953 = vpop.f32.mrb[0].mxu0
  %7954 = vmatprep.mubr.f32.mxu0 0.0
  %7955 = vmatmul.mubr.f32.gmra.mrb[0].mxu0 %v7737
  %v7956 = vpop.f32.mrb[0].mxu0
  %v7957 = vadd.f32 0.0, %v7956
  %v7958 = vpop.f32.mrb[0].mxu0
  %7959 = vmatprep.mubr.f32.mxu0 0.0
  %7960 = vmatmul.mubr.f32.gmra.mrb[0].mxu0 %v7738
  %v7961 = vpop.f32.mrb[0].mxu0
  %v7962 = vadd.f32 0.0, %v7961
  %v7963 = vpop.f32.mrb[0].mxu0
  %7964 = vmatprep.mubr.f32.mxu0 0.0
  %7965 = vmatmul.mubr.f32.gmra.mrb[0].mxu0 %v7739
  %v7966 = vpop.f32.mrb[0].mxu0
  %v7967 = vadd.f32 0.0, %v7966
  %v7968 = vpop.f32.mrb[0].mxu0
  %7969 = vmatprep.mubr.f32.mxu0 0.0
  %7970 = vmatmul.mubr.f32.gmra.mrb[0].mxu0 %v7740
  %v7971 = vpop.f32.mrb[0].mxu0
  %v7972 = vadd.f32 0.0, %v7971
  %v7973 = vpop.f32.mrb[0].mxu0
  %7974 = vmatprep.mubr.f32.mxu0 0.0
  %7975 = vmatmul.mubr.f32.gmra.mrb[0].mxu0 %v7741
  %v7976 = vpop.f32.mrb[0].mxu0
  %v7977 = vadd.f32 0.0, %v7976
  %v7978 = vpop.f32.mrb[0].mxu0
  %7979 = vmatprep.mubr.f32.mxu0 0.0
  %7980 = vmatmul.mubr.f32.gmra.mrb[0].mxu0 %v7742
  %v7981 = vpop.f32.mrb[0].mxu0
  %v7982 = vadd.f32 0.0, %v7981
  %v7983 = vpop.f32.mrb[0].mxu0
  %7984 = vmatprep.mubr.f32.mxu0 0.0
  %7985 = vmatmul.mubr.f32.gmra.mrb[0].mxu0 %v7743
  %v7986 = vpop.f32.mrb[0].mxu0
  %v7987 = vadd.f32 0.0, %v7986
  %v7988 = vpop.f32.mrb[0].mxu0
  %7989 = vmatprep.mubr.f32.mxu0 0.0
  %7990 = vmatmul.mubr.f32.gmra.mrb[0].mxu0 %v7744
  %v7991 = vpop.f32.mrb[0].mxu0
  %v7992 = vadd.f32 0.0, %v7991
  %v7993 = vpop.f32.mrb[0].mxu0
  %7994 = vmatprep.mubr.f32.mxu0 0.0
  %7995 = vmatmul.mubr.f32.gmra.mrb[0].mxu0 %v7745
  %v7996 = vpop.f32.mrb[0].mxu0
  %v7997 = vadd.f32 0.0, %v7996
  %v7998 = vpop.f32.mrb[0].mxu0
  %7999 = vmatprep.mubr.f32.mxu0 0.0
  %8000 = vmatmul.mubr.f32.gmra.mrb[0].mxu0 %v7746
  %v8001 = vpop.f32.mrb[0].mxu0
  %v8002 = vadd.f32 0.0, %v8001
  %v8003 = vpop.f32.mrb[0].mxu0
  %8004 = vmatprep.mubr.f32.mxu0 0.0
  %8005 = vmatmul.mubr.f32.gmra.mrb[0].mxu0 %v7747
  %v8006 = vpop.f32.mrb[0].mxu0
  %v8007 = vadd.f32 0.0, %v8006
  %v8008 = vpop.f32.mrb[0].mxu0
  %8009 = vmatprep.mubr.f32.mxu0 0.0
  %8010 = vmatmul.mubr.f32.gmra.mrb[0].mxu0 %v7748
  %v8011 = vpop.f32.mrb[0].mxu0
  %v8012 = vadd.f32 0.0, %v8011
  %v8013 = vpop.f32.mrb[0].mxu0
  %8014 = vmatprep.mubr.f32.mxu0 0.0
  %8015 = vmatmul.mubr.f32.gmra.mrb[0].mxu0 %v7749
  %v8016 = vpop.f32.mrb[0].mxu0
  %v8017 = vadd.f32 0.0, %v8016
  %v8018 = vpop.f32.mrb[0].mxu0
  %8019 = vmatprep.mubr.f32.mxu0 0.0
  %8020 = vmatmul.mubr.f32.gmra.mrb[0].mxu0 %v7750
  %v8021 = vpop.f32.mrb[0].mxu0
  %v8022 = vadd.f32 0.0, %v8021
  %v8023 = vpop.f32.mrb[0].mxu0
  %8024 = vmatprep.mubr.f32.mxu0 0.0
  %8025 = vmatmul.mubr.f32.gmra.mrb[0].mxu0 %v7751
  %v8026 = vpop.f32.mrb[0].mxu0
  %v8027 = vadd.f32 0.0, %v8026
  %v8028 = vpop.f32.mrb[0].mxu0
  %8029 = vmatprep.mubr.f32.mxu0 0.0
  %8030 = vmatmul.mubr.f32.gmra.mrb[0].mxu0 %v7752
  %v8031 = vpop.f32.mrb[0].mxu0
  %v8032 = vadd.f32 0.0, %v8031
  %v8033 = vpop.f32.mrb[0].mxu0
  %8034 = vmatprep.mubr.f32.mxu0 0.0
  %8035 = vmatmul.mubr.f32.gmra.mrb[0].mxu0 %v7753
  %v8036 = vpop.f32.mrb[0].mxu0
  %v8037 = vadd.f32 0.0, %v8036
  %v8038 = vpop.f32.mrb[0].mxu0
  %8039 = vmatprep.mubr.f32.mxu0 0.0
  %8040 = vmatmul.mubr.f32.gmra.mrb[0].mxu0 %v7754
  %v8041 = vpop.f32.mrb[0].mxu0
  %v8042 = vadd.f32 0.0, %v8041
  %v8043 = vpop.f32.mrb[0].mxu0
  %8044 = vmatprep.mubr.f32.mxu0 0.0
  %8045 = vmatmul.mubr.f32.gmra.mrb[0].mxu0 %v7755
  %v8046 = vpop.f32.mrb[0].mxu0
  %v8047 = vadd.f32 0.0, %v8046
  %v8048 = vpop.f32.mrb[0].mxu0
  %8049 = vmatprep.mubr.f32.mxu0 0.0
  %8050 = vmatmul.mubr.f32.gmra.mrb[0].mxu0 %v7756
  %v8051 = vpop.f32.mrb[0].mxu0
  %v8052 = vadd.f32 0.0, %v8051
  %v8053 = vpop.f32.mrb[0].mxu0
  %8054 = vmatprep.mubr.f32.mxu0 0.0
  %8055 = vmatmul.mubr.f32.gmra.mrb[0].mxu0 %v7757
  %v8056 = vpop.f32.mrb[0].mxu0
  %v8057 = vadd.f32 0.0, %v8056
  %v8058 = vpop.f32.mrb[0].mxu0
  %8059 = vmatprep.mubr.f32.mxu0 0.0
  %8060 = vmatmul.mubr.f32.gmra.mrb[0].mxu0 %v7758
  %v8061 = vpop.f32.mrb[0].mxu0
  %v8062 = vadd.f32 0.0, %v8061
  %v8063 = vpop.f32.mrb[0].mxu0
  %8064 = vmatprep.mubr.f32.mxu0 0.0
  %8065 = vmatmul.mubr.f32.gmra.mrb[0].mxu0 %v7759
  %v8066 = vpop.f32.mrb[0].mxu0
  %v8067 = vadd.f32 0.0, %v8066
  %v8068 = vpop.f32.mrb[0].mxu0
  %8069 = vmatprep.mubr.f32.mxu0 0.0
  %8070 = vmatmul.mubr.f32.gmra.mrb[0].mxu0 %v7760
  %v8071 = vpop.f32.mrb[0].mxu0
  %v8072 = vadd.f32 0.0, %v8071
  %v8073 = vpop.f32.mrb[0].mxu0
  %8074 = vmatprep.mubr.f32.mxu0 0.0
  %8075 = vmatmul.mubr.f32.gmra.mrb[0].mxu0 %v7761
  %v8076 = vpop.f32.mrb[0].mxu0
  %v8077 = vadd.f32 0.0, %v8076
  %v8078 = vpop.f32.mrb[0].mxu0
  %8079 = vmatprep.mubr.f32.mxu0 0.0
  %8080 = vmatmul.mubr.f32.gmra.mrb[0].mxu0 %v7762
  %v8081 = vpop.f32.mrb[0].mxu0
  %v8082 = vadd.f32 0.0, %v8081
  %v8083 = vpop.f32.mrb[0].mxu0
  %8084 = vmatprep.mubr.f32.mxu0 0.0
  %8085 = vmatmul.mubr.f32.gmra.mrb[0].mxu0 %v7763
  %v8086 = vpop.f32.mrb[0].mxu0
  %v8087 = vadd.f32 0.0, %v8086
  %v8088 = vpop.f32.mrb[0].mxu0
  %8089 = vmatprep.mubr.f32.mxu0 0.0
  %8090 = vmatmul.mubr.f32.gmra.mrb[0].mxu0 %v7764
  %v8091 = vpop.f32.mrb[0].mxu0
  %v8092 = vadd.f32 0.0, %v8091
  %v8093 = vpop.f32.mrb[0].mxu0
  %8094 = vmatprep.mubr.f32.mxu0 0.0
  %8095 = vmatmul.mubr.f32.gmra.mrb[0].mxu0 %v7765
  %v8096 = vpop.f32.mrb[0].mxu0
  %v8097 = vadd.f32 0.0, %v8096
  %v8098 = vpop.f32.mrb[0].mxu0
  %8099 = vmatprep.mubr.f32.mxu0 0.0
  %8100 = vmatmul.mubr.f32.gmra.mrb[0].mxu0 %v7766
  %v8101 = vpop.f32.mrb[0].mxu0
  %v8102 = vadd.f32 0.0, %v8101
  %v8103 = vpop.f32.mrb[0].mxu0
  %8104 = vmatprep.mubr.f32.mxu0 0.0
  %8105 = vmatmul.mubr.f32.gmra.mrb[0].mxu0 %v7767
  %v8106 = vpop.f32.mrb[0].mxu0
  %v8107 = vadd.f32 0.0, %v8106
  %v8108 = vpop.f32.mrb[0].mxu0
  %8109 = vmatprep.mubr.f32.mxu0 0.0
  %8110 = vmatmul.mubr.f32.gmra.mrb[0].mxu0 %v7768
  %v8111 = vpop.f32.mrb[0].mxu0
  %v8112 = vadd.f32 0.0, %v8111
  %v8113 = vpop.f32.mrb[0].mxu0
  %8114 = vmatprep.mubr.f32.mxu0 0.0
  %8115 = vmatmul.mubr.f32.gmra.mrb[0].mxu0 %v7769
  %v8116 = vpop.f32.mrb[0].mxu0
  %v8117 = vadd.f32 0.0, %v8116
  %v8118 = vpop.f32.mrb[0].mxu0
  %8119 = vmatprep.mubr.f32.mxu0 0.0
  %8120 = vmatmul.mubr.f32.gmra.mrb[0].mxu0 %v7770
  %v8121 = vpop.f32.mrb[0].mxu0
  %v8122 = vadd.f32 0.0, %v8121
  %v8123 = vpop.f32.mrb[0].mxu0
  %8124 = vmatprep.mubr.f32.mxu0 0.0
  %8125 = vmatmul.mubr.f32.gmra.mrb[0].mxu0 %v7771
  %v8126 = vpop.f32.mrb[0].mxu0
  %v8127 = vadd.f32 0.0, %v8126
  %v8128 = vpop.f32.mrb[0].mxu0
  %8129 = vmatprep.mubr.f32.mxu0 0.0
  %8130 = vmatmul.mubr.f32.gmra.mrb[0].mxu0 %v7772
  %v8131 = vpop.f32.mrb[0].mxu0
  %v8132 = vadd.f32 0.0, %v8131
  %v8133 = vpop.f32.mrb[0].mxu0
  %8134 = vmatprep.mubr.f32.mxu0 0.0
  %8135 = vmatmul.mubr.f32.gmra.mrb[0].mxu0 %v7773
  %v8136 = vpop.f32.mrb[0].mxu0
  %v8137 = vadd.f32 0.0, %v8136
  %v8138 = vpop.f32.mrb[0].mxu0
  %8139 = vmatprep.mubr.f32.mxu0 0.0
  %8140 = vmatmul.mubr.f32.gmra.mrb[0].mxu0 %v7774
  %v8141 = vpop.f32.mrb[0].mxu0
  %v8142 = vadd.f32 0.0, %v8141
  %v8143 = vpop.f32.mrb[0].mxu0
  %8144 = vmatprep.mubr.f32.mxu0 0.0
  %8145 = vmatmul.mubr.f32.gmra.mrb[0].mxu0 %v7775
  %v8146 = vpop.f32.mrb[0].mxu0
  %v8147 = vadd.f32 0.0, %v8146
  %v8148 = vpop.f32.mrb[0].mxu0
  %8149 = vmatprep.mubr.f32.mxu0 0.0
  %8150 = vmatmul.mubr.f32.gmra.mrb[0].mxu0 %v7776
  %v8151 = vpop.f32.mrb[0].mxu0
  %v8152 = vadd.f32 0.0, %v8151
  %v8153 = vpop.f32.mrb[0].mxu0
  %8154 = vmatprep.mubr.f32.mxu0 0.0
  %8155 = vmatmul.mubr.f32.gmra.mrb[0].mxu0 %v7777
  %v8156 = vpop.f32.mrb[0].mxu0
  %v8157 = vadd.f32 0.0, %v8156
  %v8158 = vpop.f32.mrb[0].mxu0
  %8159 = vmatprep.mubr.f32.mxu0 0.0
  %8160 = vmatmul.mubr.f32.gmra.mrb[0].mxu0 %v7778
  %v8161 = vpop.f32.mrb[0].mxu0
  %v8162 = vadd.f32 0.0, %v8161
  %v8163 = vpop.f32.mrb[0].mxu0
  %8164 = vmatprep.mubr.f32.mxu0 0.0
  %8165 = vmatmul.mubr.f32.gmra.mrb[0].mxu0 %v7779
  %v8166 = vpop.f32.mrb[0].mxu0
  %v8167 = vadd.f32 0.0, %v8166
  %v8168 = vpop.f32.mrb[0].mxu0
  %8169 = vmatprep.mubr.f32.mxu0 0.0
  %8170 = vmatmul.mubr.f32.gmra.mrb[0].mxu0 %v7780
  %v8171 = vpop.f32.mrb[0].mxu0
  %v8172 = vadd.f32 0.0, %v8171
  %v8173 = vpop.f32.mrb[0].mxu0
  %8174 = vmatprep.mubr.f32.mxu0 0.0
  %8175 = vmatmul.mubr.f32.gmra.mrb[0].mxu0 %v7781
  %v8176 = vpop.f32.mrb[0].mxu0
  %v8177 = vadd.f32 0.0, %v8176
  %v8178 = vpop.f32.mrb[0].mxu0
  %8179 = vmatprep.mubr.f32.mxu0 0.0
  %8180 = vmatmul.mubr.f32.gmra.mrb[0].mxu0 %v7782
  %v8181 = vpop.f32.mrb[0].mxu0
  %v8182 = vadd.f32 0.0, %v8181
  %v8183 = vpop.f32.mrb[0].mxu0
  %8184 = vdwg.mxu0
  %v8185 = vadd.f32 %v7654, %v7867
  %v8186 = vadd.f32 %v7655, %v7872
  %v8187 = vadd.f32 %v7656, %v7877
  %v8188 = vadd.f32 %v7657, %v7882
  %v8189 = vadd.f32 %v7658, %v7887
  %v8190 = vadd.f32 %v7659, %v7892
  %v8191 = vadd.f32 %v7660, %v7897
  %v8192 = vadd.f32 %v7661, %v7902
  %v8193 = vadd.f32 %v7662, %v7907
  %v8194 = vadd.f32 %v7663, %v7912
  %v8195 = vadd.f32 %v7664, %v7917
  %v8196 = vadd.f32 %v7665, %v7922
  %v8197 = vadd.f32 %v7666, %v7927
  %v8198 = vadd.f32 %v7667, %v7932
  %v8199 = vadd.f32 %v7668, %v7937
  %v8200 = vadd.f32 %v7669, %v7942
  %v8201 = vadd.f32 %v7670, %v7947
  %v8202 = vadd.f32 %v7671, %v7952
  %v8203 = vadd.f32 %v7672, %v7957
  %v8204 = vadd.f32 %v7673, %v7962
  %v8205 = vadd.f32 %v7674, %v7967
  %v8206 = vadd.f32 %v7675, %v7972
  %v8207 = vadd.f32 %v7676, %v7977
  %v8208 = vadd.f32 %v7677, %v7982
  %v8209 = vadd.f32 %v7678, %v7987
  %v8210 = vadd.f32 %v7679, %v7992
  %v8211 = vadd.f32 %v7680, %v7997
  %v8212 = vadd.f32 %v7681, %v8002
  %v8213 = vadd.f32 %v7682, %v8007
  %v8214 = vadd.f32 %v7683, %v8012
  %v8215 = vadd.f32 %v7684, %v8017
  %v8216 = vadd.f32 %v7685, %v8022
  %v8217 = vadd.f32 %v7686, %v8027
  %v8218 = vadd.f32 %v7687, %v8032
  %v8219 = vadd.f32 %v7688, %v8037
  %v8220 = vadd.f32 %v7689, %v8042
  %v8221 = vadd.f32 %v7690, %v8047
  %v8222 = vadd.f32 %v7691, %v8052
  %v8223 = vadd.f32 %v7692, %v8057
  %v8224 = vadd.f32 %v7693, %v8062
  %v8225 = vadd.f32 %v7694, %v8067
  %v8226 = vadd.f32 %v7695, %v8072
  %v8227 = vadd.f32 %v7696, %v8077
  %v8228 = vadd.f32 %v7697, %v8082
  %v8229 = vadd.f32 %v7698, %v8087
  %v8230 = vadd.f32 %v7699, %v8092
  %v8231 = vadd.f32 %v7700, %v8097
  %v8232 = vadd.f32 %v7701, %v8102
  %v8233 = vadd.f32 %v7702, %v8107
  %v8234 = vadd.f32 %v7703, %v8112
  %v8235 = vadd.f32 %v7704, %v8117
  %v8236 = vadd.f32 %v7705, %v8122
  %v8237 = vadd.f32 %v7706, %v8127
  %v8238 = vadd.f32 %v7707, %v8132
  %v8239 = vadd.f32 %v7708, %v8137
  %v8240 = vadd.f32 %v7709, %v8142
  %v8241 = vadd.f32 %v7710, %v8147
  %v8242 = vadd.f32 %v7711, %v8152
  %v8243 = vadd.f32 %v7712, %v8157
  %v8244 = vadd.f32 %v7713, %v8162
  %v8245 = vadd.f32 %v7714, %v8167
  %v8246 = vadd.f32 %v7715, %v8172
  %v8247 = vadd.f32 %v7716, %v8177
  %v8248 = vadd.f32 %v7717, %v8182
  %v8249 = vld [vmem:[%s7718 + $0x1] sm:$0xff]
  %v8250 = vld [vmem:[%s7718 + $0x9] sm:$0xff]
  %v8251 = vld [vmem:[%s7718 + $0x19] sm:$0xff]
  %v8252 = vld [vmem:[%s7718 + $0x21] sm:$0xff]
  %v8253 = vld [vmem:[%s7718 + $0x31] sm:$0xff]
  %v8254 = vld [vmem:[%s7718 + $0x39] sm:$0xff]
  %v8255 = vld [vmem:[%s7718 + $0x49] sm:$0xff]
  %v8256 = vld [vmem:[%s7718 + $0x51] sm:$0xff]
  %v8257 = vld [vmem:[%s7718 + $0x61] sm:$0xff]
  %v8258 = vld [vmem:[%s7718 + $0x69] sm:$0xff]
  %v8259 = vld [vmem:[%s7718 + $0x79] sm:$0xff]
  %v8260 = vld [vmem:[%s7718 + $0x81] sm:$0xff]
  %v8261 = vld [vmem:[%s7718 + $0x91] sm:$0xff]
  %v8262 = vld [vmem:[%s7718 + $0x99] sm:$0xff]
  %v8263 = vld [vmem:[%s7718 + $0xa9] sm:$0xff]
  %v8264 = vld [vmem:[%s7718 + $0xb1] sm:$0xff]
  %v8265 = vld [vmem:[%s7718 + $0xc1] sm:$0xff]
  %v8266 = vld [vmem:[%s7718 + $0xc9] sm:$0xff]
  %v8267 = vld [vmem:[%s7718 + $0xd9] sm:$0xff]
  %v8268 = vld [vmem:[%s7718 + $0xe1] sm:$0xff]
  %v8269 = vld [vmem:[%s7718 + $0xf1] sm:$0xff]
  %v8270 = vld [vmem:[%s7718 + $0xf9] sm:$0xff]
  %v8271 = vld [vmem:[%s7718 + $0x109] sm:$0xff]
  %v8272 = vld [vmem:[%s7718 + $0x111] sm:$0xff]
  %v8273 = vld [vmem:[%s7718 + $0x121] sm:$0xff]
  %v8274 = vld [vmem:[%s7718 + $0x129] sm:$0xff]
  %v8275 = vld [vmem:[%s7718 + $0x139] sm:$0xff]
  %v8276 = vld [vmem:[%s7718 + $0x141] sm:$0xff]
  %v8277 = vld [vmem:[%s7718 + $0x151] sm:$0xff]
  %v8278 = vld [vmem:[%s7718 + $0x159] sm:$0xff]
  %v8279 = vld [vmem:[%s7718 + $0x169] sm:$0xff]
  %v8280 = vld [vmem:[%s7718 + $0x171] sm:$0xff]
  %v8281 = vld [vmem:[%s7718 + $0x1b1] sm:$0xff]
  %v8282 = vld [vmem:[%s7718 + $0x1b9] sm:$0xff]
  %v8283 = vld [vmem:[%s7718 + $0x1c9] sm:$0xff]
  %v8284 = vld [vmem:[%s7718 + $0x1d1] sm:$0xff]
  %v8285 = vld [vmem:[%s7718 + $0x1e1] sm:$0xff]
  %v8286 = vld [vmem:[%s7718 + $0x1e9] sm:$0xff]
  %v8287 = vld [vmem:[%s7718 + $0x1f9] sm:$0xff]
  %v8288 = vld [vmem:[%s7718 + $0x201] sm:$0xff]
  %v8289 = vld [vmem:[%s7718 + $0x211] sm:$0xff]
  %v8290 = vld [vmem:[%s7718 + $0x219] sm:$0xff]
  %v8291 = vld [vmem:[%s7718 + $0x229] sm:$0xff]
  %v8292 = vld [vmem:[%s7718 + $0x231] sm:$0xff]
  %v8293 = vld [vmem:[%s7718 + $0x241] sm:$0xff]
  %v8294 = vld [vmem:[%s7718 + $0x249] sm:$0xff]
  %v8295 = vld [vmem:[%s7718 + $0x259] sm:$0xff]
  %v8296 = vld [vmem:[%s7718 + $0x261] sm:$0xff]
  %v8297 = vld [vmem:[%s7718 + $0x271] sm:$0xff]
  %v8298 = vld [vmem:[%s7718 + $0x279] sm:$0xff]
  %v8299 = vld [vmem:[%s7718 + $0x289] sm:$0xff]
  %v8300 = vld [vmem:[%s7718 + $0x291] sm:$0xff]
  %v8301 = vld [vmem:[%s7718 + $0x2a1] sm:$0xff]
  %v8302 = vld [vmem:[%s7718 + $0x2a9] sm:$0xff]
  %v8303 = vld [vmem:[%s7718 + $0x2b9] sm:$0xff]
  %v8304 = vld [vmem:[%s7718 + $0x2c1] sm:$0xff]
  %v8305 = vld [vmem:[%s7718 + $0x2d1] sm:$0xff]
  %v8306 = vld [vmem:[%s7718 + $0x2d9] sm:$0xff]
  %v8307 = vld [vmem:[%s7718 + $0x2e9] sm:$0xff]
  %v8308 = vld [vmem:[%s7718 + $0x2f1] sm:$0xff]
  %v8309 = vld [vmem:[%s7718 + $0x301] sm:$0xff]
  %v8310 = vld [vmem:[%s7718 + $0x309] sm:$0xff]
  %v8311 = vld [vmem:[%s7718 + $0x319] sm:$0xff]
  %v8312 = vld [vmem:[%s7718 + $0x321] sm:$0xff]
  %s8313 = scalar_lea.vmem %s4, 896
  %v8314 = vld [vmem:[%s8313] sm:$0xff]
  %v8315 = vld [vmem:[%s8313 + $0x8] sm:$0xff]
  %v8316 = vld [vmem:[%s8313 + $0x10] sm:$0xff]
  %v8317 = vld [vmem:[%s8313 + $0x18] sm:$0xff]
  %v8318 = vld [vmem:[%s8313 + $0x20] sm:$0xff]
  %v8319 = vld [vmem:[%s8313 + $0x28] sm:$0xff]
  %v8320 = vld [vmem:[%s8313 + $0x30] sm:$0xff]
  %v8321 = vld [vmem:[%s8313 + $0x38] sm:$0xff]
  %v8322 = vld [vmem:[%s8313 + $0x40] sm:$0xff]
  %v8323 = vld [vmem:[%s8313 + $0x48] sm:$0xff]
  %v8324 = vld [vmem:[%s8313 + $0x50] sm:$0xff]
  %v8325 = vld [vmem:[%s8313 + $0x58] sm:$0xff]
  %v8326 = vld [vmem:[%s8313 + $0x60] sm:$0xff]
  %v8327 = vld [vmem:[%s8313 + $0x68] sm:$0xff]
  %v8328 = vld [vmem:[%s8313 + $0x70] sm:$0xff]
  %v8329 = vld [vmem:[%s8313 + $0x78] sm:$0xff]
  %8330 = vmatprep.subr.mxu0 0.0
  %8331 = vmatpush1.msra.mxu0 %v8314
  %8332 = vmatprep.subr.mxu0 0.0
  %8333 = vmatpush1.msra.mxu0 %v8315
  %8334 = vmatprep.subr.mxu0 0.0
  %8335 = vmatpush1.msra.mxu0 %v8316
  %8336 = vmatprep.subr.mxu0 0.0
  %8337 = vmatpush1.msra.mxu0 %v8317
  %8338 = vmatprep.subr.mxu0 0.0
  %8339 = vmatpush1.msra.mxu0 %v8318
  %8340 = vmatprep.subr.mxu0 0.0
  %8341 = vmatpush1.msra.mxu0 %v8319
  %8342 = vmatprep.subr.mxu0 0.0
  %8343 = vmatpush1.msra.mxu0 %v8320
  %8344 = vmatprep.subr.mxu0 0.0
  %8345 = vmatpush1.msra.mxu0 %v8321
  %8346 = vmatprep.subr.mxu0 0.0
  %8347 = vmatpush1.msra.mxu0 %v8322
  %8348 = vmatprep.subr.mxu0 0.0
  %8349 = vmatpush1.msra.mxu0 %v8323
  %8350 = vmatprep.subr.mxu0 0.0
  %8351 = vmatpush1.msra.mxu0 %v8324
  %8352 = vmatprep.subr.mxu0 0.0
  %8353 = vmatpush1.msra.mxu0 %v8325
  %8354 = vmatprep.subr.mxu0 0.0
  %8355 = vmatpush1.msra.mxu0 %v8326
  %8356 = vmatprep.subr.mxu0 0.0
  %8357 = vmatpush1.msra.mxu0 %v8327
  %8358 = vmatprep.subr.mxu0 0.0
  %8359 = vmatpush1.msra.mxu0 %v8328
  %8360 = vmatprep.subr.mxu0 0.0
  %8361 = vmatpush1.msra.mxu0 %v8329
  %8362 = vmatprep.subr.mxu0 0.0
  %8363 = vmatpush1.msra.mxu0 0.0
  %8364 = vmatprep.subr.mxu0 0.0
  %8365 = vmatpush1.msra.mxu0 0.0
  %8366 = vmatprep.subr.mxu0 0.0
  %8367 = vmatpush1.msra.mxu0 0.0
  %8368 = vmatprep.subr.mxu0 0.0
  %8369 = vmatpush1.msra.mxu0 0.0
  %8370 = vmatprep.subr.mxu0 0.0
  %8371 = vmatpush1.msra.mxu0 0.0
  %8372 = vmatprep.subr.mxu0 0.0
  %8373 = vmatpush1.msra.mxu0 0.0
  %8374 = vmatprep.subr.mxu0 0.0
  %8375 = vmatpush1.msra.mxu0 0.0
  %8376 = vmatprep.subr.mxu0 0.0
  %8377 = vmatpush1.msra.mxu0 0.0
  %8378 = vmatprep.subr.mxu0 0.0
  %8379 = vmatpush1.msra.mxu0 0.0
  %8380 = vmatprep.subr.mxu0 0.0
  %8381 = vmatpush1.msra.mxu0 0.0
  %8382 = vmatprep.subr.mxu0 0.0
  %8383 = vmatpush1.msra.mxu0 0.0
  %8384 = vmatprep.subr.mxu0 0.0
  %8385 = vmatpush1.msra.mxu0 0.0
  %8386 = vmatprep.subr.mxu0 0.0
  %8387 = vmatpush1.msra.mxu0 0.0
  %8388 = vmatprep.subr.mxu0 0.0
  %8389 = vmatpush1.msra.mxu0 0.0
  %8390 = vmatprep.subr.mxu0 0.0
  %8391 = vmatpush1.msra.mxu0 0.0
  %8392 = vmatprep.subr.mxu0 0.0
  %8393 = vmatpush1.msra.mxu0 0.0
  %8394 = vmatprep.mubr.f32.mxu0 0.0
  %8395 = vmatmul.mubr.f32.gmra.mrb[0].mxu0 %v8249
  %v8396 = vpop.f32.mrb[0].mxu0
  %v8397 = vadd.f32 0.0, %v8396
  %v8398 = vpop.f32.mrb[0].mxu0
  %8399 = vmatprep.mubr.f32.mxu0 0.0
  %8400 = vmatmul.mubr.f32.gmra.mrb[0].mxu0 %v8250
  %v8401 = vpop.f32.mrb[0].mxu0
  %v8402 = vadd.f32 0.0, %v8401
  %v8403 = vpop.f32.mrb[0].mxu0
  %8404 = vmatprep.mubr.f32.mxu0 0.0
  %8405 = vmatmul.mubr.f32.gmra.mrb[0].mxu0 %v8251
  %v8406 = vpop.f32.mrb[0].mxu0
  %v8407 = vadd.f32 0.0, %v8406
  %v8408 = vpop.f32.mrb[0].mxu0
  %8409 = vmatprep.mubr.f32.mxu0 0.0
  %8410 = vmatmul.mubr.f32.gmra.mrb[0].mxu0 %v8252
  %v8411 = vpop.f32.mrb[0].mxu0
  %v8412 = vadd.f32 0.0, %v8411
  %v8413 = vpop.f32.mrb[0].mxu0
  %8414 = vmatprep.mubr.f32.mxu0 0.0
  %8415 = vmatmul.mubr.f32.gmra.mrb[0].mxu0 %v8253
  %v8416 = vpop.f32.mrb[0].mxu0
  %v8417 = vadd.f32 0.0, %v8416
  %v8418 = vpop.f32.mrb[0].mxu0
  %8419 = vmatprep.mubr.f32.mxu0 0.0
  %8420 = vmatmul.mubr.f32.gmra.mrb[0].mxu0 %v8254
  %v8421 = vpop.f32.mrb[0].mxu0
  %v8422 = vadd.f32 0.0, %v8421
  %v8423 = vpop.f32.mrb[0].mxu0
  %8424 = vmatprep.mubr.f32.mxu0 0.0
  %8425 = vmatmul.mubr.f32.gmra.mrb[0].mxu0 %v8255
  %v8426 = vpop.f32.mrb[0].mxu0
  %v8427 = vadd.f32 0.0, %v8426
  %v8428 = vpop.f32.mrb[0].mxu0
  %8429 = vmatprep.mubr.f32.mxu0 0.0
  %8430 = vmatmul.mubr.f32.gmra.mrb[0].mxu0 %v8256
  %v8431 = vpop.f32.mrb[0].mxu0
  %v8432 = vadd.f32 0.0, %v8431
  %v8433 = vpop.f32.mrb[0].mxu0
  %8434 = vmatprep.mubr.f32.mxu0 0.0
  %8435 = vmatmul.mubr.f32.gmra.mrb[0].mxu0 %v8257
  %v8436 = vpop.f32.mrb[0].mxu0
  %v8437 = vadd.f32 0.0, %v8436
  %v8438 = vpop.f32.mrb[0].mxu0
  %8439 = vmatprep.mubr.f32.mxu0 0.0
  %8440 = vmatmul.mubr.f32.gmra.mrb[0].mxu0 %v8258
  %v8441 = vpop.f32.mrb[0].mxu0
  %v8442 = vadd.f32 0.0, %v8441
  %v8443 = vpop.f32.mrb[0].mxu0
  %8444 = vmatprep.mubr.f32.mxu0 0.0
  %8445 = vmatmul.mubr.f32.gmra.mrb[0].mxu0 %v8259
  %v8446 = vpop.f32.mrb[0].mxu0
  %v8447 = vadd.f32 0.0, %v8446
  %v8448 = vpop.f32.mrb[0].mxu0
  %8449 = vmatprep.mubr.f32.mxu0 0.0
  %8450 = vmatmul.mubr.f32.gmra.mrb[0].mxu0 %v8260
  %v8451 = vpop.f32.mrb[0].mxu0
  %v8452 = vadd.f32 0.0, %v8451
  %v8453 = vpop.f32.mrb[0].mxu0
  %8454 = vmatprep.mubr.f32.mxu0 0.0
  %8455 = vmatmul.mubr.f32.gmra.mrb[0].mxu0 %v8261
  %v8456 = vpop.f32.mrb[0].mxu0
  %v8457 = vadd.f32 0.0, %v8456
  %v8458 = vpop.f32.mrb[0].mxu0
  %8459 = vmatprep.mubr.f32.mxu0 0.0
  %8460 = vmatmul.mubr.f32.gmra.mrb[0].mxu0 %v8262
  %v8461 = vpop.f32.mrb[0].mxu0
  %v8462 = vadd.f32 0.0, %v8461
  %v8463 = vpop.f32.mrb[0].mxu0
  %8464 = vmatprep.mubr.f32.mxu0 0.0
  %8465 = vmatmul.mubr.f32.gmra.mrb[0].mxu0 %v8263
  %v8466 = vpop.f32.mrb[0].mxu0
  %v8467 = vadd.f32 0.0, %v8466
  %v8468 = vpop.f32.mrb[0].mxu0
  %8469 = vmatprep.mubr.f32.mxu0 0.0
  %8470 = vmatmul.mubr.f32.gmra.mrb[0].mxu0 %v8264
  %v8471 = vpop.f32.mrb[0].mxu0
  %v8472 = vadd.f32 0.0, %v8471
  %v8473 = vpop.f32.mrb[0].mxu0
  %8474 = vmatprep.mubr.f32.mxu0 0.0
  %8475 = vmatmul.mubr.f32.gmra.mrb[0].mxu0 %v8265
  %v8476 = vpop.f32.mrb[0].mxu0
  %v8477 = vadd.f32 0.0, %v8476
  %v8478 = vpop.f32.mrb[0].mxu0
  %8479 = vmatprep.mubr.f32.mxu0 0.0
  %8480 = vmatmul.mubr.f32.gmra.mrb[0].mxu0 %v8266
  %v8481 = vpop.f32.mrb[0].mxu0
  %v8482 = vadd.f32 0.0, %v8481
  %v8483 = vpop.f32.mrb[0].mxu0
  %8484 = vmatprep.mubr.f32.mxu0 0.0
  %8485 = vmatmul.mubr.f32.gmra.mrb[0].mxu0 %v8267
  %v8486 = vpop.f32.mrb[0].mxu0
  %v8487 = vadd.f32 0.0, %v8486
  %v8488 = vpop.f32.mrb[0].mxu0
  %8489 = vmatprep.mubr.f32.mxu0 0.0
  %8490 = vmatmul.mubr.f32.gmra.mrb[0].mxu0 %v8268
  %v8491 = vpop.f32.mrb[0].mxu0
  %v8492 = vadd.f32 0.0, %v8491
  %v8493 = vpop.f32.mrb[0].mxu0
  %8494 = vmatprep.mubr.f32.mxu0 0.0
  %8495 = vmatmul.mubr.f32.gmra.mrb[0].mxu0 %v8269
  %v8496 = vpop.f32.mrb[0].mxu0
  %v8497 = vadd.f32 0.0, %v8496
  %v8498 = vpop.f32.mrb[0].mxu0
  %8499 = vmatprep.mubr.f32.mxu0 0.0
  %8500 = vmatmul.mubr.f32.gmra.mrb[0].mxu0 %v8270
  %v8501 = vpop.f32.mrb[0].mxu0
  %v8502 = vadd.f32 0.0, %v8501
  %v8503 = vpop.f32.mrb[0].mxu0
  %8504 = vmatprep.mubr.f32.mxu0 0.0
  %8505 = vmatmul.mubr.f32.gmra.mrb[0].mxu0 %v8271
  %v8506 = vpop.f32.mrb[0].mxu0
  %v8507 = vadd.f32 0.0, %v8506
  %v8508 = vpop.f32.mrb[0].mxu0
  %8509 = vmatprep.mubr.f32.mxu0 0.0
  %8510 = vmatmul.mubr.f32.gmra.mrb[0].mxu0 %v8272
  %v8511 = vpop.f32.mrb[0].mxu0
  %v8512 = vadd.f32 0.0, %v8511
  %v8513 = vpop.f32.mrb[0].mxu0
  %8514 = vmatprep.mubr.f32.mxu0 0.0
  %8515 = vmatmul.mubr.f32.gmra.mrb[0].mxu0 %v8273
  %v8516 = vpop.f32.mrb[0].mxu0
  %v8517 = vadd.f32 0.0, %v8516
  %v8518 = vpop.f32.mrb[0].mxu0
  %8519 = vmatprep.mubr.f32.mxu0 0.0
  %8520 = vmatmul.mubr.f32.gmra.mrb[0].mxu0 %v8274
  %v8521 = vpop.f32.mrb[0].mxu0
  %v8522 = vadd.f32 0.0, %v8521
  %v8523 = vpop.f32.mrb[0].mxu0
  %8524 = vmatprep.mubr.f32.mxu0 0.0
  %8525 = vmatmul.mubr.f32.gmra.mrb[0].mxu0 %v8275
  %v8526 = vpop.f32.mrb[0].mxu0
  %v8527 = vadd.f32 0.0, %v8526
  %v8528 = vpop.f32.mrb[0].mxu0
  %8529 = vmatprep.mubr.f32.mxu0 0.0
  %8530 = vmatmul.mubr.f32.gmra.mrb[0].mxu0 %v8276
  %v8531 = vpop.f32.mrb[0].mxu0
  %v8532 = vadd.f32 0.0, %v8531
  %v8533 = vpop.f32.mrb[0].mxu0
  %8534 = vmatprep.mubr.f32.mxu0 0.0
  %8535 = vmatmul.mubr.f32.gmra.mrb[0].mxu0 %v8277
  %v8536 = vpop.f32.mrb[0].mxu0
  %v8537 = vadd.f32 0.0, %v8536
  %v8538 = vpop.f32.mrb[0].mxu0
  %8539 = vmatprep.mubr.f32.mxu0 0.0
  %8540 = vmatmul.mubr.f32.gmra.mrb[0].mxu0 %v8278
  %v8541 = vpop.f32.mrb[0].mxu0
  %v8542 = vadd.f32 0.0, %v8541
  %v8543 = vpop.f32.mrb[0].mxu0
  %8544 = vmatprep.mubr.f32.mxu0 0.0
  %8545 = vmatmul.mubr.f32.gmra.mrb[0].mxu0 %v8279
  %v8546 = vpop.f32.mrb[0].mxu0
  %v8547 = vadd.f32 0.0, %v8546
  %v8548 = vpop.f32.mrb[0].mxu0
  %8549 = vmatprep.mubr.f32.mxu0 0.0
  %8550 = vmatmul.mubr.f32.gmra.mrb[0].mxu0 %v8280
  %v8551 = vpop.f32.mrb[0].mxu0
  %v8552 = vadd.f32 0.0, %v8551
  %v8553 = vpop.f32.mrb[0].mxu0
  %8554 = vmatprep.mubr.f32.mxu0 0.0
  %8555 = vmatmul.mubr.f32.gmra.mrb[0].mxu0 %v8281
  %v8556 = vpop.f32.mrb[0].mxu0
  %v8557 = vadd.f32 0.0, %v8556
  %v8558 = vpop.f32.mrb[0].mxu0
  %8559 = vmatprep.mubr.f32.mxu0 0.0
  %8560 = vmatmul.mubr.f32.gmra.mrb[0].mxu0 %v8282
  %v8561 = vpop.f32.mrb[0].mxu0
  %v8562 = vadd.f32 0.0, %v8561
  %v8563 = vpop.f32.mrb[0].mxu0
  %8564 = vmatprep.mubr.f32.mxu0 0.0
  %8565 = vmatmul.mubr.f32.gmra.mrb[0].mxu0 %v8283
  %v8566 = vpop.f32.mrb[0].mxu0
  %v8567 = vadd.f32 0.0, %v8566
  %v8568 = vpop.f32.mrb[0].mxu0
  %8569 = vmatprep.mubr.f32.mxu0 0.0
  %8570 = vmatmul.mubr.f32.gmra.mrb[0].mxu0 %v8284
  %v8571 = vpop.f32.mrb[0].mxu0
  %v8572 = vadd.f32 0.0, %v8571
  %v8573 = vpop.f32.mrb[0].mxu0
  %8574 = vmatprep.mubr.f32.mxu0 0.0
  %8575 = vmatmul.mubr.f32.gmra.mrb[0].mxu0 %v8285
  %v8576 = vpop.f32.mrb[0].mxu0
  %v8577 = vadd.f32 0.0, %v8576
  %v8578 = vpop.f32.mrb[0].mxu0
  %8579 = vmatprep.mubr.f32.mxu0 0.0
  %8580 = vmatmul.mubr.f32.gmra.mrb[0].mxu0 %v8286
  %v8581 = vpop.f32.mrb[0].mxu0
  %v8582 = vadd.f32 0.0, %v8581
  %v8583 = vpop.f32.mrb[0].mxu0
  %8584 = vmatprep.mubr.f32.mxu0 0.0
  %8585 = vmatmul.mubr.f32.gmra.mrb[0].mxu0 %v8287
  %v8586 = vpop.f32.mrb[0].mxu0
  %v8587 = vadd.f32 0.0, %v8586
  %v8588 = vpop.f32.mrb[0].mxu0
  %8589 = vmatprep.mubr.f32.mxu0 0.0
  %8590 = vmatmul.mubr.f32.gmra.mrb[0].mxu0 %v8288
  %v8591 = vpop.f32.mrb[0].mxu0
  %v8592 = vadd.f32 0.0, %v8591
  %v8593 = vpop.f32.mrb[0].mxu0
  %8594 = vmatprep.mubr.f32.mxu0 0.0
  %8595 = vmatmul.mubr.f32.gmra.mrb[0].mxu0 %v8289
  %v8596 = vpop.f32.mrb[0].mxu0
  %v8597 = vadd.f32 0.0, %v8596
  %v8598 = vpop.f32.mrb[0].mxu0
  %8599 = vmatprep.mubr.f32.mxu0 0.0
  %8600 = vmatmul.mubr.f32.gmra.mrb[0].mxu0 %v8290
  %v8601 = vpop.f32.mrb[0].mxu0
  %v8602 = vadd.f32 0.0, %v8601
  %v8603 = vpop.f32.mrb[0].mxu0
  %8604 = vmatprep.mubr.f32.mxu0 0.0
  %8605 = vmatmul.mubr.f32.gmra.mrb[0].mxu0 %v8291
  %v8606 = vpop.f32.mrb[0].mxu0
  %v8607 = vadd.f32 0.0, %v8606
  %v8608 = vpop.f32.mrb[0].mxu0
  %8609 = vmatprep.mubr.f32.mxu0 0.0
  %8610 = vmatmul.mubr.f32.gmra.mrb[0].mxu0 %v8292
  %v8611 = vpop.f32.mrb[0].mxu0
  %v8612 = vadd.f32 0.0, %v8611
  %v8613 = vpop.f32.mrb[0].mxu0
  %8614 = vmatprep.mubr.f32.mxu0 0.0
  %8615 = vmatmul.mubr.f32.gmra.mrb[0].mxu0 %v8293
  %v8616 = vpop.f32.mrb[0].mxu0
  %v8617 = vadd.f32 0.0, %v8616
  %v8618 = vpop.f32.mrb[0].mxu0
  %8619 = vmatprep.mubr.f32.mxu0 0.0
  %8620 = vmatmul.mubr.f32.gmra.mrb[0].mxu0 %v8294
  %v8621 = vpop.f32.mrb[0].mxu0
  %v8622 = vadd.f32 0.0, %v8621
  %v8623 = vpop.f32.mrb[0].mxu0
  %8624 = vmatprep.mubr.f32.mxu0 0.0
  %8625 = vmatmul.mubr.f32.gmra.mrb[0].mxu0 %v8295
  %v8626 = vpop.f32.mrb[0].mxu0
  %v8627 = vadd.f32 0.0, %v8626
  %v8628 = vpop.f32.mrb[0].mxu0
  %8629 = vmatprep.mubr.f32.mxu0 0.0
  %8630 = vmatmul.mubr.f32.gmra.mrb[0].mxu0 %v8296
  %v8631 = vpop.f32.mrb[0].mxu0
  %v8632 = vadd.f32 0.0, %v8631
  %v8633 = vpop.f32.mrb[0].mxu0
  %8634 = vmatprep.mubr.f32.mxu0 0.0
  %8635 = vmatmul.mubr.f32.gmra.mrb[0].mxu0 %v8297
  %v8636 = vpop.f32.mrb[0].mxu0
  %v8637 = vadd.f32 0.0, %v8636
  %v8638 = vpop.f32.mrb[0].mxu0
  %8639 = vmatprep.mubr.f32.mxu0 0.0
  %8640 = vmatmul.mubr.f32.gmra.mrb[0].mxu0 %v8298
  %v8641 = vpop.f32.mrb[0].mxu0
  %v8642 = vadd.f32 0.0, %v8641
  %v8643 = vpop.f32.mrb[0].mxu0
  %8644 = vmatprep.mubr.f32.mxu0 0.0
  %8645 = vmatmul.mubr.f32.gmra.mrb[0].mxu0 %v8299
  %v8646 = vpop.f32.mrb[0].mxu0
  %v8647 = vadd.f32 0.0, %v8646
  %v8648 = vpop.f32.mrb[0].mxu0
  %8649 = vmatprep.mubr.f32.mxu0 0.0
  %8650 = vmatmul.mubr.f32.gmra.mrb[0].mxu0 %v8300
  %v8651 = vpop.f32.mrb[0].mxu0
  %v8652 = vadd.f32 0.0, %v8651
  %v8653 = vpop.f32.mrb[0].mxu0
  %8654 = vmatprep.mubr.f32.mxu0 0.0
  %8655 = vmatmul.mubr.f32.gmra.mrb[0].mxu0 %v8301
  %v8656 = vpop.f32.mrb[0].mxu0
  %v8657 = vadd.f32 0.0, %v8656
  %v8658 = vpop.f32.mrb[0].mxu0
  %8659 = vmatprep.mubr.f32.mxu0 0.0
  %8660 = vmatmul.mubr.f32.gmra.mrb[0].mxu0 %v8302
  %v8661 = vpop.f32.mrb[0].mxu0
  %v8662 = vadd.f32 0.0, %v8661
  %v8663 = vpop.f32.mrb[0].mxu0
  %8664 = vmatprep.mubr.f32.mxu0 0.0
  %8665 = vmatmul.mubr.f32.gmra.mrb[0].mxu0 %v8303
  %v8666 = vpop.f32.mrb[0].mxu0
  %v8667 = vadd.f32 0.0, %v8666
  %v8668 = vpop.f32.mrb[0].mxu0
  %8669 = vmatprep.mubr.f32.mxu0 0.0
  %8670 = vmatmul.mubr.f32.gmra.mrb[0].mxu0 %v8304
  %v8671 = vpop.f32.mrb[0].mxu0
  %v8672 = vadd.f32 0.0, %v8671
  %v8673 = vpop.f32.mrb[0].mxu0
  %8674 = vmatprep.mubr.f32.mxu0 0.0
  %8675 = vmatmul.mubr.f32.gmra.mrb[0].mxu0 %v8305
  %v8676 = vpop.f32.mrb[0].mxu0
  %v8677 = vadd.f32 0.0, %v8676
  %v8678 = vpop.f32.mrb[0].mxu0
  %8679 = vmatprep.mubr.f32.mxu0 0.0
  %8680 = vmatmul.mubr.f32.gmra.mrb[0].mxu0 %v8306
  %v8681 = vpop.f32.mrb[0].mxu0
  %v8682 = vadd.f32 0.0, %v8681
  %v8683 = vpop.f32.mrb[0].mxu0
  %8684 = vmatprep.mubr.f32.mxu0 0.0
  %8685 = vmatmul.mubr.f32.gmra.mrb[0].mxu0 %v8307
  %v8686 = vpop.f32.mrb[0].mxu0
  %v8687 = vadd.f32 0.0, %v8686
  %v8688 = vpop.f32.mrb[0].mxu0
  %8689 = vmatprep.mubr.f32.mxu0 0.0
  %8690 = vmatmul.mubr.f32.gmra.mrb[0].mxu0 %v8308
  %v8691 = vpop.f32.mrb[0].mxu0
  %v8692 = vadd.f32 0.0, %v8691
  %v8693 = vpop.f32.mrb[0].mxu0
  %8694 = vmatprep.mubr.f32.mxu0 0.0
  %8695 = vmatmul.mubr.f32.gmra.mrb[0].mxu0 %v8309
  %v8696 = vpop.f32.mrb[0].mxu0
  %v8697 = vadd.f32 0.0, %v8696
  %v8698 = vpop.f32.mrb[0].mxu0
  %8699 = vmatprep.mubr.f32.mxu0 0.0
  %8700 = vmatmul.mubr.f32.gmra.mrb[0].mxu0 %v8310
  %v8701 = vpop.f32.mrb[0].mxu0
  %v8702 = vadd.f32 0.0, %v8701
  %v8703 = vpop.f32.mrb[0].mxu0
  %8704 = vmatprep.mubr.f32.mxu0 0.0
  %8705 = vmatmul.mubr.f32.gmra.mrb[0].mxu0 %v8311
  %v8706 = vpop.f32.mrb[0].mxu0
  %v8707 = vadd.f32 0.0, %v8706
  %v8708 = vpop.f32.mrb[0].mxu0
  %8709 = vmatprep.mubr.f32.mxu0 0.0
  %8710 = vmatmul.mubr.f32.gmra.mrb[0].mxu0 %v8312
  %v8711 = vpop.f32.mrb[0].mxu0
  %v8712 = vadd.f32 0.0, %v8711
  %v8713 = vpop.f32.mrb[0].mxu0
  %8714 = vdwg.mxu0
  %v8715 = vadd.f32 %v8185, %v8397
  %v8716 = vadd.f32 %v8186, %v8402
  %v8717 = vadd.f32 %v8187, %v8407
  %v8718 = vadd.f32 %v8188, %v8412
  %v8719 = vadd.f32 %v8189, %v8417
  %v8720 = vadd.f32 %v8190, %v8422
  %v8721 = vadd.f32 %v8191, %v8427
  %v8722 = vadd.f32 %v8192, %v8432
  %v8723 = vadd.f32 %v8193, %v8437
  %v8724 = vadd.f32 %v8194, %v8442
  %v8725 = vadd.f32 %v8195, %v8447
  %v8726 = vadd.f32 %v8196, %v8452
  %v8727 = vadd.f32 %v8197, %v8457
  %v8728 = vadd.f32 %v8198, %v8462
  %v8729 = vadd.f32 %v8199, %v8467
  %v8730 = vadd.f32 %v8200, %v8472
  %v8731 = vadd.f32 %v8201, %v8477
  %v8732 = vadd.f32 %v8202, %v8482
  %v8733 = vadd.f32 %v8203, %v8487
  %v8734 = vadd.f32 %v8204, %v8492
  %v8735 = vadd.f32 %v8205, %v8497
  %v8736 = vadd.f32 %v8206, %v8502
  %v8737 = vadd.f32 %v8207, %v8507
  %v8738 = vadd.f32 %v8208, %v8512
  %v8739 = vadd.f32 %v8209, %v8517
  %v8740 = vadd.f32 %v8210, %v8522
  %v8741 = vadd.f32 %v8211, %v8527
  %v8742 = vadd.f32 %v8212, %v8532
  %v8743 = vadd.f32 %v8213, %v8537
  %v8744 = vadd.f32 %v8214, %v8542
  %v8745 = vadd.f32 %v8215, %v8547
  %v8746 = vadd.f32 %v8216, %v8552
  %v8747 = vadd.f32 %v8217, %v8557
  %v8748 = vadd.f32 %v8218, %v8562
  %v8749 = vadd.f32 %v8219, %v8567
  %v8750 = vadd.f32 %v8220, %v8572
  %v8751 = vadd.f32 %v8221, %v8577
  %v8752 = vadd.f32 %v8222, %v8582
  %v8753 = vadd.f32 %v8223, %v8587
  %v8754 = vadd.f32 %v8224, %v8592
  %v8755 = vadd.f32 %v8225, %v8597
  %v8756 = vadd.f32 %v8226, %v8602
  %v8757 = vadd.f32 %v8227, %v8607
  %v8758 = vadd.f32 %v8228, %v8612
  %v8759 = vadd.f32 %v8229, %v8617
  %v8760 = vadd.f32 %v8230, %v8622
  %v8761 = vadd.f32 %v8231, %v8627
  %v8762 = vadd.f32 %v8232, %v8632
  %v8763 = vadd.f32 %v8233, %v8637
  %v8764 = vadd.f32 %v8234, %v8642
  %v8765 = vadd.f32 %v8235, %v8647
  %v8766 = vadd.f32 %v8236, %v8652
  %v8767 = vadd.f32 %v8237, %v8657
  %v8768 = vadd.f32 %v8238, %v8662
  %v8769 = vadd.f32 %v8239, %v8667
  %v8770 = vadd.f32 %v8240, %v8672
  %v8771 = vadd.f32 %v8241, %v8677
  %v8772 = vadd.f32 %v8242, %v8682
  %v8773 = vadd.f32 %v8243, %v8687
  %v8774 = vadd.f32 %v8244, %v8692
  %v8775 = vadd.f32 %v8245, %v8697
  %v8776 = vadd.f32 %v8246, %v8702
  %v8777 = vadd.f32 %v8247, %v8707
  %v8778 = vadd.f32 %v8248, %v8712
  %v8779 = vld [vmem:[%s7718 + $0x2] sm:$0xff]
  %v8780 = vld [vmem:[%s7718 + $0xa] sm:$0xff]
  %v8781 = vld [vmem:[%s7718 + $0x1a] sm:$0xff]
  %v8782 = vld [vmem:[%s7718 + $0x22] sm:$0xff]
  %v8783 = vld [vmem:[%s7718 + $0x32] sm:$0xff]
  %v8784 = vld [vmem:[%s7718 + $0x3a] sm:$0xff]
  %v8785 = vld [vmem:[%s7718 + $0x4a] sm:$0xff]
  %v8786 = vld [vmem:[%s7718 + $0x52] sm:$0xff]
  %v8787 = vld [vmem:[%s7718 + $0x62] sm:$0xff]
  %v8788 = vld [vmem:[%s7718 + $0x6a] sm:$0xff]
  %v8789 = vld [vmem:[%s7718 + $0x7a] sm:$0xff]
  %v8790 = vld [vmem:[%s7718 + $0x82] sm:$0xff]
  %v8791 = vld [vmem:[%s7718 + $0x92] sm:$0xff]
  %v8792 = vld [vmem:[%s7718 + $0x9a] sm:$0xff]
  %v8793 = vld [vmem:[%s7718 + $0xaa] sm:$0xff]
  %v8794 = vld [vmem:[%s7718 + $0xb2] sm:$0xff]
  %v8795 = vld [vmem:[%s7718 + $0xc2] sm:$0xff]
  %v8796 = vld [vmem:[%s7718 + $0xca] sm:$0xff]
  %v8797 = vld [vmem:[%s7718 + $0xda] sm:$0xff]
  %v8798 = vld [vmem:[%s7718 + $0xe2] sm:$0xff]
  %v8799 = vld [vmem:[%s7718 + $0xf2] sm:$0xff]
  %v8800 = vld [vmem:[%s7718 + $0xfa] sm:$0xff]
  %v8801 = vld [vmem:[%s7718 + $0x10a] sm:$0xff]
  %v8802 = vld [vmem:[%s7718 + $0x112] sm:$0xff]
  %v8803 = vld [vmem:[%s7718 + $0x122] sm:$0xff]
  %v8804 = vld [vmem:[%s7718 + $0x12a] sm:$0xff]
  %v8805 = vld [vmem:[%s7718 + $0x13a] sm:$0xff]
  %v8806 = vld [vmem:[%s7718 + $0x142] sm:$0xff]
  %v8807 = vld [vmem:[%s7718 + $0x152] sm:$0xff]
  %v8808 = vld [vmem:[%s7718 + $0x15a] sm:$0xff]
  %v8809 = vld [vmem:[%s7718 + $0x16a] sm:$0xff]
  %v8810 = vld [vmem:[%s7718 + $0x172] sm:$0xff]
  %v8811 = vld [vmem:[%s7718 + $0x1b2] sm:$0xff]
  %v8812 = vld [vmem:[%s7718 + $0x1ba] sm:$0xff]
  %v8813 = vld [vmem:[%s7718 + $0x1ca] sm:$0xff]
  %v8814 = vld [vmem:[%s7718 + $0x1d2] sm:$0xff]
  %v8815 = vld [vmem:[%s7718 + $0x1e2] sm:$0xff]
  %v8816 = vld [vmem:[%s7718 + $0x1ea] sm:$0xff]
  %v8817 = vld [vmem:[%s7718 + $0x1fa] sm:$0xff]
  %v8818 = vld [vmem:[%s7718 + $0x202] sm:$0xff]
  %v8819 = vld [vmem:[%s7718 + $0x212] sm:$0xff]
  %v8820 = vld [vmem:[%s7718 + $0x21a] sm:$0xff]
  %v8821 = vld [vmem:[%s7718 + $0x22a] sm:$0xff]
  %v8822 = vld [vmem:[%s7718 + $0x232] sm:$0xff]
  %v8823 = vld [vmem:[%s7718 + $0x242] sm:$0xff]
  %v8824 = vld [vmem:[%s7718 + $0x24a] sm:$0xff]
  %v8825 = vld [vmem:[%s7718 + $0x25a] sm:$0xff]
  %v8826 = vld [vmem:[%s7718 + $0x262] sm:$0xff]
  %v8827 = vld [vmem:[%s7718 + $0x272] sm:$0xff]
  %v8828 = vld [vmem:[%s7718 + $0x27a] sm:$0xff]
  %v8829 = vld [vmem:[%s7718 + $0x28a] sm:$0xff]
  %v8830 = vld [vmem:[%s7718 + $0x292] sm:$0xff]
  %v8831 = vld [vmem:[%s7718 + $0x2a2] sm:$0xff]
  %v8832 = vld [vmem:[%s7718 + $0x2aa] sm:$0xff]
  %v8833 = vld [vmem:[%s7718 + $0x2ba] sm:$0xff]
  %v8834 = vld [vmem:[%s7718 + $0x2c2] sm:$0xff]
  %v8835 = vld [vmem:[%s7718 + $0x2d2] sm:$0xff]
  %v8836 = vld [vmem:[%s7718 + $0x2da] sm:$0xff]
  %v8837 = vld [vmem:[%s7718 + $0x2ea] sm:$0xff]
  %v8838 = vld [vmem:[%s7718 + $0x2f2] sm:$0xff]
  %v8839 = vld [vmem:[%s7718 + $0x302] sm:$0xff]
  %v8840 = vld [vmem:[%s7718 + $0x30a] sm:$0xff]
  %v8841 = vld [vmem:[%s7718 + $0x31a] sm:$0xff]
  %v8842 = vld [vmem:[%s7718 + $0x322] sm:$0xff]
  %s8843 = scalar_lea.vmem %s4, 1024
  %v8844 = vld [vmem:[%s8843] sm:$0xff]
  %v8845 = vld [vmem:[%s8843 + $0x8] sm:$0xff]
  %v8846 = vld [vmem:[%s8843 + $0x10] sm:$0xff]
  %v8847 = vld [vmem:[%s8843 + $0x18] sm:$0xff]
  %v8848 = vld [vmem:[%s8843 + $0x20] sm:$0xff]
  %v8849 = vld [vmem:[%s8843 + $0x28] sm:$0xff]
  %v8850 = vld [vmem:[%s8843 + $0x30] sm:$0xff]
  %v8851 = vld [vmem:[%s8843 + $0x38] sm:$0xff]
  %v8852 = vld [vmem:[%s8843 + $0x40] sm:$0xff]
  %v8853 = vld [vmem:[%s8843 + $0x48] sm:$0xff]
  %v8854 = vld [vmem:[%s8843 + $0x50] sm:$0xff]
  %v8855 = vld [vmem:[%s8843 + $0x58] sm:$0xff]
  %v8856 = vld [vmem:[%s8843 + $0x60] sm:$0xff]
  %v8857 = vld [vmem:[%s8843 + $0x68] sm:$0xff]
  %v8858 = vld [vmem:[%s8843 + $0x70] sm:$0xff]
  %v8859 = vld [vmem:[%s8843 + $0x78] sm:$0xff]
  %8860 = vmatprep.subr.mxu0 0.0
  %8861 = vmatpush1.msra.mxu0 %v8844
  %8862 = vmatprep.subr.mxu0 0.0
  %8863 = vmatpush1.msra.mxu0 %v8845
  %8864 = vmatprep.subr.mxu0 0.0
  %8865 = vmatpush1.msra.mxu0 %v8846
  %8866 = vmatprep.subr.mxu0 0.0
  %8867 = vmatpush1.msra.mxu0 %v8847
  %8868 = vmatprep.subr.mxu0 0.0
  %8869 = vmatpush1.msra.mxu0 %v8848
  %8870 = vmatprep.subr.mxu0 0.0
  %8871 = vmatpush1.msra.mxu0 %v8849
  %8872 = vmatprep.subr.mxu0 0.0
  %8873 = vmatpush1.msra.mxu0 %v8850
  %8874 = vmatprep.subr.mxu0 0.0
  %8875 = vmatpush1.msra.mxu0 %v8851
  %8876 = vmatprep.subr.mxu0 0.0
  %8877 = vmatpush1.msra.mxu0 %v8852
  %8878 = vmatprep.subr.mxu0 0.0
  %8879 = vmatpush1.msra.mxu0 %v8853
  %8880 = vmatprep.subr.mxu0 0.0
  %8881 = vmatpush1.msra.mxu0 %v8854
  %8882 = vmatprep.subr.mxu0 0.0
  %8883 = vmatpush1.msra.mxu0 %v8855
  %8884 = vmatprep.subr.mxu0 0.0
  %8885 = vmatpush1.msra.mxu0 %v8856
  %8886 = vmatprep.subr.mxu0 0.0
  %8887 = vmatpush1.msra.mxu0 %v8857
  %8888 = vmatprep.subr.mxu0 0.0
  %8889 = vmatpush1.msra.mxu0 %v8858
  %8890 = vmatprep.subr.mxu0 0.0
  %8891 = vmatpush1.msra.mxu0 %v8859
  %8892 = vmatprep.subr.mxu0 0.0
  %8893 = vmatpush1.msra.mxu0 0.0
  %8894 = vmatprep.subr.mxu0 0.0
  %8895 = vmatpush1.msra.mxu0 0.0
  %8896 = vmatprep.subr.mxu0 0.0
  %8897 = vmatpush1.msra.mxu0 0.0
  %8898 = vmatprep.subr.mxu0 0.0
  %8899 = vmatpush1.msra.mxu0 0.0
  %8900 = vmatprep.subr.mxu0 0.0
  %8901 = vmatpush1.msra.mxu0 0.0
  %8902 = vmatprep.subr.mxu0 0.0
  %8903 = vmatpush1.msra.mxu0 0.0
  %8904 = vmatprep.subr.mxu0 0.0
  %8905 = vmatpush1.msra.mxu0 0.0
  %8906 = vmatprep.subr.mxu0 0.0
  %8907 = vmatpush1.msra.mxu0 0.0
  %8908 = vmatprep.subr.mxu0 0.0
  %8909 = vmatpush1.msra.mxu0 0.0
  %8910 = vmatprep.subr.mxu0 0.0
  %8911 = vmatpush1.msra.mxu0 0.0
  %8912 = vmatprep.subr.mxu0 0.0
  %8913 = vmatpush1.msra.mxu0 0.0
  %8914 = vmatprep.subr.mxu0 0.0
  %8915 = vmatpush1.msra.mxu0 0.0
  %8916 = vmatprep.subr.mxu0 0.0
  %8917 = vmatpush1.msra.mxu0 0.0
  %8918 = vmatprep.subr.mxu0 0.0
  %8919 = vmatpush1.msra.mxu0 0.0
  %8920 = vmatprep.subr.mxu0 0.0
  %8921 = vmatpush1.msra.mxu0 0.0
  %8922 = vmatprep.subr.mxu0 0.0
  %8923 = vmatpush1.msra.mxu0 0.0
  %8924 = vmatprep.mubr.f32.mxu0 0.0
  %8925 = vmatmul.mubr.f32.gmra.mrb[0].mxu0 %v8779
  %v8926 = vpop.f32.mrb[0].mxu0
  %v8927 = vadd.f32 0.0, %v8926
  %v8928 = vpop.f32.mrb[0].mxu0
  %8929 = vmatprep.mubr.f32.mxu0 0.0
  %8930 = vmatmul.mubr.f32.gmra.mrb[0].mxu0 %v8780
  %v8931 = vpop.f32.mrb[0].mxu0
  %v8932 = vadd.f32 0.0, %v8931
  %v8933 = vpop.f32.mrb[0].mxu0
  %8934 = vmatprep.mubr.f32.mxu0 0.0
  %8935 = vmatmul.mubr.f32.gmra.mrb[0].mxu0 %v8781
  %v8936 = vpop.f32.mrb[0].mxu0
  %v8937 = vadd.f32 0.0, %v8936
  %v8938 = vpop.f32.mrb[0].mxu0
  %8939 = vmatprep.mubr.f32.mxu0 0.0
  %8940 = vmatmul.mubr.f32.gmra.mrb[0].mxu0 %v8782
  %v8941 = vpop.f32.mrb[0].mxu0
  %v8942 = vadd.f32 0.0, %v8941
  %v8943 = vpop.f32.mrb[0].mxu0
  %8944 = vmatprep.mubr.f32.mxu0 0.0
  %8945 = vmatmul.mubr.f32.gmra.mrb[0].mxu0 %v8783
  %v8946 = vpop.f32.mrb[0].mxu0
  %v8947 = vadd.f32 0.0, %v8946
  %v8948 = vpop.f32.mrb[0].mxu0
  %8949 = vmatprep.mubr.f32.mxu0 0.0
  %8950 = vmatmul.mubr.f32.gmra.mrb[0].mxu0 %v8784
  %v8951 = vpop.f32.mrb[0].mxu0
  %v8952 = vadd.f32 0.0, %v8951
  %v8953 = vpop.f32.mrb[0].mxu0
  %8954 = vmatprep.mubr.f32.mxu0 0.0
  %8955 = vmatmul.mubr.f32.gmra.mrb[0].mxu0 %v8785
  %v8956 = vpop.f32.mrb[0].mxu0
  %v8957 = vadd.f32 0.0, %v8956
  %v8958 = vpop.f32.mrb[0].mxu0
  %8959 = vmatprep.mubr.f32.mxu0 0.0
  %8960 = vmatmul.mubr.f32.gmra.mrb[0].mxu0 %v8786
  %v8961 = vpop.f32.mrb[0].mxu0
  %v8962 = vadd.f32 0.0, %v8961
  %v8963 = vpop.f32.mrb[0].mxu0
  %8964 = vmatprep.mubr.f32.mxu0 0.0
  %8965 = vmatmul.mubr.f32.gmra.mrb[0].mxu0 %v8787
  %v8966 = vpop.f32.mrb[0].mxu0
  %v8967 = vadd.f32 0.0, %v8966
  %v8968 = vpop.f32.mrb[0].mxu0
  %8969 = vmatprep.mubr.f32.mxu0 0.0
  %8970 = vmatmul.mubr.f32.gmra.mrb[0].mxu0 %v8788
  %v8971 = vpop.f32.mrb[0].mxu0
  %v8972 = vadd.f32 0.0, %v8971
  %v8973 = vpop.f32.mrb[0].mxu0
  %8974 = vmatprep.mubr.f32.mxu0 0.0
  %8975 = vmatmul.mubr.f32.gmra.mrb[0].mxu0 %v8789
  %v8976 = vpop.f32.mrb[0].mxu0
  %v8977 = vadd.f32 0.0, %v8976
  %v8978 = vpop.f32.mrb[0].mxu0
  %8979 = vmatprep.mubr.f32.mxu0 0.0
  %8980 = vmatmul.mubr.f32.gmra.mrb[0].mxu0 %v8790
  %v8981 = vpop.f32.mrb[0].mxu0
  %v8982 = vadd.f32 0.0, %v8981
  %v8983 = vpop.f32.mrb[0].mxu0
  %8984 = vmatprep.mubr.f32.mxu0 0.0
  %8985 = vmatmul.mubr.f32.gmra.mrb[0].mxu0 %v8791
  %v8986 = vpop.f32.mrb[0].mxu0
  %v8987 = vadd.f32 0.0, %v8986
  %v8988 = vpop.f32.mrb[0].mxu0
  %8989 = vmatprep.mubr.f32.mxu0 0.0
  %8990 = vmatmul.mubr.f32.gmra.mrb[0].mxu0 %v8792
  %v8991 = vpop.f32.mrb[0].mxu0
  %v8992 = vadd.f32 0.0, %v8991
  %v8993 = vpop.f32.mrb[0].mxu0
  %8994 = vmatprep.mubr.f32.mxu0 0.0
  %8995 = vmatmul.mubr.f32.gmra.mrb[0].mxu0 %v8793
  %v8996 = vpop.f32.mrb[0].mxu0
  %v8997 = vadd.f32 0.0, %v8996
  %v8998 = vpop.f32.mrb[0].mxu0
  %8999 = vmatprep.mubr.f32.mxu0 0.0
  %9000 = vmatmul.mubr.f32.gmra.mrb[0].mxu0 %v8794
  %v9001 = vpop.f32.mrb[0].mxu0
  %v9002 = vadd.f32 0.0, %v9001
  %v9003 = vpop.f32.mrb[0].mxu0
  %9004 = vmatprep.mubr.f32.mxu0 0.0
  %9005 = vmatmul.mubr.f32.gmra.mrb[0].mxu0 %v8795
  %v9006 = vpop.f32.mrb[0].mxu0
  %v9007 = vadd.f32 0.0, %v9006
  %v9008 = vpop.f32.mrb[0].mxu0
  %9009 = vmatprep.mubr.f32.mxu0 0.0
  %9010 = vmatmul.mubr.f32.gmra.mrb[0].mxu0 %v8796
  %v9011 = vpop.f32.mrb[0].mxu0
  %v9012 = vadd.f32 0.0, %v9011
  %v9013 = vpop.f32.mrb[0].mxu0
  %9014 = vmatprep.mubr.f32.mxu0 0.0
  %9015 = vmatmul.mubr.f32.gmra.mrb[0].mxu0 %v8797
  %v9016 = vpop.f32.mrb[0].mxu0
  %v9017 = vadd.f32 0.0, %v9016
  %v9018 = vpop.f32.mrb[0].mxu0
  %9019 = vmatprep.mubr.f32.mxu0 0.0
  %9020 = vmatmul.mubr.f32.gmra.mrb[0].mxu0 %v8798
  %v9021 = vpop.f32.mrb[0].mxu0
  %v9022 = vadd.f32 0.0, %v9021
  %v9023 = vpop.f32.mrb[0].mxu0
  %9024 = vmatprep.mubr.f32.mxu0 0.0
  %9025 = vmatmul.mubr.f32.gmra.mrb[0].mxu0 %v8799
  %v9026 = vpop.f32.mrb[0].mxu0
  %v9027 = vadd.f32 0.0, %v9026
  %v9028 = vpop.f32.mrb[0].mxu0
  %9029 = vmatprep.mubr.f32.mxu0 0.0
  %9030 = vmatmul.mubr.f32.gmra.mrb[0].mxu0 %v8800
  %v9031 = vpop.f32.mrb[0].mxu0
  %v9032 = vadd.f32 0.0, %v9031
  %v9033 = vpop.f32.mrb[0].mxu0
  %9034 = vmatprep.mubr.f32.mxu0 0.0
  %9035 = vmatmul.mubr.f32.gmra.mrb[0].mxu0 %v8801
  %v9036 = vpop.f32.mrb[0].mxu0
  %v9037 = vadd.f32 0.0, %v9036
  %v9038 = vpop.f32.mrb[0].mxu0
  %9039 = vmatprep.mubr.f32.mxu0 0.0
  %9040 = vmatmul.mubr.f32.gmra.mrb[0].mxu0 %v8802
  %v9041 = vpop.f32.mrb[0].mxu0
  %v9042 = vadd.f32 0.0, %v9041
  %v9043 = vpop.f32.mrb[0].mxu0
  %9044 = vmatprep.mubr.f32.mxu0 0.0
  %9045 = vmatmul.mubr.f32.gmra.mrb[0].mxu0 %v8803
  %v9046 = vpop.f32.mrb[0].mxu0
  %v9047 = vadd.f32 0.0, %v9046
  %v9048 = vpop.f32.mrb[0].mxu0
  %9049 = vmatprep.mubr.f32.mxu0 0.0
  %9050 = vmatmul.mubr.f32.gmra.mrb[0].mxu0 %v8804
  %v9051 = vpop.f32.mrb[0].mxu0
  %v9052 = vadd.f32 0.0, %v9051
  %v9053 = vpop.f32.mrb[0].mxu0
  %9054 = vmatprep.mubr.f32.mxu0 0.0
  %9055 = vmatmul.mubr.f32.gmra.mrb[0].mxu0 %v8805
  %v9056 = vpop.f32.mrb[0].mxu0
  %v9057 = vadd.f32 0.0, %v9056
  %v9058 = vpop.f32.mrb[0].mxu0
  %9059 = vmatprep.mubr.f32.mxu0 0.0
  %9060 = vmatmul.mubr.f32.gmra.mrb[0].mxu0 %v8806
  %v9061 = vpop.f32.mrb[0].mxu0
  %v9062 = vadd.f32 0.0, %v9061
  %v9063 = vpop.f32.mrb[0].mxu0
  %9064 = vmatprep.mubr.f32.mxu0 0.0
  %9065 = vmatmul.mubr.f32.gmra.mrb[0].mxu0 %v8807
  %v9066 = vpop.f32.mrb[0].mxu0
  %v9067 = vadd.f32 0.0, %v9066
  %v9068 = vpop.f32.mrb[0].mxu0
  %9069 = vmatprep.mubr.f32.mxu0 0.0
  %9070 = vmatmul.mubr.f32.gmra.mrb[0].mxu0 %v8808
  %v9071 = vpop.f32.mrb[0].mxu0
  %v9072 = vadd.f32 0.0, %v9071
  %v9073 = vpop.f32.mrb[0].mxu0
  %9074 = vmatprep.mubr.f32.mxu0 0.0
  %9075 = vmatmul.mubr.f32.gmra.mrb[0].mxu0 %v8809
  %v9076 = vpop.f32.mrb[0].mxu0
  %v9077 = vadd.f32 0.0, %v9076
  %v9078 = vpop.f32.mrb[0].mxu0
  %9079 = vmatprep.mubr.f32.mxu0 0.0
  %9080 = vmatmul.mubr.f32.gmra.mrb[0].mxu0 %v8810
  %v9081 = vpop.f32.mrb[0].mxu0
  %v9082 = vadd.f32 0.0, %v9081
  %v9083 = vpop.f32.mrb[0].mxu0
  %9084 = vmatprep.mubr.f32.mxu0 0.0
  %9085 = vmatmul.mubr.f32.gmra.mrb[0].mxu0 %v8811
  %v9086 = vpop.f32.mrb[0].mxu0
  %v9087 = vadd.f32 0.0, %v9086
  %v9088 = vpop.f32.mrb[0].mxu0
  %9089 = vmatprep.mubr.f32.mxu0 0.0
  %9090 = vmatmul.mubr.f32.gmra.mrb[0].mxu0 %v8812
  %v9091 = vpop.f32.mrb[0].mxu0
  %v9092 = vadd.f32 0.0, %v9091
  %v9093 = vpop.f32.mrb[0].mxu0
  %9094 = vmatprep.mubr.f32.mxu0 0.0
  %9095 = vmatmul.mubr.f32.gmra.mrb[0].mxu0 %v8813
  %v9096 = vpop.f32.mrb[0].mxu0
  %v9097 = vadd.f32 0.0, %v9096
  %v9098 = vpop.f32.mrb[0].mxu0
  %9099 = vmatprep.mubr.f32.mxu0 0.0
  %9100 = vmatmul.mubr.f32.gmra.mrb[0].mxu0 %v8814
  %v9101 = vpop.f32.mrb[0].mxu0
  %v9102 = vadd.f32 0.0, %v9101
  %v9103 = vpop.f32.mrb[0].mxu0
  %9104 = vmatprep.mubr.f32.mxu0 0.0
  %9105 = vmatmul.mubr.f32.gmra.mrb[0].mxu0 %v8815
  %v9106 = vpop.f32.mrb[0].mxu0
  %v9107 = vadd.f32 0.0, %v9106
  %v9108 = vpop.f32.mrb[0].mxu0
  %9109 = vmatprep.mubr.f32.mxu0 0.0
  %9110 = vmatmul.mubr.f32.gmra.mrb[0].mxu0 %v8816
  %v9111 = vpop.f32.mrb[0].mxu0
  %v9112 = vadd.f32 0.0, %v9111
  %v9113 = vpop.f32.mrb[0].mxu0
  %9114 = vmatprep.mubr.f32.mxu0 0.0
  %9115 = vmatmul.mubr.f32.gmra.mrb[0].mxu0 %v8817
  %v9116 = vpop.f32.mrb[0].mxu0
  %v9117 = vadd.f32 0.0, %v9116
  %v9118 = vpop.f32.mrb[0].mxu0
  %9119 = vmatprep.mubr.f32.mxu0 0.0
  %9120 = vmatmul.mubr.f32.gmra.mrb[0].mxu0 %v8818
  %v9121 = vpop.f32.mrb[0].mxu0
  %v9122 = vadd.f32 0.0, %v9121
  %v9123 = vpop.f32.mrb[0].mxu0
  %9124 = vmatprep.mubr.f32.mxu0 0.0
  %9125 = vmatmul.mubr.f32.gmra.mrb[0].mxu0 %v8819
  %v9126 = vpop.f32.mrb[0].mxu0
  %v9127 = vadd.f32 0.0, %v9126
  %v9128 = vpop.f32.mrb[0].mxu0
  %9129 = vmatprep.mubr.f32.mxu0 0.0
  %9130 = vmatmul.mubr.f32.gmra.mrb[0].mxu0 %v8820
  %v9131 = vpop.f32.mrb[0].mxu0
  %v9132 = vadd.f32 0.0, %v9131
  %v9133 = vpop.f32.mrb[0].mxu0
  %9134 = vmatprep.mubr.f32.mxu0 0.0
  %9135 = vmatmul.mubr.f32.gmra.mrb[0].mxu0 %v8821
  %v9136 = vpop.f32.mrb[0].mxu0
  %v9137 = vadd.f32 0.0, %v9136
  %v9138 = vpop.f32.mrb[0].mxu0
  %9139 = vmatprep.mubr.f32.mxu0 0.0
  %9140 = vmatmul.mubr.f32.gmra.mrb[0].mxu0 %v8822
  %v9141 = vpop.f32.mrb[0].mxu0
  %v9142 = vadd.f32 0.0, %v9141
  %v9143 = vpop.f32.mrb[0].mxu0
  %9144 = vmatprep.mubr.f32.mxu0 0.0
  %9145 = vmatmul.mubr.f32.gmra.mrb[0].mxu0 %v8823
  %v9146 = vpop.f32.mrb[0].mxu0
  %v9147 = vadd.f32 0.0, %v9146
  %v9148 = vpop.f32.mrb[0].mxu0
  %9149 = vmatprep.mubr.f32.mxu0 0.0
  %9150 = vmatmul.mubr.f32.gmra.mrb[0].mxu0 %v8824
  %v9151 = vpop.f32.mrb[0].mxu0
  %v9152 = vadd.f32 0.0, %v9151
  %v9153 = vpop.f32.mrb[0].mxu0
  %9154 = vmatprep.mubr.f32.mxu0 0.0
  %9155 = vmatmul.mubr.f32.gmra.mrb[0].mxu0 %v8825
  %v9156 = vpop.f32.mrb[0].mxu0
  %v9157 = vadd.f32 0.0, %v9156
  %v9158 = vpop.f32.mrb[0].mxu0
  %9159 = vmatprep.mubr.f32.mxu0 0.0
  %9160 = vmatmul.mubr.f32.gmra.mrb[0].mxu0 %v8826
  %v9161 = vpop.f32.mrb[0].mxu0
  %v9162 = vadd.f32 0.0, %v9161
  %v9163 = vpop.f32.mrb[0].mxu0
  %9164 = vmatprep.mubr.f32.mxu0 0.0
  %9165 = vmatmul.mubr.f32.gmra.mrb[0].mxu0 %v8827
  %v9166 = vpop.f32.mrb[0].mxu0
  %v9167 = vadd.f32 0.0, %v9166
  %v9168 = vpop.f32.mrb[0].mxu0
  %9169 = vmatprep.mubr.f32.mxu0 0.0
  %9170 = vmatmul.mubr.f32.gmra.mrb[0].mxu0 %v8828
  %v9171 = vpop.f32.mrb[0].mxu0
  %v9172 = vadd.f32 0.0, %v9171
  %v9173 = vpop.f32.mrb[0].mxu0
  %9174 = vmatprep.mubr.f32.mxu0 0.0
  %9175 = vmatmul.mubr.f32.gmra.mrb[0].mxu0 %v8829
  %v9176 = vpop.f32.mrb[0].mxu0
  %v9177 = vadd.f32 0.0, %v9176
  %v9178 = vpop.f32.mrb[0].mxu0
  %9179 = vmatprep.mubr.f32.mxu0 0.0
  %9180 = vmatmul.mubr.f32.gmra.mrb[0].mxu0 %v8830
  %v9181 = vpop.f32.mrb[0].mxu0
  %v9182 = vadd.f32 0.0, %v9181
  %v9183 = vpop.f32.mrb[0].mxu0
  %9184 = vmatprep.mubr.f32.mxu0 0.0
  %9185 = vmatmul.mubr.f32.gmra.mrb[0].mxu0 %v8831
  %v9186 = vpop.f32.mrb[0].mxu0
  %v9187 = vadd.f32 0.0, %v9186
  %v9188 = vpop.f32.mrb[0].mxu0
  %9189 = vmatprep.mubr.f32.mxu0 0.0
  %9190 = vmatmul.mubr.f32.gmra.mrb[0].mxu0 %v8832
  %v9191 = vpop.f32.mrb[0].mxu0
  %v9192 = vadd.f32 0.0, %v9191
  %v9193 = vpop.f32.mrb[0].mxu0
  %9194 = vmatprep.mubr.f32.mxu0 0.0
  %9195 = vmatmul.mubr.f32.gmra.mrb[0].mxu0 %v8833
  %v9196 = vpop.f32.mrb[0].mxu0
  %v9197 = vadd.f32 0.0, %v9196
  %v9198 = vpop.f32.mrb[0].mxu0
  %9199 = vmatprep.mubr.f32.mxu0 0.0
  %9200 = vmatmul.mubr.f32.gmra.mrb[0].mxu0 %v8834
  %v9201 = vpop.f32.mrb[0].mxu0
  %v9202 = vadd.f32 0.0, %v9201
  %v9203 = vpop.f32.mrb[0].mxu0
  %9204 = vmatprep.mubr.f32.mxu0 0.0
  %9205 = vmatmul.mubr.f32.gmra.mrb[0].mxu0 %v8835
  %v9206 = vpop.f32.mrb[0].mxu0
  %v9207 = vadd.f32 0.0, %v9206
  %v9208 = vpop.f32.mrb[0].mxu0
  %9209 = vmatprep.mubr.f32.mxu0 0.0
  %9210 = vmatmul.mubr.f32.gmra.mrb[0].mxu0 %v8836
  %v9211 = vpop.f32.mrb[0].mxu0
  %v9212 = vadd.f32 0.0, %v9211
  %v9213 = vpop.f32.mrb[0].mxu0
  %9214 = vmatprep.mubr.f32.mxu0 0.0
  %9215 = vmatmul.mubr.f32.gmra.mrb[0].mxu0 %v8837
  %v9216 = vpop.f32.mrb[0].mxu0
  %v9217 = vadd.f32 0.0, %v9216
  %v9218 = vpop.f32.mrb[0].mxu0
  %9219 = vmatprep.mubr.f32.mxu0 0.0
  %9220 = vmatmul.mubr.f32.gmra.mrb[0].mxu0 %v8838
  %v9221 = vpop.f32.mrb[0].mxu0
  %v9222 = vadd.f32 0.0, %v9221
  %v9223 = vpop.f32.mrb[0].mxu0
  %9224 = vmatprep.mubr.f32.mxu0 0.0
  %9225 = vmatmul.mubr.f32.gmra.mrb[0].mxu0 %v8839
  %v9226 = vpop.f32.mrb[0].mxu0
  %v9227 = vadd.f32 0.0, %v9226
  %v9228 = vpop.f32.mrb[0].mxu0
  %9229 = vmatprep.mubr.f32.mxu0 0.0
  %9230 = vmatmul.mubr.f32.gmra.mrb[0].mxu0 %v8840
  %v9231 = vpop.f32.mrb[0].mxu0
  %v9232 = vadd.f32 0.0, %v9231
  %v9233 = vpop.f32.mrb[0].mxu0
  %9234 = vmatprep.mubr.f32.mxu0 0.0
  %9235 = vmatmul.mubr.f32.gmra.mrb[0].mxu0 %v8841
  %v9236 = vpop.f32.mrb[0].mxu0
  %v9237 = vadd.f32 0.0, %v9236
  %v9238 = vpop.f32.mrb[0].mxu0
  %9239 = vmatprep.mubr.f32.mxu0 0.0
  %9240 = vmatmul.mubr.f32.gmra.mrb[0].mxu0 %v8842
  %v9241 = vpop.f32.mrb[0].mxu0
  %v9242 = vadd.f32 0.0, %v9241
  %v9243 = vpop.f32.mrb[0].mxu0
  %9244 = vdwg.mxu0
  %v9245 = vadd.f32 %v8715, %v8927
  %v9246 = vadd.f32 %v8716, %v8932
  %v9247 = vadd.f32 %v8717, %v8937
  %v9248 = vadd.f32 %v8718, %v8942
  %v9249 = vadd.f32 %v8719, %v8947
  %v9250 = vadd.f32 %v8720, %v8952
  %v9251 = vadd.f32 %v8721, %v8957
  %v9252 = vadd.f32 %v8722, %v8962
  %v9253 = vadd.f32 %v8723, %v8967
  %v9254 = vadd.f32 %v8724, %v8972
  %v9255 = vadd.f32 %v8725, %v8977
  %v9256 = vadd.f32 %v8726, %v8982
  %v9257 = vadd.f32 %v8727, %v8987
  %v9258 = vadd.f32 %v8728, %v8992
  %v9259 = vadd.f32 %v8729, %v8997
  %v9260 = vadd.f32 %v8730, %v9002
  %v9261 = vadd.f32 %v8731, %v9007
  %v9262 = vadd.f32 %v8732, %v9012
  %v9263 = vadd.f32 %v8733, %v9017
  %v9264 = vadd.f32 %v8734, %v9022
  %v9265 = vadd.f32 %v8735, %v9027
  %v9266 = vadd.f32 %v8736, %v9032
  %v9267 = vadd.f32 %v8737, %v9037
  %v9268 = vadd.f32 %v8738, %v9042
  %v9269 = vadd.f32 %v8739, %v9047
  %v9270 = vadd.f32 %v8740, %v9052
  %v9271 = vadd.f32 %v8741, %v9057
  %v9272 = vadd.f32 %v8742, %v9062
  %v9273 = vadd.f32 %v8743, %v9067
  %v9274 = vadd.f32 %v8744, %v9072
  %v9275 = vadd.f32 %v8745, %v9077
  %v9276 = vadd.f32 %v8746, %v9082
  %v9277 = vadd.f32 %v8747, %v9087
  %v9278 = vadd.f32 %v8748, %v9092
  %v9279 = vadd.f32 %v8749, %v9097
  %v9280 = vadd.f32 %v8750, %v9102
  %v9281 = vadd.f32 %v8751, %v9107
  %v9282 = vadd.f32 %v8752, %v9112
  %v9283 = vadd.f32 %v8753, %v9117
  %v9284 = vadd.f32 %v8754, %v9122
  %v9285 = vadd.f32 %v8755, %v9127
  %v9286 = vadd.f32 %v8756, %v9132
  %v9287 = vadd.f32 %v8757, %v9137
  %v9288 = vadd.f32 %v8758, %v9142
  %v9289 = vadd.f32 %v8759, %v9147
  %v9290 = vadd.f32 %v8760, %v9152
  %v9291 = vadd.f32 %v8761, %v9157
  %v9292 = vadd.f32 %v8762, %v9162
  %v9293 = vadd.f32 %v8763, %v9167
  %v9294 = vadd.f32 %v8764, %v9172
  %v9295 = vadd.f32 %v8765, %v9177
  %v9296 = vadd.f32 %v8766, %v9182
  %v9297 = vadd.f32 %v8767, %v9187
  %v9298 = vadd.f32 %v8768, %v9192
  %v9299 = vadd.f32 %v8769, %v9197
  %v9300 = vadd.f32 %v8770, %v9202
  %v9301 = vadd.f32 %v8771, %v9207
  %v9302 = vadd.f32 %v8772, %v9212
  %v9303 = vadd.f32 %v8773, %v9217
  %v9304 = vadd.f32 %v8774, %v9222
  %v9305 = vadd.f32 %v8775, %v9227
  %v9306 = vadd.f32 %v8776, %v9232
  %v9307 = vadd.f32 %v8777, %v9237
  %v9308 = vadd.f32 %v8778, %v9242
  %v9309 = vadd.f32 %v9245, %v9246
  %v9310 = vadd.f32 %v9309, %v9247
  %v9311 = vadd.f32 %v9310, %v9248
  %v9312 = vadd.f32 %v9311, %v9249
  %v9313 = vadd.f32 %v9312, %v9250
  %v9314 = vadd.f32 %v9313, %v9251
  %v9315 = vadd.f32 %v9314, %v9252
  %v9316 = vadd.f32 %v9315, %v9253
  %v9317 = vadd.f32 %v9316, %v9254
  %v9318 = vadd.f32 %v9317, %v9255
  %v9319 = vadd.f32 %v9318, %v9256
  %v9320 = vadd.f32 %v9319, %v9257
  %v9321 = vadd.f32 %v9320, %v9258
  %v9322 = vadd.f32 %v9321, %v9259
  %v9323 = vadd.f32 %v9322, %v9260
  %v9324 = vadd.f32 %v9323, %v9261
  %v9325 = vadd.f32 %v9324, %v9262
  %v9326 = vadd.f32 %v9325, %v9263
  %v9327 = vadd.f32 %v9326, %v9264
  %v9328 = vadd.f32 %v9327, %v9265
  %v9329 = vadd.f32 %v9328, %v9266
  %v9330 = vadd.f32 %v9329, %v9267
  %v9331 = vadd.f32 %v9330, %v9268
  %v9332 = vadd.f32 %v9331, %v9269
  %v9333 = vadd.f32 %v9332, %v9270
  %v9334 = vadd.f32 %v9333, %v9271
  %v9335 = vadd.f32 %v9334, %v9272
  %v9336 = vadd.f32 %v9335, %v9273
  %v9337 = vadd.f32 %v9336, %v9274
  %v9338 = vadd.f32 %v9337, %v9275
  %v9339 = vadd.f32 %v9338, %v9276
  %v9340 = vadd.f32 %v9339, %v9277
  %v9341 = vadd.f32 %v9340, %v9278
  %v9342 = vadd.f32 %v9341, %v9279
  %v9343 = vadd.f32 %v9342, %v9280
  %v9344 = vadd.f32 %v9343, %v9281
  %v9345 = vadd.f32 %v9344, %v9282
  %v9346 = vadd.f32 %v9345, %v9283
  %v9347 = vadd.f32 %v9346, %v9284
  %v9348 = vadd.f32 %v9347, %v9285
  %v9349 = vadd.f32 %v9348, %v9286
  %v9350 = vadd.f32 %v9349, %v9287
  %v9351 = vadd.f32 %v9350, %v9288
  %v9352 = vadd.f32 %v9351, %v9289
  %v9353 = vadd.f32 %v9352, %v9290
  %v9354 = vadd.f32 %v9353, %v9291
  %v9355 = vadd.f32 %v9354, %v9292
  %v9356 = vadd.f32 %v9355, %v9293
  %v9357 = vadd.f32 %v9356, %v9294
  %v9358 = vadd.f32 %v9357, %v9295
  %v9359 = vadd.f32 %v9358, %v9296
  %v9360 = vadd.f32 %v9359, %v9297
  %v9361 = vadd.f32 %v9360, %v9298
  %v9362 = vadd.f32 %v9361, %v9299
  %v9363 = vadd.f32 %v9362, %v9300
  %v9364 = vadd.f32 %v9363, %v9301
  %v9365 = vadd.f32 %v9364, %v9302
  %v9366 = vadd.f32 %v9365, %v9303
  %v9367 = vadd.f32 %v9366, %v9304
  %v9368 = vadd.f32 %v9367, %v9305
  %v9369 = vadd.f32 %v9368, %v9306
  %v9370 = vadd.f32 %v9369, %v9307
  %v9371 = vadd.f32 %v9370, %v9308
  %v9372 = vrot.slane %v9371, 4
  %v9373 = vadd.f32 %v9371, %v9372
  %v9374 = vrot.slane %v9373, 2
  %v9375 = vadd.f32 %v9373, %v9374
  %v9376 = vrot.slane %v9375, 1
  %v9377 = vadd.f32 %v9375, %v9376
  %v9378 = vmul.f32 %v9377, 0.001953125
  %v9379 = vmul.f32 %v9245, %v9245
  %v9380 = vmul.f32 %v9246, %v9246
  %v9381 = vmul.f32 %v9247, %v9247
  %v9382 = vmul.f32 %v9248, %v9248
  %v9383 = vmul.f32 %v9249, %v9249
  %v9384 = vmul.f32 %v9250, %v9250
  %v9385 = vmul.f32 %v9251, %v9251
  %v9386 = vmul.f32 %v9252, %v9252
  %v9387 = vmul.f32 %v9253, %v9253
  %v9388 = vmul.f32 %v9254, %v9254
  %v9389 = vmul.f32 %v9255, %v9255
  %v9390 = vmul.f32 %v9256, %v9256
  %v9391 = vmul.f32 %v9257, %v9257
  %v9392 = vmul.f32 %v9258, %v9258
  %v9393 = vmul.f32 %v9259, %v9259
  %v9394 = vmul.f32 %v9260, %v9260
  %v9395 = vmul.f32 %v9261, %v9261
  %v9396 = vmul.f32 %v9262, %v9262
  %v9397 = vmul.f32 %v9263, %v9263
  %v9398 = vmul.f32 %v9264, %v9264
  %v9399 = vmul.f32 %v9265, %v9265
  %v9400 = vmul.f32 %v9266, %v9266
  %v9401 = vmul.f32 %v9267, %v9267
  %v9402 = vmul.f32 %v9268, %v9268
  %v9403 = vmul.f32 %v9269, %v9269
  %v9404 = vmul.f32 %v9270, %v9270
  %v9405 = vmul.f32 %v9271, %v9271
  %v9406 = vmul.f32 %v9272, %v9272
  %v9407 = vmul.f32 %v9273, %v9273
  %v9408 = vmul.f32 %v9274, %v9274
  %v9409 = vmul.f32 %v9275, %v9275
  %v9410 = vmul.f32 %v9276, %v9276
  %v9411 = vmul.f32 %v9277, %v9277
  %v9412 = vmul.f32 %v9278, %v9278
  %v9413 = vmul.f32 %v9279, %v9279
  %v9414 = vmul.f32 %v9280, %v9280
  %v9415 = vmul.f32 %v9281, %v9281
  %v9416 = vmul.f32 %v9282, %v9282
  %v9417 = vmul.f32 %v9283, %v9283
  %v9418 = vmul.f32 %v9284, %v9284
  %v9419 = vmul.f32 %v9285, %v9285
  %v9420 = vmul.f32 %v9286, %v9286
  %v9421 = vmul.f32 %v9287, %v9287
  %v9422 = vmul.f32 %v9288, %v9288
  %v9423 = vmul.f32 %v9289, %v9289
  %v9424 = vmul.f32 %v9290, %v9290
  %v9425 = vmul.f32 %v9291, %v9291
  %v9426 = vmul.f32 %v9292, %v9292
  %v9427 = vmul.f32 %v9293, %v9293
  %v9428 = vmul.f32 %v9294, %v9294
  %v9429 = vmul.f32 %v9295, %v9295
  %v9430 = vmul.f32 %v9296, %v9296
  %v9431 = vmul.f32 %v9297, %v9297
  %v9432 = vmul.f32 %v9298, %v9298
  %v9433 = vmul.f32 %v9299, %v9299
  %v9434 = vmul.f32 %v9300, %v9300
  %v9435 = vmul.f32 %v9301, %v9301
  %v9436 = vmul.f32 %v9302, %v9302
  %v9437 = vmul.f32 %v9303, %v9303
  %v9438 = vmul.f32 %v9304, %v9304
  %v9439 = vmul.f32 %v9305, %v9305
  %v9440 = vmul.f32 %v9306, %v9306
  %v9441 = vmul.f32 %v9307, %v9307
  %v9442 = vmul.f32 %v9308, %v9308
  %v9443 = vadd.f32 %v9379, %v9380
  %v9444 = vadd.f32 %v9443, %v9381
  %v9445 = vadd.f32 %v9444, %v9382
  %v9446 = vadd.f32 %v9445, %v9383
  %v9447 = vadd.f32 %v9446, %v9384
  %v9448 = vadd.f32 %v9447, %v9385
  %v9449 = vadd.f32 %v9448, %v9386
  %v9450 = vadd.f32 %v9449, %v9387
  %v9451 = vadd.f32 %v9450, %v9388
  %v9452 = vadd.f32 %v9451, %v9389
  %v9453 = vadd.f32 %v9452, %v9390
  %v9454 = vadd.f32 %v9453, %v9391
  %v9455 = vadd.f32 %v9454, %v9392
  %v9456 = vadd.f32 %v9455, %v9393
  %v9457 = vadd.f32 %v9456, %v9394
  %v9458 = vadd.f32 %v9457, %v9395
  %v9459 = vadd.f32 %v9458, %v9396
  %v9460 = vadd.f32 %v9459, %v9397
  %v9461 = vadd.f32 %v9460, %v9398
  %v9462 = vadd.f32 %v9461, %v9399
  %v9463 = vadd.f32 %v9462, %v9400
  %v9464 = vadd.f32 %v9463, %v9401
  %v9465 = vadd.f32 %v9464, %v9402
  %v9466 = vadd.f32 %v9465, %v9403
  %v9467 = vadd.f32 %v9466, %v9404
  %v9468 = vadd.f32 %v9467, %v9405
  %v9469 = vadd.f32 %v9468, %v9406
  %v9470 = vadd.f32 %v9469, %v9407
  %v9471 = vadd.f32 %v9470, %v9408
  %v9472 = vadd.f32 %v9471, %v9409
  %v9473 = vadd.f32 %v9472, %v9410
  %v9474 = vadd.f32 %v9473, %v9411
  %v9475 = vadd.f32 %v9474, %v9412
  %v9476 = vadd.f32 %v9475, %v9413
  %v9477 = vadd.f32 %v9476, %v9414
  %v9478 = vadd.f32 %v9477, %v9415
  %v9479 = vadd.f32 %v9478, %v9416
  %v9480 = vadd.f32 %v9479, %v9417
  %v9481 = vadd.f32 %v9480, %v9418
  %v9482 = vadd.f32 %v9481, %v9419
  %v9483 = vadd.f32 %v9482, %v9420
  %v9484 = vadd.f32 %v9483, %v9421
  %v9485 = vadd.f32 %v9484, %v9422
  %v9486 = vadd.f32 %v9485, %v9423
  %v9487 = vadd.f32 %v9486, %v9424
  %v9488 = vadd.f32 %v9487, %v9425
  %v9489 = vadd.f32 %v9488, %v9426
  %v9490 = vadd.f32 %v9489, %v9427
  %v9491 = vadd.f32 %v9490, %v9428
  %v9492 = vadd.f32 %v9491, %v9429
  %v9493 = vadd.f32 %v9492, %v9430
  %v9494 = vadd.f32 %v9493, %v9431
  %v9495 = vadd.f32 %v9494, %v9432
  %v9496 = vadd.f32 %v9495, %v9433
  %v9497 = vadd.f32 %v9496, %v9434
  %v9498 = vadd.f32 %v9497, %v9435
  %v9499 = vadd.f32 %v9498, %v9436
  %v9500 = vadd.f32 %v9499, %v9437
  %v9501 = vadd.f32 %v9500, %v9438
  %v9502 = vadd.f32 %v9501, %v9439
  %v9503 = vadd.f32 %v9502, %v9440
  %v9504 = vadd.f32 %v9503, %v9441
  %v9505 = vadd.f32 %v9504, %v9442
  %v9506 = vrot.slane %v9505, 4
  %v9507 = vadd.f32 %v9505, %v9506
  %v9508 = vrot.slane %v9507, 2
  %v9509 = vadd.f32 %v9507, %v9508
  %v9510 = vrot.slane %v9509, 1
  %v9511 = vadd.f32 %v9509, %v9510
  %v9512 = vmul.f32 %v9511, 0.001953125
  %v9513 = vmul.f32 %v9378, %v9378
  %v9514 = vsub.f32 %v9512, %v9513
  %v9515 = vmax.f32 %v9514, 0.0
  %v9516 = vsub.f32 %v9245, %v9378
  %v9517 = vsub.f32 %v9246, %v9378
  %v9518 = vsub.f32 %v9247, %v9378
  %v9519 = vsub.f32 %v9248, %v9378
  %v9520 = vsub.f32 %v9249, %v9378
  %v9521 = vsub.f32 %v9250, %v9378
  %v9522 = vsub.f32 %v9251, %v9378
  %v9523 = vsub.f32 %v9252, %v9378
  %v9524 = vsub.f32 %v9253, %v9378
  %v9525 = vsub.f32 %v9254, %v9378
  %v9526 = vsub.f32 %v9255, %v9378
  %v9527 = vsub.f32 %v9256, %v9378
  %v9528 = vsub.f32 %v9257, %v9378
  %v9529 = vsub.f32 %v9258, %v9378
  %v9530 = vsub.f32 %v9259, %v9378
  %v9531 = vsub.f32 %v9260, %v9378
  %v9532 = vsub.f32 %v9261, %v9378
  %v9533 = vsub.f32 %v9262, %v9378
  %v9534 = vsub.f32 %v9263, %v9378
  %v9535 = vsub.f32 %v9264, %v9378
  %v9536 = vsub.f32 %v9265, %v9378
  %v9537 = vsub.f32 %v9266, %v9378
  %v9538 = vsub.f32 %v9267, %v9378
  %v9539 = vsub.f32 %v9268, %v9378
  %v9540 = vsub.f32 %v9269, %v9378
  %v9541 = vsub.f32 %v9270, %v9378
  %v9542 = vsub.f32 %v9271, %v9378
  %v9543 = vsub.f32 %v9272, %v9378
  %v9544 = vsub.f32 %v9273, %v9378
  %v9545 = vsub.f32 %v9274, %v9378
  %v9546 = vsub.f32 %v9275, %v9378
  %v9547 = vsub.f32 %v9276, %v9378
  %v9548 = vsub.f32 %v9277, %v9378
  %v9549 = vsub.f32 %v9278, %v9378
  %v9550 = vsub.f32 %v9279, %v9378
  %v9551 = vsub.f32 %v9280, %v9378
  %v9552 = vsub.f32 %v9281, %v9378
  %v9553 = vsub.f32 %v9282, %v9378
  %v9554 = vsub.f32 %v9283, %v9378
  %v9555 = vsub.f32 %v9284, %v9378
  %v9556 = vsub.f32 %v9285, %v9378
  %v9557 = vsub.f32 %v9286, %v9378
  %v9558 = vsub.f32 %v9287, %v9378
  %v9559 = vsub.f32 %v9288, %v9378
  %v9560 = vsub.f32 %v9289, %v9378
  %v9561 = vsub.f32 %v9290, %v9378
  %v9562 = vsub.f32 %v9291, %v9378
  %v9563 = vsub.f32 %v9292, %v9378
  %v9564 = vsub.f32 %v9293, %v9378
  %v9565 = vsub.f32 %v9294, %v9378
  %v9566 = vsub.f32 %v9295, %v9378
  %v9567 = vsub.f32 %v9296, %v9378
  %v9568 = vsub.f32 %v9297, %v9378
  %v9569 = vsub.f32 %v9298, %v9378
  %v9570 = vsub.f32 %v9299, %v9378
  %v9571 = vsub.f32 %v9300, %v9378
  %v9572 = vsub.f32 %v9301, %v9378
  %v9573 = vsub.f32 %v9302, %v9378
  %v9574 = vsub.f32 %v9303, %v9378
  %v9575 = vsub.f32 %v9304, %v9378
  %v9576 = vsub.f32 %v9305, %v9378
  %v9577 = vsub.f32 %v9306, %v9378
  %v9578 = vsub.f32 %v9307, %v9378
  %v9579 = vsub.f32 %v9308, %v9378
  %v9580 = vadd.f32 %v9515, 1e-05
  %v9581 = vrsqrt.pop %v9580
  %v9582 = vmul.f32 %v9516, %v9581
  %v9583 = vmul.f32 %v9517, %v9581
  %v9584 = vmul.f32 %v9518, %v9581
  %v9585 = vmul.f32 %v9519, %v9581
  %v9586 = vmul.f32 %v9520, %v9581
  %v9587 = vmul.f32 %v9521, %v9581
  %v9588 = vmul.f32 %v9522, %v9581
  %v9589 = vmul.f32 %v9523, %v9581
  %v9590 = vmul.f32 %v9524, %v9581
  %v9591 = vmul.f32 %v9525, %v9581
  %v9592 = vmul.f32 %v9526, %v9581
  %v9593 = vmul.f32 %v9527, %v9581
  %v9594 = vmul.f32 %v9528, %v9581
  %v9595 = vmul.f32 %v9529, %v9581
  %v9596 = vmul.f32 %v9530, %v9581
  %v9597 = vmul.f32 %v9531, %v9581
  %v9598 = vmul.f32 %v9532, %v9581
  %v9599 = vmul.f32 %v9533, %v9581
  %v9600 = vmul.f32 %v9534, %v9581
  %v9601 = vmul.f32 %v9535, %v9581
  %v9602 = vmul.f32 %v9536, %v9581
  %v9603 = vmul.f32 %v9537, %v9581
  %v9604 = vmul.f32 %v9538, %v9581
  %v9605 = vmul.f32 %v9539, %v9581
  %v9606 = vmul.f32 %v9540, %v9581
  %v9607 = vmul.f32 %v9541, %v9581
  %v9608 = vmul.f32 %v9542, %v9581
  %v9609 = vmul.f32 %v9543, %v9581
  %v9610 = vmul.f32 %v9544, %v9581
  %v9611 = vmul.f32 %v9545, %v9581
  %v9612 = vmul.f32 %v9546, %v9581
  %v9613 = vmul.f32 %v9547, %v9581
  %v9614 = vmul.f32 %v9548, %v9581
  %v9615 = vmul.f32 %v9549, %v9581
  %v9616 = vmul.f32 %v9550, %v9581
  %v9617 = vmul.f32 %v9551, %v9581
  %v9618 = vmul.f32 %v9552, %v9581
  %v9619 = vmul.f32 %v9553, %v9581
  %v9620 = vmul.f32 %v9554, %v9581
  %v9621 = vmul.f32 %v9555, %v9581
  %v9622 = vmul.f32 %v9556, %v9581
  %v9623 = vmul.f32 %v9557, %v9581
  %v9624 = vmul.f32 %v9558, %v9581
  %v9625 = vmul.f32 %v9559, %v9581
  %v9626 = vmul.f32 %v9560, %v9581
  %v9627 = vmul.f32 %v9561, %v9581
  %v9628 = vmul.f32 %v9562, %v9581
  %v9629 = vmul.f32 %v9563, %v9581
  %v9630 = vmul.f32 %v9564, %v9581
  %v9631 = vmul.f32 %v9565, %v9581
  %v9632 = vmul.f32 %v9566, %v9581
  %v9633 = vmul.f32 %v9567, %v9581
  %v9634 = vmul.f32 %v9568, %v9581
  %v9635 = vmul.f32 %v9569, %v9581
  %v9636 = vmul.f32 %v9570, %v9581
  %v9637 = vmul.f32 %v9571, %v9581
  %v9638 = vmul.f32 %v9572, %v9581
  %v9639 = vmul.f32 %v9573, %v9581
  %v9640 = vmul.f32 %v9574, %v9581
  %v9641 = vmul.f32 %v9575, %v9581
  %v9642 = vmul.f32 %v9576, %v9581
  %v9643 = vmul.f32 %v9577, %v9581
  %v9644 = vmul.f32 %v9578, %v9581
  %v9645 = vmul.f32 %v9579, %v9581
  %v9646 = vld [vmem:[%s5] sm:$0x1]
  %v9648 = vlaneseq
  %v9649 = vshrl.u32 %v9648, 7
  %v9650 = vsub.s32 0, %v9649
  %v9651 = vrot.slane %v9646, %v9650
  %v9653 = vmul.f32 %v9582, %v9651
  %v9654 = vmul.f32 %v9583, %v9651
  %v9655 = vmul.f32 %v9584, %v9651
  %v9656 = vmul.f32 %v9585, %v9651
  %v9657 = vmul.f32 %v9586, %v9651
  %v9658 = vmul.f32 %v9587, %v9651
  %v9659 = vmul.f32 %v9588, %v9651
  %v9660 = vmul.f32 %v9589, %v9651
  %v9661 = vmul.f32 %v9590, %v9651
  %v9662 = vmul.f32 %v9591, %v9651
  %v9663 = vmul.f32 %v9592, %v9651
  %v9664 = vmul.f32 %v9593, %v9651
  %v9665 = vmul.f32 %v9594, %v9651
  %v9666 = vmul.f32 %v9595, %v9651
  %v9667 = vmul.f32 %v9596, %v9651
  %v9668 = vmul.f32 %v9597, %v9651
  %v9669 = vmul.f32 %v9598, %v9651
  %v9670 = vmul.f32 %v9599, %v9651
  %v9671 = vmul.f32 %v9600, %v9651
  %v9672 = vmul.f32 %v9601, %v9651
  %v9673 = vmul.f32 %v9602, %v9651
  %v9674 = vmul.f32 %v9603, %v9651
  %v9675 = vmul.f32 %v9604, %v9651
  %v9676 = vmul.f32 %v9605, %v9651
  %v9677 = vmul.f32 %v9606, %v9651
  %v9678 = vmul.f32 %v9607, %v9651
  %v9679 = vmul.f32 %v9608, %v9651
  %v9680 = vmul.f32 %v9609, %v9651
  %v9681 = vmul.f32 %v9610, %v9651
  %v9682 = vmul.f32 %v9611, %v9651
  %v9683 = vmul.f32 %v9612, %v9651
  %v9684 = vmul.f32 %v9613, %v9651
  %v9685 = vmul.f32 %v9614, %v9651
  %v9686 = vmul.f32 %v9615, %v9651
  %v9687 = vmul.f32 %v9616, %v9651
  %v9688 = vmul.f32 %v9617, %v9651
  %v9689 = vmul.f32 %v9618, %v9651
  %v9690 = vmul.f32 %v9619, %v9651
  %v9691 = vmul.f32 %v9620, %v9651
  %v9692 = vmul.f32 %v9621, %v9651
  %v9693 = vmul.f32 %v9622, %v9651
  %v9694 = vmul.f32 %v9623, %v9651
  %v9695 = vmul.f32 %v9624, %v9651
  %v9696 = vmul.f32 %v9625, %v9651
  %v9697 = vmul.f32 %v9626, %v9651
  %v9698 = vmul.f32 %v9627, %v9651
  %v9699 = vmul.f32 %v9628, %v9651
  %v9700 = vmul.f32 %v9629, %v9651
  %v9701 = vmul.f32 %v9630, %v9651
  %v9702 = vmul.f32 %v9631, %v9651
  %v9703 = vmul.f32 %v9632, %v9651
  %v9704 = vmul.f32 %v9633, %v9651
  %v9705 = vmul.f32 %v9634, %v9651
  %v9706 = vmul.f32 %v9635, %v9651
  %v9707 = vmul.f32 %v9636, %v9651
  %v9708 = vmul.f32 %v9637, %v9651
  %v9709 = vmul.f32 %v9638, %v9651
  %v9710 = vmul.f32 %v9639, %v9651
  %v9711 = vmul.f32 %v9640, %v9651
  %v9712 = vmul.f32 %v9641, %v9651
  %v9713 = vmul.f32 %v9642, %v9651
  %v9714 = vmul.f32 %v9643, %v9651
  %v9715 = vmul.f32 %v9644, %v9651
  %v9716 = vmul.f32 %v9645, %v9651
  %v9717 = vld [vmem:[%s6] sm:$0x1]
  %v9719 = vlaneseq
  %v9720 = vshrl.u32 %v9719, 7
  %v9721 = vsub.s32 0, %v9720
  %v9722 = vrot.slane %v9717, %v9721
  %v9724 = vadd.f32 %v9653, %v9722
  %v9725 = vadd.f32 %v9654, %v9722
  %v9726 = vadd.f32 %v9655, %v9722
  %v9727 = vadd.f32 %v9656, %v9722
  %v9728 = vadd.f32 %v9657, %v9722
  %v9729 = vadd.f32 %v9658, %v9722
  %v9730 = vadd.f32 %v9659, %v9722
  %v9731 = vadd.f32 %v9660, %v9722
  %v9732 = vadd.f32 %v9661, %v9722
  %v9733 = vadd.f32 %v9662, %v9722
  %v9734 = vadd.f32 %v9663, %v9722
  %v9735 = vadd.f32 %v9664, %v9722
  %v9736 = vadd.f32 %v9665, %v9722
  %v9737 = vadd.f32 %v9666, %v9722
  %v9738 = vadd.f32 %v9667, %v9722
  %v9739 = vadd.f32 %v9668, %v9722
  %v9740 = vadd.f32 %v9669, %v9722
  %v9741 = vadd.f32 %v9670, %v9722
  %v9742 = vadd.f32 %v9671, %v9722
  %v9743 = vadd.f32 %v9672, %v9722
  %v9744 = vadd.f32 %v9673, %v9722
  %v9745 = vadd.f32 %v9674, %v9722
  %v9746 = vadd.f32 %v9675, %v9722
  %v9747 = vadd.f32 %v9676, %v9722
  %v9748 = vadd.f32 %v9677, %v9722
  %v9749 = vadd.f32 %v9678, %v9722
  %v9750 = vadd.f32 %v9679, %v9722
  %v9751 = vadd.f32 %v9680, %v9722
  %v9752 = vadd.f32 %v9681, %v9722
  %v9753 = vadd.f32 %v9682, %v9722
  %v9754 = vadd.f32 %v9683, %v9722
  %v9755 = vadd.f32 %v9684, %v9722
  %v9756 = vadd.f32 %v9685, %v9722
  %v9757 = vadd.f32 %v9686, %v9722
  %v9758 = vadd.f32 %v9687, %v9722
  %v9759 = vadd.f32 %v9688, %v9722
  %v9760 = vadd.f32 %v9689, %v9722
  %v9761 = vadd.f32 %v9690, %v9722
  %v9762 = vadd.f32 %v9691, %v9722
  %v9763 = vadd.f32 %v9692, %v9722
  %v9764 = vadd.f32 %v9693, %v9722
  %v9765 = vadd.f32 %v9694, %v9722
  %v9766 = vadd.f32 %v9695, %v9722
  %v9767 = vadd.f32 %v9696, %v9722
  %v9768 = vadd.f32 %v9697, %v9722
  %v9769 = vadd.f32 %v9698, %v9722
  %v9770 = vadd.f32 %v9699, %v9722
  %v9771 = vadd.f32 %v9700, %v9722
  %v9772 = vadd.f32 %v9701, %v9722
  %v9773 = vadd.f32 %v9702, %v9722
  %v9774 = vadd.f32 %v9703, %v9722
  %v9775 = vadd.f32 %v9704, %v9722
  %v9776 = vadd.f32 %v9705, %v9722
  %v9777 = vadd.f32 %v9706, %v9722
  %v9778 = vadd.f32 %v9707, %v9722
  %v9779 = vadd.f32 %v9708, %v9722
  %v9780 = vadd.f32 %v9709, %v9722
  %v9781 = vadd.f32 %v9710, %v9722
  %v9782 = vadd.f32 %v9711, %v9722
  %v9783 = vadd.f32 %v9712, %v9722
  %v9784 = vadd.f32 %v9713, %v9722
  %v9785 = vadd.f32 %v9714, %v9722
  %v9786 = vadd.f32 %v9715, %v9722
  %v9787 = vadd.f32 %v9716, %v9722
  %v9788 = vmax.f32 %v9724, 0.0
  %v9789 = vmax.f32 %v9725, 0.0
  %v9790 = vmax.f32 %v9726, 0.0
  %v9791 = vmax.f32 %v9727, 0.0
  %v9792 = vmax.f32 %v9728, 0.0
  %v9793 = vmax.f32 %v9729, 0.0
  %v9794 = vmax.f32 %v9730, 0.0
  %v9795 = vmax.f32 %v9731, 0.0
  %v9796 = vmax.f32 %v9732, 0.0
  %v9797 = vmax.f32 %v9733, 0.0
  %v9798 = vmax.f32 %v9734, 0.0
  %v9799 = vmax.f32 %v9735, 0.0
  %v9800 = vmax.f32 %v9736, 0.0
  %v9801 = vmax.f32 %v9737, 0.0
  %v9802 = vmax.f32 %v9738, 0.0
  %v9803 = vmax.f32 %v9739, 0.0
  %v9804 = vmax.f32 %v9740, 0.0
  %v9805 = vmax.f32 %v9741, 0.0
  %v9806 = vmax.f32 %v9742, 0.0
  %v9807 = vmax.f32 %v9743, 0.0
  %v9808 = vmax.f32 %v9744, 0.0
  %v9809 = vmax.f32 %v9745, 0.0
  %v9810 = vmax.f32 %v9746, 0.0
  %v9811 = vmax.f32 %v9747, 0.0
  %v9812 = vmax.f32 %v9748, 0.0
  %v9813 = vmax.f32 %v9749, 0.0
  %v9814 = vmax.f32 %v9750, 0.0
  %v9815 = vmax.f32 %v9751, 0.0
  %v9816 = vmax.f32 %v9752, 0.0
  %v9817 = vmax.f32 %v9753, 0.0
  %v9818 = vmax.f32 %v9754, 0.0
  %v9819 = vmax.f32 %v9755, 0.0
  %v9820 = vmax.f32 %v9756, 0.0
  %v9821 = vmax.f32 %v9757, 0.0
  %v9822 = vmax.f32 %v9758, 0.0
  %v9823 = vmax.f32 %v9759, 0.0
  %v9824 = vmax.f32 %v9760, 0.0
  %v9825 = vmax.f32 %v9761, 0.0
  %v9826 = vmax.f32 %v9762, 0.0
  %v9827 = vmax.f32 %v9763, 0.0
  %v9828 = vmax.f32 %v9764, 0.0
  %v9829 = vmax.f32 %v9765, 0.0
  %v9830 = vmax.f32 %v9766, 0.0
  %v9831 = vmax.f32 %v9767, 0.0
  %v9832 = vmax.f32 %v9768, 0.0
  %v9833 = vmax.f32 %v9769, 0.0
  %v9834 = vmax.f32 %v9770, 0.0
  %v9835 = vmax.f32 %v9771, 0.0
  %v9836 = vmax.f32 %v9772, 0.0
  %v9837 = vmax.f32 %v9773, 0.0
  %v9838 = vmax.f32 %v9774, 0.0
  %v9839 = vmax.f32 %v9775, 0.0
  %v9840 = vmax.f32 %v9776, 0.0
  %v9841 = vmax.f32 %v9777, 0.0
  %v9842 = vmax.f32 %v9778, 0.0
  %v9843 = vmax.f32 %v9779, 0.0
  %v9844 = vmax.f32 %v9780, 0.0
  %v9845 = vmax.f32 %v9781, 0.0
  %v9846 = vmax.f32 %v9782, 0.0
  %v9847 = vmax.f32 %v9783, 0.0
  %v9848 = vmax.f32 %v9784, 0.0
  %v9849 = vmax.f32 %v9785, 0.0
  %v9850 = vmax.f32 %v9786, 0.0
  %v9851 = vmax.f32 %v9787, 0.0
  %9852 = vst [vmem:[%s7] sm:$0xff] %v9788
  %9853 = vst [vmem:[%s7 + $0x8] sm:$0xff] %v9789
  %9854 = vst [vmem:[%s7 + $0x10] sm:$0xff] %v9790
  %9855 = vst [vmem:[%s7 + $0x18] sm:$0xff] %v9791
  %9856 = vst [vmem:[%s7 + $0x20] sm:$0xff] %v9792
  %9857 = vst [vmem:[%s7 + $0x28] sm:$0xff] %v9793
  %9858 = vst [vmem:[%s7 + $0x30] sm:$0xff] %v9794
  %9859 = vst [vmem:[%s7 + $0x38] sm:$0xff] %v9795
  %9860 = vst [vmem:[%s7 + $0x40] sm:$0xff] %v9796
  %9861 = vst [vmem:[%s7 + $0x48] sm:$0xff] %v9797
  %9862 = vst [vmem:[%s7 + $0x50] sm:$0xff] %v9798
  %9863 = vst [vmem:[%s7 + $0x58] sm:$0xff] %v9799
  %9864 = vst [vmem:[%s7 + $0x60] sm:$0xff] %v9800
  %9865 = vst [vmem:[%s7 + $0x68] sm:$0xff] %v9801
  %9866 = vst [vmem:[%s7 + $0x70] sm:$0xff] %v9802
  %9867 = vst [vmem:[%s7 + $0x78] sm:$0xff] %v9803
  %9868 = vst [vmem:[%s7 + $0x80] sm:$0xff] %v9804
  %9869 = vst [vmem:[%s7 + $0x88] sm:$0xff] %v9805
  %9870 = vst [vmem:[%s7 + $0x90] sm:$0xff] %v9806
  %9871 = vst [vmem:[%s7 + $0x98] sm:$0xff] %v9807
  %9872 = vst [vmem:[%s7 + $0xa0] sm:$0xff] %v9808
  %9873 = vst [vmem:[%s7 + $0xa8] sm:$0xff] %v9809
  %9874 = vst [vmem:[%s7 + $0xb0] sm:$0xff] %v9810
  %9875 = vst [vmem:[%s7 + $0xb8] sm:$0xff] %v9811
  %9876 = vst [vmem:[%s7 + $0xc0] sm:$0xff] %v9812
  %9877 = vst [vmem:[%s7 + $0xc8] sm:$0xff] %v9813
  %9878 = vst [vmem:[%s7 + $0xd0] sm:$0xff] %v9814
  %9879 = vst [vmem:[%s7 + $0xd8] sm:$0xff] %v9815
  %9880 = vst [vmem:[%s7 + $0xe0] sm:$0xff] %v9816
  %9881 = vst [vmem:[%s7 + $0xe8] sm:$0xff] %v9817
  %9882 = vst [vmem:[%s7 + $0xf0] sm:$0xff] %v9818
  %9883 = vst [vmem:[%s7 + $0xf8] sm:$0xff] %v9819
  %9884 = vst [vmem:[%s7 + $0x100] sm:$0xff] %v9820
  %9885 = vst [vmem:[%s7 + $0x108] sm:$0xff] %v9821
  %9886 = vst [vmem:[%s7 + $0x110] sm:$0xff] %v9822
  %9887 = vst [vmem:[%s7 + $0x118] sm:$0xff] %v9823
  %9888 = vst [vmem:[%s7 + $0x120] sm:$0xff] %v9824
  %9889 = vst [vmem:[%s7 + $0x128] sm:$0xff] %v9825
  %9890 = vst [vmem:[%s7 + $0x130] sm:$0xff] %v9826
  %9891 = vst [vmem:[%s7 + $0x138] sm:$0xff] %v9827
  %9892 = vst [vmem:[%s7 + $0x140] sm:$0xff] %v9828
  %9893 = vst [vmem:[%s7 + $0x148] sm:$0xff] %v9829
  %9894 = vst [vmem:[%s7 + $0x150] sm:$0xff] %v9830
  %9895 = vst [vmem:[%s7 + $0x158] sm:$0xff] %v9831
  %9896 = vst [vmem:[%s7 + $0x160] sm:$0xff] %v9832
  %9897 = vst [vmem:[%s7 + $0x168] sm:$0xff] %v9833
  %9898 = vst [vmem:[%s7 + $0x170] sm:$0xff] %v9834
  %9899 = vst [vmem:[%s7 + $0x178] sm:$0xff] %v9835
  %9900 = vst [vmem:[%s7 + $0x180] sm:$0xff] %v9836
  %9901 = vst [vmem:[%s7 + $0x188] sm:$0xff] %v9837
  %9902 = vst [vmem:[%s7 + $0x190] sm:$0xff] %v9838
  %9903 = vst [vmem:[%s7 + $0x198] sm:$0xff] %v9839
  %9904 = vst [vmem:[%s7 + $0x1a0] sm:$0xff] %v9840
  %9905 = vst [vmem:[%s7 + $0x1a8] sm:$0xff] %v9841
  %9906 = vst [vmem:[%s7 + $0x1b0] sm:$0xff] %v9842
  %9907 = vst [vmem:[%s7 + $0x1b8] sm:$0xff] %v9843
  %9908 = vst [vmem:[%s7 + $0x1c0] sm:$0xff] %v9844
  %9909 = vst [vmem:[%s7 + $0x1c8] sm:$0xff] %v9845
  %9910 = vst [vmem:[%s7 + $0x1d0] sm:$0xff] %v9846
  %9911 = vst [vmem:[%s7 + $0x1d8] sm:$0xff] %v9847
  %9912 = vst [vmem:[%s7 + $0x1e0] sm:$0xff] %v9848
  %9913 = vst [vmem:[%s7 + $0x1e8] sm:$0xff] %v9849
  %9914 = vst [vmem:[%s7 + $0x1f0] sm:$0xff] %v9850
  %9915 = vst [vmem:[%s7 + $0x1f8] sm:$0xff] %v9851
  // Predicated region
  $region30: #{double_conv.1} parent=0 // pred_check
    _
  $region31: #{double_conv.1} parent=0 // pred_check_branch
    %9917 = sbr.rel (0) target = $region33
  $region32: #{double_conv.1} parent=0 // pred_region
    _
  $region33: #{double_conv.1} parent=0 // pred_fallthru
    _
  // Predicated region
  $region34: #{double_conv.1} parent=0 // pred_check
    _
  $region35: #{double_conv.1} parent=0 // pred_check_branch
    %9919 = sbr.rel (0) target = $region37
  $region36: #{double_conv.1} parent=0 // pred_region
    _
  $region37: #{double_conv.1} parent=0 // pred_fallthru
    _

</llo_original>
